<compile_context>
chip_gen: v5e
topology: v5e:2x2
jax: 0.10.0
libtpu: 0.0.40
codegen_flags: <defaults>
</compile_context>

<pallas_src>
import math

import jax
import jax.numpy as jnp
from jax.experimental import pallas as pl
from jax.experimental.pallas import tpu as pltpu

# ---------------- configuration (small, consistent with the module) ----------
B = 2
S = 8
INPUT_SIZE = 16
D_MODEL = 64
N_HEADS = 4
HEAD_DIM = D_MODEL // N_HEADS
D_FF = 128
NUM_LSTM_LAYERS = 2
NUM_ENC_LAYERS = 2
OUTPUT_SIZE = 32
MAX_LEN = 32
LN_EPS = 1e-5


# ---------------------------- shared math helpers ----------------------------
def _mm(a, b):
    return jnp.dot(a, b, preferred_element_type=jnp.float32)


def _elu(x):
    return jnp.where(x > 0, x, jnp.exp(jnp.minimum(x, 0.0)) - 1.0)


def _layer_norm(y, g, b):
    mu = jnp.mean(y, axis=-1, keepdims=True)
    var = jnp.mean((y - mu) ** 2, axis=-1, keepdims=True)
    return (y - mu) * jax.lax.rsqrt(var + LN_EPS) * g + b


def _lstm_cell(gates, c_prev):
    D = D_MODEL
    i = jax.nn.sigmoid(gates[:, 0:D])
    f = jax.nn.sigmoid(gates[:, D:2 * D])
    g = jnp.tanh(gates[:, 2 * D:3 * D])
    o = jax.nn.sigmoid(gates[:, 3 * D:4 * D])
    c = f * c_prev + i * g
    h = o * jnp.tanh(c)
    return h, c


def _grn(x, w1, b1, w2, b2, wg, bg):
    # input_size == output_size -> identity skip
    a = _elu(_mm(x, w1) + b1)
    a2 = _mm(a, w2) + b2
    gate = jax.nn.sigmoid(_mm(a2, wg) + bg)
    return gate * a2 + (1.0 - gate) * x


# ---------------------------- fused Pallas kernel ----------------------------
def _tft_fused_kernel(
        x_ref, pe_ref, amask_ref, avg_ref,
        wih1_ref, bl1_ref, wrec_ref, wih2_ref, bl2_ref,
        wqkv_ref, bqkv_ref, wo_ref, bo_ref, ln1g_ref, ln1b_ref,
        w1_ref, b1_ref, w2_ref, b2_ref, ln2g_ref, ln2b_ref,
        g1_ref, gb1_ref, g2_ref, gb2_ref, gg_ref, ggb_ref,
        dwcat_ref, dbl_ref, dg1_ref, dgb1_ref, dg2_ref, dgb2_ref,
        dgg_ref, dggb_ref, dwo_ref, dbo_ref,
        out_ref,
        seq_ref, hstate_ref):
    D = D_MODEL

    # ---- encoder LSTM stack (feature projection pre-folded into wih1) ------
    # hoisted layer-1 input projection: one [S*B,16]@[16,4D] matmul, rows are
    # time-major (row = t*B + b) so per-step reads are contiguous.
    xp1 = _mm(x_ref[...], wih1_ref[...]) + bl1_ref[...]        # [S*B, 4D]
    wrec = wrec_ref[...]                                       # [2D, 8D] blockdiag
    wih2 = wih2_ref[...]                                       # [D, 4D]
    bl2 = bl2_ref[...]                                         # [1, 4D]

    hstate_ref[...] = jnp.zeros((B, 2 * D), jnp.float32)       # [h1 | h2]
    c1 = jnp.zeros((B, D), jnp.float32)
    c2 = jnp.zeros((B, D), jnp.float32)
    h2 = jnp.zeros((B, D), jnp.float32)
    for t in range(S):                       # statically unrolled (S = 8)
        # both layers' recurrent terms in ONE K=2D matmul off prev-step state
        recur = _mm(hstate_ref[...], wrec)                     # [B, 8D]
        h1, c1 = _lstm_cell(xp1[t * B:(t + 1) * B, :] + recur[:, :4 * D], c1)
        h2, c2 = _lstm_cell(_mm(h1, wih2) + recur[:, 4 * D:] + bl2, c2)
        hstate_ref[:, :D] = h1
        hstate_ref[:, D:] = h2
        seq_ref[t * B:(t + 1) * B, :] = h2                     # time-major rows
    hf, cf = h2, c2                                            # final states

    # ---- positional encoding: single vector add (pe pre-tiled to [S*B, D]) -
    h = seq_ref[...] + pe_ref[...]                             # [S*B, D]

    amask = amask_ref[...]                    # additive same-batch block mask
    scale = 1.0 / math.sqrt(HEAD_DIM)

    # ---- encoder layers: MHA + FFN + GRN (dropout = identity) --------------
    for l in range(NUM_ENC_LAYERS):
        qkv = _mm(h, wqkv_ref[l]) + bqkv_ref[l]                # [S*B, 3D]
        ctx_parts = []
        for hh in range(N_HEADS):
            lo = hh * HEAD_DIM
            q = qkv[:, lo:lo + HEAD_DIM]                       # [S*B, hd]
            k = qkv[:, D + lo:D + lo + HEAD_DIM]
            v = qkv[:, 2 * D + lo:2 * D + lo + HEAD_DIM]
            s = jax.lax.dot_general(
                q, k, (((1,), (1,)), ((), ())),
                preferred_element_type=jnp.float32)            # [S*B, S*B]
            s = s * scale + amask                              # mask cross-batch
            m = jnp.max(s, axis=-1, keepdims=True)
            e = jnp.exp(s - m)
            p = e * pl.reciprocal(jnp.sum(e, axis=-1, keepdims=True),
                                  approx=True)
            ctx_parts.append(_mm(p, v))                        # [S*B, hd]
        ctx = jnp.concatenate(ctx_parts, axis=-1)              # [S*B, D]
        attn = _mm(ctx, wo_ref[l]) + bo_ref[l]                 # single K=D proj
        h = _layer_norm(h + attn, ln1g_ref[l], ln1b_ref[l])

        z = jnp.maximum(_mm(h, w1_ref[l]) + b1_ref[l], 0.0)
        z = _mm(z, w2_ref[l]) + b2_ref[l]
        h = _layer_norm(h + z, ln2g_ref[l], ln2b_ref[l])

        h = _grn(h, g1_ref[l], gb1_ref[l], g2_ref[l], gb2_ref[l],
                 gg_ref[l], ggb_ref[l])

    # ---- decoder: block-average matmul -> 1-step LSTM -> GRN -> head -------
    ctx = _mm(avg_ref[...], h)                                 # [B, D]
    zcat = jnp.concatenate([ctx, hf], axis=1)                  # [B, 2D]
    hdec, _ = _lstm_cell(_mm(zcat, dwcat_ref[...]) + dbl_ref[...], cf)
    gr = _grn(hdec, dg1_ref[...], dgb1_ref[...], dg2_ref[...], dgb2_ref[...],
              dgg_ref[...], dggb_ref[...])
    out_ref[...] = _mm(gr, dwo_ref[...]) + dbo_ref[...]        # [B, OUTPUT_SIZE]


# ---------------------------- wrapper -----------------------------------------
def _full_spec(shape):
    nd = len(shape)
    return pl.BlockSpec(shape, lambda *args, nd=nd: (0,) * nd)


def tft_forward_fused(packed, x):
    # host-side layout plumbing: time-major rows (row = t*B + b)
    x_tm = jnp.transpose(x, (1, 0, 2)).reshape(S * B, INPUT_SIZE)
    args = (x_tm,) + tuple(packed)
    return pl.pallas_call(
        _tft_fused_kernel,
        in_specs=[_full_spec(a.shape) for a in args],
        out_specs=_full_spec((B, OUTPUT_SIZE)),
        out_shape=jax.ShapeDtypeStruct((B, OUTPUT_SIZE), jnp.float32),
        scratch_shapes=[pltpu.VMEM((S * B, D_MODEL), jnp.float32),   # h2 seq
                        pltpu.VMEM((B, 2 * D_MODEL), jnp.float32)],  # [h1|h2]
        compiler_params=pltpu.CompilerParams(vmem_limit_bytes=32 * 1024 * 1024),
    )(*args)


# ---------------------------- parameters --------------------------------------
def make_pe(max_len, d_model):
    position = jnp.arange(max_len, dtype=jnp.float32)[:, None]
    div_term = jnp.exp(jnp.arange(0, d_model, 2, dtype=jnp.float32)
                       * (-math.log(10000.0) / d_model))
    pe = jnp.zeros((max_len, d_model), jnp.float32)
    pe = pe.at[:, 0::2].set(jnp.sin(position * div_term))
    pe = pe.at[:, 1::2].set(jnp.cos(position * div_term))
    return pe


def init_params(key):
    keys = iter(jax.random.split(key, 64))

    def lin(in_dim, out_dim):
        k1, k2 = next(keys), next(keys)
        bound = 1.0 / math.sqrt(in_dim)
        w = jax.random.uniform(k1, (out_dim, in_dim), jnp.float32, -bound, bound)
        b = jax.random.uniform(k2, (1, out_dim), jnp.float32, -bound, bound)
        return jnp.transpose(w), b            # transposed: [in, out]

    params = {"feature_proj": lin(INPUT_SIZE, D_MODEL)}

    enc_lstm = []
    for _ in range(NUM_LSTM_LAYERS):
        wih_t, bih = lin(D_MODEL, 4 * D_MODEL)
        whh_t, bhh = lin(D_MODEL, 4 * D_MODEL)
        enc_lstm.append((wih_t, whh_t, bih + bhh))
    params["enc_lstm"] = enc_lstm

    params["pe"] = make_pe(MAX_LEN, D_MODEL)

    enc_layers = []
    for _ in range(NUM_ENC_LAYERS):
        wqkv_t, bqkv = lin(D_MODEL, 3 * D_MODEL)
        wo_t, bo = lin(D_MODEL, D_MODEL)
        ln1_g = jnp.ones((1, D_MODEL), jnp.float32)
        ln1_b = jnp.zeros((1, D_MODEL), jnp.float32)
        w1_t, b1 = lin(D_MODEL, D_FF)
        w2_t, b2 = lin(D_FF, D_MODEL)
        ln2_g = jnp.ones((1, D_MODEL), jnp.float32)
        ln2_b = jnp.zeros((1, D_MODEL), jnp.float32)
        g1_t, gb1 = lin(D_MODEL, D_MODEL)
        g2_t, gb2 = lin(D_MODEL, D_MODEL)
        gg_t, ggb = lin(D_MODEL, D_MODEL)
        enc_layers.append({
            "mha": (wqkv_t, bqkv, wo_t, bo, ln1_g, ln1_b),
            "ff": (w1_t, b1, w2_t, b2, ln2_g, ln2_b),
            "grn": (g1_t, gb1, g2_t, gb2, gg_t, ggb),
        })
    params["enc_layers"] = enc_layers

    dwih_t, dbih = lin(D_MODEL, 4 * D_MODEL)
    dwhh_t, dbhh = lin(D_MODEL, 4 * D_MODEL)
    dg1_t, dgb1 = lin(D_MODEL, D_MODEL)
    dg2_t, dgb2 = lin(D_MODEL, D_MODEL)
    dgg_t, dggb = lin(D_MODEL, D_MODEL)
    dwo_t, dbo = lin(D_MODEL, OUTPUT_SIZE)
    params["dec"] = (dwih_t, dwhh_t, dbih + dbhh,
                     dg1_t, dgb1, dg2_t, dgb2, dgg_t, dggb,
                     dwo_t, dbo)
    return params


def pack_params(params):
    """One-time host-side weight prep: fold feature proj into LSTM-1, build
    the block-diagonal fused recurrent weight, pre-tile the positional
    encoding / attention mask / pooling matrix, stack per-layer weights."""
    hp = jax.lax.Precision.HIGHEST
    D = D_MODEL
    wp_t, bp = params["feature_proj"]
    wih1_t, whh1_t, bl1 = params["enc_lstm"][0]
    wih2_t, whh2_t, bl2 = params["enc_lstm"][1]
    wih1_eff = jnp.dot(wp_t, wih1_t, precision=hp)         # [16, 4D]
    bl1_eff = jnp.dot(bp, wih1_t, precision=hp) + bl1      # [1, 4D]

    # [h1 | h2] @ wrec  ->  [h1@Whh1 | h2@Whh2]   (one K=2D matmul per step)
    wrec = jnp.zeros((2 * D, 8 * D), jnp.float32)
    wrec = wrec.at[:D, :4 * D].set(whh1_t)
    wrec = wrec.at[D:, 4 * D:].set(whh2_t)

    # positional encoding pre-tiled to time-major activation rows (t*B + b)
    pe_tiled = jnp.repeat(params["pe"][:S], B, axis=0)      # [S*B, D]

    # additive attention mask: allow only same-batch (block-diagonal) pairs
    bidx = jnp.arange(S * B, dtype=jnp.int32) % B
    amask = jnp.where(bidx[:, None] == bidx[None, :],
                      0.0, -1e30).astype(jnp.float32)       # [S*B, S*B]

    # block-averaging matrix for the decoder mean-pool over time-major rows
    avg = jnp.zeros((B, S * B), jnp.float32)
    rows = jnp.arange(S) * B
    for b in range(B):
        avg = avg.at[b, rows + b].set(1.0 / S)

    enc_layers = params["enc_layers"]

    def st(grp, idx):
        return jnp.stack([lyr[grp][idx] for lyr in enc_layers], axis=0)

    (dwih_t, dwhh_t, dbl, dg1, dgb1, dg2, dgb2, dgg, dggb,
     dwo, dbo) = params["dec"]
    dwcat = jnp.concatenate([dwih_t, dwhh_t], axis=0)       # [2D, 4D]

    return (pe_tiled, amask, avg,
            wih1_eff, bl1_eff, wrec, wih2_t, bl2,
            st("mha", 0), st("mha", 1), st("mha", 2), st("mha", 3),
            st("mha", 4), st("mha", 5),
            st("ff", 0), st("ff", 1), st("ff", 2), st("ff", 3),
            st("ff", 4), st("ff", 5),
            st("grn", 0), st("grn", 1), st("grn", 2), st("grn", 3),
            st("grn", 4), st("grn", 5),
            dwcat, dbl, dg1, dgb1, dg2, dgb2, dgg, dggb, dwo, dbo)


# ---------------------------- pure-JAX reference ------------------------------
def _mha_ref(x, wqkv_t, bqkv, wo_t, bo, g, b):
    Bc, Sc, Dm = x.shape
    qkv = _mm(x, wqkv_t) + bqkv
    q = qkv[..., :Dm].reshape(Bc, Sc, N_HEADS, HEAD_DIM)
    k = qkv[..., Dm:2 * Dm].reshape(Bc, Sc, N_HEADS, HEAD_DIM)
    v = qkv[..., 2 * Dm:].reshape(Bc, Sc, N_HEADS, HEAD_DIM)
    s = jnp.einsum('bqhd,bkhd->bhqk', q, k) / math.sqrt(HEAD_DIM)
    p = jax.nn.softmax(s, axis=-1)
    ctx = jnp.einsum('bhqk,bkhd->bqhd', p, v).reshape(Bc, Sc, Dm)
    attn = _mm(ctx, wo_t) + bo
    return _layer_norm(x + attn, g, b)


def _lstm_layer_ref(xs, wih_t, whh_t, bl):
    Bc, Sc, _ = xs.shape
    h = jnp.zeros((Bc, D_MODEL), jnp.float32)
    c = jnp.zeros((Bc, D_MODEL), jnp.float32)
    ys = []
    for t in range(Sc):
        h, c = _lstm_cell(_mm(xs[:, t, :], wih_t) + _mm(h, whh_t) + bl, c)
        ys.append(h)
    return jnp.stack(ys, axis=1), h, c


def tft_forward_ref(params, x):
    wp_t, bp = params["feature_proj"]
    h = _mm(x, wp_t) + bp
    cur, hf, cf = h, None, None
    for (wih_t, whh_t, bl) in params["enc_lstm"]:
        cur, hf, cf = _lstm_layer_ref(cur, wih_t, whh_t, bl)
    h = cur + params["pe"][None, :x.shape[1], :]          # PositionalEncoding
    for lyr in params["enc_layers"]:
        h = _mha_ref(h, *lyr["mha"])
        w1, b1, w2, b2, g, b = lyr["ff"]
        z = _mm(jnp.maximum(_mm(h, w1) + b1, 0.0), w2) + b2
        h = _layer_norm(h + z, g, b)
        h = _grn(h, *lyr["grn"])
    (dwih_t, dwhh_t, dbl, dg1, dgb1, dg2, dgb2, dgg, dggb,
     dwo, dbo) = params["dec"]
    ctx = jnp.mean(h, axis=1)
    hdec, _ = _lstm_cell(_mm(ctx, dwih_t) + _mm(hf, dwhh_t) + dbl, cf)
    gr = _grn(hdec, dg1, dgb1, dg2, dgb2, dgg, dggb)
    return _mm(gr, dwo) + dbo


# ---------------------------- main --------------------------------------------
if __name__ == "__main__":
    key = jax.random.PRNGKey(0)
    pkey, xkey = jax.random.split(key)
    params = init_params(pkey)
    x = jax.random.normal(xkey, (B, S, INPUT_SIZE), dtype=jnp.float32)

    packed = pack_params(params)
    logits = jax.jit(tft_forward_fused)(packed, x)
    logits = jax.block_until_ready(logits)

    with jax.default_matmul_precision("highest"):
        ref = jax.jit(tft_forward_ref)(params, x)
    ref = jax.block_until_ready(ref)

    assert logits.shape == (B, OUTPUT_SIZE)
    assert bool(jnp.all(jnp.isfinite(logits)))
    # tolerance slightly loosened vs exact-division reference because the
    # kernel uses the approximate EUP reciprocal for the softmax denominator.
    assert bool(jnp.allclose(logits, ref, atol=1e-2, rtol=1e-2)), (
        "max abs diff = %g" % float(jnp.max(jnp.abs(logits - ref))))
    print("KERNEL_OK")
</pallas_src>

<mosaic_0001>
module attributes {stable_mosaic.version = 11 : i64} {
  func.func @_tft_fused_kernel(%arg0: memref<16x16xf32, #tpu.memory_space<vmem>>, %arg1: memref<16x64xf32, #tpu.memory_space<vmem>>, %arg2: memref<16x16xf32, #tpu.memory_space<vmem>>, %arg3: memref<2x16xf32, #tpu.memory_space<vmem>>, %arg4: memref<16x256xf32, #tpu.memory_space<vmem>>, %arg5: memref<1x256xf32, #tpu.memory_space<vmem>>, %arg6: memref<128x512xf32, #tpu.memory_space<vmem>>, %arg7: memref<64x256xf32, #tpu.memory_space<vmem>>, %arg8: memref<1x256xf32, #tpu.memory_space<vmem>>, %arg9: memref<2x64x192xf32, #tpu.memory_space<vmem>>, %arg10: memref<2x1x192xf32, #tpu.memory_space<vmem>>, %arg11: memref<2x64x64xf32, #tpu.memory_space<vmem>>, %arg12: memref<2x1x64xf32, #tpu.memory_space<vmem>>, %arg13: memref<2x1x64xf32, #tpu.memory_space<vmem>>, %arg14: memref<2x1x64xf32, #tpu.memory_space<vmem>>, %arg15: memref<2x64x128xf32, #tpu.memory_space<vmem>>, %arg16: memref<2x1x128xf32, #tpu.memory_space<vmem>>, %arg17: memref<2x128x64xf32, #tpu.memory_space<vmem>>, %arg18: memref<2x1x64xf32, #tpu.memory_space<vmem>>, %arg19: memref<2x1x64xf32, #tpu.memory_space<vmem>>, %arg20: memref<2x1x64xf32, #tpu.memory_space<vmem>>, %arg21: memref<2x64x64xf32, #tpu.memory_space<vmem>>, %arg22: memref<2x1x64xf32, #tpu.memory_space<vmem>>, %arg23: memref<2x64x64xf32, #tpu.memory_space<vmem>>, %arg24: memref<2x1x64xf32, #tpu.memory_space<vmem>>, %arg25: memref<2x64x64xf32, #tpu.memory_space<vmem>>, %arg26: memref<2x1x64xf32, #tpu.memory_space<vmem>>, %arg27: memref<128x256xf32, #tpu.memory_space<vmem>>, %arg28: memref<1x256xf32, #tpu.memory_space<vmem>>, %arg29: memref<64x64xf32, #tpu.memory_space<vmem>>, %arg30: memref<1x64xf32, #tpu.memory_space<vmem>>, %arg31: memref<64x64xf32, #tpu.memory_space<vmem>>, %arg32: memref<1x64xf32, #tpu.memory_space<vmem>>, %arg33: memref<64x64xf32, #tpu.memory_space<vmem>>, %arg34: memref<1x64xf32, #tpu.memory_space<vmem>>, %arg35: memref<64x32xf32, #tpu.memory_space<vmem>>, %arg36: memref<1x32xf32, #tpu.memory_space<vmem>>, %arg37: memref<2x32xf32, #tpu.memory_space<vmem>>, %arg38: memref<16x64xf32, #tpu.memory_space<vmem>>, %arg39: memref<2x128xf32, #tpu.memory_space<vmem>>) attributes {dimension_semantics = [], scalar_prefetch = 0 : i64, scratch_operands = 2 : i64, tpu.core_type = #tpu.core_type<tc>} {
    %c0 = arith.constant 0 : index
    %c0_0 = arith.constant 0 : index
    %0 = vector.load %arg0[%c0, %c0_0] : memref<16x16xf32, #tpu.memory_space<vmem>>, vector<16x16xf32>
    %c0_1 = arith.constant 0 : index
    %c0_2 = arith.constant 0 : index
    %1 = vector.load %arg4[%c0_1, %c0_2] : memref<16x256xf32, #tpu.memory_space<vmem>>, vector<16x256xf32>
    %cst = arith.constant dense<0.000000e+00> : vector<16x256xf32>
    %2 = tpu.matmul %0, %1, %cst {dimension_numbers = #tpu.dot_dimension_numbers<[1], [0], [0], [1], [0, 0, 1, 1], [], []>} : vector<16x16xf32>, vector<16x256xf32>, vector<16x256xf32> -> vector<16x256xf32>
    %c0_3 = arith.constant 0 : index
    %c0_4 = arith.constant 0 : index
    %3 = vector.load %arg5[%c0_3, %c0_4] : memref<1x256xf32, #tpu.memory_space<vmem>>, vector<1x256xf32>
    %4 = vector.broadcast %3 : vector<1x256xf32> to vector<16x256xf32>
    %5 = arith.addf %2, %4 : vector<16x256xf32>
    %c0_5 = arith.constant 0 : index
    %c0_6 = arith.constant 0 : index
    %6 = vector.load %arg6[%c0_5, %c0_6] : memref<128x512xf32, #tpu.memory_space<vmem>>, vector<128x512xf32>
    %c0_7 = arith.constant 0 : index
    %c0_8 = arith.constant 0 : index
    %7 = vector.load %arg7[%c0_7, %c0_8] : memref<64x256xf32, #tpu.memory_space<vmem>>, vector<64x256xf32>
    %c0_9 = arith.constant 0 : index
    %c0_10 = arith.constant 0 : index
    %8 = vector.load %arg8[%c0_9, %c0_10] : memref<1x256xf32, #tpu.memory_space<vmem>>, vector<1x256xf32>
    %cst_11 = arith.constant 0.000000e+00 : f32
    %9 = vector.broadcast %cst_11 : f32 to vector<2x128xf32>
    %c0_12 = arith.constant 0 : index
    %c0_13 = arith.constant 0 : index
    %10 = vector.load %arg39[%c0_12, %c0_13] : memref<2x128xf32, #tpu.memory_space<vmem>>, vector<2x128xf32>
    tpu.vector_store %arg39[%c0_12, %c0_13], %9 {strides = array<i32>} : memref<2x128xf32, #tpu.memory_space<vmem>>, vector<2x128xf32>,
    %cst_14 = arith.constant 0.000000e+00 : f32
    %11 = vector.broadcast %cst_14 : f32 to vector<2x64xf32>
    %cst_15 = arith.constant 0.000000e+00 : f32
    %12 = vector.broadcast %cst_15 : f32 to vector<2x64xf32>
    %c0_16 = arith.constant 0 : index
    %c0_17 = arith.constant 0 : index
    %13 = vector.load %arg39[%c0_16, %c0_17] : memref<2x128xf32, #tpu.memory_space<vmem>>, vector<2x128xf32>
    %cst_18 = arith.constant dense<0.000000e+00> : vector<2x512xf32>
    %14 = tpu.matmul %13, %6, %cst_18 {dimension_numbers = #tpu.dot_dimension_numbers<[1], [0], [0], [1], [0, 0, 1, 1], [], []>} : vector<2x128xf32>, vector<128x512xf32>, vector<2x512xf32> -> vector<2x512xf32>
    %15 = vector.extract_strided_slice %5 {offsets = [0, 0], sizes = [2, 256], strides = [1, 1]} : vector<16x256xf32> to vector<2x256xf32>
    %16 = vector.extract_strided_slice %14 {offsets = [0, 0], sizes = [2, 256], strides = [1, 1]} : vector<2x512xf32> to vector<2x256xf32>
    %17 = arith.addf %15, %16 : vector<2x256xf32>
    %18 = vector.extract_strided_slice %17 {offsets = [0, 0], sizes = [2, 64], strides = [1, 1]} : vector<2x256xf32> to vector<2x64xf32>
    %19 = arith.negf %18 : vector<2x64xf32>
    %20 = math.exp %19 : vector<2x64xf32>
    %cst_19 = arith.constant 1.000000e+00 : f32
    %21 = vector.broadcast %cst_19 : f32 to vector<2x64xf32>
    %22 = arith.addf %21, %20 : vector<2x64xf32>
    %23 = arith.divf %21, %22 : vector<2x64xf32>
    %24 = vector.extract_strided_slice %17 {offsets = [0, 64], sizes = [2, 64], strides = [1, 1]} : vector<2x256xf32> to vector<2x64xf32>
    %25 = arith.negf %24 : vector<2x64xf32>
    %26 = math.exp %25 : vector<2x64xf32>
    %cst_20 = arith.constant 1.000000e+00 : f32
    %27 = vector.broadcast %cst_20 : f32 to vector<2x64xf32>
    %28 = arith.addf %27, %26 : vector<2x64xf32>
    %29 = arith.divf %27, %28 : vector<2x64xf32>
    %30 = vector.extract_strided_slice %17 {offsets = [0, 128], sizes = [2, 64], strides = [1, 1]} : vector<2x256xf32> to vector<2x64xf32>
    %31 = math.tanh %30 : vector<2x64xf32>
    %32 = vector.extract_strided_slice %17 {offsets = [0, 192], sizes = [2, 64], strides = [1, 1]} : vector<2x256xf32> to vector<2x64xf32>
    %33 = arith.negf %32 : vector<2x64xf32>
    %34 = math.exp %33 : vector<2x64xf32>
    %cst_21 = arith.constant 1.000000e+00 : f32
    %35 = vector.broadcast %cst_21 : f32 to vector<2x64xf32>
    %36 = arith.addf %35, %34 : vector<2x64xf32>
    %37 = arith.divf %35, %36 : vector<2x64xf32>
    %38 = arith.mulf %29, %11 : vector<2x64xf32>
    %39 = arith.mulf %23, %31 : vector<2x64xf32>
    %40 = arith.addf %38, %39 : vector<2x64xf32>
    %41 = math.tanh %40 : vector<2x64xf32>
    %42 = arith.mulf %37, %41 : vector<2x64xf32>
    %cst_22 = arith.constant dense<0.000000e+00> : vector<2x256xf32>
    %43 = tpu.matmul %42, %7, %cst_22 {dimension_numbers = #tpu.dot_dimension_numbers<[1], [0], [0], [1], [0, 0, 1, 1], [], []>} : vector<2x64xf32>, vector<64x256xf32>, vector<2x256xf32> -> vector<2x256xf32>
    %44 = vector.extract_strided_slice %14 {offsets = [0, 256], sizes = [2, 256], strides = [1, 1]} : vector<2x512xf32> to vector<2x256xf32>
    %45 = arith.addf %43, %44 : vector<2x256xf32>
    %46 = vector.broadcast %8 : vector<1x256xf32> to vector<2x256xf32>
    %47 = arith.addf %45, %46 : vector<2x256xf32>
    %48 = vector.extract_strided_slice %47 {offsets = [0, 0], sizes = [2, 64], strides = [1, 1]} : vector<2x256xf32> to vector<2x64xf32>
    %49 = arith.negf %48 : vector<2x64xf32>
    %50 = math.exp %49 : vector<2x64xf32>
    %cst_23 = arith.constant 1.000000e+00 : f32
    %51 = vector.broadcast %cst_23 : f32 to vector<2x64xf32>
    %52 = arith.addf %51, %50 : vector<2x64xf32>
    %53 = arith.divf %51, %52 : vector<2x64xf32>
    %54 = vector.extract_strided_slice %47 {offsets = [0, 64], sizes = [2, 64], strides = [1, 1]} : vector<2x256xf32> to vector<2x64xf32>
    %55 = arith.negf %54 : vector<2x64xf32>
    %56 = math.exp %55 : vector<2x64xf32>
    %cst_24 = arith.constant 1.000000e+00 : f32
    %57 = vector.broadcast %cst_24 : f32 to vector<2x64xf32>
    %58 = arith.addf %57, %56 : vector<2x64xf32>
    %59 = arith.divf %57, %58 : vector<2x64xf32>
    %60 = vector.extract_strided_slice %47 {offsets = [0, 128], sizes = [2, 64], strides = [1, 1]} : vector<2x256xf32> to vector<2x64xf32>
    %61 = math.tanh %60 : vector<2x64xf32>
    %62 = vector.extract_strided_slice %47 {offsets = [0, 192], sizes = [2, 64], strides = [1, 1]} : vector<2x256xf32> to vector<2x64xf32>
    %63 = arith.negf %62 : vector<2x64xf32>
    %64 = math.exp %63 : vector<2x64xf32>
    %cst_25 = arith.constant 1.000000e+00 : f32
    %65 = vector.broadcast %cst_25 : f32 to vector<2x64xf32>
    %66 = arith.addf %65, %64 : vector<2x64xf32>
    %67 = arith.divf %65, %66 : vector<2x64xf32>
    %68 = arith.mulf %59, %12 : vector<2x64xf32>
    %69 = arith.mulf %53, %61 : vector<2x64xf32>
    %70 = arith.addf %68, %69 : vector<2x64xf32>
    %71 = math.tanh %70 : vector<2x64xf32>
    %72 = arith.mulf %67, %71 : vector<2x64xf32>
    %c0_26 = arith.constant 0 : index
    %c0_27 = arith.constant 0 : index
    %73 = vector.load %arg39[%c0_26, %c0_27] : memref<2x128xf32, #tpu.memory_space<vmem>>, vector<2x64xf32>
    tpu.vector_store %arg39[%c0_26, %c0_27], %42 {strides = array<i32>} : memref<2x128xf32, #tpu.memory_space<vmem>>, vector<2x64xf32>,
    %c0_28 = arith.constant 0 : index
    %c64 = arith.constant 64 : index
    %74 = vector.load %arg39[%c0_28, %c64] : memref<2x128xf32, #tpu.memory_space<vmem>>, vector<2x64xf32>
    tpu.vector_store %arg39[%c0_28, %c64], %72 {strides = array<i32>} : memref<2x128xf32, #tpu.memory_space<vmem>>, vector<2x64xf32>,
    %c0_29 = arith.constant 0 : index
    %c0_30 = arith.constant 0 : index
    %75 = vector.load %arg38[%c0_29, %c0_30] : memref<16x64xf32, #tpu.memory_space<vmem>>, vector<2x64xf32>
    tpu.vector_store %arg38[%c0_29, %c0_30], %72 {strides = array<i32>} : memref<16x64xf32, #tpu.memory_space<vmem>>, vector<2x64xf32>,
    %c0_31 = arith.constant 0 : index
    %c0_32 = arith.constant 0 : index
    %76 = vector.load %arg39[%c0_31, %c0_32] : memref<2x128xf32, #tpu.memory_space<vmem>>, vector<2x128xf32>
    %cst_33 = arith.constant dense<0.000000e+00> : vector<2x512xf32>
    %77 = tpu.matmul %76, %6, %cst_33 {dimension_numbers = #tpu.dot_dimension_numbers<[1], [0], [0], [1], [0, 0, 1, 1], [], []>} : vector<2x128xf32>, vector<128x512xf32>, vector<2x512xf32> -> vector<2x512xf32>
    %78 = vector.extract_strided_slice %5 {offsets = [2, 0], sizes = [2, 256], strides = [1, 1]} : vector<16x256xf32> to vector<2x256xf32>
    %79 = vector.extract_strided_slice %77 {offsets = [0, 0], sizes = [2, 256], strides = [1, 1]} : vector<2x512xf32> to vector<2x256xf32>
    %80 = arith.addf %78, %79 : vector<2x256xf32>
    %81 = vector.extract_strided_slice %80 {offsets = [0, 0], sizes = [2, 64], strides = [1, 1]} : vector<2x256xf32> to vector<2x64xf32>
    %82 = arith.negf %81 : vector<2x64xf32>
    %83 = math.exp %82 : vector<2x64xf32>
    %cst_34 = arith.constant 1.000000e+00 : f32
    %84 = vector.broadcast %cst_34 : f32 to vector<2x64xf32>
    %85 = arith.addf %84, %83 : vector<2x64xf32>
    %86 = arith.divf %84, %85 : vector<2x64xf32>
    %87 = vector.extract_strided_slice %80 {offsets = [0, 64], sizes = [2, 64], strides = [1, 1]} : vector<2x256xf32> to vector<2x64xf32>
    %88 = arith.negf %87 : vector<2x64xf32>
    %89 = math.exp %88 : vector<2x64xf32>
    %cst_35 = arith.constant 1.000000e+00 : f32
    %90 = vector.broadcast %cst_35 : f32 to vector<2x64xf32>
    %91 = arith.addf %90, %89 : vector<2x64xf32>
    %92 = arith.divf %90, %91 : vector<2x64xf32>
    %93 = vector.extract_strided_slice %80 {offsets = [0, 128], sizes = [2, 64], strides = [1, 1]} : vector<2x256xf32> to vector<2x64xf32>
    %94 = math.tanh %93 : vector<2x64xf32>
    %95 = vector.extract_strided_slice %80 {offsets = [0, 192], sizes = [2, 64], strides = [1, 1]} : vector<2x256xf32> to vector<2x64xf32>
    %96 = arith.negf %95 : vector<2x64xf32>
    %97 = math.exp %96 : vector<2x64xf32>
    %cst_36 = arith.constant 1.000000e+00 : f32
    %98 = vector.broadcast %cst_36 : f32 to vector<2x64xf32>
    %99 = arith.addf %98, %97 : vector<2x64xf32>
    %100 = arith.divf %98, %99 : vector<2x64xf32>
    %101 = arith.mulf %92, %40 : vector<2x64xf32>
    %102 = arith.mulf %86, %94 : vector<2x64xf32>
    %103 = arith.addf %101, %102 : vector<2x64xf32>
    %104 = math.tanh %103 : vector<2x64xf32>
    %105 = arith.mulf %100, %104 : vector<2x64xf32>
    %cst_37 = arith.constant dense<0.000000e+00> : vector<2x256xf32>
    %106 = tpu.matmul %105, %7, %cst_37 {dimension_numbers = #tpu.dot_dimension_numbers<[1], [0], [0], [1], [0, 0, 1, 1], [], []>} : vector<2x64xf32>, vector<64x256xf32>, vector<2x256xf32> -> vector<2x256xf32>
    %107 = vector.extract_strided_slice %77 {offsets = [0, 256], sizes = [2, 256], strides = [1, 1]} : vector<2x512xf32> to vector<2x256xf32>
    %108 = arith.addf %106, %107 : vector<2x256xf32>
    %109 = vector.broadcast %8 : vector<1x256xf32> to vector<2x256xf32>
    %110 = arith.addf %108, %109 : vector<2x256xf32>
    %111 = vector.extract_strided_slice %110 {offsets = [0, 0], sizes = [2, 64], strides = [1, 1]} : vector<2x256xf32> to vector<2x64xf32>
    %112 = arith.negf %111 : vector<2x64xf32>
    %113 = math.exp %112 : vector<2x64xf32>
    %cst_38 = arith.constant 1.000000e+00 : f32
    %114 = vector.broadcast %cst_38 : f32 to vector<2x64xf32>
    %115 = arith.addf %114, %113 : vector<2x64xf32>
    %116 = arith.divf %114, %115 : vector<2x64xf32>
    %117 = vector.extract_strided_slice %110 {offsets = [0, 64], sizes = [2, 64], strides = [1, 1]} : vector<2x256xf32> to vector<2x64xf32>
    %118 = arith.negf %117 : vector<2x64xf32>
    %119 = math.exp %118 : vector<2x64xf32>
    %cst_39 = arith.constant 1.000000e+00 : f32
    %120 = vector.broadcast %cst_39 : f32 to vector<2x64xf32>
    %121 = arith.addf %120, %119 : vector<2x64xf32>
    %122 = arith.divf %120, %121 : vector<2x64xf32>
    %123 = vector.extract_strided_slice %110 {offsets = [0, 128], sizes = [2, 64], strides = [1, 1]} : vector<2x256xf32> to vector<2x64xf32>
    %124 = math.tanh %123 : vector<2x64xf32>
    %125 = vector.extract_strided_slice %110 {offsets = [0, 192], sizes = [2, 64], strides = [1, 1]} : vector<2x256xf32> to vector<2x64xf32>
    %126 = arith.negf %125 : vector<2x64xf32>
    %127 = math.exp %126 : vector<2x64xf32>
    %cst_40 = arith.constant 1.000000e+00 : f32
    %128 = vector.broadcast %cst_40 : f32 to vector<2x64xf32>
    %129 = arith.addf %128, %127 : vector<2x64xf32>
    %130 = arith.divf %128, %129 : vector<2x64xf32>
    %131 = arith.mulf %122, %70 : vector<2x64xf32>
    %132 = arith.mulf %116, %124 : vector<2x64xf32>
    %133 = arith.addf %131, %132 : vector<2x64xf32>
    %134 = math.tanh %133 : vector<2x64xf32>
    %135 = arith.mulf %130, %134 : vector<2x64xf32>
    %c0_41 = arith.constant 0 : index
    %c0_42 = arith.constant 0 : index
    %136 = vector.load %arg39[%c0_41, %c0_42] : memref<2x128xf32, #tpu.memory_space<vmem>>, vector<2x64xf32>
    tpu.vector_store %arg39[%c0_41, %c0_42], %105 {strides = array<i32>} : memref<2x128xf32, #tpu.memory_space<vmem>>, vector<2x64xf32>,
    %c0_43 = arith.constant 0 : index
    %c64_44 = arith.constant 64 : index
    %137 = vector.load %arg39[%c0_43, %c64_44] : memref<2x128xf32, #tpu.memory_space<vmem>>, vector<2x64xf32>
    tpu.vector_store %arg39[%c0_43, %c64_44], %135 {strides = array<i32>} : memref<2x128xf32, #tpu.memory_space<vmem>>, vector<2x64xf32>,
    %c2 = arith.constant 2 : index
    %c0_45 = arith.constant 0 : index
    %138 = vector.load %arg38[%c2, %c0_45] : memref<16x64xf32, #tpu.memory_space<vmem>>, vector<2x64xf32>
    tpu.vector_store %arg38[%c2, %c0_45], %135 {strides = array<i32>} : memref<16x64xf32, #tpu.memory_space<vmem>>, vector<2x64xf32>,
    %c0_46 = arith.constant 0 : index
    %c0_47 = arith.constant 0 : index
    %139 = vector.load %arg39[%c0_46, %c0_47] : memref<2x128xf32, #tpu.memory_space<vmem>>, vector<2x128xf32>
    %cst_48 = arith.constant dense<0.000000e+00> : vector<2x512xf32>
    %140 = tpu.matmul %139, %6, %cst_48 {dimension_numbers = #tpu.dot_dimension_numbers<[1], [0], [0], [1], [0, 0, 1, 1], [], []>} : vector<2x128xf32>, vector<128x512xf32>, vector<2x512xf32> -> vector<2x512xf32>
    %141 = vector.extract_strided_slice %5 {offsets = [4, 0], sizes = [2, 256], strides = [1, 1]} : vector<16x256xf32> to vector<2x256xf32>
    %142 = vector.extract_strided_slice %140 {offsets = [0, 0], sizes = [2, 256], strides = [1, 1]} : vector<2x512xf32> to vector<2x256xf32>
    %143 = arith.addf %141, %142 : vector<2x256xf32>
    %144 = vector.extract_strided_slice %143 {offsets = [0, 0], sizes = [2, 64], strides = [1, 1]} : vector<2x256xf32> to vector<2x64xf32>
    %145 = arith.negf %144 : vector<2x64xf32>
    %146 = math.exp %145 : vector<2x64xf32>
    %cst_49 = arith.constant 1.000000e+00 : f32
    %147 = vector.broadcast %cst_49 : f32 to vector<2x64xf32>
    %148 = arith.addf %147, %146 : vector<2x64xf32>
    %149 = arith.divf %147, %148 : vector<2x64xf32>
    %150 = vector.extract_strided_slice %143 {offsets = [0, 64], sizes = [2, 64], strides = [1, 1]} : vector<2x256xf32> to vector<2x64xf32>
    %151 = arith.negf %150 : vector<2x64xf32>
    %152 = math.exp %151 : vector<2x64xf32>
    %cst_50 = arith.constant 1.000000e+00 : f32
    %153 = vector.broadcast %cst_50 : f32 to vector<2x64xf32>
    %154 = arith.addf %153, %152 : vector<2x64xf32>
    %155 = arith.divf %153, %154 : vector<2x64xf32>
    %156 = vector.extract_strided_slice %143 {offsets = [0, 128], sizes = [2, 64], strides = [1, 1]} : vector<2x256xf32> to vector<2x64xf32>
    %157 = math.tanh %156 : vector<2x64xf32>
    %158 = vector.extract_strided_slice %143 {offsets = [0, 192], sizes = [2, 64], strides = [1, 1]} : vector<2x256xf32> to vector<2x64xf32>
    %159 = arith.negf %158 : vector<2x64xf32>
    %160 = math.exp %159 : vector<2x64xf32>
    %cst_51 = arith.constant 1.000000e+00 : f32
    %161 = vector.broadcast %cst_51 : f32 to vector<2x64xf32>
    %162 = arith.addf %161, %160 : vector<2x64xf32>
    %163 = arith.divf %161, %162 : vector<2x64xf32>
    %164 = arith.mulf %155, %103 : vector<2x64xf32>
    %165 = arith.mulf %149, %157 : vector<2x64xf32>
    %166 = arith.addf %164, %165 : vector<2x64xf32>
    %167 = math.tanh %166 : vector<2x64xf32>
    %168 = arith.mulf %163, %167 : vector<2x64xf32>
    %cst_52 = arith.constant dense<0.000000e+00> : vector<2x256xf32>
    %169 = tpu.matmul %168, %7, %cst_52 {dimension_numbers = #tpu.dot_dimension_numbers<[1], [0], [0], [1], [0, 0, 1, 1], [], []>} : vector<2x64xf32>, vector<64x256xf32>, vector<2x256xf32> -> vector<2x256xf32>
    %170 = vector.extract_strided_slice %140 {offsets = [0, 256], sizes = [2, 256], strides = [1, 1]} : vector<2x512xf32> to vector<2x256xf32>
    %171 = arith.addf %169, %170 : vector<2x256xf32>
    %172 = vector.broadcast %8 : vector<1x256xf32> to vector<2x256xf32>
    %173 = arith.addf %171, %172 : vector<2x256xf32>
    %174 = vector.extract_strided_slice %173 {offsets = [0, 0], sizes = [2, 64], strides = [1, 1]} : vector<2x256xf32> to vector<2x64xf32>
    %175 = arith.negf %174 : vector<2x64xf32>
    %176 = math.exp %175 : vector<2x64xf32>
    %cst_53 = arith.constant 1.000000e+00 : f32
    %177 = vector.broadcast %cst_53 : f32 to vector<2x64xf32>
    %178 = arith.addf %177, %176 : vector<2x64xf32>
    %179 = arith.divf %177, %178 : vector<2x64xf32>
    %180 = vector.extract_strided_slice %173 {offsets = [0, 64], sizes = [2, 64], strides = [1, 1]} : vector<2x256xf32> to vector<2x64xf32>
    %181 = arith.negf %180 : vector<2x64xf32>
    %182 = math.exp %181 : vector<2x64xf32>
    %cst_54 = arith.constant 1.000000e+00 : f32
    %183 = vector.broadcast %cst_54 : f32 to vector<2x64xf32>
    %184 = arith.addf %183, %182 : vector<2x64xf32>
    %185 = arith.divf %183, %184 : vector<2x64xf32>
    %186 = vector.extract_strided_slice %173 {offsets = [0, 128], sizes = [2, 64], strides = [1, 1]} : vector<2x256xf32> to vector<2x64xf32>
    %187 = math.tanh %186 : vector<2x64xf32>
    %188 = vector.extract_strided_slice %173 {offsets = [0, 192], sizes = [2, 64], strides = [1, 1]} : vector<2x256xf32> to vector<2x64xf32>
    %189 = arith.negf %188 : vector<2x64xf32>
    %190 = math.exp %189 : vector<2x64xf32>
    %cst_55 = arith.constant 1.000000e+00 : f32
    %191 = vector.broadcast %cst_55 : f32 to vector<2x64xf32>
    %192 = arith.addf %191, %190 : vector<2x64xf32>
    %193 = arith.divf %191, %192 : vector<2x64xf32>
    %194 = arith.mulf %185, %133 : vector<2x64xf32>
    %195 = arith.mulf %179, %187 : vector<2x64xf32>
    %196 = arith.addf %194, %195 : vector<2x64xf32>
    %197 = math.tanh %196 : vector<2x64xf32>
    %198 = arith.mulf %193, %197 : vector<2x64xf32>
    %c0_56 = arith.constant 0 : index
    %c0_57 = arith.constant 0 : index
    %199 = vector.load %arg39[%c0_56, %c0_57] : memref<2x128xf32, #tpu.memory_space<vmem>>, vector<2x64xf32>
    tpu.vector_store %arg39[%c0_56, %c0_57], %168 {strides = array<i32>} : memref<2x128xf32, #tpu.memory_space<vmem>>, vector<2x64xf32>,
    %c0_58 = arith.constant 0 : index
    %c64_59 = arith.constant 64 : index
    %200 = vector.load %arg39[%c0_58, %c64_59] : memref<2x128xf32, #tpu.memory_space<vmem>>, vector<2x64xf32>
    tpu.vector_store %arg39[%c0_58, %c64_59], %198 {strides = array<i32>} : memref<2x128xf32, #tpu.memory_space<vmem>>, vector<2x64xf32>,
    %c4 = arith.constant 4 : index
    %c0_60 = arith.constant 0 : index
    %201 = vector.load %arg38[%c4, %c0_60] : memref<16x64xf32, #tpu.memory_space<vmem>>, vector<2x64xf32>
    tpu.vector_store %arg38[%c4, %c0_60], %198 {strides = array<i32>} : memref<16x64xf32, #tpu.memory_space<vmem>>, vector<2x64xf32>,
    %c0_61 = arith.constant 0 : index
    %c0_62 = arith.constant 0 : index
    %202 = vector.load %arg39[%c0_61, %c0_62] : memref<2x128xf32, #tpu.memory_space<vmem>>, vector<2x128xf32>
    %cst_63 = arith.constant dense<0.000000e+00> : vector<2x512xf32>
    %203 = tpu.matmul %202, %6, %cst_63 {dimension_numbers = #tpu.dot_dimension_numbers<[1], [0], [0], [1], [0, 0, 1, 1], [], []>} : vector<2x128xf32>, vector<128x512xf32>, vector<2x512xf32> -> vector<2x512xf32>
    %204 = vector.extract_strided_slice %5 {offsets = [6, 0], sizes = [2, 256], strides = [1, 1]} : vector<16x256xf32> to vector<2x256xf32>
    %205 = vector.extract_strided_slice %203 {offsets = [0, 0], sizes = [2, 256], strides = [1, 1]} : vector<2x512xf32> to vector<2x256xf32>
    %206 = arith.addf %204, %205 : vector<2x256xf32>
    %207 = vector.extract_strided_slice %206 {offsets = [0, 0], sizes = [2, 64], strides = [1, 1]} : vector<2x256xf32> to vector<2x64xf32>
    %208 = arith.negf %207 : vector<2x64xf32>
    %209 = math.exp %208 : vector<2x64xf32>
    %cst_64 = arith.constant 1.000000e+00 : f32
    %210 = vector.broadcast %cst_64 : f32 to vector<2x64xf32>
    %211 = arith.addf %210, %209 : vector<2x64xf32>
    %212 = arith.divf %210, %211 : vector<2x64xf32>
    %213 = vector.extract_strided_slice %206 {offsets = [0, 64], sizes = [2, 64], strides = [1, 1]} : vector<2x256xf32> to vector<2x64xf32>
    %214 = arith.negf %213 : vector<2x64xf32>
    %215 = math.exp %214 : vector<2x64xf32>
    %cst_65 = arith.constant 1.000000e+00 : f32
    %216 = vector.broadcast %cst_65 : f32 to vector<2x64xf32>
    %217 = arith.addf %216, %215 : vector<2x64xf32>
    %218 = arith.divf %216, %217 : vector<2x64xf32>
    %219 = vector.extract_strided_slice %206 {offsets = [0, 128], sizes = [2, 64], strides = [1, 1]} : vector<2x256xf32> to vector<2x64xf32>
    %220 = math.tanh %219 : vector<2x64xf32>
    %221 = vector.extract_strided_slice %206 {offsets = [0, 192], sizes = [2, 64], strides = [1, 1]} : vector<2x256xf32> to vector<2x64xf32>
    %222 = arith.negf %221 : vector<2x64xf32>
    %223 = math.exp %222 : vector<2x64xf32>
    %cst_66 = arith.constant 1.000000e+00 : f32
    %224 = vector.broadcast %cst_66 : f32 to vector<2x64xf32>
    %225 = arith.addf %224, %223 : vector<2x64xf32>
    %226 = arith.divf %224, %225 : vector<2x64xf32>
    %227 = arith.mulf %218, %166 : vector<2x64xf32>
    %228 = arith.mulf %212, %220 : vector<2x64xf32>
    %229 = arith.addf %227, %228 : vector<2x64xf32>
    %230 = math.tanh %229 : vector<2x64xf32>
    %231 = arith.mulf %226, %230 : vector<2x64xf32>
    %cst_67 = arith.constant dense<0.000000e+00> : vector<2x256xf32>
    %232 = tpu.matmul %231, %7, %cst_67 {dimension_numbers = #tpu.dot_dimension_numbers<[1], [0], [0], [1], [0, 0, 1, 1], [], []>} : vector<2x64xf32>, vector<64x256xf32>, vector<2x256xf32> -> vector<2x256xf32>
    %233 = vector.extract_strided_slice %203 {offsets = [0, 256], sizes = [2, 256], strides = [1, 1]} : vector<2x512xf32> to vector<2x256xf32>
    %234 = arith.addf %232, %233 : vector<2x256xf32>
    %235 = vector.broadcast %8 : vector<1x256xf32> to vector<2x256xf32>
    %236 = arith.addf %234, %235 : vector<2x256xf32>
    %237 = vector.extract_strided_slice %236 {offsets = [0, 0], sizes = [2, 64], strides = [1, 1]} : vector<2x256xf32> to vector<2x64xf32>
    %238 = arith.negf %237 : vector<2x64xf32>
    %239 = math.exp %238 : vector<2x64xf32>
    %cst_68 = arith.constant 1.000000e+00 : f32
    %240 = vector.broadcast %cst_68 : f32 to vector<2x64xf32>
    %241 = arith.addf %240, %239 : vector<2x64xf32>
    %242 = arith.divf %240, %241 : vector<2x64xf32>
    %243 = vector.extract_strided_slice %236 {offsets = [0, 64], sizes = [2, 64], strides = [1, 1]} : vector<2x256xf32> to vector<2x64xf32>
    %244 = arith.negf %243 : vector<2x64xf32>
    %245 = math.exp %244 : vector<2x64xf32>
    %cst_69 = arith.constant 1.000000e+00 : f32
    %246 = vector.broadcast %cst_69 : f32 to vector<2x64xf32>
    %247 = arith.addf %246, %245 : vector<2x64xf32>
    %248 = arith.divf %246, %247 : vector<2x64xf32>
    %249 = vector.extract_strided_slice %236 {offsets = [0, 128], sizes = [2, 64], strides = [1, 1]} : vector<2x256xf32> to vector<2x64xf32>
    %250 = math.tanh %249 : vector<2x64xf32>
    %251 = vector.extract_strided_slice %236 {offsets = [0, 192], sizes = [2, 64], strides = [1, 1]} : vector<2x256xf32> to vector<2x64xf32>
    %252 = arith.negf %251 : vector<2x64xf32>
    %253 = math.exp %252 : vector<2x64xf32>
    %cst_70 = arith.constant 1.000000e+00 : f32
    %254 = vector.broadcast %cst_70 : f32 to vector<2x64xf32>
    %255 = arith.addf %254, %253 : vector<2x64xf32>
    %256 = arith.divf %254, %255 : vector<2x64xf32>
    %257 = arith.mulf %248, %196 : vector<2x64xf32>
    %258 = arith.mulf %242, %250 : vector<2x64xf32>
    %259 = arith.addf %257, %258 : vector<2x64xf32>
    %260 = math.tanh %259 : vector<2x64xf32>
    %261 = arith.mulf %256, %260 : vector<2x64xf32>
    %c0_71 = arith.constant 0 : index
    %c0_72 = arith.constant 0 : index
    %262 = vector.load %arg39[%c0_71, %c0_72] : memref<2x128xf32, #tpu.memory_space<vmem>>, vector<2x64xf32>
    tpu.vector_store %arg39[%c0_71, %c0_72], %231 {strides = array<i32>} : memref<2x128xf32, #tpu.memory_space<vmem>>, vector<2x64xf32>,
    %c0_73 = arith.constant 0 : index
    %c64_74 = arith.constant 64 : index
    %263 = vector.load %arg39[%c0_73, %c64_74] : memref<2x128xf32, #tpu.memory_space<vmem>>, vector<2x64xf32>
    tpu.vector_store %arg39[%c0_73, %c64_74], %261 {strides = array<i32>} : memref<2x128xf32, #tpu.memory_space<vmem>>, vector<2x64xf32>,
    %c6 = arith.constant 6 : index
    %c0_75 = arith.constant 0 : index
    %264 = vector.load %arg38[%c6, %c0_75] : memref<16x64xf32, #tpu.memory_space<vmem>>, vector<2x64xf32>
    tpu.vector_store %arg38[%c6, %c0_75], %261 {strides = array<i32>} : memref<16x64xf32, #tpu.memory_space<vmem>>, vector<2x64xf32>,
    %c0_76 = arith.constant 0 : index
    %c0_77 = arith.constant 0 : index
    %265 = vector.load %arg39[%c0_76, %c0_77] : memref<2x128xf32, #tpu.memory_space<vmem>>, vector<2x128xf32>
    %cst_78 = arith.constant dense<0.000000e+00> : vector<2x512xf32>
    %266 = tpu.matmul %265, %6, %cst_78 {dimension_numbers = #tpu.dot_dimension_numbers<[1], [0], [0], [1], [0, 0, 1, 1], [], []>} : vector<2x128xf32>, vector<128x512xf32>, vector<2x512xf32> -> vector<2x512xf32>
    %267 = vector.extract_strided_slice %5 {offsets = [8, 0], sizes = [2, 256], strides = [1, 1]} : vector<16x256xf32> to vector<2x256xf32>
    %268 = vector.extract_strided_slice %266 {offsets = [0, 0], sizes = [2, 256], strides = [1, 1]} : vector<2x512xf32> to vector<2x256xf32>
    %269 = arith.addf %267, %268 : vector<2x256xf32>
    %270 = vector.extract_strided_slice %269 {offsets = [0, 0], sizes = [2, 64], strides = [1, 1]} : vector<2x256xf32> to vector<2x64xf32>
    %271 = arith.negf %270 : vector<2x64xf32>
    %272 = math.exp %271 : vector<2x64xf32>
    %cst_79 = arith.constant 1.000000e+00 : f32
    %273 = vector.broadcast %cst_79 : f32 to vector<2x64xf32>
    %274 = arith.addf %273, %272 : vector<2x64xf32>
    %275 = arith.divf %273, %274 : vector<2x64xf32>
    %276 = vector.extract_strided_slice %269 {offsets = [0, 64], sizes = [2, 64], strides = [1, 1]} : vector<2x256xf32> to vector<2x64xf32>
    %277 = arith.negf %276 : vector<2x64xf32>
    %278 = math.exp %277 : vector<2x64xf32>
    %cst_80 = arith.constant 1.000000e+00 : f32
    %279 = vector.broadcast %cst_80 : f32 to vector<2x64xf32>
    %280 = arith.addf %279, %278 : vector<2x64xf32>
    %281 = arith.divf %279, %280 : vector<2x64xf32>
    %282 = vector.extract_strided_slice %269 {offsets = [0, 128], sizes = [2, 64], strides = [1, 1]} : vector<2x256xf32> to vector<2x64xf32>
    %283 = math.tanh %282 : vector<2x64xf32>
    %284 = vector.extract_strided_slice %269 {offsets = [0, 192], sizes = [2, 64], strides = [1, 1]} : vector<2x256xf32> to vector<2x64xf32>
    %285 = arith.negf %284 : vector<2x64xf32>
    %286 = math.exp %285 : vector<2x64xf32>
    %cst_81 = arith.constant 1.000000e+00 : f32
    %287 = vector.broadcast %cst_81 : f32 to vector<2x64xf32>
    %288 = arith.addf %287, %286 : vector<2x64xf32>
    %289 = arith.divf %287, %288 : vector<2x64xf32>
    %290 = arith.mulf %281, %229 : vector<2x64xf32>
    %291 = arith.mulf %275, %283 : vector<2x64xf32>
    %292 = arith.addf %290, %291 : vector<2x64xf32>
    %293 = math.tanh %292 : vector<2x64xf32>
    %294 = arith.mulf %289, %293 : vector<2x64xf32>
    %cst_82 = arith.constant dense<0.000000e+00> : vector<2x256xf32>
    %295 = tpu.matmul %294, %7, %cst_82 {dimension_numbers = #tpu.dot_dimension_numbers<[1], [0], [0], [1], [0, 0, 1, 1], [], []>} : vector<2x64xf32>, vector<64x256xf32>, vector<2x256xf32> -> vector<2x256xf32>
    %296 = vector.extract_strided_slice %266 {offsets = [0, 256], sizes = [2, 256], strides = [1, 1]} : vector<2x512xf32> to vector<2x256xf32>
    %297 = arith.addf %295, %296 : vector<2x256xf32>
    %298 = vector.broadcast %8 : vector<1x256xf32> to vector<2x256xf32>
    %299 = arith.addf %297, %298 : vector<2x256xf32>
    %300 = vector.extract_strided_slice %299 {offsets = [0, 0], sizes = [2, 64], strides = [1, 1]} : vector<2x256xf32> to vector<2x64xf32>
    %301 = arith.negf %300 : vector<2x64xf32>
    %302 = math.exp %301 : vector<2x64xf32>
    %cst_83 = arith.constant 1.000000e+00 : f32
    %303 = vector.broadcast %cst_83 : f32 to vector<2x64xf32>
    %304 = arith.addf %303, %302 : vector<2x64xf32>
    %305 = arith.divf %303, %304 : vector<2x64xf32>
    %306 = vector.extract_strided_slice %299 {offsets = [0, 64], sizes = [2, 64], strides = [1, 1]} : vector<2x256xf32> to vector<2x64xf32>
    %307 = arith.negf %306 : vector<2x64xf32>
    %308 = math.exp %307 : vector<2x64xf32>
    %cst_84 = arith.constant 1.000000e+00 : f32
    %309 = vector.broadcast %cst_84 : f32 to vector<2x64xf32>
    %310 = arith.addf %309, %308 : vector<2x64xf32>
    %311 = arith.divf %309, %310 : vector<2x64xf32>
    %312 = vector.extract_strided_slice %299 {offsets = [0, 128], sizes = [2, 64], strides = [1, 1]} : vector<2x256xf32> to vector<2x64xf32>
    %313 = math.tanh %312 : vector<2x64xf32>
    %314 = vector.extract_strided_slice %299 {offsets = [0, 192], sizes = [2, 64], strides = [1, 1]} : vector<2x256xf32> to vector<2x64xf32>
    %315 = arith.negf %314 : vector<2x64xf32>
    %316 = math.exp %315 : vector<2x64xf32>
    %cst_85 = arith.constant 1.000000e+00 : f32
    %317 = vector.broadcast %cst_85 : f32 to vector<2x64xf32>
    %318 = arith.addf %317, %316 : vector<2x64xf32>
    %319 = arith.divf %317, %318 : vector<2x64xf32>
    %320 = arith.mulf %311, %259 : vector<2x64xf32>
    %321 = arith.mulf %305, %313 : vector<2x64xf32>
    %322 = arith.addf %320, %321 : vector<2x64xf32>
    %323 = math.tanh %322 : vector<2x64xf32>
    %324 = arith.mulf %319, %323 : vector<2x64xf32>
    %c0_86 = arith.constant 0 : index
    %c0_87 = arith.constant 0 : index
    %325 = vector.load %arg39[%c0_86, %c0_87] : memref<2x128xf32, #tpu.memory_space<vmem>>, vector<2x64xf32>
    tpu.vector_store %arg39[%c0_86, %c0_87], %294 {strides = array<i32>} : memref<2x128xf32, #tpu.memory_space<vmem>>, vector<2x64xf32>,
    %c0_88 = arith.constant 0 : index
    %c64_89 = arith.constant 64 : index
    %326 = vector.load %arg39[%c0_88, %c64_89] : memref<2x128xf32, #tpu.memory_space<vmem>>, vector<2x64xf32>
    tpu.vector_store %arg39[%c0_88, %c64_89], %324 {strides = array<i32>} : memref<2x128xf32, #tpu.memory_space<vmem>>, vector<2x64xf32>,
    %c8 = arith.constant 8 : index
    %c0_90 = arith.constant 0 : index
    %327 = vector.load %arg38[%c8, %c0_90] : memref<16x64xf32, #tpu.memory_space<vmem>>, vector<2x64xf32>
    tpu.vector_store %arg38[%c8, %c0_90], %324 {strides = array<i32>} : memref<16x64xf32, #tpu.memory_space<vmem>>, vector<2x64xf32>,
    %c0_91 = arith.constant 0 : index
    %c0_92 = arith.constant 0 : index
    %328 = vector.load %arg39[%c0_91, %c0_92] : memref<2x128xf32, #tpu.memory_space<vmem>>, vector<2x128xf32>
    %cst_93 = arith.constant dense<0.000000e+00> : vector<2x512xf32>
    %329 = tpu.matmul %328, %6, %cst_93 {dimension_numbers = #tpu.dot_dimension_numbers<[1], [0], [0], [1], [0, 0, 1, 1], [], []>} : vector<2x128xf32>, vector<128x512xf32>, vector<2x512xf32> -> vector<2x512xf32>
    %330 = vector.extract_strided_slice %5 {offsets = [10, 0], sizes = [2, 256], strides = [1, 1]} : vector<16x256xf32> to vector<2x256xf32>
    %331 = vector.extract_strided_slice %329 {offsets = [0, 0], sizes = [2, 256], strides = [1, 1]} : vector<2x512xf32> to vector<2x256xf32>
    %332 = arith.addf %330, %331 : vector<2x256xf32>
    %333 = vector.extract_strided_slice %332 {offsets = [0, 0], sizes = [2, 64], strides = [1, 1]} : vector<2x256xf32> to vector<2x64xf32>
    %334 = arith.negf %333 : vector<2x64xf32>
    %335 = math.exp %334 : vector<2x64xf32>
    %cst_94 = arith.constant 1.000000e+00 : f32
    %336 = vector.broadcast %cst_94 : f32 to vector<2x64xf32>
    %337 = arith.addf %336, %335 : vector<2x64xf32>
    %338 = arith.divf %336, %337 : vector<2x64xf32>
    %339 = vector.extract_strided_slice %332 {offsets = [0, 64], sizes = [2, 64], strides = [1, 1]} : vector<2x256xf32> to vector<2x64xf32>
    %340 = arith.negf %339 : vector<2x64xf32>
    %341 = math.exp %340 : vector<2x64xf32>
    %cst_95 = arith.constant 1.000000e+00 : f32
    %342 = vector.broadcast %cst_95 : f32 to vector<2x64xf32>
    %343 = arith.addf %342, %341 : vector<2x64xf32>
    %344 = arith.divf %342, %343 : vector<2x64xf32>
    %345 = vector.extract_strided_slice %332 {offsets = [0, 128], sizes = [2, 64], strides = [1, 1]} : vector<2x256xf32> to vector<2x64xf32>
    %346 = math.tanh %345 : vector<2x64xf32>
    %347 = vector.extract_strided_slice %332 {offsets = [0, 192], sizes = [2, 64], strides = [1, 1]} : vector<2x256xf32> to vector<2x64xf32>
    %348 = arith.negf %347 : vector<2x64xf32>
    %349 = math.exp %348 : vector<2x64xf32>
    %cst_96 = arith.constant 1.000000e+00 : f32
    %350 = vector.broadcast %cst_96 : f32 to vector<2x64xf32>
    %351 = arith.addf %350, %349 : vector<2x64xf32>
    %352 = arith.divf %350, %351 : vector<2x64xf32>
    %353 = arith.mulf %344, %292 : vector<2x64xf32>
    %354 = arith.mulf %338, %346 : vector<2x64xf32>
    %355 = arith.addf %353, %354 : vector<2x64xf32>
    %356 = math.tanh %355 : vector<2x64xf32>
    %357 = arith.mulf %352, %356 : vector<2x64xf32>
    %cst_97 = arith.constant dense<0.000000e+00> : vector<2x256xf32>
    %358 = tpu.matmul %357, %7, %cst_97 {dimension_numbers = #tpu.dot_dimension_numbers<[1], [0], [0], [1], [0, 0, 1, 1], [], []>} : vector<2x64xf32>, vector<64x256xf32>, vector<2x256xf32> -> vector<2x256xf32>
    %359 = vector.extract_strided_slice %329 {offsets = [0, 256], sizes = [2, 256], strides = [1, 1]} : vector<2x512xf32> to vector<2x256xf32>
    %360 = arith.addf %358, %359 : vector<2x256xf32>
    %361 = vector.broadcast %8 : vector<1x256xf32> to vector<2x256xf32>
    %362 = arith.addf %360, %361 : vector<2x256xf32>
    %363 = vector.extract_strided_slice %362 {offsets = [0, 0], sizes = [2, 64], strides = [1, 1]} : vector<2x256xf32> to vector<2x64xf32>
    %364 = arith.negf %363 : vector<2x64xf32>
    %365 = math.exp %364 : vector<2x64xf32>
    %cst_98 = arith.constant 1.000000e+00 : f32
    %366 = vector.broadcast %cst_98 : f32 to vector<2x64xf32>
    %367 = arith.addf %366, %365 : vector<2x64xf32>
    %368 = arith.divf %366, %367 : vector<2x64xf32>
    %369 = vector.extract_strided_slice %362 {offsets = [0, 64], sizes = [2, 64], strides = [1, 1]} : vector<2x256xf32> to vector<2x64xf32>
    %370 = arith.negf %369 : vector<2x64xf32>
    %371 = math.exp %370 : vector<2x64xf32>
    %cst_99 = arith.constant 1.000000e+00 : f32
    %372 = vector.broadcast %cst_99 : f32 to vector<2x64xf32>
    %373 = arith.addf %372, %371 : vector<2x64xf32>
    %374 = arith.divf %372, %373 : vector<2x64xf32>
    %375 = vector.extract_strided_slice %362 {offsets = [0, 128], sizes = [2, 64], strides = [1, 1]} : vector<2x256xf32> to vector<2x64xf32>
    %376 = math.tanh %375 : vector<2x64xf32>
    %377 = vector.extract_strided_slice %362 {offsets = [0, 192], sizes = [2, 64], strides = [1, 1]} : vector<2x256xf32> to vector<2x64xf32>
    %378 = arith.negf %377 : vector<2x64xf32>
    %379 = math.exp %378 : vector<2x64xf32>
    %cst_100 = arith.constant 1.000000e+00 : f32
    %380 = vector.broadcast %cst_100 : f32 to vector<2x64xf32>
    %381 = arith.addf %380, %379 : vector<2x64xf32>
    %382 = arith.divf %380, %381 : vector<2x64xf32>
    %383 = arith.mulf %374, %322 : vector<2x64xf32>
    %384 = arith.mulf %368, %376 : vector<2x64xf32>
    %385 = arith.addf %383, %384 : vector<2x64xf32>
    %386 = math.tanh %385 : vector<2x64xf32>
    %387 = arith.mulf %382, %386 : vector<2x64xf32>
    %c0_101 = arith.constant 0 : index
    %c0_102 = arith.constant 0 : index
    %388 = vector.load %arg39[%c0_101, %c0_102] : memref<2x128xf32, #tpu.memory_space<vmem>>, vector<2x64xf32>
    tpu.vector_store %arg39[%c0_101, %c0_102], %357 {strides = array<i32>} : memref<2x128xf32, #tpu.memory_space<vmem>>, vector<2x64xf32>,
    %c0_103 = arith.constant 0 : index
    %c64_104 = arith.constant 64 : index
    %389 = vector.load %arg39[%c0_103, %c64_104] : memref<2x128xf32, #tpu.memory_space<vmem>>, vector<2x64xf32>
    tpu.vector_store %arg39[%c0_103, %c64_104], %387 {strides = array<i32>} : memref<2x128xf32, #tpu.memory_space<vmem>>, vector<2x64xf32>,
    %c10 = arith.constant 10 : index
    %c0_105 = arith.constant 0 : index
    %390 = vector.load %arg38[%c10, %c0_105] : memref<16x64xf32, #tpu.memory_space<vmem>>, vector<2x64xf32>
    tpu.vector_store %arg38[%c10, %c0_105], %387 {strides = array<i32>} : memref<16x64xf32, #tpu.memory_space<vmem>>, vector<2x64xf32>,
    %c0_106 = arith.constant 0 : index
    %c0_107 = arith.constant 0 : index
    %391 = vector.load %arg39[%c0_106, %c0_107] : memref<2x128xf32, #tpu.memory_space<vmem>>, vector<2x128xf32>
    %cst_108 = arith.constant dense<0.000000e+00> : vector<2x512xf32>
    %392 = tpu.matmul %391, %6, %cst_108 {dimension_numbers = #tpu.dot_dimension_numbers<[1], [0], [0], [1], [0, 0, 1, 1], [], []>} : vector<2x128xf32>, vector<128x512xf32>, vector<2x512xf32> -> vector<2x512xf32>
    %393 = vector.extract_strided_slice %5 {offsets = [12, 0], sizes = [2, 256], strides = [1, 1]} : vector<16x256xf32> to vector<2x256xf32>
    %394 = vector.extract_strided_slice %392 {offsets = [0, 0], sizes = [2, 256], strides = [1, 1]} : vector<2x512xf32> to vector<2x256xf32>
    %395 = arith.addf %393, %394 : vector<2x256xf32>
    %396 = vector.extract_strided_slice %395 {offsets = [0, 0], sizes = [2, 64], strides = [1, 1]} : vector<2x256xf32> to vector<2x64xf32>
    %397 = arith.negf %396 : vector<2x64xf32>
    %398 = math.exp %397 : vector<2x64xf32>
    %cst_109 = arith.constant 1.000000e+00 : f32
    %399 = vector.broadcast %cst_109 : f32 to vector<2x64xf32>
    %400 = arith.addf %399, %398 : vector<2x64xf32>
    %401 = arith.divf %399, %400 : vector<2x64xf32>
    %402 = vector.extract_strided_slice %395 {offsets = [0, 64], sizes = [2, 64], strides = [1, 1]} : vector<2x256xf32> to vector<2x64xf32>
    %403 = arith.negf %402 : vector<2x64xf32>
    %404 = math.exp %403 : vector<2x64xf32>
    %cst_110 = arith.constant 1.000000e+00 : f32
    %405 = vector.broadcast %cst_110 : f32 to vector<2x64xf32>
    %406 = arith.addf %405, %404 : vector<2x64xf32>
    %407 = arith.divf %405, %406 : vector<2x64xf32>
    %408 = vector.extract_strided_slice %395 {offsets = [0, 128], sizes = [2, 64], strides = [1, 1]} : vector<2x256xf32> to vector<2x64xf32>
    %409 = math.tanh %408 : vector<2x64xf32>
    %410 = vector.extract_strided_slice %395 {offsets = [0, 192], sizes = [2, 64], strides = [1, 1]} : vector<2x256xf32> to vector<2x64xf32>
    %411 = arith.negf %410 : vector<2x64xf32>
    %412 = math.exp %411 : vector<2x64xf32>
    %cst_111 = arith.constant 1.000000e+00 : f32
    %413 = vector.broadcast %cst_111 : f32 to vector<2x64xf32>
    %414 = arith.addf %413, %412 : vector<2x64xf32>
    %415 = arith.divf %413, %414 : vector<2x64xf32>
    %416 = arith.mulf %407, %355 : vector<2x64xf32>
    %417 = arith.mulf %401, %409 : vector<2x64xf32>
    %418 = arith.addf %416, %417 : vector<2x64xf32>
    %419 = math.tanh %418 : vector<2x64xf32>
    %420 = arith.mulf %415, %419 : vector<2x64xf32>
    %cst_112 = arith.constant dense<0.000000e+00> : vector<2x256xf32>
    %421 = tpu.matmul %420, %7, %cst_112 {dimension_numbers = #tpu.dot_dimension_numbers<[1], [0], [0], [1], [0, 0, 1, 1], [], []>} : vector<2x64xf32>, vector<64x256xf32>, vector<2x256xf32> -> vector<2x256xf32>
    %422 = vector.extract_strided_slice %392 {offsets = [0, 256], sizes = [2, 256], strides = [1, 1]} : vector<2x512xf32> to vector<2x256xf32>
    %423 = arith.addf %421, %422 : vector<2x256xf32>
    %424 = vector.broadcast %8 : vector<1x256xf32> to vector<2x256xf32>
    %425 = arith.addf %423, %424 : vector<2x256xf32>
    %426 = vector.extract_strided_slice %425 {offsets = [0, 0], sizes = [2, 64], strides = [1, 1]} : vector<2x256xf32> to vector<2x64xf32>
    %427 = arith.negf %426 : vector<2x64xf32>
    %428 = math.exp %427 : vector<2x64xf32>
    %cst_113 = arith.constant 1.000000e+00 : f32
    %429 = vector.broadcast %cst_113 : f32 to vector<2x64xf32>
    %430 = arith.addf %429, %428 : vector<2x64xf32>
    %431 = arith.divf %429, %430 : vector<2x64xf32>
    %432 = vector.extract_strided_slice %425 {offsets = [0, 64], sizes = [2, 64], strides = [1, 1]} : vector<2x256xf32> to vector<2x64xf32>
    %433 = arith.negf %432 : vector<2x64xf32>
    %434 = math.exp %433 : vector<2x64xf32>
    %cst_114 = arith.constant 1.000000e+00 : f32
    %435 = vector.broadcast %cst_114 : f32 to vector<2x64xf32>
    %436 = arith.addf %435, %434 : vector<2x64xf32>
    %437 = arith.divf %435, %436 : vector<2x64xf32>
    %438 = vector.extract_strided_slice %425 {offsets = [0, 128], sizes = [2, 64], strides = [1, 1]} : vector<2x256xf32> to vector<2x64xf32>
    %439 = math.tanh %438 : vector<2x64xf32>
    %440 = vector.extract_strided_slice %425 {offsets = [0, 192], sizes = [2, 64], strides = [1, 1]} : vector<2x256xf32> to vector<2x64xf32>
    %441 = arith.negf %440 : vector<2x64xf32>
    %442 = math.exp %441 : vector<2x64xf32>
    %cst_115 = arith.constant 1.000000e+00 : f32
    %443 = vector.broadcast %cst_115 : f32 to vector<2x64xf32>
    %444 = arith.addf %443, %442 : vector<2x64xf32>
    %445 = arith.divf %443, %444 : vector<2x64xf32>
    %446 = arith.mulf %437, %385 : vector<2x64xf32>
    %447 = arith.mulf %431, %439 : vector<2x64xf32>
    %448 = arith.addf %446, %447 : vector<2x64xf32>
    %449 = math.tanh %448 : vector<2x64xf32>
    %450 = arith.mulf %445, %449 : vector<2x64xf32>
    %c0_116 = arith.constant 0 : index
    %c0_117 = arith.constant 0 : index
    %451 = vector.load %arg39[%c0_116, %c0_117] : memref<2x128xf32, #tpu.memory_space<vmem>>, vector<2x64xf32>
    tpu.vector_store %arg39[%c0_116, %c0_117], %420 {strides = array<i32>} : memref<2x128xf32, #tpu.memory_space<vmem>>, vector<2x64xf32>,
    %c0_118 = arith.constant 0 : index
    %c64_119 = arith.constant 64 : index
    %452 = vector.load %arg39[%c0_118, %c64_119] : memref<2x128xf32, #tpu.memory_space<vmem>>, vector<2x64xf32>
    tpu.vector_store %arg39[%c0_118, %c64_119], %450 {strides = array<i32>} : memref<2x128xf32, #tpu.memory_space<vmem>>, vector<2x64xf32>,
    %c12 = arith.constant 12 : index
    %c0_120 = arith.constant 0 : index
    %453 = vector.load %arg38[%c12, %c0_120] : memref<16x64xf32, #tpu.memory_space<vmem>>, vector<2x64xf32>
    tpu.vector_store %arg38[%c12, %c0_120], %450 {strides = array<i32>} : memref<16x64xf32, #tpu.memory_space<vmem>>, vector<2x64xf32>,
    %c0_121 = arith.constant 0 : index
    %c0_122 = arith.constant 0 : index
    %454 = vector.load %arg39[%c0_121, %c0_122] : memref<2x128xf32, #tpu.memory_space<vmem>>, vector<2x128xf32>
    %cst_123 = arith.constant dense<0.000000e+00> : vector<2x512xf32>
    %455 = tpu.matmul %454, %6, %cst_123 {dimension_numbers = #tpu.dot_dimension_numbers<[1], [0], [0], [1], [0, 0, 1, 1], [], []>} : vector<2x128xf32>, vector<128x512xf32>, vector<2x512xf32> -> vector<2x512xf32>
    %456 = vector.extract_strided_slice %5 {offsets = [14, 0], sizes = [2, 256], strides = [1, 1]} : vector<16x256xf32> to vector<2x256xf32>
    %457 = vector.extract_strided_slice %455 {offsets = [0, 0], sizes = [2, 256], strides = [1, 1]} : vector<2x512xf32> to vector<2x256xf32>
    %458 = arith.addf %456, %457 : vector<2x256xf32>
    %459 = vector.extract_strided_slice %458 {offsets = [0, 0], sizes = [2, 64], strides = [1, 1]} : vector<2x256xf32> to vector<2x64xf32>
    %460 = arith.negf %459 : vector<2x64xf32>
    %461 = math.exp %460 : vector<2x64xf32>
    %cst_124 = arith.constant 1.000000e+00 : f32
    %462 = vector.broadcast %cst_124 : f32 to vector<2x64xf32>
    %463 = arith.addf %462, %461 : vector<2x64xf32>
    %464 = arith.divf %462, %463 : vector<2x64xf32>
    %465 = vector.extract_strided_slice %458 {offsets = [0, 64], sizes = [2, 64], strides = [1, 1]} : vector<2x256xf32> to vector<2x64xf32>
    %466 = arith.negf %465 : vector<2x64xf32>
    %467 = math.exp %466 : vector<2x64xf32>
    %cst_125 = arith.constant 1.000000e+00 : f32
    %468 = vector.broadcast %cst_125 : f32 to vector<2x64xf32>
    %469 = arith.addf %468, %467 : vector<2x64xf32>
    %470 = arith.divf %468, %469 : vector<2x64xf32>
    %471 = vector.extract_strided_slice %458 {offsets = [0, 128], sizes = [2, 64], strides = [1, 1]} : vector<2x256xf32> to vector<2x64xf32>
    %472 = math.tanh %471 : vector<2x64xf32>
    %473 = vector.extract_strided_slice %458 {offsets = [0, 192], sizes = [2, 64], strides = [1, 1]} : vector<2x256xf32> to vector<2x64xf32>
    %474 = arith.negf %473 : vector<2x64xf32>
    %475 = math.exp %474 : vector<2x64xf32>
    %cst_126 = arith.constant 1.000000e+00 : f32
    %476 = vector.broadcast %cst_126 : f32 to vector<2x64xf32>
    %477 = arith.addf %476, %475 : vector<2x64xf32>
    %478 = arith.divf %476, %477 : vector<2x64xf32>
    %479 = arith.mulf %470, %418 : vector<2x64xf32>
    %480 = arith.mulf %464, %472 : vector<2x64xf32>
    %481 = arith.addf %479, %480 : vector<2x64xf32>
    %482 = math.tanh %481 : vector<2x64xf32>
    %483 = arith.mulf %478, %482 : vector<2x64xf32>
    %cst_127 = arith.constant dense<0.000000e+00> : vector<2x256xf32>
    %484 = tpu.matmul %483, %7, %cst_127 {dimension_numbers = #tpu.dot_dimension_numbers<[1], [0], [0], [1], [0, 0, 1, 1], [], []>} : vector<2x64xf32>, vector<64x256xf32>, vector<2x256xf32> -> vector<2x256xf32>
    %485 = vector.extract_strided_slice %455 {offsets = [0, 256], sizes = [2, 256], strides = [1, 1]} : vector<2x512xf32> to vector<2x256xf32>
    %486 = arith.addf %484, %485 : vector<2x256xf32>
    %487 = vector.broadcast %8 : vector<1x256xf32> to vector<2x256xf32>
    %488 = arith.addf %486, %487 : vector<2x256xf32>
    %489 = vector.extract_strided_slice %488 {offsets = [0, 0], sizes = [2, 64], strides = [1, 1]} : vector<2x256xf32> to vector<2x64xf32>
    %490 = arith.negf %489 : vector<2x64xf32>
    %491 = math.exp %490 : vector<2x64xf32>
    %cst_128 = arith.constant 1.000000e+00 : f32
    %492 = vector.broadcast %cst_128 : f32 to vector<2x64xf32>
    %493 = arith.addf %492, %491 : vector<2x64xf32>
    %494 = arith.divf %492, %493 : vector<2x64xf32>
    %495 = vector.extract_strided_slice %488 {offsets = [0, 64], sizes = [2, 64], strides = [1, 1]} : vector<2x256xf32> to vector<2x64xf32>
    %496 = arith.negf %495 : vector<2x64xf32>
    %497 = math.exp %496 : vector<2x64xf32>
    %cst_129 = arith.constant 1.000000e+00 : f32
    %498 = vector.broadcast %cst_129 : f32 to vector<2x64xf32>
    %499 = arith.addf %498, %497 : vector<2x64xf32>
    %500 = arith.divf %498, %499 : vector<2x64xf32>
    %501 = vector.extract_strided_slice %488 {offsets = [0, 128], sizes = [2, 64], strides = [1, 1]} : vector<2x256xf32> to vector<2x64xf32>
    %502 = math.tanh %501 : vector<2x64xf32>
    %503 = vector.extract_strided_slice %488 {offsets = [0, 192], sizes = [2, 64], strides = [1, 1]} : vector<2x256xf32> to vector<2x64xf32>
    %504 = arith.negf %503 : vector<2x64xf32>
    %505 = math.exp %504 : vector<2x64xf32>
    %cst_130 = arith.constant 1.000000e+00 : f32
    %506 = vector.broadcast %cst_130 : f32 to vector<2x64xf32>
    %507 = arith.addf %506, %505 : vector<2x64xf32>
    %508 = arith.divf %506, %507 : vector<2x64xf32>
    %509 = arith.mulf %500, %448 : vector<2x64xf32>
    %510 = arith.mulf %494, %502 : vector<2x64xf32>
    %511 = arith.addf %509, %510 : vector<2x64xf32>
    %512 = math.tanh %511 : vector<2x64xf32>
    %513 = arith.mulf %508, %512 : vector<2x64xf32>
    %c0_131 = arith.constant 0 : index
    %c0_132 = arith.constant 0 : index
    %514 = vector.load %arg39[%c0_131, %c0_132] : memref<2x128xf32, #tpu.memory_space<vmem>>, vector<2x64xf32>
    tpu.vector_store %arg39[%c0_131, %c0_132], %483 {strides = array<i32>} : memref<2x128xf32, #tpu.memory_space<vmem>>, vector<2x64xf32>,
    %c0_133 = arith.constant 0 : index
    %c64_134 = arith.constant 64 : index
    %515 = vector.load %arg39[%c0_133, %c64_134] : memref<2x128xf32, #tpu.memory_space<vmem>>, vector<2x64xf32>
    tpu.vector_store %arg39[%c0_133, %c64_134], %513 {strides = array<i32>} : memref<2x128xf32, #tpu.memory_space<vmem>>, vector<2x64xf32>,
    %c14 = arith.constant 14 : index
    %c0_135 = arith.constant 0 : index
    %516 = vector.load %arg38[%c14, %c0_135] : memref<16x64xf32, #tpu.memory_space<vmem>>, vector<2x64xf32>
    tpu.vector_store %arg38[%c14, %c0_135], %513 {strides = array<i32>} : memref<16x64xf32, #tpu.memory_space<vmem>>, vector<2x64xf32>,
    %c0_136 = arith.constant 0 : index
    %c0_137 = arith.constant 0 : index
    %517 = vector.load %arg38[%c0_136, %c0_137] : memref<16x64xf32, #tpu.memory_space<vmem>>, vector<16x64xf32>
    %c0_138 = arith.constant 0 : index
    %c0_139 = arith.constant 0 : index
    %518 = vector.load %arg1[%c0_138, %c0_139] : memref<16x64xf32, #tpu.memory_space<vmem>>, vector<16x64xf32>
    %519 = arith.addf %517, %518 : vector<16x64xf32>
    %c0_140 = arith.constant 0 : index
    %c0_141 = arith.constant 0 : index
    %520 = vector.load %arg2[%c0_140, %c0_141] : memref<16x16xf32, #tpu.memory_space<vmem>>, vector<16x16xf32>
    %c0_142 = arith.constant 0 : index
    %c0_143 = arith.constant 0 : index
    %c0_144 = arith.constant 0 : index
    %521 = vector.load %arg9[%c0_142, %c0_143, %c0_144] : memref<2x64x192xf32, #tpu.memory_space<vmem>>, vector<1x64x192xf32>
    %522 = vector.shape_cast %521 : vector<1x64x192xf32> to vector<64x192xf32>
    %cst_145 = arith.constant dense<0.000000e+00> : vector<16x192xf32>
    %523 = tpu.matmul %519, %522, %cst_145 {dimension_numbers = #tpu.dot_dimension_numbers<[1], [0], [0], [1], [0, 0, 1, 1], [], []>} : vector<16x64xf32>, vector<64x192xf32>, vector<16x192xf32> -> vector<16x192xf32>
    %c0_146 = arith.constant 0 : index
    %c0_147 = arith.constant 0 : index
    %c0_148 = arith.constant 0 : index
    %524 = vector.load %arg10[%c0_146, %c0_147, %c0_148] : memref<2x1x192xf32, #tpu.memory_space<vmem>>, vector<1x1x192xf32>
    %525 = vector.shape_cast %524 : vector<1x1x192xf32> to vector<1x192xf32>
    %526 = vector.broadcast %525 : vector<1x192xf32> to vector<16x192xf32>
    %527 = arith.addf %523, %526 : vector<16x192xf32>
    %528 = vector.extract_strided_slice %527 {offsets = [0, 0], sizes = [16, 16], strides = [1, 1]} : vector<16x192xf32> to vector<16x16xf32>
    %529 = vector.extract_strided_slice %527 {offsets = [0, 64], sizes = [16, 16], strides = [1, 1]} : vector<16x192xf32> to vector<16x16xf32>
    %530 = vector.extract_strided_slice %527 {offsets = [0, 128], sizes = [16, 16], strides = [1, 1]} : vector<16x192xf32> to vector<16x16xf32>
    %cst_149 = arith.constant dense<0.000000e+00> : vector<16x16xf32>
    %531 = tpu.matmul %528, %529, %cst_149 {dimension_numbers = #tpu.dot_dimension_numbers<[1], [1], [0], [0], [0, 0, 1, 0], [], []>} : vector<16x16xf32>, vector<16x16xf32>, vector<16x16xf32> -> vector<16x16xf32>
    %cst_150 = arith.constant 2.500000e-01 : f32
    %532 = vector.broadcast %cst_150 : f32 to vector<16x16xf32>
    %533 = arith.mulf %531, %532 : vector<16x16xf32>
    %534 = arith.addf %533, %520 : vector<16x16xf32>
    %cst_151 = arith.constant dense<0xFF800000> : vector<16xf32>
    %535 = vector.multi_reduction <maximumf>, %534, %cst_151 [1] : vector<16x16xf32> to vector<16xf32>
    %536 = vector.shape_cast %535 : vector<16xf32> to vector<16x1xf32>
    %537 = vector.broadcast %536 : vector<16x1xf32> to vector<16x16xf32>
    %538 = arith.subf %534, %537 : vector<16x16xf32>
    %539 = math.exp %538 : vector<16x16xf32>
    %cst_152 = arith.constant dense<0.000000e+00> : vector<16xf32>
    %540 = vector.multi_reduction <add>, %539, %cst_152 [1] : vector<16x16xf32> to vector<16xf32>
    %541 = vector.shape_cast %540 : vector<16xf32> to vector<16x1xf32>
    %542 = tpu.reciprocal %541 {approx = true} : vector<16x1xf32> -> vector<16x1xf32>
    %543 = vector.broadcast %542 : vector<16x1xf32> to vector<16x16xf32>
    %544 = arith.mulf %539, %543 : vector<16x16xf32>
    %cst_153 = arith.constant dense<0.000000e+00> : vector<16x16xf32>
    %545 = tpu.matmul %544, %530, %cst_153 {dimension_numbers = #tpu.dot_dimension_numbers<[1], [0], [0], [1], [0, 0, 1, 1], [], []>} : vector<16x16xf32>, vector<16x16xf32>, vector<16x16xf32> -> vector<16x16xf32>
    %546 = vector.extract_strided_slice %527 {offsets = [0, 16], sizes = [16, 16], strides = [1, 1]} : vector<16x192xf32> to vector<16x16xf32>
    %547 = vector.extract_strided_slice %527 {offsets = [0, 80], sizes = [16, 16], strides = [1, 1]} : vector<16x192xf32> to vector<16x16xf32>
    %548 = vector.extract_strided_slice %527 {offsets = [0, 144], sizes = [16, 16], strides = [1, 1]} : vector<16x192xf32> to vector<16x16xf32>
    %cst_154 = arith.constant dense<0.000000e+00> : vector<16x16xf32>
    %549 = tpu.matmul %546, %547, %cst_154 {dimension_numbers = #tpu.dot_dimension_numbers<[1], [1], [0], [0], [0, 0, 1, 0], [], []>} : vector<16x16xf32>, vector<16x16xf32>, vector<16x16xf32> -> vector<16x16xf32>
    %cst_155 = arith.constant 2.500000e-01 : f32
    %550 = vector.broadcast %cst_155 : f32 to vector<16x16xf32>
    %551 = arith.mulf %549, %550 : vector<16x16xf32>
    %552 = arith.addf %551, %520 : vector<16x16xf32>
    %cst_156 = arith.constant dense<0xFF800000> : vector<16xf32>
    %553 = vector.multi_reduction <maximumf>, %552, %cst_156 [1] : vector<16x16xf32> to vector<16xf32>
    %554 = vector.shape_cast %553 : vector<16xf32> to vector<16x1xf32>
    %555 = vector.broadcast %554 : vector<16x1xf32> to vector<16x16xf32>
    %556 = arith.subf %552, %555 : vector<16x16xf32>
    %557 = math.exp %556 : vector<16x16xf32>
    %cst_157 = arith.constant dense<0.000000e+00> : vector<16xf32>
    %558 = vector.multi_reduction <add>, %557, %cst_157 [1] : vector<16x16xf32> to vector<16xf32>
    %559 = vector.shape_cast %558 : vector<16xf32> to vector<16x1xf32>
    %560 = tpu.reciprocal %559 {approx = true} : vector<16x1xf32> -> vector<16x1xf32>
    %561 = vector.broadcast %560 : vector<16x1xf32> to vector<16x16xf32>
    %562 = arith.mulf %557, %561 : vector<16x16xf32>
    %cst_158 = arith.constant dense<0.000000e+00> : vector<16x16xf32>
    %563 = tpu.matmul %562, %548, %cst_158 {dimension_numbers = #tpu.dot_dimension_numbers<[1], [0], [0], [1], [0, 0, 1, 1], [], []>} : vector<16x16xf32>, vector<16x16xf32>, vector<16x16xf32> -> vector<16x16xf32>
    %564 = vector.extract_strided_slice %527 {offsets = [0, 32], sizes = [16, 16], strides = [1, 1]} : vector<16x192xf32> to vector<16x16xf32>
    %565 = vector.extract_strided_slice %527 {offsets = [0, 96], sizes = [16, 16], strides = [1, 1]} : vector<16x192xf32> to vector<16x16xf32>
    %566 = vector.extract_strided_slice %527 {offsets = [0, 160], sizes = [16, 16], strides = [1, 1]} : vector<16x192xf32> to vector<16x16xf32>
    %cst_159 = arith.constant dense<0.000000e+00> : vector<16x16xf32>
    %567 = tpu.matmul %564, %565, %cst_159 {dimension_numbers = #tpu.dot_dimension_numbers<[1], [1], [0], [0], [0, 0, 1, 0], [], []>} : vector<16x16xf32>, vector<16x16xf32>, vector<16x16xf32> -> vector<16x16xf32>
    %cst_160 = arith.constant 2.500000e-01 : f32
    %568 = vector.broadcast %cst_160 : f32 to vector<16x16xf32>
    %569 = arith.mulf %567, %568 : vector<16x16xf32>
    %570 = arith.addf %569, %520 : vector<16x16xf32>
    %cst_161 = arith.constant dense<0xFF800000> : vector<16xf32>
    %571 = vector.multi_reduction <maximumf>, %570, %cst_161 [1] : vector<16x16xf32> to vector<16xf32>
    %572 = vector.shape_cast %571 : vector<16xf32> to vector<16x1xf32>
    %573 = vector.broadcast %572 : vector<16x1xf32> to vector<16x16xf32>
    %574 = arith.subf %570, %573 : vector<16x16xf32>
    %575 = math.exp %574 : vector<16x16xf32>
    %cst_162 = arith.constant dense<0.000000e+00> : vector<16xf32>
    %576 = vector.multi_reduction <add>, %575, %cst_162 [1] : vector<16x16xf32> to vector<16xf32>
    %577 = vector.shape_cast %576 : vector<16xf32> to vector<16x1xf32>
    %578 = tpu.reciprocal %577 {approx = true} : vector<16x1xf32> -> vector<16x1xf32>
    %579 = vector.broadcast %578 : vector<16x1xf32> to vector<16x16xf32>
    %580 = arith.mulf %575, %579 : vector<16x16xf32>
    %cst_163 = arith.constant dense<0.000000e+00> : vector<16x16xf32>
    %581 = tpu.matmul %580, %566, %cst_163 {dimension_numbers = #tpu.dot_dimension_numbers<[1], [0], [0], [1], [0, 0, 1, 1], [], []>} : vector<16x16xf32>, vector<16x16xf32>, vector<16x16xf32> -> vector<16x16xf32>
    %582 = vector.extract_strided_slice %527 {offsets = [0, 48], sizes = [16, 16], strides = [1, 1]} : vector<16x192xf32> to vector<16x16xf32>
    %583 = vector.extract_strided_slice %527 {offsets = [0, 112], sizes = [16, 16], strides = [1, 1]} : vector<16x192xf32> to vector<16x16xf32>
    %584 = vector.extract_strided_slice %527 {offsets = [0, 176], sizes = [16, 16], strides = [1, 1]} : vector<16x192xf32> to vector<16x16xf32>
    %cst_164 = arith.constant dense<0.000000e+00> : vector<16x16xf32>
    %585 = tpu.matmul %582, %583, %cst_164 {dimension_numbers = #tpu.dot_dimension_numbers<[1], [1], [0], [0], [0, 0, 1, 0], [], []>} : vector<16x16xf32>, vector<16x16xf32>, vector<16x16xf32> -> vector<16x16xf32>
    %cst_165 = arith.constant 2.500000e-01 : f32
    %586 = vector.broadcast %cst_165 : f32 to vector<16x16xf32>
    %587 = arith.mulf %585, %586 : vector<16x16xf32>
    %588 = arith.addf %587, %520 : vector<16x16xf32>
    %cst_166 = arith.constant dense<0xFF800000> : vector<16xf32>
    %589 = vector.multi_reduction <maximumf>, %588, %cst_166 [1] : vector<16x16xf32> to vector<16xf32>
    %590 = vector.shape_cast %589 : vector<16xf32> to vector<16x1xf32>
    %591 = vector.broadcast %590 : vector<16x1xf32> to vector<16x16xf32>
    %592 = arith.subf %588, %591 : vector<16x16xf32>
    %593 = math.exp %592 : vector<16x16xf32>
    %cst_167 = arith.constant dense<0.000000e+00> : vector<16xf32>
    %594 = vector.multi_reduction <add>, %593, %cst_167 [1] : vector<16x16xf32> to vector<16xf32>
    %595 = vector.shape_cast %594 : vector<16xf32> to vector<16x1xf32>
    %596 = tpu.reciprocal %595 {approx = true} : vector<16x1xf32> -> vector<16x1xf32>
    %597 = vector.broadcast %596 : vector<16x1xf32> to vector<16x16xf32>
    %598 = arith.mulf %593, %597 : vector<16x16xf32>
    %cst_168 = arith.constant dense<0.000000e+00> : vector<16x16xf32>
    %599 = tpu.matmul %598, %584, %cst_168 {dimension_numbers = #tpu.dot_dimension_numbers<[1], [0], [0], [1], [0, 0, 1, 1], [], []>} : vector<16x16xf32>, vector<16x16xf32>, vector<16x16xf32> -> vector<16x16xf32>
    %600 = tpu.concatenate %545, %563, %581, %599 in 1 : vector<16x16xf32>, vector<16x16xf32>, vector<16x16xf32>, vector<16x16xf32> -> vector<16x64xf32>
    %c0_169 = arith.constant 0 : index
    %c0_170 = arith.constant 0 : index
    %c0_171 = arith.constant 0 : index
    %601 = vector.load %arg11[%c0_169, %c0_170, %c0_171] : memref<2x64x64xf32, #tpu.memory_space<vmem>>, vector<1x64x64xf32>
    %602 = vector.shape_cast %601 : vector<1x64x64xf32> to vector<64x64xf32>
    %cst_172 = arith.constant dense<0.000000e+00> : vector<16x64xf32>
    %603 = tpu.matmul %600, %602, %cst_172 {dimension_numbers = #tpu.dot_dimension_numbers<[1], [0], [0], [1], [0, 0, 1, 1], [], []>} : vector<16x64xf32>, vector<64x64xf32>, vector<16x64xf32> -> vector<16x64xf32>
    %c0_173 = arith.constant 0 : index
    %c0_174 = arith.constant 0 : index
    %c0_175 = arith.constant 0 : index
    %604 = vector.load %arg12[%c0_173, %c0_174, %c0_175] : memref<2x1x64xf32, #tpu.memory_space<vmem>>, vector<1x1x64xf32>
    %605 = vector.shape_cast %604 : vector<1x1x64xf32> to vector<1x64xf32>
    %606 = vector.broadcast %605 : vector<1x64xf32> to vector<16x64xf32>
    %607 = arith.addf %603, %606 : vector<16x64xf32>
    %608 = arith.addf %519, %607 : vector<16x64xf32>
    %c0_176 = arith.constant 0 : index
    %c0_177 = arith.constant 0 : index
    %c0_178 = arith.constant 0 : index
    %609 = vector.load %arg13[%c0_176, %c0_177, %c0_178] : memref<2x1x64xf32, #tpu.memory_space<vmem>>, vector<1x1x64xf32>
    %610 = vector.shape_cast %609 : vector<1x1x64xf32> to vector<1x64xf32>
    %c0_179 = arith.constant 0 : index
    %c0_180 = arith.constant 0 : index
    %c0_181 = arith.constant 0 : index
    %611 = vector.load %arg14[%c0_179, %c0_180, %c0_181] : memref<2x1x64xf32, #tpu.memory_space<vmem>>, vector<1x1x64xf32>
    %612 = vector.shape_cast %611 : vector<1x1x64xf32> to vector<1x64xf32>
    %cst_182 = arith.constant dense<0.000000e+00> : vector<16xf32>
    %613 = vector.multi_reduction <add>, %608, %cst_182 [1] : vector<16x64xf32> to vector<16xf32>
    %614 = vector.shape_cast %613 : vector<16xf32> to vector<16x1xf32>
    %cst_183 = arith.constant 6.400000e+01 : f32
    %615 = vector.broadcast %cst_183 : f32 to vector<16x1xf32>
    %616 = arith.divf %614, %615 : vector<16x1xf32>
    %617 = vector.broadcast %616 : vector<16x1xf32> to vector<16x64xf32>
    %618 = arith.subf %608, %617 : vector<16x64xf32>
    %619 = arith.mulf %618, %618 : vector<16x64xf32>
    %cst_184 = arith.constant dense<0.000000e+00> : vector<16xf32>
    %620 = vector.multi_reduction <add>, %619, %cst_184 [1] : vector<16x64xf32> to vector<16xf32>
    %621 = vector.shape_cast %620 : vector<16xf32> to vector<16x1xf32>
    %cst_185 = arith.constant 6.400000e+01 : f32
    %622 = vector.broadcast %cst_185 : f32 to vector<16x1xf32>
    %623 = arith.divf %621, %622 : vector<16x1xf32>
    %624 = vector.broadcast %616 : vector<16x1xf32> to vector<16x64xf32>
    %625 = arith.subf %608, %624 : vector<16x64xf32>
    %cst_186 = arith.constant 9.99999974E-6 : f32
    %626 = vector.broadcast %cst_186 : f32 to vector<16x1xf32>
    %627 = arith.addf %623, %626 : vector<16x1xf32>
    %628 = math.rsqrt %627 : vector<16x1xf32>
    %629 = vector.broadcast %628 : vector<16x1xf32> to vector<16x64xf32>
    %630 = arith.mulf %625, %629 : vector<16x64xf32>
    %631 = vector.broadcast %610 : vector<1x64xf32> to vector<16x64xf32>
    %632 = arith.mulf %630, %631 : vector<16x64xf32>
    %633 = vector.broadcast %612 : vector<1x64xf32> to vector<16x64xf32>
    %634 = arith.addf %632, %633 : vector<16x64xf32>
    %c0_187 = arith.constant 0 : index
    %c0_188 = arith.constant 0 : index
    %c0_189 = arith.constant 0 : index
    %635 = vector.load %arg15[%c0_187, %c0_188, %c0_189] : memref<2x64x128xf32, #tpu.memory_space<vmem>>, vector<1x64x128xf32>
    %636 = vector.shape_cast %635 : vector<1x64x128xf32> to vector<64x128xf32>
    %cst_190 = arith.constant dense<0.000000e+00> : vector<16x128xf32>
    %637 = tpu.matmul %634, %636, %cst_190 {dimension_numbers = #tpu.dot_dimension_numbers<[1], [0], [0], [1], [0, 0, 1, 1], [], []>} : vector<16x64xf32>, vector<64x128xf32>, vector<16x128xf32> -> vector<16x128xf32>
    %c0_191 = arith.constant 0 : index
    %c0_192 = arith.constant 0 : index
    %c0_193 = arith.constant 0 : index
    %638 = vector.load %arg16[%c0_191, %c0_192, %c0_193] : memref<2x1x128xf32, #tpu.memory_space<vmem>>, vector<1x1x128xf32>
    %639 = vector.shape_cast %638 : vector<1x1x128xf32> to vector<1x128xf32>
    %640 = vector.broadcast %639 : vector<1x128xf32> to vector<16x128xf32>
    %641 = arith.addf %637, %640 : vector<16x128xf32>
    %cst_194 = arith.constant 0.000000e+00 : f32
    %642 = vector.broadcast %cst_194 : f32 to vector<16x128xf32>
    %643 = arith.maximumf %641, %642 : vector<16x128xf32>
    %c0_195 = arith.constant 0 : index
    %c0_196 = arith.constant 0 : index
    %c0_197 = arith.constant 0 : index
    %644 = vector.load %arg17[%c0_195, %c0_196, %c0_197] : memref<2x128x64xf32, #tpu.memory_space<vmem>>, vector<1x128x64xf32>
    %645 = vector.shape_cast %644 : vector<1x128x64xf32> to vector<128x64xf32>
    %cst_198 = arith.constant dense<0.000000e+00> : vector<16x64xf32>
    %646 = tpu.matmul %643, %645, %cst_198 {dimension_numbers = #tpu.dot_dimension_numbers<[1], [0], [0], [1], [0, 0, 1, 1], [], []>} : vector<16x128xf32>, vector<128x64xf32>, vector<16x64xf32> -> vector<16x64xf32>
    %c0_199 = arith.constant 0 : index
    %c0_200 = arith.constant 0 : index
    %c0_201 = arith.constant 0 : index
    %647 = vector.load %arg18[%c0_199, %c0_200, %c0_201] : memref<2x1x64xf32, #tpu.memory_space<vmem>>, vector<1x1x64xf32>
    %648 = vector.shape_cast %647 : vector<1x1x64xf32> to vector<1x64xf32>
    %649 = vector.broadcast %648 : vector<1x64xf32> to vector<16x64xf32>
    %650 = arith.addf %646, %649 : vector<16x64xf32>
    %651 = arith.addf %634, %650 : vector<16x64xf32>
    %c0_202 = arith.constant 0 : index
    %c0_203 = arith.constant 0 : index
    %c0_204 = arith.constant 0 : index
    %652 = vector.load %arg19[%c0_202, %c0_203, %c0_204] : memref<2x1x64xf32, #tpu.memory_space<vmem>>, vector<1x1x64xf32>
    %653 = vector.shape_cast %652 : vector<1x1x64xf32> to vector<1x64xf32>
    %c0_205 = arith.constant 0 : index
    %c0_206 = arith.constant 0 : index
    %c0_207 = arith.constant 0 : index
    %654 = vector.load %arg20[%c0_205, %c0_206, %c0_207] : memref<2x1x64xf32, #tpu.memory_space<vmem>>, vector<1x1x64xf32>
    %655 = vector.shape_cast %654 : vector<1x1x64xf32> to vector<1x64xf32>
    %cst_208 = arith.constant dense<0.000000e+00> : vector<16xf32>
    %656 = vector.multi_reduction <add>, %651, %cst_208 [1] : vector<16x64xf32> to vector<16xf32>
    %657 = vector.shape_cast %656 : vector<16xf32> to vector<16x1xf32>
    %cst_209 = arith.constant 6.400000e+01 : f32
    %658 = vector.broadcast %cst_209 : f32 to vector<16x1xf32>
    %659 = arith.divf %657, %658 : vector<16x1xf32>
    %660 = vector.broadcast %659 : vector<16x1xf32> to vector<16x64xf32>
    %661 = arith.subf %651, %660 : vector<16x64xf32>
    %662 = arith.mulf %661, %661 : vector<16x64xf32>
    %cst_210 = arith.constant dense<0.000000e+00> : vector<16xf32>
    %663 = vector.multi_reduction <add>, %662, %cst_210 [1] : vector<16x64xf32> to vector<16xf32>
    %664 = vector.shape_cast %663 : vector<16xf32> to vector<16x1xf32>
    %cst_211 = arith.constant 6.400000e+01 : f32
    %665 = vector.broadcast %cst_211 : f32 to vector<16x1xf32>
    %666 = arith.divf %664, %665 : vector<16x1xf32>
    %667 = vector.broadcast %659 : vector<16x1xf32> to vector<16x64xf32>
    %668 = arith.subf %651, %667 : vector<16x64xf32>
    %cst_212 = arith.constant 9.99999974E-6 : f32
    %669 = vector.broadcast %cst_212 : f32 to vector<16x1xf32>
    %670 = arith.addf %666, %669 : vector<16x1xf32>
    %671 = math.rsqrt %670 : vector<16x1xf32>
    %672 = vector.broadcast %671 : vector<16x1xf32> to vector<16x64xf32>
    %673 = arith.mulf %668, %672 : vector<16x64xf32>
    %674 = vector.broadcast %653 : vector<1x64xf32> to vector<16x64xf32>
    %675 = arith.mulf %673, %674 : vector<16x64xf32>
    %676 = vector.broadcast %655 : vector<1x64xf32> to vector<16x64xf32>
    %677 = arith.addf %675, %676 : vector<16x64xf32>
    %c0_213 = arith.constant 0 : index
    %c0_214 = arith.constant 0 : index
    %c0_215 = arith.constant 0 : index
    %678 = vector.load %arg21[%c0_213, %c0_214, %c0_215] : memref<2x64x64xf32, #tpu.memory_space<vmem>>, vector<1x64x64xf32>
    %679 = vector.shape_cast %678 : vector<1x64x64xf32> to vector<64x64xf32>
    %c0_216 = arith.constant 0 : index
    %c0_217 = arith.constant 0 : index
    %c0_218 = arith.constant 0 : index
    %680 = vector.load %arg22[%c0_216, %c0_217, %c0_218] : memref<2x1x64xf32, #tpu.memory_space<vmem>>, vector<1x1x64xf32>
    %681 = vector.shape_cast %680 : vector<1x1x64xf32> to vector<1x64xf32>
    %c0_219 = arith.constant 0 : index
    %c0_220 = arith.constant 0 : index
    %c0_221 = arith.constant 0 : index
    %682 = vector.load %arg23[%c0_219, %c0_220, %c0_221] : memref<2x64x64xf32, #tpu.memory_space<vmem>>, vector<1x64x64xf32>
    %683 = vector.shape_cast %682 : vector<1x64x64xf32> to vector<64x64xf32>
    %c0_222 = arith.constant 0 : index
    %c0_223 = arith.constant 0 : index
    %c0_224 = arith.constant 0 : index
    %684 = vector.load %arg24[%c0_222, %c0_223, %c0_224] : memref<2x1x64xf32, #tpu.memory_space<vmem>>, vector<1x1x64xf32>
    %685 = vector.shape_cast %684 : vector<1x1x64xf32> to vector<1x64xf32>
    %c0_225 = arith.constant 0 : index
    %c0_226 = arith.constant 0 : index
    %c0_227 = arith.constant 0 : index
    %686 = vector.load %arg25[%c0_225, %c0_226, %c0_227] : memref<2x64x64xf32, #tpu.memory_space<vmem>>, vector<1x64x64xf32>
    %687 = vector.shape_cast %686 : vector<1x64x64xf32> to vector<64x64xf32>
    %c0_228 = arith.constant 0 : index
    %c0_229 = arith.constant 0 : index
    %c0_230 = arith.constant 0 : index
    %688 = vector.load %arg26[%c0_228, %c0_229, %c0_230] : memref<2x1x64xf32, #tpu.memory_space<vmem>>, vector<1x1x64xf32>
    %689 = vector.shape_cast %688 : vector<1x1x64xf32> to vector<1x64xf32>
    %cst_231 = arith.constant dense<0.000000e+00> : vector<16x64xf32>
    %690 = tpu.matmul %677, %679, %cst_231 {dimension_numbers = #tpu.dot_dimension_numbers<[1], [0], [0], [1], [0, 0, 1, 1], [], []>} : vector<16x64xf32>, vector<64x64xf32>, vector<16x64xf32> -> vector<16x64xf32>
    %691 = vector.broadcast %681 : vector<1x64xf32> to vector<16x64xf32>
    %692 = arith.addf %690, %691 : vector<16x64xf32>
    %cst_232 = arith.constant 0.000000e+00 : f32
    %693 = vector.broadcast %cst_232 : f32 to vector<16x64xf32>
    %694 = arith.cmpf ogt, %692, %693 : vector<16x64xf32>
    %cst_233 = arith.constant 0.000000e+00 : f32
    %695 = vector.broadcast %cst_233 : f32 to vector<16x64xf32>
    %696 = arith.minimumf %692, %695 : vector<16x64xf32>
    %697 = math.exp %696 : vector<16x64xf32>
    %cst_234 = arith.constant 1.000000e+00 : f32
    %698 = vector.broadcast %cst_234 : f32 to vector<16x64xf32>
    %699 = arith.subf %697, %698 : vector<16x64xf32>
    %700 = arith.select %694, %692, %699 : vector<16x64xi1>, vector<16x64xf32>
    %cst_235 = arith.constant dense<0.000000e+00> : vector<16x64xf32>
    %701 = tpu.matmul %700, %683, %cst_235 {dimension_numbers = #tpu.dot_dimension_numbers<[1], [0], [0], [1], [0, 0, 1, 1], [], []>} : vector<16x64xf32>, vector<64x64xf32>, vector<16x64xf32> -> vector<16x64xf32>
    %702 = vector.broadcast %685 : vector<1x64xf32> to vector<16x64xf32>
    %703 = arith.addf %701, %702 : vector<16x64xf32>
    %cst_236 = arith.constant dense<0.000000e+00> : vector<16x64xf32>
    %704 = tpu.matmul %703, %687, %cst_236 {dimension_numbers = #tpu.dot_dimension_numbers<[1], [0], [0], [1], [0, 0, 1, 1], [], []>} : vector<16x64xf32>, vector<64x64xf32>, vector<16x64xf32> -> vector<16x64xf32>
    %705 = vector.broadcast %689 : vector<1x64xf32> to vector<16x64xf32>
    %706 = arith.addf %704, %705 : vector<16x64xf32>
    %707 = arith.negf %706 : vector<16x64xf32>
    %708 = math.exp %707 : vector<16x64xf32>
    %cst_237 = arith.constant 1.000000e+00 : f32
    %709 = vector.broadcast %cst_237 : f32 to vector<16x64xf32>
    %710 = arith.addf %709, %708 : vector<16x64xf32>
    %711 = arith.divf %709, %710 : vector<16x64xf32>
    %712 = arith.mulf %711, %703 : vector<16x64xf32>
    %cst_238 = arith.constant 1.000000e+00 : f32
    %713 = vector.broadcast %cst_238 : f32 to vector<16x64xf32>
    %714 = arith.subf %713, %711 : vector<16x64xf32>
    %715 = arith.mulf %714, %677 : vector<16x64xf32>
    %716 = arith.addf %712, %715 : vector<16x64xf32>
    %c1 = arith.constant 1 : index
    %c0_239 = arith.constant 0 : index
    %c0_240 = arith.constant 0 : index
    %717 = vector.load %arg9[%c1, %c0_239, %c0_240] : memref<2x64x192xf32, #tpu.memory_space<vmem>>, vector<1x64x192xf32>
    %718 = vector.shape_cast %717 : vector<1x64x192xf32> to vector<64x192xf32>
    %cst_241 = arith.constant dense<0.000000e+00> : vector<16x192xf32>
    %719 = tpu.matmul %716, %718, %cst_241 {dimension_numbers = #tpu.dot_dimension_numbers<[1], [0], [0], [1], [0, 0, 1, 1], [], []>} : vector<16x64xf32>, vector<64x192xf32>, vector<16x192xf32> -> vector<16x192xf32>
    %c1_242 = arith.constant 1 : index
    %c0_243 = arith.constant 0 : index
    %c0_244 = arith.constant 0 : index
    %720 = vector.load %arg10[%c1_242, %c0_243, %c0_244] : memref<2x1x192xf32, #tpu.memory_space<vmem>>, vector<1x1x192xf32>
    %721 = vector.shape_cast %720 : vector<1x1x192xf32> to vector<1x192xf32>
    %722 = vector.broadcast %721 : vector<1x192xf32> to vector<16x192xf32>
    %723 = arith.addf %719, %722 : vector<16x192xf32>
    %724 = vector.extract_strided_slice %723 {offsets = [0, 0], sizes = [16, 16], strides = [1, 1]} : vector<16x192xf32> to vector<16x16xf32>
    %725 = vector.extract_strided_slice %723 {offsets = [0, 64], sizes = [16, 16], strides = [1, 1]} : vector<16x192xf32> to vector<16x16xf32>
    %726 = vector.extract_strided_slice %723 {offsets = [0, 128], sizes = [16, 16], strides = [1, 1]} : vector<16x192xf32> to vector<16x16xf32>
    %cst_245 = arith.constant dense<0.000000e+00> : vector<16x16xf32>
    %727 = tpu.matmul %724, %725, %cst_245 {dimension_numbers = #tpu.dot_dimension_numbers<[1], [1], [0], [0], [0, 0, 1, 0], [], []>} : vector<16x16xf32>, vector<16x16xf32>, vector<16x16xf32> -> vector<16x16xf32>
    %cst_246 = arith.constant 2.500000e-01 : f32
    %728 = vector.broadcast %cst_246 : f32 to vector<16x16xf32>
    %729 = arith.mulf %727, %728 : vector<16x16xf32>
    %730 = arith.addf %729, %520 : vector<16x16xf32>
    %cst_247 = arith.constant dense<0xFF800000> : vector<16xf32>
    %731 = vector.multi_reduction <maximumf>, %730, %cst_247 [1] : vector<16x16xf32> to vector<16xf32>
    %732 = vector.shape_cast %731 : vector<16xf32> to vector<16x1xf32>
    %733 = vector.broadcast %732 : vector<16x1xf32> to vector<16x16xf32>
    %734 = arith.subf %730, %733 : vector<16x16xf32>
    %735 = math.exp %734 : vector<16x16xf32>
    %cst_248 = arith.constant dense<0.000000e+00> : vector<16xf32>
    %736 = vector.multi_reduction <add>, %735, %cst_248 [1] : vector<16x16xf32> to vector<16xf32>
    %737 = vector.shape_cast %736 : vector<16xf32> to vector<16x1xf32>
    %738 = tpu.reciprocal %737 {approx = true} : vector<16x1xf32> -> vector<16x1xf32>
    %739 = vector.broadcast %738 : vector<16x1xf32> to vector<16x16xf32>
    %740 = arith.mulf %735, %739 : vector<16x16xf32>
    %cst_249 = arith.constant dense<0.000000e+00> : vector<16x16xf32>
    %741 = tpu.matmul %740, %726, %cst_249 {dimension_numbers = #tpu.dot_dimension_numbers<[1], [0], [0], [1], [0, 0, 1, 1], [], []>} : vector<16x16xf32>, vector<16x16xf32>, vector<16x16xf32> -> vector<16x16xf32>
    %742 = vector.extract_strided_slice %723 {offsets = [0, 16], sizes = [16, 16], strides = [1, 1]} : vector<16x192xf32> to vector<16x16xf32>
    %743 = vector.extract_strided_slice %723 {offsets = [0, 80], sizes = [16, 16], strides = [1, 1]} : vector<16x192xf32> to vector<16x16xf32>
    %744 = vector.extract_strided_slice %723 {offsets = [0, 144], sizes = [16, 16], strides = [1, 1]} : vector<16x192xf32> to vector<16x16xf32>
    %cst_250 = arith.constant dense<0.000000e+00> : vector<16x16xf32>
    %745 = tpu.matmul %742, %743, %cst_250 {dimension_numbers = #tpu.dot_dimension_numbers<[1], [1], [0], [0], [0, 0, 1, 0], [], []>} : vector<16x16xf32>, vector<16x16xf32>, vector<16x16xf32> -> vector<16x16xf32>
    %cst_251 = arith.constant 2.500000e-01 : f32
    %746 = vector.broadcast %cst_251 : f32 to vector<16x16xf32>
    %747 = arith.mulf %745, %746 : vector<16x16xf32>
    %748 = arith.addf %747, %520 : vector<16x16xf32>
    %cst_252 = arith.constant dense<0xFF800000> : vector<16xf32>
    %749 = vector.multi_reduction <maximumf>, %748, %cst_252 [1] : vector<16x16xf32> to vector<16xf32>
    %750 = vector.shape_cast %749 : vector<16xf32> to vector<16x1xf32>
    %751 = vector.broadcast %750 : vector<16x1xf32> to vector<16x16xf32>
    %752 = arith.subf %748, %751 : vector<16x16xf32>
    %753 = math.exp %752 : vector<16x16xf32>
    %cst_253 = arith.constant dense<0.000000e+00> : vector<16xf32>
    %754 = vector.multi_reduction <add>, %753, %cst_253 [1] : vector<16x16xf32> to vector<16xf32>
    %755 = vector.shape_cast %754 : vector<16xf32> to vector<16x1xf32>
    %756 = tpu.reciprocal %755 {approx = true} : vector<16x1xf32> -> vector<16x1xf32>
    %757 = vector.broadcast %756 : vector<16x1xf32> to vector<16x16xf32>
    %758 = arith.mulf %753, %757 : vector<16x16xf32>
    %cst_254 = arith.constant dense<0.000000e+00> : vector<16x16xf32>
    %759 = tpu.matmul %758, %744, %cst_254 {dimension_numbers = #tpu.dot_dimension_numbers<[1], [0], [0], [1], [0, 0, 1, 1], [], []>} : vector<16x16xf32>, vector<16x16xf32>, vector<16x16xf32> -> vector<16x16xf32>
    %760 = vector.extract_strided_slice %723 {offsets = [0, 32], sizes = [16, 16], strides = [1, 1]} : vector<16x192xf32> to vector<16x16xf32>
    %761 = vector.extract_strided_slice %723 {offsets = [0, 96], sizes = [16, 16], strides = [1, 1]} : vector<16x192xf32> to vector<16x16xf32>
    %762 = vector.extract_strided_slice %723 {offsets = [0, 160], sizes = [16, 16], strides = [1, 1]} : vector<16x192xf32> to vector<16x16xf32>
    %cst_255 = arith.constant dense<0.000000e+00> : vector<16x16xf32>
    %763 = tpu.matmul %760, %761, %cst_255 {dimension_numbers = #tpu.dot_dimension_numbers<[1], [1], [0], [0], [0, 0, 1, 0], [], []>} : vector<16x16xf32>, vector<16x16xf32>, vector<16x16xf32> -> vector<16x16xf32>
    %cst_256 = arith.constant 2.500000e-01 : f32
    %764 = vector.broadcast %cst_256 : f32 to vector<16x16xf32>
    %765 = arith.mulf %763, %764 : vector<16x16xf32>
    %766 = arith.addf %765, %520 : vector<16x16xf32>
    %cst_257 = arith.constant dense<0xFF800000> : vector<16xf32>
    %767 = vector.multi_reduction <maximumf>, %766, %cst_257 [1] : vector<16x16xf32> to vector<16xf32>
    %768 = vector.shape_cast %767 : vector<16xf32> to vector<16x1xf32>
    %769 = vector.broadcast %768 : vector<16x1xf32> to vector<16x16xf32>
    %770 = arith.subf %766, %769 : vector<16x16xf32>
    %771 = math.exp %770 : vector<16x16xf32>
    %cst_258 = arith.constant dense<0.000000e+00> : vector<16xf32>
    %772 = vector.multi_reduction <add>, %771, %cst_258 [1] : vector<16x16xf32> to vector<16xf32>
    %773 = vector.shape_cast %772 : vector<16xf32> to vector<16x1xf32>
    %774 = tpu.reciprocal %773 {approx = true} : vector<16x1xf32> -> vector<16x1xf32>
    %775 = vector.broadcast %774 : vector<16x1xf32> to vector<16x16xf32>
    %776 = arith.mulf %771, %775 : vector<16x16xf32>
    %cst_259 = arith.constant dense<0.000000e+00> : vector<16x16xf32>
    %777 = tpu.matmul %776, %762, %cst_259 {dimension_numbers = #tpu.dot_dimension_numbers<[1], [0], [0], [1], [0, 0, 1, 1], [], []>} : vector<16x16xf32>, vector<16x16xf32>, vector<16x16xf32> -> vector<16x16xf32>
    %778 = vector.extract_strided_slice %723 {offsets = [0, 48], sizes = [16, 16], strides = [1, 1]} : vector<16x192xf32> to vector<16x16xf32>
    %779 = vector.extract_strided_slice %723 {offsets = [0, 112], sizes = [16, 16], strides = [1, 1]} : vector<16x192xf32> to vector<16x16xf32>
    %780 = vector.extract_strided_slice %723 {offsets = [0, 176], sizes = [16, 16], strides = [1, 1]} : vector<16x192xf32> to vector<16x16xf32>
    %cst_260 = arith.constant dense<0.000000e+00> : vector<16x16xf32>
    %781 = tpu.matmul %778, %779, %cst_260 {dimension_numbers = #tpu.dot_dimension_numbers<[1], [1], [0], [0], [0, 0, 1, 0], [], []>} : vector<16x16xf32>, vector<16x16xf32>, vector<16x16xf32> -> vector<16x16xf32>
    %cst_261 = arith.constant 2.500000e-01 : f32
    %782 = vector.broadcast %cst_261 : f32 to vector<16x16xf32>
    %783 = arith.mulf %781, %782 : vector<16x16xf32>
    %784 = arith.addf %783, %520 : vector<16x16xf32>
    %cst_262 = arith.constant dense<0xFF800000> : vector<16xf32>
    %785 = vector.multi_reduction <maximumf>, %784, %cst_262 [1] : vector<16x16xf32> to vector<16xf32>
    %786 = vector.shape_cast %785 : vector<16xf32> to vector<16x1xf32>
    %787 = vector.broadcast %786 : vector<16x1xf32> to vector<16x16xf32>
    %788 = arith.subf %784, %787 : vector<16x16xf32>
    %789 = math.exp %788 : vector<16x16xf32>
    %cst_263 = arith.constant dense<0.000000e+00> : vector<16xf32>
    %790 = vector.multi_reduction <add>, %789, %cst_263 [1] : vector<16x16xf32> to vector<16xf32>
    %791 = vector.shape_cast %790 : vector<16xf32> to vector<16x1xf32>
    %792 = tpu.reciprocal %791 {approx = true} : vector<16x1xf32> -> vector<16x1xf32>
    %793 = vector.broadcast %792 : vector<16x1xf32> to vector<16x16xf32>
    %794 = arith.mulf %789, %793 : vector<16x16xf32>
    %cst_264 = arith.constant dense<0.000000e+00> : vector<16x16xf32>
    %795 = tpu.matmul %794, %780, %cst_264 {dimension_numbers = #tpu.dot_dimension_numbers<[1], [0], [0], [1], [0, 0, 1, 1], [], []>} : vector<16x16xf32>, vector<16x16xf32>, vector<16x16xf32> -> vector<16x16xf32>
    %796 = tpu.concatenate %741, %759, %777, %795 in 1 : vector<16x16xf32>, vector<16x16xf32>, vector<16x16xf32>, vector<16x16xf32> -> vector<16x64xf32>
    %c1_265 = arith.constant 1 : index
    %c0_266 = arith.constant 0 : index
    %c0_267 = arith.constant 0 : index
    %797 = vector.load %arg11[%c1_265, %c0_266, %c0_267] : memref<2x64x64xf32, #tpu.memory_space<vmem>>, vector<1x64x64xf32>
    %798 = vector.shape_cast %797 : vector<1x64x64xf32> to vector<64x64xf32>
    %cst_268 = arith.constant dense<0.000000e+00> : vector<16x64xf32>
    %799 = tpu.matmul %796, %798, %cst_268 {dimension_numbers = #tpu.dot_dimension_numbers<[1], [0], [0], [1], [0, 0, 1, 1], [], []>} : vector<16x64xf32>, vector<64x64xf32>, vector<16x64xf32> -> vector<16x64xf32>
    %c1_269 = arith.constant 1 : index
    %c0_270 = arith.constant 0 : index
    %c0_271 = arith.constant 0 : index
    %800 = vector.load %arg12[%c1_269, %c0_270, %c0_271] : memref<2x1x64xf32, #tpu.memory_space<vmem>>, vector<1x1x64xf32>
    %801 = vector.shape_cast %800 : vector<1x1x64xf32> to vector<1x64xf32>
    %802 = vector.broadcast %801 : vector<1x64xf32> to vector<16x64xf32>
    %803 = arith.addf %799, %802 : vector<16x64xf32>
    %804 = arith.addf %716, %803 : vector<16x64xf32>
    %c1_272 = arith.constant 1 : index
    %c0_273 = arith.constant 0 : index
    %c0_274 = arith.constant 0 : index
    %805 = vector.load %arg13[%c1_272, %c0_273, %c0_274] : memref<2x1x64xf32, #tpu.memory_space<vmem>>, vector<1x1x64xf32>
    %806 = vector.shape_cast %805 : vector<1x1x64xf32> to vector<1x64xf32>
    %c1_275 = arith.constant 1 : index
    %c0_276 = arith.constant 0 : index
    %c0_277 = arith.constant 0 : index
    %807 = vector.load %arg14[%c1_275, %c0_276, %c0_277] : memref<2x1x64xf32, #tpu.memory_space<vmem>>, vector<1x1x64xf32>
    %808 = vector.shape_cast %807 : vector<1x1x64xf32> to vector<1x64xf32>
    %cst_278 = arith.constant dense<0.000000e+00> : vector<16xf32>
    %809 = vector.multi_reduction <add>, %804, %cst_278 [1] : vector<16x64xf32> to vector<16xf32>
    %810 = vector.shape_cast %809 : vector<16xf32> to vector<16x1xf32>
    %cst_279 = arith.constant 6.400000e+01 : f32
    %811 = vector.broadcast %cst_279 : f32 to vector<16x1xf32>
    %812 = arith.divf %810, %811 : vector<16x1xf32>
    %813 = vector.broadcast %812 : vector<16x1xf32> to vector<16x64xf32>
    %814 = arith.subf %804, %813 : vector<16x64xf32>
    %815 = arith.mulf %814, %814 : vector<16x64xf32>
    %cst_280 = arith.constant dense<0.000000e+00> : vector<16xf32>
    %816 = vector.multi_reduction <add>, %815, %cst_280 [1] : vector<16x64xf32> to vector<16xf32>
    %817 = vector.shape_cast %816 : vector<16xf32> to vector<16x1xf32>
    %cst_281 = arith.constant 6.400000e+01 : f32
    %818 = vector.broadcast %cst_281 : f32 to vector<16x1xf32>
    %819 = arith.divf %817, %818 : vector<16x1xf32>
    %820 = vector.broadcast %812 : vector<16x1xf32> to vector<16x64xf32>
    %821 = arith.subf %804, %820 : vector<16x64xf32>
    %cst_282 = arith.constant 9.99999974E-6 : f32
    %822 = vector.broadcast %cst_282 : f32 to vector<16x1xf32>
    %823 = arith.addf %819, %822 : vector<16x1xf32>
    %824 = math.rsqrt %823 : vector<16x1xf32>
    %825 = vector.broadcast %824 : vector<16x1xf32> to vector<16x64xf32>
    %826 = arith.mulf %821, %825 : vector<16x64xf32>
    %827 = vector.broadcast %806 : vector<1x64xf32> to vector<16x64xf32>
    %828 = arith.mulf %826, %827 : vector<16x64xf32>
    %829 = vector.broadcast %808 : vector<1x64xf32> to vector<16x64xf32>
    %830 = arith.addf %828, %829 : vector<16x64xf32>
    %c1_283 = arith.constant 1 : index
    %c0_284 = arith.constant 0 : index
    %c0_285 = arith.constant 0 : index
    %831 = vector.load %arg15[%c1_283, %c0_284, %c0_285] : memref<2x64x128xf32, #tpu.memory_space<vmem>>, vector<1x64x128xf32>
    %832 = vector.shape_cast %831 : vector<1x64x128xf32> to vector<64x128xf32>
    %cst_286 = arith.constant dense<0.000000e+00> : vector<16x128xf32>
    %833 = tpu.matmul %830, %832, %cst_286 {dimension_numbers = #tpu.dot_dimension_numbers<[1], [0], [0], [1], [0, 0, 1, 1], [], []>} : vector<16x64xf32>, vector<64x128xf32>, vector<16x128xf32> -> vector<16x128xf32>
    %c1_287 = arith.constant 1 : index
    %c0_288 = arith.constant 0 : index
    %c0_289 = arith.constant 0 : index
    %834 = vector.load %arg16[%c1_287, %c0_288, %c0_289] : memref<2x1x128xf32, #tpu.memory_space<vmem>>, vector<1x1x128xf32>
    %835 = vector.shape_cast %834 : vector<1x1x128xf32> to vector<1x128xf32>
    %836 = vector.broadcast %835 : vector<1x128xf32> to vector<16x128xf32>
    %837 = arith.addf %833, %836 : vector<16x128xf32>
    %cst_290 = arith.constant 0.000000e+00 : f32
    %838 = vector.broadcast %cst_290 : f32 to vector<16x128xf32>
    %839 = arith.maximumf %837, %838 : vector<16x128xf32>
    %c1_291 = arith.constant 1 : index
    %c0_292 = arith.constant 0 : index
    %c0_293 = arith.constant 0 : index
    %840 = vector.load %arg17[%c1_291, %c0_292, %c0_293] : memref<2x128x64xf32, #tpu.memory_space<vmem>>, vector<1x128x64xf32>
    %841 = vector.shape_cast %840 : vector<1x128x64xf32> to vector<128x64xf32>
    %cst_294 = arith.constant dense<0.000000e+00> : vector<16x64xf32>
    %842 = tpu.matmul %839, %841, %cst_294 {dimension_numbers = #tpu.dot_dimension_numbers<[1], [0], [0], [1], [0, 0, 1, 1], [], []>} : vector<16x128xf32>, vector<128x64xf32>, vector<16x64xf32> -> vector<16x64xf32>
    %c1_295 = arith.constant 1 : index
    %c0_296 = arith.constant 0 : index
    %c0_297 = arith.constant 0 : index
    %843 = vector.load %arg18[%c1_295, %c0_296, %c0_297] : memref<2x1x64xf32, #tpu.memory_space<vmem>>, vector<1x1x64xf32>
    %844 = vector.shape_cast %843 : vector<1x1x64xf32> to vector<1x64xf32>
    %845 = vector.broadcast %844 : vector<1x64xf32> to vector<16x64xf32>
    %846 = arith.addf %842, %845 : vector<16x64xf32>
    %847 = arith.addf %830, %846 : vector<16x64xf32>
    %c1_298 = arith.constant 1 : index
    %c0_299 = arith.constant 0 : index
    %c0_300 = arith.constant 0 : index
    %848 = vector.load %arg19[%c1_298, %c0_299, %c0_300] : memref<2x1x64xf32, #tpu.memory_space<vmem>>, vector<1x1x64xf32>
    %849 = vector.shape_cast %848 : vector<1x1x64xf32> to vector<1x64xf32>
    %c1_301 = arith.constant 1 : index
    %c0_302 = arith.constant 0 : index
    %c0_303 = arith.constant 0 : index
    %850 = vector.load %arg20[%c1_301, %c0_302, %c0_303] : memref<2x1x64xf32, #tpu.memory_space<vmem>>, vector<1x1x64xf32>
    %851 = vector.shape_cast %850 : vector<1x1x64xf32> to vector<1x64xf32>
    %cst_304 = arith.constant dense<0.000000e+00> : vector<16xf32>
    %852 = vector.multi_reduction <add>, %847, %cst_304 [1] : vector<16x64xf32> to vector<16xf32>
    %853 = vector.shape_cast %852 : vector<16xf32> to vector<16x1xf32>
    %cst_305 = arith.constant 6.400000e+01 : f32
    %854 = vector.broadcast %cst_305 : f32 to vector<16x1xf32>
    %855 = arith.divf %853, %854 : vector<16x1xf32>
    %856 = vector.broadcast %855 : vector<16x1xf32> to vector<16x64xf32>
    %857 = arith.subf %847, %856 : vector<16x64xf32>
    %858 = arith.mulf %857, %857 : vector<16x64xf32>
    %cst_306 = arith.constant dense<0.000000e+00> : vector<16xf32>
    %859 = vector.multi_reduction <add>, %858, %cst_306 [1] : vector<16x64xf32> to vector<16xf32>
    %860 = vector.shape_cast %859 : vector<16xf32> to vector<16x1xf32>
    %cst_307 = arith.constant 6.400000e+01 : f32
    %861 = vector.broadcast %cst_307 : f32 to vector<16x1xf32>
    %862 = arith.divf %860, %861 : vector<16x1xf32>
    %863 = vector.broadcast %855 : vector<16x1xf32> to vector<16x64xf32>
    %864 = arith.subf %847, %863 : vector<16x64xf32>
    %cst_308 = arith.constant 9.99999974E-6 : f32
    %865 = vector.broadcast %cst_308 : f32 to vector<16x1xf32>
    %866 = arith.addf %862, %865 : vector<16x1xf32>
    %867 = math.rsqrt %866 : vector<16x1xf32>
    %868 = vector.broadcast %867 : vector<16x1xf32> to vector<16x64xf32>
    %869 = arith.mulf %864, %868 : vector<16x64xf32>
    %870 = vector.broadcast %849 : vector<1x64xf32> to vector<16x64xf32>
    %871 = arith.mulf %869, %870 : vector<16x64xf32>
    %872 = vector.broadcast %851 : vector<1x64xf32> to vector<16x64xf32>
    %873 = arith.addf %871, %872 : vector<16x64xf32>
    %c1_309 = arith.constant 1 : index
    %c0_310 = arith.constant 0 : index
    %c0_311 = arith.constant 0 : index
    %874 = vector.load %arg21[%c1_309, %c0_310, %c0_311] : memref<2x64x64xf32, #tpu.memory_space<vmem>>, vector<1x64x64xf32>
    %875 = vector.shape_cast %874 : vector<1x64x64xf32> to vector<64x64xf32>
    %c1_312 = arith.constant 1 : index
    %c0_313 = arith.constant 0 : index
    %c0_314 = arith.constant 0 : index
    %876 = vector.load %arg22[%c1_312, %c0_313, %c0_314] : memref<2x1x64xf32, #tpu.memory_space<vmem>>, vector<1x1x64xf32>
    %877 = vector.shape_cast %876 : vector<1x1x64xf32> to vector<1x64xf32>
    %c1_315 = arith.constant 1 : index
    %c0_316 = arith.constant 0 : index
    %c0_317 = arith.constant 0 : index
    %878 = vector.load %arg23[%c1_315, %c0_316, %c0_317] : memref<2x64x64xf32, #tpu.memory_space<vmem>>, vector<1x64x64xf32>
    %879 = vector.shape_cast %878 : vector<1x64x64xf32> to vector<64x64xf32>
    %c1_318 = arith.constant 1 : index
    %c0_319 = arith.constant 0 : index
    %c0_320 = arith.constant 0 : index
    %880 = vector.load %arg24[%c1_318, %c0_319, %c0_320] : memref<2x1x64xf32, #tpu.memory_space<vmem>>, vector<1x1x64xf32>
    %881 = vector.shape_cast %880 : vector<1x1x64xf32> to vector<1x64xf32>
    %c1_321 = arith.constant 1 : index
    %c0_322 = arith.constant 0 : index
    %c0_323 = arith.constant 0 : index
    %882 = vector.load %arg25[%c1_321, %c0_322, %c0_323] : memref<2x64x64xf32, #tpu.memory_space<vmem>>, vector<1x64x64xf32>
    %883 = vector.shape_cast %882 : vector<1x64x64xf32> to vector<64x64xf32>
    %c1_324 = arith.constant 1 : index
    %c0_325 = arith.constant 0 : index
    %c0_326 = arith.constant 0 : index
    %884 = vector.load %arg26[%c1_324, %c0_325, %c0_326] : memref<2x1x64xf32, #tpu.memory_space<vmem>>, vector<1x1x64xf32>
    %885 = vector.shape_cast %884 : vector<1x1x64xf32> to vector<1x64xf32>
    %cst_327 = arith.constant dense<0.000000e+00> : vector<16x64xf32>
    %886 = tpu.matmul %873, %875, %cst_327 {dimension_numbers = #tpu.dot_dimension_numbers<[1], [0], [0], [1], [0, 0, 1, 1], [], []>} : vector<16x64xf32>, vector<64x64xf32>, vector<16x64xf32> -> vector<16x64xf32>
    %887 = vector.broadcast %877 : vector<1x64xf32> to vector<16x64xf32>
    %888 = arith.addf %886, %887 : vector<16x64xf32>
    %cst_328 = arith.constant 0.000000e+00 : f32
    %889 = vector.broadcast %cst_328 : f32 to vector<16x64xf32>
    %890 = arith.cmpf ogt, %888, %889 : vector<16x64xf32>
    %cst_329 = arith.constant 0.000000e+00 : f32
    %891 = vector.broadcast %cst_329 : f32 to vector<16x64xf32>
    %892 = arith.minimumf %888, %891 : vector<16x64xf32>
    %893 = math.exp %892 : vector<16x64xf32>
    %cst_330 = arith.constant 1.000000e+00 : f32
    %894 = vector.broadcast %cst_330 : f32 to vector<16x64xf32>
    %895 = arith.subf %893, %894 : vector<16x64xf32>
    %896 = arith.select %890, %888, %895 : vector<16x64xi1>, vector<16x64xf32>
    %cst_331 = arith.constant dense<0.000000e+00> : vector<16x64xf32>
    %897 = tpu.matmul %896, %879, %cst_331 {dimension_numbers = #tpu.dot_dimension_numbers<[1], [0], [0], [1], [0, 0, 1, 1], [], []>} : vector<16x64xf32>, vector<64x64xf32>, vector<16x64xf32> -> vector<16x64xf32>
    %898 = vector.broadcast %881 : vector<1x64xf32> to vector<16x64xf32>
    %899 = arith.addf %897, %898 : vector<16x64xf32>
    %cst_332 = arith.constant dense<0.000000e+00> : vector<16x64xf32>
    %900 = tpu.matmul %899, %883, %cst_332 {dimension_numbers = #tpu.dot_dimension_numbers<[1], [0], [0], [1], [0, 0, 1, 1], [], []>} : vector<16x64xf32>, vector<64x64xf32>, vector<16x64xf32> -> vector<16x64xf32>
    %901 = vector.broadcast %885 : vector<1x64xf32> to vector<16x64xf32>
    %902 = arith.addf %900, %901 : vector<16x64xf32>
    %903 = arith.negf %902 : vector<16x64xf32>
    %904 = math.exp %903 : vector<16x64xf32>
    %cst_333 = arith.constant 1.000000e+00 : f32
    %905 = vector.broadcast %cst_333 : f32 to vector<16x64xf32>
    %906 = arith.addf %905, %904 : vector<16x64xf32>
    %907 = arith.divf %905, %906 : vector<16x64xf32>
    %908 = arith.mulf %907, %899 : vector<16x64xf32>
    %cst_334 = arith.constant 1.000000e+00 : f32
    %909 = vector.broadcast %cst_334 : f32 to vector<16x64xf32>
    %910 = arith.subf %909, %907 : vector<16x64xf32>
    %911 = arith.mulf %910, %873 : vector<16x64xf32>
    %912 = arith.addf %908, %911 : vector<16x64xf32>
    %c0_335 = arith.constant 0 : index
    %c0_336 = arith.constant 0 : index
    %913 = vector.load %arg3[%c0_335, %c0_336] : memref<2x16xf32, #tpu.memory_space<vmem>>, vector<2x16xf32>
    %cst_337 = arith.constant dense<0.000000e+00> : vector<2x64xf32>
    %914 = tpu.matmul %913, %912, %cst_337 {dimension_numbers = #tpu.dot_dimension_numbers<[1], [0], [0], [1], [0, 0, 1, 1], [], []>} : vector<2x16xf32>, vector<16x64xf32>, vector<2x64xf32> -> vector<2x64xf32>
    %915 = tpu.concatenate %914, %513 in 1 : vector<2x64xf32>, vector<2x64xf32> -> vector<2x128xf32>
    %c0_338 = arith.constant 0 : index
    %c0_339 = arith.constant 0 : index
    %916 = vector.load %arg27[%c0_338, %c0_339] : memref<128x256xf32, #tpu.memory_space<vmem>>, vector<128x256xf32>
    %cst_340 = arith.constant dense<0.000000e+00> : vector<2x256xf32>
    %917 = tpu.matmul %915, %916, %cst_340 {dimension_numbers = #tpu.dot_dimension_numbers<[1], [0], [0], [1], [0, 0, 1, 1], [], []>} : vector<2x128xf32>, vector<128x256xf32>, vector<2x256xf32> -> vector<2x256xf32>
    %c0_341 = arith.constant 0 : index
    %c0_342 = arith.constant 0 : index
    %918 = vector.load %arg28[%c0_341, %c0_342] : memref<1x256xf32, #tpu.memory_space<vmem>>, vector<1x256xf32>
    %919 = vector.broadcast %918 : vector<1x256xf32> to vector<2x256xf32>
    %920 = arith.addf %917, %919 : vector<2x256xf32>
    %921 = vector.extract_strided_slice %920 {offsets = [0, 0], sizes = [2, 64], strides = [1, 1]} : vector<2x256xf32> to vector<2x64xf32>
    %922 = arith.negf %921 : vector<2x64xf32>
    %923 = math.exp %922 : vector<2x64xf32>
    %cst_343 = arith.constant 1.000000e+00 : f32
    %924 = vector.broadcast %cst_343 : f32 to vector<2x64xf32>
    %925 = arith.addf %924, %923 : vector<2x64xf32>
    %926 = arith.divf %924, %925 : vector<2x64xf32>
    %927 = vector.extract_strided_slice %920 {offsets = [0, 64], sizes = [2, 64], strides = [1, 1]} : vector<2x256xf32> to vector<2x64xf32>
    %928 = arith.negf %927 : vector<2x64xf32>
    %929 = math.exp %928 : vector<2x64xf32>
    %cst_344 = arith.constant 1.000000e+00 : f32
    %930 = vector.broadcast %cst_344 : f32 to vector<2x64xf32>
    %931 = arith.addf %930, %929 : vector<2x64xf32>
    %932 = arith.divf %930, %931 : vector<2x64xf32>
    %933 = vector.extract_strided_slice %920 {offsets = [0, 128], sizes = [2, 64], strides = [1, 1]} : vector<2x256xf32> to vector<2x64xf32>
    %934 = math.tanh %933 : vector<2x64xf32>
    %935 = vector.extract_strided_slice %920 {offsets = [0, 192], sizes = [2, 64], strides = [1, 1]} : vector<2x256xf32> to vector<2x64xf32>
    %936 = arith.negf %935 : vector<2x64xf32>
    %937 = math.exp %936 : vector<2x64xf32>
    %cst_345 = arith.constant 1.000000e+00 : f32
    %938 = vector.broadcast %cst_345 : f32 to vector<2x64xf32>
    %939 = arith.addf %938, %937 : vector<2x64xf32>
    %940 = arith.divf %938, %939 : vector<2x64xf32>
    %941 = arith.mulf %932, %511 : vector<2x64xf32>
    %942 = arith.mulf %926, %934 : vector<2x64xf32>
    %943 = arith.addf %941, %942 : vector<2x64xf32>
    %944 = math.tanh %943 : vector<2x64xf32>
    %945 = arith.mulf %940, %944 : vector<2x64xf32>
    %c0_346 = arith.constant 0 : index
    %c0_347 = arith.constant 0 : index
    %946 = vector.load %arg29[%c0_346, %c0_347] : memref<64x64xf32, #tpu.memory_space<vmem>>, vector<64x64xf32>
    %c0_348 = arith.constant 0 : index
    %c0_349 = arith.constant 0 : index
    %947 = vector.load %arg30[%c0_348, %c0_349] : memref<1x64xf32, #tpu.memory_space<vmem>>, vector<1x64xf32>
    %c0_350 = arith.constant 0 : index
    %c0_351 = arith.constant 0 : index
    %948 = vector.load %arg31[%c0_350, %c0_351] : memref<64x64xf32, #tpu.memory_space<vmem>>, vector<64x64xf32>
    %c0_352 = arith.constant 0 : index
    %c0_353 = arith.constant 0 : index
    %949 = vector.load %arg32[%c0_352, %c0_353] : memref<1x64xf32, #tpu.memory_space<vmem>>, vector<1x64xf32>
    %c0_354 = arith.constant 0 : index
    %c0_355 = arith.constant 0 : index
    %950 = vector.load %arg33[%c0_354, %c0_355] : memref<64x64xf32, #tpu.memory_space<vmem>>, vector<64x64xf32>
    %c0_356 = arith.constant 0 : index
    %c0_357 = arith.constant 0 : index
    %951 = vector.load %arg34[%c0_356, %c0_357] : memref<1x64xf32, #tpu.memory_space<vmem>>, vector<1x64xf32>
    %cst_358 = arith.constant dense<0.000000e+00> : vector<2x64xf32>
    %952 = tpu.matmul %945, %946, %cst_358 {dimension_numbers = #tpu.dot_dimension_numbers<[1], [0], [0], [1], [0, 0, 1, 1], [], []>} : vector<2x64xf32>, vector<64x64xf32>, vector<2x64xf32> -> vector<2x64xf32>
    %953 = vector.broadcast %947 : vector<1x64xf32> to vector<2x64xf32>
    %954 = arith.addf %952, %953 : vector<2x64xf32>
    %cst_359 = arith.constant 0.000000e+00 : f32
    %955 = vector.broadcast %cst_359 : f32 to vector<2x64xf32>
    %956 = arith.cmpf ogt, %954, %955 : vector<2x64xf32>
    %cst_360 = arith.constant 0.000000e+00 : f32
    %957 = vector.broadcast %cst_360 : f32 to vector<2x64xf32>
    %958 = arith.minimumf %954, %957 : vector<2x64xf32>
    %959 = math.exp %958 : vector<2x64xf32>
    %cst_361 = arith.constant 1.000000e+00 : f32
    %960 = vector.broadcast %cst_361 : f32 to vector<2x64xf32>
    %961 = arith.subf %959, %960 : vector<2x64xf32>
    %962 = arith.select %956, %954, %961 : vector<2x64xi1>, vector<2x64xf32>
    %cst_362 = arith.constant dense<0.000000e+00> : vector<2x64xf32>
    %963 = tpu.matmul %962, %948, %cst_362 {dimension_numbers = #tpu.dot_dimension_numbers<[1], [0], [0], [1], [0, 0, 1, 1], [], []>} : vector<2x64xf32>, vector<64x64xf32>, vector<2x64xf32> -> vector<2x64xf32>
    %964 = vector.broadcast %949 : vector<1x64xf32> to vector<2x64xf32>
    %965 = arith.addf %963, %964 : vector<2x64xf32>
    %cst_363 = arith.constant dense<0.000000e+00> : vector<2x64xf32>
    %966 = tpu.matmul %965, %950, %cst_363 {dimension_numbers = #tpu.dot_dimension_numbers<[1], [0], [0], [1], [0, 0, 1, 1], [], []>} : vector<2x64xf32>, vector<64x64xf32>, vector<2x64xf32> -> vector<2x64xf32>
    %967 = vector.broadcast %951 : vector<1x64xf32> to vector<2x64xf32>
    %968 = arith.addf %966, %967 : vector<2x64xf32>
    %969 = arith.negf %968 : vector<2x64xf32>
    %970 = math.exp %969 : vector<2x64xf32>
    %cst_364 = arith.constant 1.000000e+00 : f32
    %971 = vector.broadcast %cst_364 : f32 to vector<2x64xf32>
    %972 = arith.addf %971, %970 : vector<2x64xf32>
    %973 = arith.divf %971, %972 : vector<2x64xf32>
    %974 = arith.mulf %973, %965 : vector<2x64xf32>
    %cst_365 = arith.constant 1.000000e+00 : f32
    %975 = vector.broadcast %cst_365 : f32 to vector<2x64xf32>
    %976 = arith.subf %975, %973 : vector<2x64xf32>
    %977 = arith.mulf %976, %945 : vector<2x64xf32>
    %978 = arith.addf %974, %977 : vector<2x64xf32>
    %c0_366 = arith.constant 0 : index
    %c0_367 = arith.constant 0 : index
    %979 = vector.load %arg35[%c0_366, %c0_367] : memref<64x32xf32, #tpu.memory_space<vmem>>, vector<64x32xf32>
    %cst_368 = arith.constant dense<0.000000e+00> : vector<2x32xf32>
    %980 = tpu.matmul %978, %979, %cst_368 {dimension_numbers = #tpu.dot_dimension_numbers<[1], [0], [0], [1], [0, 0, 1, 1], [], []>} : vector<2x64xf32>, vector<64x32xf32>, vector<2x32xf32> -> vector<2x32xf32>
    %c0_369 = arith.constant 0 : index
    %c0_370 = arith.constant 0 : index
    %981 = vector.load %arg36[%c0_369, %c0_370] : memref<1x32xf32, #tpu.memory_space<vmem>>, vector<1x32xf32>
    %982 = vector.broadcast %981 : vector<1x32xf32> to vector<2x32xf32>
    %983 = arith.addf %980, %982 : vector<2x32xf32>
    %c0_371 = arith.constant 0 : index
    %c0_372 = arith.constant 0 : index
    %984 = vector.load %arg37[%c0_371, %c0_372] : memref<2x32xf32, #tpu.memory_space<vmem>>, vector<2x32xf32>
    tpu.vector_store %arg37[%c0_371, %c0_372], %983 {strides = array<i32>} : memref<2x32xf32, #tpu.memory_space<vmem>>, vector<2x32xf32>,
    return
  }
}

</mosaic_0001>

<llo_original>
// kernel: tft_forward_fused.1
$region0: #{tft_forward_fused.1}
  #allocation0 [shape = 'u32[]', space=smem, size = 0x4, offset = 0x4, fixed_abs, tag = 'smem constant byte address 0x4 - core index']
  #allocation1 [shape = 'u32[72,128]{1,0:T(1,128)}', space=vmem, size = 0x9000, scoped, tag = 'internal scratch']
  #allocation2 [shape = 'f32[16,64]{1,0:T(8,128)}', space=vmem, size = 0x2000, scoped, tag = 'scratch operand']
  #allocation3 [shape = 'f32[2,128]{1,0:T(2,128)}', space=vmem, size = 0x400, scoped, tag = 'scratch operand']
  %s0 = inlined_call_operand.smem [shape: u32[38], index: -1, kind: input, shape index: {}]
  %s1 = sld [smem:[%s0]]
  %s2 = scalar_lea.smem %s0, 1
  %s3 = sld [smem:[%s2]]
  %s4 = scalar_lea.smem %s0, 2
  %s5 = sld [smem:[%s4]]
  %s6 = scalar_lea.smem %s0, 3
  %s7 = sld [smem:[%s6]]
  %s8 = scalar_lea.smem %s0, 4
  %s9 = sld [smem:[%s8]]
  %s10 = scalar_lea.smem %s0, 5
  %s11 = sld [smem:[%s10]]
  %s12 = scalar_lea.smem %s0, 6
  %s13 = sld [smem:[%s12]]
  %s14 = scalar_lea.smem %s0, 7
  %s15 = sld [smem:[%s14]]
  %s16 = scalar_lea.smem %s0, 8
  %s17 = sld [smem:[%s16]]
  %s18 = scalar_lea.smem %s0, 9
  %s19 = sld [smem:[%s18]]
  %s20 = scalar_lea.smem %s0, 10
  %s21 = sld [smem:[%s20]]
  %s22 = scalar_lea.smem %s0, 11
  %s23 = sld [smem:[%s22]]
  %s24 = scalar_lea.smem %s0, 12
  %s25 = sld [smem:[%s24]]
  %s26 = scalar_lea.smem %s0, 13
  %s27 = sld [smem:[%s26]]
  %s28 = scalar_lea.smem %s0, 14
  %s29 = sld [smem:[%s28]]
  %s30 = scalar_lea.smem %s0, 15
  %s31 = sld [smem:[%s30]]
  %s32 = scalar_lea.smem %s0, 16
  %s33 = sld [smem:[%s32]]
  %s34 = scalar_lea.smem %s0, 17
  %s35 = sld [smem:[%s34]]
  %s36 = scalar_lea.smem %s0, 18
  %s37 = sld [smem:[%s36]]
  %s38 = scalar_lea.smem %s0, 19
  %s39 = sld [smem:[%s38]]
  %s40 = scalar_lea.smem %s0, 20
  %s41 = sld [smem:[%s40]]
  %s42 = scalar_lea.smem %s0, 21
  %s43 = sld [smem:[%s42]]
  %s44 = scalar_lea.smem %s0, 22
  %s45 = sld [smem:[%s44]]
  %s46 = scalar_lea.smem %s0, 23
  %s47 = sld [smem:[%s46]]
  %s48 = scalar_lea.smem %s0, 24
  %s49 = sld [smem:[%s48]]
  %s50 = scalar_lea.smem %s0, 25
  %s51 = sld [smem:[%s50]]
  %s52 = scalar_lea.smem %s0, 26
  %s53 = sld [smem:[%s52]]
  %s54 = scalar_lea.smem %s0, 27
  %s55 = sld [smem:[%s54]]
  %s56 = scalar_lea.smem %s0, 28
  %s57 = sld [smem:[%s56]]
  %s58 = scalar_lea.smem %s0, 29
  %s59 = sld [smem:[%s58]]
  %s60 = scalar_lea.smem %s0, 30
  %s61 = sld [smem:[%s60]]
  %s62 = scalar_lea.smem %s0, 31
  %s63 = sld [smem:[%s62]]
  %s64 = scalar_lea.smem %s0, 32
  %s65 = sld [smem:[%s64]]
  %s66 = scalar_lea.smem %s0, 33
  %s67 = sld [smem:[%s66]]
  %s68 = scalar_lea.smem %s0, 34
  %s69 = sld [smem:[%s68]]
  %s70 = scalar_lea.smem %s0, 35
  %s71 = sld [smem:[%s70]]
  %s72 = scalar_lea.smem %s0, 36
  %s73 = sld [smem:[%s72]]
  %s74 = scalar_lea.smem %s0, 37
  %s75 = sld [smem:[%s74]]
  %s76 = sld [smem:[#allocation0]]
  $region282: #{tft_forward_fused.1} parent=0
    _
  %s78 = ssub.s32 1, %s76
  %s79 = scalar_select 0, %s78, %s76
  $region1: #{tft_forward_fused.1} parent=0
    #allocation4 [shape = 'u8[8192]{0}', space=vmem, size = 0x2000, scoped, tag = 'input window, operand 1, single buffered']
    #allocation5 [shape = 's32[1]{0}', space=sflag, size = 0x4, scoped, tag = 'scoped memory for tft_forward_fused.1']
    #allocation6 [shape = 's32[1]{0}', space=sflag, size = 0x4, scoped, tag = 'scoped memory for tft_forward_fused.1']
    #allocation7 [shape = 'u8[8192]{0}', space=vmem, size = 0x2000, scoped, tag = 'input window, operand 2, single buffered']
    #allocation8 [shape = 's32[1]{0}', space=sflag, size = 0x4, scoped, tag = 'scoped memory for tft_forward_fused.1']
    #allocation9 [shape = 'u8[1024]{0}', space=vmem, size = 0x400, scoped, tag = 'input window, operand 3, single buffered']
    #allocation10 [shape = 'u8[16384]{0}', space=vmem, size = 0x4000, scoped, tag = 'input window, operand 4, single buffered']
    #allocation11 [shape = 's32[1]{0}', space=sflag, size = 0x4, scoped, tag = 'scoped memory for tft_forward_fused.1']
    #allocation12 [shape = 'u8[1024]{0}', space=vmem, size = 0x400, scoped, tag = 'input window, operand 5, single buffered']
    #allocation13 [shape = 'u8[262144]{0}', space=vmem, size = 0x40000, scoped, tag = 'input window, operand 6, single buffered']
    #allocation14 [shape = 's32[1]{0}', space=sflag, size = 0x4, scoped, tag = 'scoped memory for tft_forward_fused.1']
    #allocation15 [shape = 'u8[1024]{0}', space=vmem, size = 0x400, scoped, tag = 'input window, operand 8, single buffered']
    #allocation16 [shape = 'u8[2048]{0}', space=vmem, size = 0x800, scoped, tag = 'input window, operand 10, single buffered']
    #allocation17 [shape = 's32[1]{0}', space=sflag, size = 0x4, scoped, tag = 'scoped memory for tft_forward_fused.1']
    #allocation18 [shape = 'u8[65536]{0}', space=vmem, size = 0x10000, scoped, tag = 'input window, operand 11, single buffered']
    #allocation19 [shape = 'u8[1024]{0}', space=vmem, size = 0x400, scoped, tag = 'input window, operand 12, single buffered']
    #allocation20 [shape = 's32[1]{0}', space=sflag, size = 0x4, scoped, tag = 'scoped memory for tft_forward_fused.1']
    #allocation21 [shape = 'u8[1024]{0}', space=vmem, size = 0x400, scoped, tag = 'input window, operand 13, single buffered']
    #allocation22 [shape = 'u8[1024]{0}', space=vmem, size = 0x400, scoped, tag = 'input window, operand 14, single buffered']
    #allocation23 [shape = 's32[1]{0}', space=sflag, size = 0x4, scoped, tag = 'scoped memory for tft_forward_fused.1']
    #allocation24 [shape = 'u8[65536]{0}', space=vmem, size = 0x10000, scoped, tag = 'input window, operand 15, single buffered']
    #allocation25 [shape = 'u8[1024]{0}', space=vmem, size = 0x400, scoped, tag = 'input window, operand 16, single buffered']
    #allocation26 [shape = 's32[1]{0}', space=sflag, size = 0x4, scoped, tag = 'scoped memory for tft_forward_fused.1']
    #allocation27 [shape = 'u8[1024]{0}', space=vmem, size = 0x400, scoped, tag = 'input window, operand 18, single buffered']
    #allocation28 [shape = 'u8[1024]{0}', space=vmem, size = 0x400, scoped, tag = 'input window, operand 19, single buffered']
    #allocation29 [shape = 's32[1]{0}', space=sflag, size = 0x4, scoped, tag = 'scoped memory for tft_forward_fused.1']
    #allocation30 [shape = 'u8[1024]{0}', space=vmem, size = 0x400, scoped, tag = 'input window, operand 20, single buffered']
    #allocation31 [shape = 'u8[65536]{0}', space=vmem, size = 0x10000, scoped, tag = 'input window, operand 21, single buffered']
    #allocation32 [shape = 's32[1]{0}', space=sflag, size = 0x4, scoped, tag = 'scoped memory for tft_forward_fused.1']
    #allocation33 [shape = 'u8[1024]{0}', space=vmem, size = 0x400, scoped, tag = 'input window, operand 22, single buffered']
    #allocation34 [shape = 'u8[65536]{0}', space=vmem, size = 0x10000, scoped, tag = 'input window, operand 23, single buffered']
    #allocation35 [shape = 's32[1]{0}', space=sflag, size = 0x4, scoped, tag = 'scoped memory for tft_forward_fused.1']
    #allocation36 [shape = 'u8[1024]{0}', space=vmem, size = 0x400, scoped, tag = 'input window, operand 24, single buffered']
    #allocation37 [shape = 'u8[65536]{0}', space=vmem, size = 0x10000, scoped, tag = 'input window, operand 25, single buffered']
    #allocation38 [shape = 's32[1]{0}', space=sflag, size = 0x4, scoped, tag = 'scoped memory for tft_forward_fused.1']
    #allocation39 [shape = 'u8[1024]{0}', space=vmem, size = 0x400, scoped, tag = 'input window, operand 26, single buffered']
    #allocation40 [shape = 'u8[131072]{0}', space=vmem, size = 0x20000, scoped, tag = 'input window, operand 27, single buffered']
    #allocation41 [shape = 's32[1]{0}', space=sflag, size = 0x4, scoped, tag = 'scoped memory for tft_forward_fused.1']
    #allocation42 [shape = 'u8[1024]{0}', space=vmem, size = 0x400, scoped, tag = 'input window, operand 28, single buffered']
    #allocation43 [shape = 'u8[32768]{0}', space=vmem, size = 0x8000, scoped, tag = 'input window, operand 29, single buffered']
    #allocation44 [shape = 's32[1]{0}', space=sflag, size = 0x4, scoped, tag = 'scoped memory for tft_forward_fused.1']
    #allocation45 [shape = 'u8[512]{0}', space=vmem, size = 0x400, scoped, tag = 'input window, operand 30, single buffered']
    #allocation46 [shape = 'u8[32768]{0}', space=vmem, size = 0x8000, scoped, tag = 'input window, operand 31, single buffered']
    #allocation47 [shape = 's32[1]{0}', space=sflag, size = 0x4, scoped, tag = 'scoped memory for tft_forward_fused.1']
    #allocation48 [shape = 'u8[512]{0}', space=vmem, size = 0x400, scoped, tag = 'input window, operand 32, single buffered']
    #allocation49 [shape = 'u8[32768]{0}', space=vmem, size = 0x8000, scoped, tag = 'input window, operand 33, single buffered']
    #allocation50 [shape = 's32[1]{0}', space=sflag, size = 0x4, scoped, tag = 'scoped memory for tft_forward_fused.1']
    #allocation51 [shape = 'u8[512]{0}', space=vmem, size = 0x400, scoped, tag = 'input window, operand 34, single buffered']
    #allocation52 [shape = 'u8[1024]{0}', space=vmem, size = 0x400, scoped, tag = 'output window, operand 0, single buffered']
    %80 = vsyncpa [#allocation5], 0
    %81 = vsyncpa [#allocation8], 0
    %82 = vsyncpa [#allocation11], 0
    %83 = vsyncpa [#allocation14], 0
    %84 = vsyncpa [#allocation17], 0
    %85 = vsyncpa [#allocation20], 0
    %86 = vsyncpa [#allocation23], 0
    %87 = vsyncpa [#allocation26], 0
    %88 = vsyncpa [#allocation29], 0
    %89 = vsyncpa [#allocation32], 0
    %90 = vsyncpa [#allocation35], 0
    %91 = vsyncpa [#allocation38], 0
    %92 = vsyncpa [#allocation41], 0
    %93 = vsyncpa [#allocation44], 0
    %94 = vsyncpa [#allocation47], 0
    %95 = vsyncpa [#allocation50], 0
    %96 = vsyncpa [#allocation6], 0
    // Predicated region
    $region2: #{tft_forward_fused.1} parent=1 // pred_check
      _
    $region3: #{tft_forward_fused.1} parent=1 // pred_check_branch
      %98 = sbr.rel (0) target = $region5
    $region4: #{tft_forward_fused.1} parent=1 // pred_region
      _
    $region5: #{tft_forward_fused.1} parent=1 // pred_fallthru
      _
    // Predicated region
    $region6: #{tft_forward_fused.1} parent=1 // pred_check
      _
    $region7: #{tft_forward_fused.1} parent=1 // pred_check_branch
      %100 = sbr.rel (0) target = $region9
    $region8: #{tft_forward_fused.1} parent=1 // pred_region
      %102 = vsyncadd [#allocation5], 0
      %s103 = sshll.u32 %s3, 4
      %s104 = int_to_ptr.hbm [resolvable:$true] %s103
      %s105 = sshll.u32 [#allocation4], 4
      %s106 = int_to_ptr.vmem [resolvable:$true] %s105
      %111 = dma.hbm_to_vmem [thread:$0]  %s104, 256, %s106, [#allocation5], 128, 128, 8
    $region9: #{tft_forward_fused.1} parent=1 // pred_fallthru
      _
    // Predicated region
    $region10: #{tft_forward_fused.1} parent=1 // pred_check
      _
    $region11: #{tft_forward_fused.1} parent=1 // pred_check_branch
      %113 = sbr.rel (0) target = $region13
    $region12: #{tft_forward_fused.1} parent=1 // pred_region
      %115 = vsyncadd [#allocation8], 0
      %s116 = sshll.u32 %s5, 4
      %s117 = int_to_ptr.hbm [resolvable:$true] %s116
      %s118 = sshll.u32 [#allocation7], 4
      %s119 = int_to_ptr.vmem [resolvable:$true] %s118
      %124 = dma.hbm_to_vmem [thread:$0]  %s117, 256, %s119, [#allocation8], 128, 128, 8
    $region13: #{tft_forward_fused.1} parent=1 // pred_fallthru
      _
    // Predicated region
    $region14: #{tft_forward_fused.1} parent=1 // pred_check
      _
    $region15: #{tft_forward_fused.1} parent=1 // pred_check_branch
      %126 = sbr.rel (0) target = $region17
    $region16: #{tft_forward_fused.1} parent=1 // pred_region
      %128 = vsyncadd [#allocation8], 0
      %s130 = sshll.u32 %s7, 4
      %s131 = int_to_ptr.hbm [resolvable:$true] %s130
      %s132 = sshll.u32 [#allocation9], 4
      %s133 = int_to_ptr.vmem [resolvable:$true] %s132
      %135 = dma.hbm_to_vmem [thread:$0]  %s131, 32, %s133, [#allocation8]
    $region17: #{tft_forward_fused.1} parent=1 // pred_fallthru
      _
    // Predicated region
    $region18: #{tft_forward_fused.1} parent=1 // pred_check
      _
    $region19: #{tft_forward_fused.1} parent=1 // pred_check_branch
      %137 = sbr.rel (0) target = $region21
    $region20: #{tft_forward_fused.1} parent=1 // pred_region
      %139 = vsyncadd [#allocation11], 0
      %s140 = sshll.u32 %s9, 4
      %s141 = int_to_ptr.hbm [resolvable:$true] %s140
      %s142 = sshll.u32 [#allocation10], 4
      %s143 = int_to_ptr.vmem [resolvable:$true] %s142
      %148 = dma.hbm_to_vmem [thread:$0]  %s141, 512, %s143, [#allocation11], 256, 256, 16
    $region21: #{tft_forward_fused.1} parent=1 // pred_fallthru
      _
    // Predicated region
    $region22: #{tft_forward_fused.1} parent=1 // pred_check
      _
    $region23: #{tft_forward_fused.1} parent=1 // pred_check_branch
      %150 = sbr.rel (0) target = $region25
    $region24: #{tft_forward_fused.1} parent=1 // pred_region
      %152 = vsyncadd [#allocation11], 0
      %s154 = sshll.u32 %s11, 4
      %s155 = int_to_ptr.hbm [resolvable:$true] %s154
      %s156 = sshll.u32 [#allocation12], 4
      %s157 = int_to_ptr.vmem [resolvable:$true] %s156
      %159 = dma.hbm_to_vmem [thread:$0]  %s155, 32, %s157, [#allocation11]
    $region25: #{tft_forward_fused.1} parent=1 // pred_fallthru
      _
    // Predicated region
    $region26: #{tft_forward_fused.1} parent=1 // pred_check
      _
    $region27: #{tft_forward_fused.1} parent=1 // pred_check_branch
      %161 = sbr.rel (0) target = $region29
    $region28: #{tft_forward_fused.1} parent=1 // pred_region
      %163 = vsyncadd [#allocation14], 0
      %s164 = sshll.u32 %s13, 4
      %s165 = int_to_ptr.hbm [resolvable:$true] %s164
      %s166 = sshll.u32 [#allocation13], 4
      %s167 = int_to_ptr.vmem [resolvable:$true] %s166
      %172 = dma.hbm_to_vmem [thread:$0]  %s165, 8192, %s167, [#allocation14], 512, 512, 32
    $region29: #{tft_forward_fused.1} parent=1 // pred_fallthru
      _
    // Predicated region
    $region30: #{tft_forward_fused.1} parent=1 // pred_check
      _
    $region31: #{tft_forward_fused.1} parent=1 // pred_check_branch
      %174 = sbr.rel (0) target = $region33
    $region32: #{tft_forward_fused.1} parent=1 // pred_region
      _
    $region33: #{tft_forward_fused.1} parent=1 // pred_fallthru
      _
    // Predicated region
    $region34: #{tft_forward_fused.1} parent=1 // pred_check
      _
    $region35: #{tft_forward_fused.1} parent=1 // pred_check_branch
      %176 = sbr.rel (0) target = $region37
    $region36: #{tft_forward_fused.1} parent=1 // pred_region
      %178 = vsyncadd [#allocation14], 0
      %s180 = sshll.u32 %s17, 4
      %s181 = int_to_ptr.hbm [resolvable:$true] %s180
      %s182 = sshll.u32 [#allocation15], 4
      %s183 = int_to_ptr.vmem [resolvable:$true] %s182
      %185 = dma.hbm_to_vmem [thread:$0]  %s181, 32, %s183, [#allocation14]
    $region37: #{tft_forward_fused.1} parent=1 // pred_fallthru
      _
    // Predicated region
    $region38: #{tft_forward_fused.1} parent=1 // pred_check
      _
    $region39: #{tft_forward_fused.1} parent=1 // pred_check_branch
      %187 = sbr.rel (0) target = $region41
    $region40: #{tft_forward_fused.1} parent=1 // pred_region
      _
    $region41: #{tft_forward_fused.1} parent=1 // pred_fallthru
      _
    // Predicated region
    $region42: #{tft_forward_fused.1} parent=1 // pred_check
      _
    $region43: #{tft_forward_fused.1} parent=1 // pred_check_branch
      %189 = sbr.rel (0) target = $region45
    $region44: #{tft_forward_fused.1} parent=1 // pred_region
      %191 = vsyncadd [#allocation17], 0
      %s192 = sshll.u32 %s21, 4
      %s193 = int_to_ptr.hbm [resolvable:$true] %s192
      %s194 = sshll.u32 [#allocation16], 4
      %s195 = int_to_ptr.vmem [resolvable:$true] %s194
      %200 = dma.hbm_to_vmem [thread:$0]  %s193, 64, %s195, [#allocation17], 32, 32, 2
    $region45: #{tft_forward_fused.1} parent=1 // pred_fallthru
      _
    // Predicated region
    $region46: #{tft_forward_fused.1} parent=1 // pred_check
      _
    $region47: #{tft_forward_fused.1} parent=1 // pred_check_branch
      %202 = sbr.rel (0) target = $region49
    $region48: #{tft_forward_fused.1} parent=1 // pred_region
      %204 = vsyncadd [#allocation17], 0
      %s205 = sshll.u32 %s23, 4
      %s206 = int_to_ptr.hbm [resolvable:$true] %s205
      %s207 = sshll.u32 [#allocation18], 4
      %s208 = int_to_ptr.vmem [resolvable:$true] %s207
      %213 = dma.hbm_to_vmem [thread:$0]  %s206, 2048, %s208, [#allocation17], 128, 128, 8
    $region49: #{tft_forward_fused.1} parent=1 // pred_fallthru
      _
    // Predicated region
    $region50: #{tft_forward_fused.1} parent=1 // pred_check
      _
    $region51: #{tft_forward_fused.1} parent=1 // pred_check_branch
      %215 = sbr.rel (0) target = $region53
    $region52: #{tft_forward_fused.1} parent=1 // pred_region
      %217 = vsyncadd [#allocation20], 0
      %s218 = sshll.u32 %s25, 4
      %s219 = int_to_ptr.hbm [resolvable:$true] %s218
      %s220 = sshll.u32 [#allocation19], 4
      %s221 = int_to_ptr.vmem [resolvable:$true] %s220
      %226 = dma.hbm_to_vmem [thread:$0]  %s219, 32, %s221, [#allocation20], 16, 16, 1
    $region53: #{tft_forward_fused.1} parent=1 // pred_fallthru
      _
    // Predicated region
    $region54: #{tft_forward_fused.1} parent=1 // pred_check
      _
    $region55: #{tft_forward_fused.1} parent=1 // pred_check_branch
      %228 = sbr.rel (0) target = $region57
    $region56: #{tft_forward_fused.1} parent=1 // pred_region
      %230 = vsyncadd [#allocation20], 0
      %s231 = sshll.u32 %s27, 4
      %s232 = int_to_ptr.hbm [resolvable:$true] %s231
      %s233 = sshll.u32 [#allocation21], 4
      %s234 = int_to_ptr.vmem [resolvable:$true] %s233
      %239 = dma.hbm_to_vmem [thread:$0]  %s232, 32, %s234, [#allocation20], 16, 16, 1
    $region57: #{tft_forward_fused.1} parent=1 // pred_fallthru
      _
    // Predicated region
    $region58: #{tft_forward_fused.1} parent=1 // pred_check
      _
    $region59: #{tft_forward_fused.1} parent=1 // pred_check_branch
      %241 = sbr.rel (0) target = $region61
    $region60: #{tft_forward_fused.1} parent=1 // pred_region
      %243 = vsyncadd [#allocation23], 0
      %s244 = sshll.u32 %s29, 4
      %s245 = int_to_ptr.hbm [resolvable:$true] %s244
      %s246 = sshll.u32 [#allocation22], 4
      %s247 = int_to_ptr.vmem [resolvable:$true] %s246
      %252 = dma.hbm_to_vmem [thread:$0]  %s245, 32, %s247, [#allocation23], 16, 16, 1
    $region61: #{tft_forward_fused.1} parent=1 // pred_fallthru
      _
    // Predicated region
    $region62: #{tft_forward_fused.1} parent=1 // pred_check
      _
    $region63: #{tft_forward_fused.1} parent=1 // pred_check_branch
      %254 = sbr.rel (0) target = $region65
    $region64: #{tft_forward_fused.1} parent=1 // pred_region
      %256 = vsyncadd [#allocation23], 0
      %s257 = sshll.u32 %s31, 4
      %s258 = int_to_ptr.hbm [resolvable:$true] %s257
      %s259 = sshll.u32 [#allocation24], 4
      %s260 = int_to_ptr.vmem [resolvable:$true] %s259
      %265 = dma.hbm_to_vmem [thread:$0]  %s258, 2048, %s260, [#allocation23], 128, 128, 8
    $region65: #{tft_forward_fused.1} parent=1 // pred_fallthru
      _
    // Predicated region
    $region66: #{tft_forward_fused.1} parent=1 // pred_check
      _
    $region67: #{tft_forward_fused.1} parent=1 // pred_check_branch
      %267 = sbr.rel (0) target = $region69
    $region68: #{tft_forward_fused.1} parent=1 // pred_region
      %269 = vsyncadd [#allocation26], 0
      %s270 = sshll.u32 %s33, 4
      %s271 = int_to_ptr.hbm [resolvable:$true] %s270
      %s272 = sshll.u32 [#allocation25], 4
      %s273 = int_to_ptr.vmem [resolvable:$true] %s272
      %278 = dma.hbm_to_vmem [thread:$0]  %s271, 32, %s273, [#allocation26], 16, 16, 1
    $region69: #{tft_forward_fused.1} parent=1 // pred_fallthru
      _
    // Predicated region
    $region70: #{tft_forward_fused.1} parent=1 // pred_check
      _
    $region71: #{tft_forward_fused.1} parent=1 // pred_check_branch
      %280 = sbr.rel (0) target = $region73
    $region72: #{tft_forward_fused.1} parent=1 // pred_region
      _
    $region73: #{tft_forward_fused.1} parent=1 // pred_fallthru
      _
    // Predicated region
    $region74: #{tft_forward_fused.1} parent=1 // pred_check
      _
    $region75: #{tft_forward_fused.1} parent=1 // pred_check_branch
      %282 = sbr.rel (0) target = $region77
    $region76: #{tft_forward_fused.1} parent=1 // pred_region
      %284 = vsyncadd [#allocation26], 0
      %s285 = sshll.u32 %s37, 4
      %s286 = int_to_ptr.hbm [resolvable:$true] %s285
      %s287 = sshll.u32 [#allocation27], 4
      %s288 = int_to_ptr.vmem [resolvable:$true] %s287
      %293 = dma.hbm_to_vmem [thread:$0]  %s286, 32, %s288, [#allocation26], 16, 16, 1
    $region77: #{tft_forward_fused.1} parent=1 // pred_fallthru
      _
    // Predicated region
    $region78: #{tft_forward_fused.1} parent=1 // pred_check
      _
    $region79: #{tft_forward_fused.1} parent=1 // pred_check_branch
      %295 = sbr.rel (0) target = $region81
    $region80: #{tft_forward_fused.1} parent=1 // pred_region
      %297 = vsyncadd [#allocation29], 0
      %s298 = sshll.u32 %s39, 4
      %s299 = int_to_ptr.hbm [resolvable:$true] %s298
      %s300 = sshll.u32 [#allocation28], 4
      %s301 = int_to_ptr.vmem [resolvable:$true] %s300
      %306 = dma.hbm_to_vmem [thread:$0]  %s299, 32, %s301, [#allocation29], 16, 16, 1
    $region81: #{tft_forward_fused.1} parent=1 // pred_fallthru
      _
    // Predicated region
    $region82: #{tft_forward_fused.1} parent=1 // pred_check
      _
    $region83: #{tft_forward_fused.1} parent=1 // pred_check_branch
      %308 = sbr.rel (0) target = $region85
    $region84: #{tft_forward_fused.1} parent=1 // pred_region
      %310 = vsyncadd [#allocation29], 0
      %s311 = sshll.u32 %s41, 4
      %s312 = int_to_ptr.hbm [resolvable:$true] %s311
      %s313 = sshll.u32 [#allocation30], 4
      %s314 = int_to_ptr.vmem [resolvable:$true] %s313
      %319 = dma.hbm_to_vmem [thread:$0]  %s312, 32, %s314, [#allocation29], 16, 16, 1
    $region85: #{tft_forward_fused.1} parent=1 // pred_fallthru
      _
    // Predicated region
    $region86: #{tft_forward_fused.1} parent=1 // pred_check
      _
    $region87: #{tft_forward_fused.1} parent=1 // pred_check_branch
      %321 = sbr.rel (0) target = $region89
    $region88: #{tft_forward_fused.1} parent=1 // pred_region
      %323 = vsyncadd [#allocation32], 0
      %s324 = sshll.u32 %s43, 4
      %s325 = int_to_ptr.hbm [resolvable:$true] %s324
      %s326 = sshll.u32 [#allocation31], 4
      %s327 = int_to_ptr.vmem [resolvable:$true] %s326
      %332 = dma.hbm_to_vmem [thread:$0]  %s325, 2048, %s327, [#allocation32], 128, 128, 8
    $region89: #{tft_forward_fused.1} parent=1 // pred_fallthru
      _
    // Predicated region
    $region90: #{tft_forward_fused.1} parent=1 // pred_check
      _
    $region91: #{tft_forward_fused.1} parent=1 // pred_check_branch
      %334 = sbr.rel (0) target = $region93
    $region92: #{tft_forward_fused.1} parent=1 // pred_region
      %336 = vsyncadd [#allocation32], 0
      %s337 = sshll.u32 %s45, 4
      %s338 = int_to_ptr.hbm [resolvable:$true] %s337
      %s339 = sshll.u32 [#allocation33], 4
      %s340 = int_to_ptr.vmem [resolvable:$true] %s339
      %345 = dma.hbm_to_vmem [thread:$0]  %s338, 32, %s340, [#allocation32], 16, 16, 1
    $region93: #{tft_forward_fused.1} parent=1 // pred_fallthru
      _
    // Predicated region
    $region94: #{tft_forward_fused.1} parent=1 // pred_check
      _
    $region95: #{tft_forward_fused.1} parent=1 // pred_check_branch
      %347 = sbr.rel (0) target = $region97
    $region96: #{tft_forward_fused.1} parent=1 // pred_region
      %349 = vsyncadd [#allocation35], 0
      %s350 = sshll.u32 %s47, 4
      %s351 = int_to_ptr.hbm [resolvable:$true] %s350
      %s352 = sshll.u32 [#allocation34], 4
      %s353 = int_to_ptr.vmem [resolvable:$true] %s352
      %358 = dma.hbm_to_vmem [thread:$0]  %s351, 2048, %s353, [#allocation35], 128, 128, 8
    $region97: #{tft_forward_fused.1} parent=1 // pred_fallthru
      _
    // Predicated region
    $region98: #{tft_forward_fused.1} parent=1 // pred_check
      _
    $region99: #{tft_forward_fused.1} parent=1 // pred_check_branch
      %360 = sbr.rel (0) target = $region101
    $region100: #{tft_forward_fused.1} parent=1 // pred_region
      %362 = vsyncadd [#allocation35], 0
      %s363 = sshll.u32 %s49, 4
      %s364 = int_to_ptr.hbm [resolvable:$true] %s363
      %s365 = sshll.u32 [#allocation36], 4
      %s366 = int_to_ptr.vmem [resolvable:$true] %s365
      %371 = dma.hbm_to_vmem [thread:$0]  %s364, 32, %s366, [#allocation35], 16, 16, 1
    $region101: #{tft_forward_fused.1} parent=1 // pred_fallthru
      _
    // Predicated region
    $region102: #{tft_forward_fused.1} parent=1 // pred_check
      _
    $region103: #{tft_forward_fused.1} parent=1 // pred_check_branch
      %373 = sbr.rel (0) target = $region105
    $region104: #{tft_forward_fused.1} parent=1 // pred_region
      %375 = vsyncadd [#allocation38], 0
      %s376 = sshll.u32 %s51, 4
      %s377 = int_to_ptr.hbm [resolvable:$true] %s376
      %s378 = sshll.u32 [#allocation37], 4
      %s379 = int_to_ptr.vmem [resolvable:$true] %s378
      %384 = dma.hbm_to_vmem [thread:$0]  %s377, 2048, %s379, [#allocation38], 128, 128, 8
    $region105: #{tft_forward_fused.1} parent=1 // pred_fallthru
      _
    // Predicated region
    $region106: #{tft_forward_fused.1} parent=1 // pred_check
      _
    $region107: #{tft_forward_fused.1} parent=1 // pred_check_branch
      %386 = sbr.rel (0) target = $region109
    $region108: #{tft_forward_fused.1} parent=1 // pred_region
      %388 = vsyncadd [#allocation38], 0
      %s389 = sshll.u32 %s53, 4
      %s390 = int_to_ptr.hbm [resolvable:$true] %s389
      %s391 = sshll.u32 [#allocation39], 4
      %s392 = int_to_ptr.vmem [resolvable:$true] %s391
      %397 = dma.hbm_to_vmem [thread:$0]  %s390, 32, %s392, [#allocation38], 16, 16, 1
    $region109: #{tft_forward_fused.1} parent=1 // pred_fallthru
      _
    // Predicated region
    $region110: #{tft_forward_fused.1} parent=1 // pred_check
      _
    $region111: #{tft_forward_fused.1} parent=1 // pred_check_branch
      %399 = sbr.rel (0) target = $region113
    $region112: #{tft_forward_fused.1} parent=1 // pred_region
      %401 = vsyncadd [#allocation41], 0
      %s402 = sshll.u32 %s55, 4
      %s403 = int_to_ptr.hbm [resolvable:$true] %s402
      %s404 = sshll.u32 [#allocation40], 4
      %s405 = int_to_ptr.vmem [resolvable:$true] %s404
      %410 = dma.hbm_to_vmem [thread:$0]  %s403, 4096, %s405, [#allocation41], 256, 256, 16
    $region113: #{tft_forward_fused.1} parent=1 // pred_fallthru
      _
    // Predicated region
    $region114: #{tft_forward_fused.1} parent=1 // pred_check
      _
    $region115: #{tft_forward_fused.1} parent=1 // pred_check_branch
      %412 = sbr.rel (0) target = $region117
    $region116: #{tft_forward_fused.1} parent=1 // pred_region
      %414 = vsyncadd [#allocation41], 0
      %s416 = sshll.u32 %s57, 4
      %s417 = int_to_ptr.hbm [resolvable:$true] %s416
      %s418 = sshll.u32 [#allocation42], 4
      %s419 = int_to_ptr.vmem [resolvable:$true] %s418
      %421 = dma.hbm_to_vmem [thread:$0]  %s417, 32, %s419, [#allocation41]
    $region117: #{tft_forward_fused.1} parent=1 // pred_fallthru
      _
    // Predicated region
    $region118: #{tft_forward_fused.1} parent=1 // pred_check
      _
    $region119: #{tft_forward_fused.1} parent=1 // pred_check_branch
      %423 = sbr.rel (0) target = $region121
    $region120: #{tft_forward_fused.1} parent=1 // pred_region
      %425 = vsyncadd [#allocation44], 0
      %s426 = sshll.u32 %s59, 4
      %s427 = int_to_ptr.hbm [resolvable:$true] %s426
      %s428 = sshll.u32 [#allocation43], 4
      %s429 = int_to_ptr.vmem [resolvable:$true] %s428
      %434 = dma.hbm_to_vmem [thread:$0]  %s427, 1024, %s429, [#allocation44], 128, 128, 8
    $region121: #{tft_forward_fused.1} parent=1 // pred_fallthru
      _
    // Predicated region
    $region122: #{tft_forward_fused.1} parent=1 // pred_check
      _
    $region123: #{tft_forward_fused.1} parent=1 // pred_check_branch
      %436 = sbr.rel (0) target = $region125
    $region124: #{tft_forward_fused.1} parent=1 // pred_region
      %438 = vsyncadd [#allocation44], 0
      %s440 = sshll.u32 %s61, 4
      %s441 = int_to_ptr.hbm [resolvable:$true] %s440
      %s442 = sshll.u32 [#allocation45], 4
      %s443 = int_to_ptr.vmem [resolvable:$true] %s442
      %445 = dma.hbm_to_vmem [thread:$0]  %s441, 16, %s443, [#allocation44]
    $region125: #{tft_forward_fused.1} parent=1 // pred_fallthru
      _
    // Predicated region
    $region126: #{tft_forward_fused.1} parent=1 // pred_check
      _
    $region127: #{tft_forward_fused.1} parent=1 // pred_check_branch
      %447 = sbr.rel (0) target = $region129
    $region128: #{tft_forward_fused.1} parent=1 // pred_region
      %449 = vsyncadd [#allocation47], 0
      %s450 = sshll.u32 %s63, 4
      %s451 = int_to_ptr.hbm [resolvable:$true] %s450
      %s452 = sshll.u32 [#allocation46], 4
      %s453 = int_to_ptr.vmem [resolvable:$true] %s452
      %458 = dma.hbm_to_vmem [thread:$0]  %s451, 1024, %s453, [#allocation47], 128, 128, 8
    $region129: #{tft_forward_fused.1} parent=1 // pred_fallthru
      _
    // Predicated region
    $region130: #{tft_forward_fused.1} parent=1 // pred_check
      _
    $region131: #{tft_forward_fused.1} parent=1 // pred_check_branch
      %460 = sbr.rel (0) target = $region133
    $region132: #{tft_forward_fused.1} parent=1 // pred_region
      %462 = vsyncadd [#allocation47], 0
      %s464 = sshll.u32 %s65, 4
      %s465 = int_to_ptr.hbm [resolvable:$true] %s464
      %s466 = sshll.u32 [#allocation48], 4
      %s467 = int_to_ptr.vmem [resolvable:$true] %s466
      %469 = dma.hbm_to_vmem [thread:$0]  %s465, 16, %s467, [#allocation47]
    $region133: #{tft_forward_fused.1} parent=1 // pred_fallthru
      _
    // Predicated region
    $region134: #{tft_forward_fused.1} parent=1 // pred_check
      _
    $region135: #{tft_forward_fused.1} parent=1 // pred_check_branch
      %471 = sbr.rel (0) target = $region137
    $region136: #{tft_forward_fused.1} parent=1 // pred_region
      %473 = vsyncadd [#allocation50], 0
      %s474 = sshll.u32 %s67, 4
      %s475 = int_to_ptr.hbm [resolvable:$true] %s474
      %s476 = sshll.u32 [#allocation49], 4
      %s477 = int_to_ptr.vmem [resolvable:$true] %s476
      %482 = dma.hbm_to_vmem [thread:$0]  %s475, 1024, %s477, [#allocation50], 128, 128, 8
    $region137: #{tft_forward_fused.1} parent=1 // pred_fallthru
      _
    // Predicated region
    $region138: #{tft_forward_fused.1} parent=1 // pred_check
      _
    $region139: #{tft_forward_fused.1} parent=1 // pred_check_branch
      %484 = sbr.rel (0) target = $region141
    $region140: #{tft_forward_fused.1} parent=1 // pred_region
      %486 = vsyncadd [#allocation50], 0
      %s488 = sshll.u32 %s69, 4
      %s489 = int_to_ptr.hbm [resolvable:$true] %s488
      %s490 = sshll.u32 [#allocation51], 4
      %s491 = int_to_ptr.vmem [resolvable:$true] %s490
      %493 = dma.hbm_to_vmem [thread:$0]  %s489, 16, %s491, [#allocation50]
    $region141: #{tft_forward_fused.1} parent=1 // pred_fallthru
      _
    // Predicated region
    $region142: #{tft_forward_fused.1} parent=1 // pred_check
      _
    $region143: #{tft_forward_fused.1} parent=1 // pred_check_branch
      %495 = sbr.rel (0) target = $region145
    $region144: #{tft_forward_fused.1} parent=1 // pred_region
      _
    $region145: #{tft_forward_fused.1} parent=1 // pred_fallthru
      _
    // Predicated region
    $region146: #{tft_forward_fused.1} parent=1 // pred_check
      _
    $region147: #{tft_forward_fused.1} parent=1 // pred_check_branch
      %497 = sbr.rel (0) target = $region149
    $region148: #{tft_forward_fused.1} parent=1 // pred_region
      _
    $region149: #{tft_forward_fused.1} parent=1 // pred_fallthru
      _
    // Predicated region
    $region150: #{tft_forward_fused.1} parent=1 // pred_check
      _
    $region151: #{tft_forward_fused.1} parent=1 // pred_check_branch
      %499 = sbr.rel (0) target = $region153
    $region152: #{tft_forward_fused.1} parent=1 // pred_region
      %501 = dma.done [#allocation5], 256
    $region153: #{tft_forward_fused.1} parent=1 // pred_fallthru
      _
    // Predicated region
    $region154: #{tft_forward_fused.1} parent=1 // pred_check
      _
    $region155: #{tft_forward_fused.1} parent=1 // pred_check_branch
      %503 = sbr.rel (0) target = $region157
    $region156: #{tft_forward_fused.1} parent=1 // pred_region
      %505 = dma.done [#allocation8], 256
    $region157: #{tft_forward_fused.1} parent=1 // pred_fallthru
      _
    // Predicated region
    $region158: #{tft_forward_fused.1} parent=1 // pred_check
      _
    $region159: #{tft_forward_fused.1} parent=1 // pred_check_branch
      %507 = sbr.rel (0) target = $region161
    $region160: #{tft_forward_fused.1} parent=1 // pred_region
      %509 = dma.done [#allocation8], 32
    $region161: #{tft_forward_fused.1} parent=1 // pred_fallthru
      _
    // Predicated region
    $region162: #{tft_forward_fused.1} parent=1 // pred_check
      _
    $region163: #{tft_forward_fused.1} parent=1 // pred_check_branch
      %511 = sbr.rel (0) target = $region165
    $region164: #{tft_forward_fused.1} parent=1 // pred_region
      %513 = dma.done [#allocation11], 512
    $region165: #{tft_forward_fused.1} parent=1 // pred_fallthru
      _
    // Predicated region
    $region166: #{tft_forward_fused.1} parent=1 // pred_check
      _
    $region167: #{tft_forward_fused.1} parent=1 // pred_check_branch
      %515 = sbr.rel (0) target = $region169
    $region168: #{tft_forward_fused.1} parent=1 // pred_region
      %517 = dma.done [#allocation11], 32
    $region169: #{tft_forward_fused.1} parent=1 // pred_fallthru
      _
    // Predicated region
    $region170: #{tft_forward_fused.1} parent=1 // pred_check
      _
    $region171: #{tft_forward_fused.1} parent=1 // pred_check_branch
      %519 = sbr.rel (0) target = $region173
    $region172: #{tft_forward_fused.1} parent=1 // pred_region
      %521 = dma.done [#allocation14], 8192
    $region173: #{tft_forward_fused.1} parent=1 // pred_fallthru
      _
    // Predicated region
    $region174: #{tft_forward_fused.1} parent=1 // pred_check
      _
    $region175: #{tft_forward_fused.1} parent=1 // pred_check_branch
      %523 = sbr.rel (0) target = $region177
    $region176: #{tft_forward_fused.1} parent=1 // pred_region
      %525 = dma.done [#allocation14], 32
    $region177: #{tft_forward_fused.1} parent=1 // pred_fallthru
      _
    // Predicated region
    $region178: #{tft_forward_fused.1} parent=1 // pred_check
      _
    $region179: #{tft_forward_fused.1} parent=1 // pred_check_branch
      %527 = sbr.rel (0) target = $region181
    $region180: #{tft_forward_fused.1} parent=1 // pred_region
      %529 = dma.done [#allocation17], 64
    $region181: #{tft_forward_fused.1} parent=1 // pred_fallthru
      _
    // Predicated region
    $region182: #{tft_forward_fused.1} parent=1 // pred_check
      _
    $region183: #{tft_forward_fused.1} parent=1 // pred_check_branch
      %531 = sbr.rel (0) target = $region185
    $region184: #{tft_forward_fused.1} parent=1 // pred_region
      %533 = dma.done [#allocation17], 2048
    $region185: #{tft_forward_fused.1} parent=1 // pred_fallthru
      _
    // Predicated region
    $region186: #{tft_forward_fused.1} parent=1 // pred_check
      _
    $region187: #{tft_forward_fused.1} parent=1 // pred_check_branch
      %535 = sbr.rel (0) target = $region189
    $region188: #{tft_forward_fused.1} parent=1 // pred_region
      %537 = dma.done [#allocation20], 32
    $region189: #{tft_forward_fused.1} parent=1 // pred_fallthru
      _
    // Predicated region
    $region190: #{tft_forward_fused.1} parent=1 // pred_check
      _
    $region191: #{tft_forward_fused.1} parent=1 // pred_check_branch
      %539 = sbr.rel (0) target = $region193
    $region192: #{tft_forward_fused.1} parent=1 // pred_region
      %541 = dma.done [#allocation20], 32
    $region193: #{tft_forward_fused.1} parent=1 // pred_fallthru
      _
    // Predicated region
    $region194: #{tft_forward_fused.1} parent=1 // pred_check
      _
    $region195: #{tft_forward_fused.1} parent=1 // pred_check_branch
      %543 = sbr.rel (0) target = $region197
    $region196: #{tft_forward_fused.1} parent=1 // pred_region
      %545 = dma.done [#allocation23], 32
    $region197: #{tft_forward_fused.1} parent=1 // pred_fallthru
      _
    // Predicated region
    $region198: #{tft_forward_fused.1} parent=1 // pred_check
      _
    $region199: #{tft_forward_fused.1} parent=1 // pred_check_branch
      %547 = sbr.rel (0) target = $region201
    $region200: #{tft_forward_fused.1} parent=1 // pred_region
      %549 = dma.done [#allocation23], 2048
    $region201: #{tft_forward_fused.1} parent=1 // pred_fallthru
      _
    // Predicated region
    $region202: #{tft_forward_fused.1} parent=1 // pred_check
      _
    $region203: #{tft_forward_fused.1} parent=1 // pred_check_branch
      %551 = sbr.rel (0) target = $region205
    $region204: #{tft_forward_fused.1} parent=1 // pred_region
      %553 = dma.done [#allocation26], 32
    $region205: #{tft_forward_fused.1} parent=1 // pred_fallthru
      _
    // Predicated region
    $region206: #{tft_forward_fused.1} parent=1 // pred_check
      _
    $region207: #{tft_forward_fused.1} parent=1 // pred_check_branch
      %555 = sbr.rel (0) target = $region209
    $region208: #{tft_forward_fused.1} parent=1 // pred_region
      %557 = dma.done [#allocation26], 32
    $region209: #{tft_forward_fused.1} parent=1 // pred_fallthru
      _
    // Predicated region
    $region210: #{tft_forward_fused.1} parent=1 // pred_check
      _
    $region211: #{tft_forward_fused.1} parent=1 // pred_check_branch
      %559 = sbr.rel (0) target = $region213
    $region212: #{tft_forward_fused.1} parent=1 // pred_region
      %561 = dma.done [#allocation29], 32
    $region213: #{tft_forward_fused.1} parent=1 // pred_fallthru
      _
    // Predicated region
    $region214: #{tft_forward_fused.1} parent=1 // pred_check
      _
    $region215: #{tft_forward_fused.1} parent=1 // pred_check_branch
      %563 = sbr.rel (0) target = $region217
    $region216: #{tft_forward_fused.1} parent=1 // pred_region
      %565 = dma.done [#allocation29], 32
    $region217: #{tft_forward_fused.1} parent=1 // pred_fallthru
      _
    // Predicated region
    $region218: #{tft_forward_fused.1} parent=1 // pred_check
      _
    $region219: #{tft_forward_fused.1} parent=1 // pred_check_branch
      %567 = sbr.rel (0) target = $region221
    $region220: #{tft_forward_fused.1} parent=1 // pred_region
      %569 = dma.done [#allocation32], 2048
    $region221: #{tft_forward_fused.1} parent=1 // pred_fallthru
      _
    // Predicated region
    $region222: #{tft_forward_fused.1} parent=1 // pred_check
      _
    $region223: #{tft_forward_fused.1} parent=1 // pred_check_branch
      %571 = sbr.rel (0) target = $region225
    $region224: #{tft_forward_fused.1} parent=1 // pred_region
      %573 = dma.done [#allocation32], 32
    $region225: #{tft_forward_fused.1} parent=1 // pred_fallthru
      _
    // Predicated region
    $region226: #{tft_forward_fused.1} parent=1 // pred_check
      _
    $region227: #{tft_forward_fused.1} parent=1 // pred_check_branch
      %575 = sbr.rel (0) target = $region229
    $region228: #{tft_forward_fused.1} parent=1 // pred_region
      %577 = dma.done [#allocation35], 2048
    $region229: #{tft_forward_fused.1} parent=1 // pred_fallthru
      _
    // Predicated region
    $region230: #{tft_forward_fused.1} parent=1 // pred_check
      _
    $region231: #{tft_forward_fused.1} parent=1 // pred_check_branch
      %579 = sbr.rel (0) target = $region233
    $region232: #{tft_forward_fused.1} parent=1 // pred_region
      %581 = dma.done [#allocation35], 32
    $region233: #{tft_forward_fused.1} parent=1 // pred_fallthru
      _
    // Predicated region
    $region234: #{tft_forward_fused.1} parent=1 // pred_check
      _
    $region235: #{tft_forward_fused.1} parent=1 // pred_check_branch
      %583 = sbr.rel (0) target = $region237
    $region236: #{tft_forward_fused.1} parent=1 // pred_region
      %585 = dma.done [#allocation38], 2048
    $region237: #{tft_forward_fused.1} parent=1 // pred_fallthru
      _
    // Predicated region
    $region238: #{tft_forward_fused.1} parent=1 // pred_check
      _
    $region239: #{tft_forward_fused.1} parent=1 // pred_check_branch
      %587 = sbr.rel (0) target = $region241
    $region240: #{tft_forward_fused.1} parent=1 // pred_region
      %589 = dma.done [#allocation38], 32
    $region241: #{tft_forward_fused.1} parent=1 // pred_fallthru
      _
    // Predicated region
    $region242: #{tft_forward_fused.1} parent=1 // pred_check
      _
    $region243: #{tft_forward_fused.1} parent=1 // pred_check_branch
      %591 = sbr.rel (0) target = $region245
    $region244: #{tft_forward_fused.1} parent=1 // pred_region
      %593 = dma.done [#allocation41], 4096
    $region245: #{tft_forward_fused.1} parent=1 // pred_fallthru
      _
    // Predicated region
    $region246: #{tft_forward_fused.1} parent=1 // pred_check
      _
    $region247: #{tft_forward_fused.1} parent=1 // pred_check_branch
      %595 = sbr.rel (0) target = $region249
    $region248: #{tft_forward_fused.1} parent=1 // pred_region
      %597 = dma.done [#allocation41], 32
    $region249: #{tft_forward_fused.1} parent=1 // pred_fallthru
      _
    // Predicated region
    $region250: #{tft_forward_fused.1} parent=1 // pred_check
      _
    $region251: #{tft_forward_fused.1} parent=1 // pred_check_branch
      %599 = sbr.rel (0) target = $region253
    $region252: #{tft_forward_fused.1} parent=1 // pred_region
      %601 = dma.done [#allocation44], 1024
    $region253: #{tft_forward_fused.1} parent=1 // pred_fallthru
      _
    // Predicated region
    $region254: #{tft_forward_fused.1} parent=1 // pred_check
      _
    $region255: #{tft_forward_fused.1} parent=1 // pred_check_branch
      %603 = sbr.rel (0) target = $region257
    $region256: #{tft_forward_fused.1} parent=1 // pred_region
      %605 = dma.done [#allocation44], 16
    $region257: #{tft_forward_fused.1} parent=1 // pred_fallthru
      _
    // Predicated region
    $region258: #{tft_forward_fused.1} parent=1 // pred_check
      _
    $region259: #{tft_forward_fused.1} parent=1 // pred_check_branch
      %607 = sbr.rel (0) target = $region261
    $region260: #{tft_forward_fused.1} parent=1 // pred_region
      %609 = dma.done [#allocation47], 1024
    $region261: #{tft_forward_fused.1} parent=1 // pred_fallthru
      _
    // Predicated region
    $region262: #{tft_forward_fused.1} parent=1 // pred_check
      _
    $region263: #{tft_forward_fused.1} parent=1 // pred_check_branch
      %611 = sbr.rel (0) target = $region265
    $region264: #{tft_forward_fused.1} parent=1 // pred_region
      %613 = dma.done [#allocation47], 16
    $region265: #{tft_forward_fused.1} parent=1 // pred_fallthru
      _
    // Predicated region
    $region266: #{tft_forward_fused.1} parent=1 // pred_check
      _
    $region267: #{tft_forward_fused.1} parent=1 // pred_check_branch
      %615 = sbr.rel (0) target = $region269
    $region268: #{tft_forward_fused.1} parent=1 // pred_region
      %617 = dma.done [#allocation50], 1024
    $region269: #{tft_forward_fused.1} parent=1 // pred_fallthru
      _
    // Predicated region
    $region270: #{tft_forward_fused.1} parent=1 // pred_check
      _
    $region271: #{tft_forward_fused.1} parent=1 // pred_check_branch
      %619 = sbr.rel (0) target = $region273
    $region272: #{tft_forward_fused.1} parent=1 // pred_region
      %621 = dma.done [#allocation50], 16
    $region273: #{tft_forward_fused.1} parent=1 // pred_fallthru
      _
    %v622 = vld [vmem:[%s1] sm:$0xff]
    %v623 = vld [vmem:[%s1 + $0x8] sm:$0xff]
    %v624 = vld [vmem:[#allocation10] sm:$0xff]
    %v625 = vld [vmem:[#allocation10 + $0x8] sm:$0xff]
    %v626 = vld [vmem:[#allocation10 + $0x10] sm:$0xff]
    %v627 = vld [vmem:[#allocation10 + $0x18] sm:$0xff]
    %v628 = vld [vmem:[#allocation12] sm:$0x3]
    %v630 = vperm.slane %v628, 0
    %v631 = vperm.slane %v628, 1
    %vm634 = vcmask 130048
    %v636 = vsel %vm634, %v622, 0
    %v639 = vsel %vm634, %v623, 0
    %641 = vmatpush.msra.mxu0 0.0
    %642 = vmatpush.msra.mxu0 0.0
    %643 = vmatpush.msra.mxu0 0.0
    %644 = vmatpush.msra.mxu0 0.0
    %645 = vmatpush.msra.mxu0 0.0
    %646 = vmatpush.msra.mxu0 0.0
    %647 = vmatpush.msra.mxu0 0.0
    %648 = vmatpush.msra.mxu0 0.0
    %649 = vmatpush.msra.mxu0 0.0
    %650 = vmatpush.msra.mxu0 0.0
    %651 = vmatpush.msra.mxu0 0.0
    %652 = vmatpush.msra.mxu0 0.0
    %653 = vmatpush.msra.mxu0 0.0
    %654 = vmatpush.msra.mxu0 0.0
    %655 = vmatpush.msra.mxu0 %v626
    %656 = vmatpush.msra.mxu0 %v624
    %657 = vmatmul.f32.gmra.mxu0 %v636
    %v658 = vpop.f32.mrf.mxu0
    %v659 = vadd.f32 %v630, %v658
    %660 = vmatmul.f32.gmra.mxu0 %v639
    %v661 = vpop.f32.mrf.mxu0
    %v662 = vadd.f32 %v630, %v661
    %663 = vdwg.mxu0
    %664 = vmatpush.msra.mxu0 0.0
    %665 = vmatpush.msra.mxu0 0.0
    %666 = vmatpush.msra.mxu0 0.0
    %667 = vmatpush.msra.mxu0 0.0
    %668 = vmatpush.msra.mxu0 0.0
    %669 = vmatpush.msra.mxu0 0.0
    %670 = vmatpush.msra.mxu0 0.0
    %671 = vmatpush.msra.mxu0 0.0
    %672 = vmatpush.msra.mxu0 0.0
    %673 = vmatpush.msra.mxu0 0.0
    %674 = vmatpush.msra.mxu0 0.0
    %675 = vmatpush.msra.mxu0 0.0
    %676 = vmatpush.msra.mxu0 0.0
    %677 = vmatpush.msra.mxu0 0.0
    %678 = vmatpush.msra.mxu0 %v627
    %679 = vmatpush.msra.mxu0 %v625
    %680 = vmatmul.f32.gmra.mxu0 %v636
    %v681 = vpop.f32.mrf.mxu0
    %v682 = vadd.f32 %v631, %v681
    %683 = vmatmul.f32.gmra.mxu0 %v639
    %v684 = vpop.f32.mrf.mxu0
    %v685 = vadd.f32 %v631, %v684
    %686 = vdwg.mxu0
    %v687 = vld [vmem:[#allocation13] sm:$0xff]
    %v688 = vld [vmem:[#allocation13 + $0x8] sm:$0xff]
    %v689 = vld [vmem:[#allocation13 + $0x10] sm:$0xff]
    %v690 = vld [vmem:[#allocation13 + $0x18] sm:$0xff]
    %v691 = vld [vmem:[#allocation13 + $0x20] sm:$0xff]
    %v692 = vld [vmem:[#allocation13 + $0x28] sm:$0xff]
    %v693 = vld [vmem:[#allocation13 + $0x30] sm:$0xff]
    %v694 = vld [vmem:[#allocation13 + $0x38] sm:$0xff]
    %v695 = vld [vmem:[#allocation13 + $0x40] sm:$0xff]
    %v696 = vld [vmem:[#allocation13 + $0x48] sm:$0xff]
    %v697 = vld [vmem:[#allocation13 + $0x50] sm:$0xff]
    %v698 = vld [vmem:[#allocation13 + $0x58] sm:$0xff]
    %v699 = vld [vmem:[#allocation13 + $0x60] sm:$0xff]
    %v700 = vld [vmem:[#allocation13 + $0x68] sm:$0xff]
    %v701 = vld [vmem:[#allocation13 + $0x70] sm:$0xff]
    %v702 = vld [vmem:[#allocation13 + $0x78] sm:$0xff]
    %v703 = vld [vmem:[#allocation13 + $0x80] sm:$0xff]
    %v704 = vld [vmem:[#allocation13 + $0x88] sm:$0xff]
    %v705 = vld [vmem:[#allocation13 + $0x90] sm:$0xff]
    %v706 = vld [vmem:[#allocation13 + $0x98] sm:$0xff]
    %v707 = vld [vmem:[#allocation13 + $0xa0] sm:$0xff]
    %v708 = vld [vmem:[#allocation13 + $0xa8] sm:$0xff]
    %v709 = vld [vmem:[#allocation13 + $0xb0] sm:$0xff]
    %v710 = vld [vmem:[#allocation13 + $0xb8] sm:$0xff]
    %v711 = vld [vmem:[#allocation13 + $0xc0] sm:$0xff]
    %v712 = vld [vmem:[#allocation13 + $0xc8] sm:$0xff]
    %v713 = vld [vmem:[#allocation13 + $0xd0] sm:$0xff]
    %v714 = vld [vmem:[#allocation13 + $0xd8] sm:$0xff]
    %v715 = vld [vmem:[#allocation13 + $0xe0] sm:$0xff]
    %v716 = vld [vmem:[#allocation13 + $0xe8] sm:$0xff]
    %v717 = vld [vmem:[#allocation13 + $0xf0] sm:$0xff]
    %v718 = vld [vmem:[#allocation13 + $0xf8] sm:$0xff]
    %v719 = vld [vmem:[#allocation13 + $0x100] sm:$0xff]
    %v720 = vld [vmem:[#allocation13 + $0x108] sm:$0xff]
    %v721 = vld [vmem:[#allocation13 + $0x110] sm:$0xff]
    %v722 = vld [vmem:[#allocation13 + $0x118] sm:$0xff]
    %v723 = vld [vmem:[#allocation13 + $0x120] sm:$0xff]
    %v724 = vld [vmem:[#allocation13 + $0x128] sm:$0xff]
    %v725 = vld [vmem:[#allocation13 + $0x130] sm:$0xff]
    %v726 = vld [vmem:[#allocation13 + $0x138] sm:$0xff]
    %v727 = vld [vmem:[#allocation13 + $0x140] sm:$0xff]
    %v728 = vld [vmem:[#allocation13 + $0x148] sm:$0xff]
    %v729 = vld [vmem:[#allocation13 + $0x150] sm:$0xff]
    %v730 = vld [vmem:[#allocation13 + $0x158] sm:$0xff]
    %v731 = vld [vmem:[#allocation13 + $0x160] sm:$0xff]
    %v732 = vld [vmem:[#allocation13 + $0x168] sm:$0xff]
    %v733 = vld [vmem:[#allocation13 + $0x170] sm:$0xff]
    %v734 = vld [vmem:[#allocation13 + $0x178] sm:$0xff]
    %v735 = vld [vmem:[#allocation13 + $0x180] sm:$0xff]
    %v736 = vld [vmem:[#allocation13 + $0x188] sm:$0xff]
    %v737 = vld [vmem:[#allocation13 + $0x190] sm:$0xff]
    %v738 = vld [vmem:[#allocation13 + $0x198] sm:$0xff]
    %v739 = vld [vmem:[#allocation13 + $0x1a0] sm:$0xff]
    %v740 = vld [vmem:[#allocation13 + $0x1a8] sm:$0xff]
    %v741 = vld [vmem:[#allocation13 + $0x1b0] sm:$0xff]
    %v742 = vld [vmem:[#allocation13 + $0x1b8] sm:$0xff]
    %v743 = vld [vmem:[#allocation13 + $0x1c0] sm:$0xff]
    %v744 = vld [vmem:[#allocation13 + $0x1c8] sm:$0xff]
    %v745 = vld [vmem:[#allocation13 + $0x1d0] sm:$0xff]
    %v746 = vld [vmem:[#allocation13 + $0x1d8] sm:$0xff]
    %v747 = vld [vmem:[#allocation13 + $0x1e0] sm:$0xff]
    %v748 = vld [vmem:[#allocation13 + $0x1e8] sm:$0xff]
    %v749 = vld [vmem:[#allocation13 + $0x1f0] sm:$0xff]
    %v750 = vld [vmem:[#allocation13 + $0x1f8] sm:$0xff]
    %v751 = vld [vmem:[%s15] sm:$0xff]
    %v752 = vld [vmem:[%s15 + $0x8] sm:$0xff]
    %v753 = vld [vmem:[%s15 + $0x10] sm:$0xff]
    %v754 = vld [vmem:[%s15 + $0x18] sm:$0xff]
    %v755 = vld [vmem:[%s15 + $0x20] sm:$0xff]
    %v756 = vld [vmem:[%s15 + $0x28] sm:$0xff]
    %v757 = vld [vmem:[%s15 + $0x30] sm:$0xff]
    %v758 = vld [vmem:[%s15 + $0x38] sm:$0xff]
    %v759 = vld [vmem:[%s15 + $0x40] sm:$0xff]
    %v760 = vld [vmem:[%s15 + $0x48] sm:$0xff]
    %v761 = vld [vmem:[%s15 + $0x50] sm:$0xff]
    %v762 = vld [vmem:[%s15 + $0x58] sm:$0xff]
    %v763 = vld [vmem:[%s15 + $0x60] sm:$0xff]
    %v764 = vld [vmem:[%s15 + $0x68] sm:$0xff]
    %v765 = vld [vmem:[%s15 + $0x70] sm:$0xff]
    %v766 = vld [vmem:[%s15 + $0x78] sm:$0xff]
    %v767 = vld [vmem:[#allocation15] sm:$0x3]
    %768 = vst [vmem:[#allocation3] sm:$0x3] 0.0
    %v769 = vld [vmem:[#allocation3] sm:$0x3]
    %770 = vmatpush.msra.mxu0 %v747
    %771 = vmatpush.msra.mxu0 %v743
    %772 = vmatpush.msra.mxu0 %v739
    %773 = vmatpush.msra.mxu0 %v735
    %774 = vmatpush.msra.mxu0 %v731
    %775 = vmatpush.msra.mxu0 %v727
    %776 = vmatpush.msra.mxu0 %v723
    %777 = vmatpush.msra.mxu0 %v719
    %778 = vmatpush.msra.mxu0 %v715
    %779 = vmatpush.msra.mxu0 %v711
    %780 = vmatpush.msra.mxu0 %v707
    %781 = vmatpush.msra.mxu0 %v703
    %782 = vmatpush.msra.mxu0 %v699
    %783 = vmatpush.msra.mxu0 %v695
    %784 = vmatpush.msra.mxu0 %v691
    %785 = vmatpush.msra.mxu0 %v687
    %786 = vmatmul.f32.gmra.mxu0 %v769
    %v787 = vpop.f32.mrf.mxu0
    %v788 = vadd.f32 0.0, %v787
    %789 = vdwg.mxu0
    %790 = vmatpush.msra.mxu0 %v748
    %791 = vmatpush.msra.mxu0 %v744
    %792 = vmatpush.msra.mxu0 %v740
    %793 = vmatpush.msra.mxu0 %v736
    %794 = vmatpush.msra.mxu0 %v732
    %795 = vmatpush.msra.mxu0 %v728
    %796 = vmatpush.msra.mxu0 %v724
    %797 = vmatpush.msra.mxu0 %v720
    %798 = vmatpush.msra.mxu0 %v716
    %799 = vmatpush.msra.mxu0 %v712
    %800 = vmatpush.msra.mxu0 %v708
    %801 = vmatpush.msra.mxu0 %v704
    %802 = vmatpush.msra.mxu0 %v700
    %803 = vmatpush.msra.mxu0 %v696
    %804 = vmatpush.msra.mxu0 %v692
    %805 = vmatpush.msra.mxu0 %v688
    %806 = vmatmul.f32.gmra.mxu0 %v769
    %v807 = vpop.f32.mrf.mxu0
    %v808 = vadd.f32 0.0, %v807
    %809 = vdwg.mxu0
    %810 = vmatpush.msra.mxu0 %v749
    %811 = vmatpush.msra.mxu0 %v745
    %812 = vmatpush.msra.mxu0 %v741
    %813 = vmatpush.msra.mxu0 %v737
    %814 = vmatpush.msra.mxu0 %v733
    %815 = vmatpush.msra.mxu0 %v729
    %816 = vmatpush.msra.mxu0 %v725
    %817 = vmatpush.msra.mxu0 %v721
    %818 = vmatpush.msra.mxu0 %v717
    %819 = vmatpush.msra.mxu0 %v713
    %820 = vmatpush.msra.mxu0 %v709
    %821 = vmatpush.msra.mxu0 %v705
    %822 = vmatpush.msra.mxu0 %v701
    %823 = vmatpush.msra.mxu0 %v697
    %824 = vmatpush.msra.mxu0 %v693
    %825 = vmatpush.msra.mxu0 %v689
    %826 = vmatmul.f32.gmra.mxu0 %v769
    %v827 = vpop.f32.mrf.mxu0
    %v828 = vadd.f32 0.0, %v827
    %829 = vdwg.mxu0
    %830 = vmatpush.msra.mxu0 %v750
    %831 = vmatpush.msra.mxu0 %v746
    %832 = vmatpush.msra.mxu0 %v742
    %833 = vmatpush.msra.mxu0 %v738
    %834 = vmatpush.msra.mxu0 %v734
    %835 = vmatpush.msra.mxu0 %v730
    %836 = vmatpush.msra.mxu0 %v726
    %837 = vmatpush.msra.mxu0 %v722
    %838 = vmatpush.msra.mxu0 %v718
    %839 = vmatpush.msra.mxu0 %v714
    %840 = vmatpush.msra.mxu0 %v710
    %841 = vmatpush.msra.mxu0 %v706
    %842 = vmatpush.msra.mxu0 %v702
    %843 = vmatpush.msra.mxu0 %v698
    %844 = vmatpush.msra.mxu0 %v694
    %845 = vmatpush.msra.mxu0 %v690
    %846 = vmatmul.f32.gmra.mxu0 %v769
    %v847 = vpop.f32.mrf.mxu0
    %v848 = vadd.f32 0.0, %v847
    %849 = vdwg.mxu0
    %v850 = vadd.f32 %v659, %v788
    %v851 = vadd.f32 %v682, %v808
    %v852 = vxor.u32 %v850, 2147483648
    %v853 = vmul.f32 %v852, 1.442695
    %v854 = vpow.pop %v853
    %v855 = vadd.f32 %v854, 1.0
    %v856 = vrcp.pop %v855
    %v857 = vmul.f32 %v855, %v856
    %v858 = vsub.f32 1.0, %v857
    %v859 = vmul.f32 %v856, %v858
    %v860 = vadd.f32 %v856, %v859
    %vm861 = vweird.f32 %v855
    %vm862 = vweird.f32 %v856
    %vm863 = vmor %vm861, %vm862
    %v864 = vsel %vm863, %v856, %v860
    %v865 = vand.u32 2147483647, %v855
    %vm866 = vcmp.eq.f32.partialorder %v865, 8.507059e+37
    %v867 = vand.u32 %v855, 2147483648
    %v868 = vor.u32 1.1754944e-38, %v867
    %v869 = vsel %vm866, %v868, %v864
    %v870 = vmul.f32 1.0, %v869
    %v871 = vtanh.pop %v851
    %v872 = vxor.u32 %v851, 2147483648
    %v873 = vmul.f32 %v872, 1.442695
    %v874 = vpow.pop %v873
    %v875 = vadd.f32 %v874, 1.0
    %v876 = vrcp.pop %v875
    %v877 = vmul.f32 %v875, %v876
    %v878 = vsub.f32 1.0, %v877
    %v879 = vmul.f32 %v876, %v878
    %v880 = vadd.f32 %v876, %v879
    %vm881 = vweird.f32 %v875
    %vm882 = vweird.f32 %v876
    %vm883 = vmor %vm881, %vm882
    %v884 = vsel %vm883, %v876, %v880
    %v885 = vand.u32 2147483647, %v875
    %vm886 = vcmp.eq.f32.partialorder %v885, 8.507059e+37
    %v887 = vand.u32 %v875, 2147483648
    %v888 = vor.u32 1.1754944e-38, %v887
    %v889 = vsel %vm886, %v888, %v884
    %v890 = vmul.f32 1.0, %v889
    %v891 = vmul.f32 %v870, 0.0
    %v892 = vmul.f32 %v870, %v871
    %894 = vrot.lane.b32.xlu0 %v892, 64
    %v895 = vpop.permute.xlu0 %894
    %v897 = vadd.f32 %v891, %v895
    %v898 = vtanh.pop %v897
    %v899 = vmul.f32 %v890, %v898
    %901 = vrot.lane.b32.xlu0 %v899, 64
    %v902 = vpop.permute.xlu0 %901
    %vm903 = vcmask 523264
    %v904 = vsel %vm903, %v902, 0
    %906 = vmatpush.msra.mxu0 0.0
    %907 = vmatpush.msra.mxu0 0.0
    %908 = vmatpush.msra.mxu0 0.0
    %909 = vmatpush.msra.mxu0 0.0
    %910 = vmatpush.msra.mxu0 0.0
    %911 = vmatpush.msra.mxu0 0.0
    %912 = vmatpush.msra.mxu0 0.0
    %913 = vmatpush.msra.mxu0 0.0
    %914 = vmatpush.msra.mxu0 %v765
    %915 = vmatpush.msra.mxu0 %v763
    %916 = vmatpush.msra.mxu0 %v761
    %917 = vmatpush.msra.mxu0 %v759
    %918 = vmatpush.msra.mxu0 %v757
    %919 = vmatpush.msra.mxu0 %v755
    %920 = vmatpush.msra.mxu0 %v753
    %921 = vmatpush.msra.mxu0 %v751
    %922 = vmatmul.f32.gmra.mxu0 %v904
    %v923 = vpop.f32.mrf.mxu0
    %v924 = vadd.f32 %v828, %v923
    %925 = vdwg.mxu0
    %926 = vmatpush.msra.mxu0 0.0
    %927 = vmatpush.msra.mxu0 0.0
    %928 = vmatpush.msra.mxu0 0.0
    %929 = vmatpush.msra.mxu0 0.0
    %930 = vmatpush.msra.mxu0 0.0
    %931 = vmatpush.msra.mxu0 0.0
    %932 = vmatpush.msra.mxu0 0.0
    %933 = vmatpush.msra.mxu0 0.0
    %934 = vmatpush.msra.mxu0 %v766
    %935 = vmatpush.msra.mxu0 %v764
    %936 = vmatpush.msra.mxu0 %v762
    %937 = vmatpush.msra.mxu0 %v760
    %938 = vmatpush.msra.mxu0 %v758
    %939 = vmatpush.msra.mxu0 %v756
    %940 = vmatpush.msra.mxu0 %v754
    %941 = vmatpush.msra.mxu0 %v752
    %942 = vmatmul.f32.gmra.mxu0 %v904
    %v943 = vpop.f32.mrf.mxu0
    %v944 = vadd.f32 %v848, %v943
    %945 = vdwg.mxu0
    %v947 = vperm.slane %v767, 0
    %v948 = vperm.slane %v767, 1
    %v951 = vadd.f32 %v924, %v947
    %v952 = vadd.f32 %v944, %v948
    %v953 = vxor.u32 %v951, 2147483648
    %v954 = vmul.f32 %v953, 1.442695
    %v955 = vpow.pop %v954
    %v956 = vadd.f32 %v955, 1.0
    %v957 = vrcp.pop %v956
    %v958 = vmul.f32 %v956, %v957
    %v959 = vsub.f32 1.0, %v958
    %v960 = vmul.f32 %v957, %v959
    %v961 = vadd.f32 %v957, %v960
    %vm962 = vweird.f32 %v956
    %vm963 = vweird.f32 %v957
    %vm964 = vmor %vm962, %vm963
    %v965 = vsel %vm964, %v957, %v961
    %v966 = vand.u32 2147483647, %v956
    %vm967 = vcmp.eq.f32.partialorder %v966, 8.507059e+37
    %v968 = vand.u32 %v956, 2147483648
    %v969 = vor.u32 1.1754944e-38, %v968
    %v970 = vsel %vm967, %v969, %v965
    %v971 = vmul.f32 1.0, %v970
    %v972 = vtanh.pop %v952
    %v973 = vxor.u32 %v952, 2147483648
    %v974 = vmul.f32 %v973, 1.442695
    %v975 = vpow.pop %v974
    %v976 = vadd.f32 %v975, 1.0
    %v977 = vrcp.pop %v976
    %v978 = vmul.f32 %v976, %v977
    %v979 = vsub.f32 1.0, %v978
    %v980 = vmul.f32 %v977, %v979
    %v981 = vadd.f32 %v977, %v980
    %vm982 = vweird.f32 %v976
    %vm983 = vweird.f32 %v977
    %vm984 = vmor %vm982, %vm983
    %v985 = vsel %vm984, %v977, %v981
    %v986 = vand.u32 2147483647, %v976
    %vm987 = vcmp.eq.f32.partialorder %v986, 8.507059e+37
    %v988 = vand.u32 %v976, 2147483648
    %v989 = vor.u32 1.1754944e-38, %v988
    %v990 = vsel %vm987, %v989, %v985
    %v991 = vmul.f32 1.0, %v990
    %v992 = vmul.f32 %v971, 0.0
    %v993 = vmul.f32 %v971, %v972
    %995 = vrot.lane.b32.xlu0 %v993, 64
    %v996 = vpop.permute.xlu0 %995
    %v998 = vadd.f32 %v992, %v996
    %v999 = vtanh.pop %v998
    %v1000 = vmul.f32 %v991, %v999
    %vm1002 = vcmask 517120
    %1003 = vst.msk [vmem:[#allocation3] sm:$0x3] %vm1002, %v902
    %vm1004 = vcmask 1041920
    %1005 = vst.msk [vmem:[#allocation3] sm:$0x3] %vm1004, %v1000
    %1007 = vrot.lane.b32.xlu0 %v1000, 64
    %v1008 = vpop.permute.xlu0 %1007
    %1010 = vst.msk [vmem:[#allocation2] sm:$0x3] %vm1002, %v1008
    %v1011 = vld [vmem:[#allocation3] sm:$0x3]
    %1012 = vmatpush.msra.mxu0 %v747
    %1013 = vmatpush.msra.mxu0 %v743
    %1014 = vmatpush.msra.mxu0 %v739
    %1015 = vmatpush.msra.mxu0 %v735
    %1016 = vmatpush.msra.mxu0 %v731
    %1017 = vmatpush.msra.mxu0 %v727
    %1018 = vmatpush.msra.mxu0 %v723
    %1019 = vmatpush.msra.mxu0 %v719
    %1020 = vmatpush.msra.mxu0 %v715
    %1021 = vmatpush.msra.mxu0 %v711
    %1022 = vmatpush.msra.mxu0 %v707
    %1023 = vmatpush.msra.mxu0 %v703
    %1024 = vmatpush.msra.mxu0 %v699
    %1025 = vmatpush.msra.mxu0 %v695
    %1026 = vmatpush.msra.mxu0 %v691
    %1027 = vmatpush.msra.mxu0 %v687
    %1028 = vmatmul.f32.gmra.mxu0 %v1011
    %v1029 = vpop.f32.mrf.mxu0
    %v1030 = vadd.f32 0.0, %v1029
    %1031 = vdwg.mxu0
    %1032 = vmatpush.msra.mxu0 %v748
    %1033 = vmatpush.msra.mxu0 %v744
    %1034 = vmatpush.msra.mxu0 %v740
    %1035 = vmatpush.msra.mxu0 %v736
    %1036 = vmatpush.msra.mxu0 %v732
    %1037 = vmatpush.msra.mxu0 %v728
    %1038 = vmatpush.msra.mxu0 %v724
    %1039 = vmatpush.msra.mxu0 %v720
    %1040 = vmatpush.msra.mxu0 %v716
    %1041 = vmatpush.msra.mxu0 %v712
    %1042 = vmatpush.msra.mxu0 %v708
    %1043 = vmatpush.msra.mxu0 %v704
    %1044 = vmatpush.msra.mxu0 %v700
    %1045 = vmatpush.msra.mxu0 %v696
    %1046 = vmatpush.msra.mxu0 %v692
    %1047 = vmatpush.msra.mxu0 %v688
    %1048 = vmatmul.f32.gmra.mxu0 %v1011
    %v1049 = vpop.f32.mrf.mxu0
    %v1050 = vadd.f32 0.0, %v1049
    %1051 = vdwg.mxu0
    %1052 = vmatpush.msra.mxu0 %v749
    %1053 = vmatpush.msra.mxu0 %v745
    %1054 = vmatpush.msra.mxu0 %v741
    %1055 = vmatpush.msra.mxu0 %v737
    %1056 = vmatpush.msra.mxu0 %v733
    %1057 = vmatpush.msra.mxu0 %v729
    %1058 = vmatpush.msra.mxu0 %v725
    %1059 = vmatpush.msra.mxu0 %v721
    %1060 = vmatpush.msra.mxu0 %v717
    %1061 = vmatpush.msra.mxu0 %v713
    %1062 = vmatpush.msra.mxu0 %v709
    %1063 = vmatpush.msra.mxu0 %v705
    %1064 = vmatpush.msra.mxu0 %v701
    %1065 = vmatpush.msra.mxu0 %v697
    %1066 = vmatpush.msra.mxu0 %v693
    %1067 = vmatpush.msra.mxu0 %v689
    %1068 = vmatmul.f32.gmra.mxu0 %v1011
    %v1069 = vpop.f32.mrf.mxu0
    %v1070 = vadd.f32 0.0, %v1069
    %1071 = vdwg.mxu0
    %1072 = vmatpush.msra.mxu0 %v750
    %1073 = vmatpush.msra.mxu0 %v746
    %1074 = vmatpush.msra.mxu0 %v742
    %1075 = vmatpush.msra.mxu0 %v738
    %1076 = vmatpush.msra.mxu0 %v734
    %1077 = vmatpush.msra.mxu0 %v730
    %1078 = vmatpush.msra.mxu0 %v726
    %1079 = vmatpush.msra.mxu0 %v722
    %1080 = vmatpush.msra.mxu0 %v718
    %1081 = vmatpush.msra.mxu0 %v714
    %1082 = vmatpush.msra.mxu0 %v710
    %1083 = vmatpush.msra.mxu0 %v706
    %1084 = vmatpush.msra.mxu0 %v702
    %1085 = vmatpush.msra.mxu0 %v698
    %1086 = vmatpush.msra.mxu0 %v694
    %1087 = vmatpush.msra.mxu0 %v690
    %1088 = vmatmul.f32.gmra.mxu0 %v1011
    %v1089 = vpop.f32.mrf.mxu0
    %v1090 = vadd.f32 0.0, %v1089
    %1091 = vdwg.mxu0
    %v1094 = vrot.slane %v1030, 6
    %v1095 = vrot.slane %v1050, 6
    %v1098 = vadd.f32 %v659, %v1094
    %v1099 = vadd.f32 %v682, %v1095
    %v1100 = vxor.u32 %v1098, 2147483648
    %v1101 = vmul.f32 %v1100, 1.442695
    %v1102 = vpow.pop %v1101
    %v1103 = vadd.f32 %v1102, 1.0
    %v1104 = vrcp.pop %v1103
    %v1105 = vmul.f32 %v1103, %v1104
    %v1106 = vsub.f32 1.0, %v1105
    %v1107 = vmul.f32 %v1104, %v1106
    %v1108 = vadd.f32 %v1104, %v1107
    %vm1109 = vweird.f32 %v1103
    %vm1110 = vweird.f32 %v1104
    %vm1111 = vmor %vm1109, %vm1110
    %v1112 = vsel %vm1111, %v1104, %v1108
    %v1113 = vand.u32 2147483647, %v1103
    %vm1114 = vcmp.eq.f32.partialorder %v1113, 8.507059e+37
    %v1115 = vand.u32 %v1103, 2147483648
    %v1116 = vor.u32 1.1754944e-38, %v1115
    %v1117 = vsel %vm1114, %v1116, %v1112
    %v1118 = vmul.f32 1.0, %v1117
    %v1119 = vtanh.pop %v1099
    %v1120 = vxor.u32 %v1099, 2147483648
    %v1121 = vmul.f32 %v1120, 1.442695
    %v1122 = vpow.pop %v1121
    %v1123 = vadd.f32 %v1122, 1.0
    %v1124 = vrcp.pop %v1123
    %v1125 = vmul.f32 %v1123, %v1124
    %v1126 = vsub.f32 1.0, %v1125
    %v1127 = vmul.f32 %v1124, %v1126
    %v1128 = vadd.f32 %v1124, %v1127
    %vm1129 = vweird.f32 %v1123
    %vm1130 = vweird.f32 %v1124
    %vm1131 = vmor %vm1129, %vm1130
    %v1132 = vsel %vm1131, %v1124, %v1128
    %v1133 = vand.u32 2147483647, %v1123
    %vm1134 = vcmp.eq.f32.partialorder %v1133, 8.507059e+37
    %v1135 = vand.u32 %v1123, 2147483648
    %v1136 = vor.u32 1.1754944e-38, %v1135
    %v1137 = vsel %vm1134, %v1136, %v1132
    %v1138 = vmul.f32 1.0, %v1137
    %v1140 = vrot.slane %v897, 6
    %v1142 = vmul.f32 %v1118, %v1140
    %v1143 = vmul.f32 %v1118, %v1119
    %1145 = vrot.lane.b32.xlu0 %v1143, 64
    %v1146 = vpop.permute.xlu0 %1145
    %v1148 = vadd.f32 %v1142, %v1146
    %v1149 = vtanh.pop %v1148
    %v1150 = vmul.f32 %v1138, %v1149
    %v1152 = vrot.slane %v1150, 2
    %1153 = vrot.lane.b32.xlu0 %v1152, 64
    %v1154 = vpop.permute.xlu0 %1153
    %v1155 = vsel %vm903, %v1154, 0
    %1157 = vmatpush.msra.mxu0 0.0
    %1158 = vmatpush.msra.mxu0 0.0
    %1159 = vmatpush.msra.mxu0 0.0
    %1160 = vmatpush.msra.mxu0 0.0
    %1161 = vmatpush.msra.mxu0 0.0
    %1162 = vmatpush.msra.mxu0 0.0
    %1163 = vmatpush.msra.mxu0 0.0
    %1164 = vmatpush.msra.mxu0 0.0
    %1165 = vmatpush.msra.mxu0 %v765
    %1166 = vmatpush.msra.mxu0 %v763
    %1167 = vmatpush.msra.mxu0 %v761
    %1168 = vmatpush.msra.mxu0 %v759
    %1169 = vmatpush.msra.mxu0 %v757
    %1170 = vmatpush.msra.mxu0 %v755
    %1171 = vmatpush.msra.mxu0 %v753
    %1172 = vmatpush.msra.mxu0 %v751
    %1173 = vmatmul.f32.gmra.mxu0 %v1155
    %v1174 = vpop.f32.mrf.mxu0
    %v1175 = vadd.f32 %v1070, %v1174
    %1176 = vdwg.mxu0
    %1177 = vmatpush.msra.mxu0 0.0
    %1178 = vmatpush.msra.mxu0 0.0
    %1179 = vmatpush.msra.mxu0 0.0
    %1180 = vmatpush.msra.mxu0 0.0
    %1181 = vmatpush.msra.mxu0 0.0
    %1182 = vmatpush.msra.mxu0 0.0
    %1183 = vmatpush.msra.mxu0 0.0
    %1184 = vmatpush.msra.mxu0 0.0
    %1185 = vmatpush.msra.mxu0 %v766
    %1186 = vmatpush.msra.mxu0 %v764
    %1187 = vmatpush.msra.mxu0 %v762
    %1188 = vmatpush.msra.mxu0 %v760
    %1189 = vmatpush.msra.mxu0 %v758
    %1190 = vmatpush.msra.mxu0 %v756
    %1191 = vmatpush.msra.mxu0 %v754
    %1192 = vmatpush.msra.mxu0 %v752
    %1193 = vmatmul.f32.gmra.mxu0 %v1155
    %v1194 = vpop.f32.mrf.mxu0
    %v1195 = vadd.f32 %v1090, %v1194
    %1196 = vdwg.mxu0
    %v1197 = vadd.f32 %v1175, %v947
    %v1198 = vadd.f32 %v1195, %v948
    %v1199 = vxor.u32 %v1197, 2147483648
    %v1200 = vmul.f32 %v1199, 1.442695
    %v1201 = vpow.pop %v1200
    %v1202 = vadd.f32 %v1201, 1.0
    %v1203 = vrcp.pop %v1202
    %v1204 = vmul.f32 %v1202, %v1203
    %v1205 = vsub.f32 1.0, %v1204
    %v1206 = vmul.f32 %v1203, %v1205
    %v1207 = vadd.f32 %v1203, %v1206
    %vm1208 = vweird.f32 %v1202
    %vm1209 = vweird.f32 %v1203
    %vm1210 = vmor %vm1208, %vm1209
    %v1211 = vsel %vm1210, %v1203, %v1207
    %v1212 = vand.u32 2147483647, %v1202
    %vm1213 = vcmp.eq.f32.partialorder %v1212, 8.507059e+37
    %v1214 = vand.u32 %v1202, 2147483648
    %v1215 = vor.u32 1.1754944e-38, %v1214
    %v1216 = vsel %vm1213, %v1215, %v1211
    %v1217 = vmul.f32 1.0, %v1216
    %v1218 = vtanh.pop %v1198
    %v1219 = vxor.u32 %v1198, 2147483648
    %v1220 = vmul.f32 %v1219, 1.442695
    %v1221 = vpow.pop %v1220
    %v1222 = vadd.f32 %v1221, 1.0
    %v1223 = vrcp.pop %v1222
    %v1224 = vmul.f32 %v1222, %v1223
    %v1225 = vsub.f32 1.0, %v1224
    %v1226 = vmul.f32 %v1223, %v1225
    %v1227 = vadd.f32 %v1223, %v1226
    %vm1228 = vweird.f32 %v1222
    %vm1229 = vweird.f32 %v1223
    %vm1230 = vmor %vm1228, %vm1229
    %v1231 = vsel %vm1230, %v1223, %v1227
    %v1232 = vand.u32 2147483647, %v1222
    %vm1233 = vcmp.eq.f32.partialorder %v1232, 8.507059e+37
    %v1234 = vand.u32 %v1222, 2147483648
    %v1235 = vor.u32 1.1754944e-38, %v1234
    %v1236 = vsel %vm1233, %v1235, %v1231
    %v1237 = vmul.f32 1.0, %v1236
    %v1238 = vmul.f32 %v1217, %v998
    %v1239 = vmul.f32 %v1217, %v1218
    %1241 = vrot.lane.b32.xlu0 %v1239, 64
    %v1242 = vpop.permute.xlu0 %1241
    %v1244 = vadd.f32 %v1238, %v1242
    %v1245 = vtanh.pop %v1244
    %v1246 = vmul.f32 %v1237, %v1245
    %1247 = vrot.lane.b32.xlu0 %v1150, 64
    %v1248 = vpop.permute.xlu0 %1247
    %vm1250 = vcmask 519170
    %1251 = vst.msk [vmem:[#allocation3 - $0x2] sm:$0xc] %vm1250, %v1248
    %1252 = vst.msk [vmem:[#allocation3] sm:$0x3] %vm1004, %v1246
    %1254 = vrot.lane.b32.xlu0 %v1246, 64
    %v1255 = vpop.permute.xlu0 %1254
    %1257 = vst.msk [vmem:[#allocation2 + $0x2] sm:$0x3] %vm1002, %v1255
    %v1258 = vld [vmem:[#allocation3] sm:$0x3]
    %1259 = vmatpush.msra.mxu0 %v747
    %1260 = vmatpush.msra.mxu0 %v743
    %1261 = vmatpush.msra.mxu0 %v739
    %1262 = vmatpush.msra.mxu0 %v735
    %1263 = vmatpush.msra.mxu0 %v731
    %1264 = vmatpush.msra.mxu0 %v727
    %1265 = vmatpush.msra.mxu0 %v723
    %1266 = vmatpush.msra.mxu0 %v719
    %1267 = vmatpush.msra.mxu0 %v715
    %1268 = vmatpush.msra.mxu0 %v711
    %1269 = vmatpush.msra.mxu0 %v707
    %1270 = vmatpush.msra.mxu0 %v703
    %1271 = vmatpush.msra.mxu0 %v699
    %1272 = vmatpush.msra.mxu0 %v695
    %1273 = vmatpush.msra.mxu0 %v691
    %1274 = vmatpush.msra.mxu0 %v687
    %1275 = vmatmul.f32.gmra.mxu0 %v1258
    %v1276 = vpop.f32.mrf.mxu0
    %v1277 = vadd.f32 0.0, %v1276
    %1278 = vdwg.mxu0
    %1279 = vmatpush.msra.mxu0 %v748
    %1280 = vmatpush.msra.mxu0 %v744
    %1281 = vmatpush.msra.mxu0 %v740
    %1282 = vmatpush.msra.mxu0 %v736
    %1283 = vmatpush.msra.mxu0 %v732
    %1284 = vmatpush.msra.mxu0 %v728
    %1285 = vmatpush.msra.mxu0 %v724
    %1286 = vmatpush.msra.mxu0 %v720
    %1287 = vmatpush.msra.mxu0 %v716
    %1288 = vmatpush.msra.mxu0 %v712
    %1289 = vmatpush.msra.mxu0 %v708
    %1290 = vmatpush.msra.mxu0 %v704
    %1291 = vmatpush.msra.mxu0 %v700
    %1292 = vmatpush.msra.mxu0 %v696
    %1293 = vmatpush.msra.mxu0 %v692
    %1294 = vmatpush.msra.mxu0 %v688
    %1295 = vmatmul.f32.gmra.mxu0 %v1258
    %v1296 = vpop.f32.mrf.mxu0
    %v1297 = vadd.f32 0.0, %v1296
    %1298 = vdwg.mxu0
    %1299 = vmatpush.msra.mxu0 %v749
    %1300 = vmatpush.msra.mxu0 %v745
    %1301 = vmatpush.msra.mxu0 %v741
    %1302 = vmatpush.msra.mxu0 %v737
    %1303 = vmatpush.msra.mxu0 %v733
    %1304 = vmatpush.msra.mxu0 %v729
    %1305 = vmatpush.msra.mxu0 %v725
    %1306 = vmatpush.msra.mxu0 %v721
    %1307 = vmatpush.msra.mxu0 %v717
    %1308 = vmatpush.msra.mxu0 %v713
    %1309 = vmatpush.msra.mxu0 %v709
    %1310 = vmatpush.msra.mxu0 %v705
    %1311 = vmatpush.msra.mxu0 %v701
    %1312 = vmatpush.msra.mxu0 %v697
    %1313 = vmatpush.msra.mxu0 %v693
    %1314 = vmatpush.msra.mxu0 %v689
    %1315 = vmatmul.f32.gmra.mxu0 %v1258
    %v1316 = vpop.f32.mrf.mxu0
    %v1317 = vadd.f32 0.0, %v1316
    %1318 = vdwg.mxu0
    %1319 = vmatpush.msra.mxu0 %v750
    %1320 = vmatpush.msra.mxu0 %v746
    %1321 = vmatpush.msra.mxu0 %v742
    %1322 = vmatpush.msra.mxu0 %v738
    %1323 = vmatpush.msra.mxu0 %v734
    %1324 = vmatpush.msra.mxu0 %v730
    %1325 = vmatpush.msra.mxu0 %v726
    %1326 = vmatpush.msra.mxu0 %v722
    %1327 = vmatpush.msra.mxu0 %v718
    %1328 = vmatpush.msra.mxu0 %v714
    %1329 = vmatpush.msra.mxu0 %v710
    %1330 = vmatpush.msra.mxu0 %v706
    %1331 = vmatpush.msra.mxu0 %v702
    %1332 = vmatpush.msra.mxu0 %v698
    %1333 = vmatpush.msra.mxu0 %v694
    %1334 = vmatpush.msra.mxu0 %v690
    %1335 = vmatmul.f32.gmra.mxu0 %v1258
    %v1336 = vpop.f32.mrf.mxu0
    %v1337 = vadd.f32 0.0, %v1336
    %1338 = vdwg.mxu0
    %v1341 = vrot.slane %v1277, 4
    %v1342 = vrot.slane %v1297, 4
    %v1345 = vadd.f32 %v659, %v1341
    %v1346 = vadd.f32 %v682, %v1342
    %v1347 = vxor.u32 %v1345, 2147483648
    %v1348 = vmul.f32 %v1347, 1.442695
    %v1349 = vpow.pop %v1348
    %v1350 = vadd.f32 %v1349, 1.0
    %v1351 = vrcp.pop %v1350
    %v1352 = vmul.f32 %v1350, %v1351
    %v1353 = vsub.f32 1.0, %v1352
    %v1354 = vmul.f32 %v1351, %v1353
    %v1355 = vadd.f32 %v1351, %v1354
    %vm1356 = vweird.f32 %v1350
    %vm1357 = vweird.f32 %v1351
    %vm1358 = vmor %vm1356, %vm1357
    %v1359 = vsel %vm1358, %v1351, %v1355
    %v1360 = vand.u32 2147483647, %v1350
    %vm1361 = vcmp.eq.f32.partialorder %v1360, 8.507059e+37
    %v1362 = vand.u32 %v1350, 2147483648
    %v1363 = vor.u32 1.1754944e-38, %v1362
    %v1364 = vsel %vm1361, %v1363, %v1359
    %v1365 = vmul.f32 1.0, %v1364
    %v1366 = vtanh.pop %v1346
    %v1367 = vxor.u32 %v1346, 2147483648
    %v1368 = vmul.f32 %v1367, 1.442695
    %v1369 = vpow.pop %v1368
    %v1370 = vadd.f32 %v1369, 1.0
    %v1371 = vrcp.pop %v1370
    %v1372 = vmul.f32 %v1370, %v1371
    %v1373 = vsub.f32 1.0, %v1372
    %v1374 = vmul.f32 %v1371, %v1373
    %v1375 = vadd.f32 %v1371, %v1374
    %vm1376 = vweird.f32 %v1370
    %vm1377 = vweird.f32 %v1371
    %vm1378 = vmor %vm1376, %vm1377
    %v1379 = vsel %vm1378, %v1371, %v1375
    %v1380 = vand.u32 2147483647, %v1370
    %vm1381 = vcmp.eq.f32.partialorder %v1380, 8.507059e+37
    %v1382 = vand.u32 %v1370, 2147483648
    %v1383 = vor.u32 1.1754944e-38, %v1382
    %v1384 = vsel %vm1381, %v1383, %v1379
    %v1385 = vmul.f32 1.0, %v1384
    %v1387 = vrot.slane %v1148, 6
    %v1389 = vmul.f32 %v1365, %v1387
    %v1390 = vmul.f32 %v1365, %v1366
    %1392 = vrot.lane.b32.xlu0 %v1390, 64
    %v1393 = vpop.permute.xlu0 %1392
    %v1395 = vadd.f32 %v1389, %v1393
    %v1396 = vtanh.pop %v1395
    %v1397 = vmul.f32 %v1385, %v1396
    %v1399 = vrot.slane %v1397, 4
    %1400 = vrot.lane.b32.xlu0 %v1399, 64
    %v1401 = vpop.permute.xlu0 %1400
    %v1402 = vsel %vm903, %v1401, 0
    %1404 = vmatpush.msra.mxu0 0.0
    %1405 = vmatpush.msra.mxu0 0.0
    %1406 = vmatpush.msra.mxu0 0.0
    %1407 = vmatpush.msra.mxu0 0.0
    %1408 = vmatpush.msra.mxu0 0.0
    %1409 = vmatpush.msra.mxu0 0.0
    %1410 = vmatpush.msra.mxu0 0.0
    %1411 = vmatpush.msra.mxu0 0.0
    %1412 = vmatpush.msra.mxu0 %v765
    %1413 = vmatpush.msra.mxu0 %v763
    %1414 = vmatpush.msra.mxu0 %v761
    %1415 = vmatpush.msra.mxu0 %v759
    %1416 = vmatpush.msra.mxu0 %v757
    %1417 = vmatpush.msra.mxu0 %v755
    %1418 = vmatpush.msra.mxu0 %v753
    %1419 = vmatpush.msra.mxu0 %v751
    %1420 = vmatmul.f32.gmra.mxu0 %v1402
    %v1421 = vpop.f32.mrf.mxu0
    %v1422 = vadd.f32 %v1317, %v1421
    %1423 = vdwg.mxu0
    %1424 = vmatpush.msra.mxu0 0.0
    %1425 = vmatpush.msra.mxu0 0.0
    %1426 = vmatpush.msra.mxu0 0.0
    %1427 = vmatpush.msra.mxu0 0.0
    %1428 = vmatpush.msra.mxu0 0.0
    %1429 = vmatpush.msra.mxu0 0.0
    %1430 = vmatpush.msra.mxu0 0.0
    %1431 = vmatpush.msra.mxu0 0.0
    %1432 = vmatpush.msra.mxu0 %v766
    %1433 = vmatpush.msra.mxu0 %v764
    %1434 = vmatpush.msra.mxu0 %v762
    %1435 = vmatpush.msra.mxu0 %v760
    %1436 = vmatpush.msra.mxu0 %v758
    %1437 = vmatpush.msra.mxu0 %v756
    %1438 = vmatpush.msra.mxu0 %v754
    %1439 = vmatpush.msra.mxu0 %v752
    %1440 = vmatmul.f32.gmra.mxu0 %v1402
    %v1441 = vpop.f32.mrf.mxu0
    %v1442 = vadd.f32 %v1337, %v1441
    %1443 = vdwg.mxu0
    %v1444 = vadd.f32 %v1422, %v947
    %v1445 = vadd.f32 %v1442, %v948
    %v1446 = vxor.u32 %v1444, 2147483648
    %v1447 = vmul.f32 %v1446, 1.442695
    %v1448 = vpow.pop %v1447
    %v1449 = vadd.f32 %v1448, 1.0
    %v1450 = vrcp.pop %v1449
    %v1451 = vmul.f32 %v1449, %v1450
    %v1452 = vsub.f32 1.0, %v1451
    %v1453 = vmul.f32 %v1450, %v1452
    %v1454 = vadd.f32 %v1450, %v1453
    %vm1455 = vweird.f32 %v1449
    %vm1456 = vweird.f32 %v1450
    %vm1457 = vmor %vm1455, %vm1456
    %v1458 = vsel %vm1457, %v1450, %v1454
    %v1459 = vand.u32 2147483647, %v1449
    %vm1460 = vcmp.eq.f32.partialorder %v1459, 8.507059e+37
    %v1461 = vand.u32 %v1449, 2147483648
    %v1462 = vor.u32 1.1754944e-38, %v1461
    %v1463 = vsel %vm1460, %v1462, %v1458
    %v1464 = vmul.f32 1.0, %v1463
    %v1465 = vtanh.pop %v1445
    %v1466 = vxor.u32 %v1445, 2147483648
    %v1467 = vmul.f32 %v1466, 1.442695
    %v1468 = vpow.pop %v1467
    %v1469 = vadd.f32 %v1468, 1.0
    %v1470 = vrcp.pop %v1469
    %v1471 = vmul.f32 %v1469, %v1470
    %v1472 = vsub.f32 1.0, %v1471
    %v1473 = vmul.f32 %v1470, %v1472
    %v1474 = vadd.f32 %v1470, %v1473
    %vm1475 = vweird.f32 %v1469
    %vm1476 = vweird.f32 %v1470
    %vm1477 = vmor %vm1475, %vm1476
    %v1478 = vsel %vm1477, %v1470, %v1474
    %v1479 = vand.u32 2147483647, %v1469
    %vm1480 = vcmp.eq.f32.partialorder %v1479, 8.507059e+37
    %v1481 = vand.u32 %v1469, 2147483648
    %v1482 = vor.u32 1.1754944e-38, %v1481
    %v1483 = vsel %vm1480, %v1482, %v1478
    %v1484 = vmul.f32 1.0, %v1483
    %v1485 = vmul.f32 %v1464, %v1244
    %v1486 = vmul.f32 %v1464, %v1465
    %1488 = vrot.lane.b32.xlu0 %v1486, 64
    %v1489 = vpop.permute.xlu0 %1488
    %v1491 = vadd.f32 %v1485, %v1489
    %v1492 = vtanh.pop %v1491
    %v1493 = vmul.f32 %v1484, %v1492
    %1494 = vrot.lane.b32.xlu0 %v1397, 64
    %v1495 = vpop.permute.xlu0 %1494
    %vm1497 = vcmask 521220
    %1498 = vst.msk [vmem:[#allocation3 - $0x4] sm:$0x30] %vm1497, %v1495
    %1499 = vst.msk [vmem:[#allocation3] sm:$0x3] %vm1004, %v1493
    %1501 = vrot.lane.b32.xlu0 %v1493, 64
    %v1502 = vpop.permute.xlu0 %1501
    %1504 = vst.msk [vmem:[#allocation2 + $0x4] sm:$0x3] %vm1002, %v1502
    %v1505 = vld [vmem:[#allocation3] sm:$0x3]
    %1506 = vmatpush.msra.mxu0 %v747
    %1507 = vmatpush.msra.mxu0 %v743
    %1508 = vmatpush.msra.mxu0 %v739
    %1509 = vmatpush.msra.mxu0 %v735
    %1510 = vmatpush.msra.mxu0 %v731
    %1511 = vmatpush.msra.mxu0 %v727
    %1512 = vmatpush.msra.mxu0 %v723
    %1513 = vmatpush.msra.mxu0 %v719
    %1514 = vmatpush.msra.mxu0 %v715
    %1515 = vmatpush.msra.mxu0 %v711
    %1516 = vmatpush.msra.mxu0 %v707
    %1517 = vmatpush.msra.mxu0 %v703
    %1518 = vmatpush.msra.mxu0 %v699
    %1519 = vmatpush.msra.mxu0 %v695
    %1520 = vmatpush.msra.mxu0 %v691
    %1521 = vmatpush.msra.mxu0 %v687
    %1522 = vmatmul.f32.gmra.mxu0 %v1505
    %v1523 = vpop.f32.mrf.mxu0
    %v1524 = vadd.f32 0.0, %v1523
    %1525 = vdwg.mxu0
    %1526 = vmatpush.msra.mxu0 %v748
    %1527 = vmatpush.msra.mxu0 %v744
    %1528 = vmatpush.msra.mxu0 %v740
    %1529 = vmatpush.msra.mxu0 %v736
    %1530 = vmatpush.msra.mxu0 %v732
    %1531 = vmatpush.msra.mxu0 %v728
    %1532 = vmatpush.msra.mxu0 %v724
    %1533 = vmatpush.msra.mxu0 %v720
    %1534 = vmatpush.msra.mxu0 %v716
    %1535 = vmatpush.msra.mxu0 %v712
    %1536 = vmatpush.msra.mxu0 %v708
    %1537 = vmatpush.msra.mxu0 %v704
    %1538 = vmatpush.msra.mxu0 %v700
    %1539 = vmatpush.msra.mxu0 %v696
    %1540 = vmatpush.msra.mxu0 %v692
    %1541 = vmatpush.msra.mxu0 %v688
    %1542 = vmatmul.f32.gmra.mxu0 %v1505
    %v1543 = vpop.f32.mrf.mxu0
    %v1544 = vadd.f32 0.0, %v1543
    %1545 = vdwg.mxu0
    %1546 = vmatpush.msra.mxu0 %v749
    %1547 = vmatpush.msra.mxu0 %v745
    %1548 = vmatpush.msra.mxu0 %v741
    %1549 = vmatpush.msra.mxu0 %v737
    %1550 = vmatpush.msra.mxu0 %v733
    %1551 = vmatpush.msra.mxu0 %v729
    %1552 = vmatpush.msra.mxu0 %v725
    %1553 = vmatpush.msra.mxu0 %v721
    %1554 = vmatpush.msra.mxu0 %v717
    %1555 = vmatpush.msra.mxu0 %v713
    %1556 = vmatpush.msra.mxu0 %v709
    %1557 = vmatpush.msra.mxu0 %v705
    %1558 = vmatpush.msra.mxu0 %v701
    %1559 = vmatpush.msra.mxu0 %v697
    %1560 = vmatpush.msra.mxu0 %v693
    %1561 = vmatpush.msra.mxu0 %v689
    %1562 = vmatmul.f32.gmra.mxu0 %v1505
    %v1563 = vpop.f32.mrf.mxu0
    %v1564 = vadd.f32 0.0, %v1563
    %1565 = vdwg.mxu0
    %1566 = vmatpush.msra.mxu0 %v750
    %1567 = vmatpush.msra.mxu0 %v746
    %1568 = vmatpush.msra.mxu0 %v742
    %1569 = vmatpush.msra.mxu0 %v738
    %1570 = vmatpush.msra.mxu0 %v734
    %1571 = vmatpush.msra.mxu0 %v730
    %1572 = vmatpush.msra.mxu0 %v726
    %1573 = vmatpush.msra.mxu0 %v722
    %1574 = vmatpush.msra.mxu0 %v718
    %1575 = vmatpush.msra.mxu0 %v714
    %1576 = vmatpush.msra.mxu0 %v710
    %1577 = vmatpush.msra.mxu0 %v706
    %1578 = vmatpush.msra.mxu0 %v702
    %1579 = vmatpush.msra.mxu0 %v698
    %1580 = vmatpush.msra.mxu0 %v694
    %1581 = vmatpush.msra.mxu0 %v690
    %1582 = vmatmul.f32.gmra.mxu0 %v1505
    %v1583 = vpop.f32.mrf.mxu0
    %v1584 = vadd.f32 0.0, %v1583
    %1585 = vdwg.mxu0
    %v1588 = vrot.slane %v1524, 2
    %v1589 = vrot.slane %v1544, 2
    %v1592 = vadd.f32 %v659, %v1588
    %v1593 = vadd.f32 %v682, %v1589
    %v1594 = vxor.u32 %v1592, 2147483648
    %v1595 = vmul.f32 %v1594, 1.442695
    %v1596 = vpow.pop %v1595
    %v1597 = vadd.f32 %v1596, 1.0
    %v1598 = vrcp.pop %v1597
    %v1599 = vmul.f32 %v1597, %v1598
    %v1600 = vsub.f32 1.0, %v1599
    %v1601 = vmul.f32 %v1598, %v1600
    %v1602 = vadd.f32 %v1598, %v1601
    %vm1603 = vweird.f32 %v1597
    %vm1604 = vweird.f32 %v1598
    %vm1605 = vmor %vm1603, %vm1604
    %v1606 = vsel %vm1605, %v1598, %v1602
    %v1607 = vand.u32 2147483647, %v1597
    %vm1608 = vcmp.eq.f32.partialorder %v1607, 8.507059e+37
    %v1609 = vand.u32 %v1597, 2147483648
    %v1610 = vor.u32 1.1754944e-38, %v1609
    %v1611 = vsel %vm1608, %v1610, %v1606
    %v1612 = vmul.f32 1.0, %v1611
    %v1613 = vtanh.pop %v1593
    %v1614 = vxor.u32 %v1593, 2147483648
    %v1615 = vmul.f32 %v1614, 1.442695
    %v1616 = vpow.pop %v1615
    %v1617 = vadd.f32 %v1616, 1.0
    %v1618 = vrcp.pop %v1617
    %v1619 = vmul.f32 %v1617, %v1618
    %v1620 = vsub.f32 1.0, %v1619
    %v1621 = vmul.f32 %v1618, %v1620
    %v1622 = vadd.f32 %v1618, %v1621
    %vm1623 = vweird.f32 %v1617
    %vm1624 = vweird.f32 %v1618
    %vm1625 = vmor %vm1623, %vm1624
    %v1626 = vsel %vm1625, %v1618, %v1622
    %v1627 = vand.u32 2147483647, %v1617
    %vm1628 = vcmp.eq.f32.partialorder %v1627, 8.507059e+37
    %v1629 = vand.u32 %v1617, 2147483648
    %v1630 = vor.u32 1.1754944e-38, %v1629
    %v1631 = vsel %vm1628, %v1630, %v1626
    %v1632 = vmul.f32 1.0, %v1631
    %v1634 = vrot.slane %v1395, 6
    %v1636 = vmul.f32 %v1612, %v1634
    %v1637 = vmul.f32 %v1612, %v1613
    %1639 = vrot.lane.b32.xlu0 %v1637, 64
    %v1640 = vpop.permute.xlu0 %1639
    %v1642 = vadd.f32 %v1636, %v1640
    %v1643 = vtanh.pop %v1642
    %v1644 = vmul.f32 %v1632, %v1643
    %v1646 = vrot.slane %v1644, 6
    %1647 = vrot.lane.b32.xlu0 %v1646, 64
    %v1648 = vpop.permute.xlu0 %1647
    %v1649 = vsel %vm903, %v1648, 0
    %1651 = vmatpush.msra.mxu0 0.0
    %1652 = vmatpush.msra.mxu0 0.0
    %1653 = vmatpush.msra.mxu0 0.0
    %1654 = vmatpush.msra.mxu0 0.0
    %1655 = vmatpush.msra.mxu0 0.0
    %1656 = vmatpush.msra.mxu0 0.0
    %1657 = vmatpush.msra.mxu0 0.0
    %1658 = vmatpush.msra.mxu0 0.0
    %1659 = vmatpush.msra.mxu0 %v765
    %1660 = vmatpush.msra.mxu0 %v763
    %1661 = vmatpush.msra.mxu0 %v761
    %1662 = vmatpush.msra.mxu0 %v759
    %1663 = vmatpush.msra.mxu0 %v757
    %1664 = vmatpush.msra.mxu0 %v755
    %1665 = vmatpush.msra.mxu0 %v753
    %1666 = vmatpush.msra.mxu0 %v751
    %1667 = vmatmul.f32.gmra.mxu0 %v1649
    %v1668 = vpop.f32.mrf.mxu0
    %v1669 = vadd.f32 %v1564, %v1668
    %1670 = vdwg.mxu0
    %1671 = vmatpush.msra.mxu0 0.0
    %1672 = vmatpush.msra.mxu0 0.0
    %1673 = vmatpush.msra.mxu0 0.0
    %1674 = vmatpush.msra.mxu0 0.0
    %1675 = vmatpush.msra.mxu0 0.0
    %1676 = vmatpush.msra.mxu0 0.0
    %1677 = vmatpush.msra.mxu0 0.0
    %1678 = vmatpush.msra.mxu0 0.0
    %1679 = vmatpush.msra.mxu0 %v766
    %1680 = vmatpush.msra.mxu0 %v764
    %1681 = vmatpush.msra.mxu0 %v762
    %1682 = vmatpush.msra.mxu0 %v760
    %1683 = vmatpush.msra.mxu0 %v758
    %1684 = vmatpush.msra.mxu0 %v756
    %1685 = vmatpush.msra.mxu0 %v754
    %1686 = vmatpush.msra.mxu0 %v752
    %1687 = vmatmul.f32.gmra.mxu0 %v1649
    %v1688 = vpop.f32.mrf.mxu0
    %v1689 = vadd.f32 %v1584, %v1688
    %1690 = vdwg.mxu0
    %v1691 = vadd.f32 %v1669, %v947
    %v1692 = vadd.f32 %v1689, %v948
    %v1693 = vxor.u32 %v1691, 2147483648
    %v1694 = vmul.f32 %v1693, 1.442695
    %v1695 = vpow.pop %v1694
    %v1696 = vadd.f32 %v1695, 1.0
    %v1697 = vrcp.pop %v1696
    %v1698 = vmul.f32 %v1696, %v1697
    %v1699 = vsub.f32 1.0, %v1698
    %v1700 = vmul.f32 %v1697, %v1699
    %v1701 = vadd.f32 %v1697, %v1700
    %vm1702 = vweird.f32 %v1696
    %vm1703 = vweird.f32 %v1697
    %vm1704 = vmor %vm1702, %vm1703
    %v1705 = vsel %vm1704, %v1697, %v1701
    %v1706 = vand.u32 2147483647, %v1696
    %vm1707 = vcmp.eq.f32.partialorder %v1706, 8.507059e+37
    %v1708 = vand.u32 %v1696, 2147483648
    %v1709 = vor.u32 1.1754944e-38, %v1708
    %v1710 = vsel %vm1707, %v1709, %v1705
    %v1711 = vmul.f32 1.0, %v1710
    %v1712 = vtanh.pop %v1692
    %v1713 = vxor.u32 %v1692, 2147483648
    %v1714 = vmul.f32 %v1713, 1.442695
    %v1715 = vpow.pop %v1714
    %v1716 = vadd.f32 %v1715, 1.0
    %v1717 = vrcp.pop %v1716
    %v1718 = vmul.f32 %v1716, %v1717
    %v1719 = vsub.f32 1.0, %v1718
    %v1720 = vmul.f32 %v1717, %v1719
    %v1721 = vadd.f32 %v1717, %v1720
    %vm1722 = vweird.f32 %v1716
    %vm1723 = vweird.f32 %v1717
    %vm1724 = vmor %vm1722, %vm1723
    %v1725 = vsel %vm1724, %v1717, %v1721
    %v1726 = vand.u32 2147483647, %v1716
    %vm1727 = vcmp.eq.f32.partialorder %v1726, 8.507059e+37
    %v1728 = vand.u32 %v1716, 2147483648
    %v1729 = vor.u32 1.1754944e-38, %v1728
    %v1730 = vsel %vm1727, %v1729, %v1725
    %v1731 = vmul.f32 1.0, %v1730
    %v1732 = vmul.f32 %v1711, %v1491
    %v1733 = vmul.f32 %v1711, %v1712
    %1735 = vrot.lane.b32.xlu0 %v1733, 64
    %v1736 = vpop.permute.xlu0 %1735
    %v1738 = vadd.f32 %v1732, %v1736
    %v1739 = vtanh.pop %v1738
    %v1740 = vmul.f32 %v1731, %v1739
    %1741 = vrot.lane.b32.xlu0 %v1644, 64
    %v1742 = vpop.permute.xlu0 %1741
    %vm1744 = vcmask 523270
    %1745 = vst.msk [vmem:[#allocation3 - $0x6] sm:$0xc0] %vm1744, %v1742
    %1746 = vst.msk [vmem:[#allocation3] sm:$0x3] %vm1004, %v1740
    %1748 = vrot.lane.b32.xlu0 %v1740, 64
    %v1749 = vpop.permute.xlu0 %1748
    %1751 = vst.msk [vmem:[#allocation2 + $0x6] sm:$0x3] %vm1002, %v1749
    %v1752 = vld [vmem:[#allocation3] sm:$0x3]
    %1753 = vmatpush.msra.mxu0 %v747
    %1754 = vmatpush.msra.mxu0 %v743
    %1755 = vmatpush.msra.mxu0 %v739
    %1756 = vmatpush.msra.mxu0 %v735
    %1757 = vmatpush.msra.mxu0 %v731
    %1758 = vmatpush.msra.mxu0 %v727
    %1759 = vmatpush.msra.mxu0 %v723
    %1760 = vmatpush.msra.mxu0 %v719
    %1761 = vmatpush.msra.mxu0 %v715
    %1762 = vmatpush.msra.mxu0 %v711
    %1763 = vmatpush.msra.mxu0 %v707
    %1764 = vmatpush.msra.mxu0 %v703
    %1765 = vmatpush.msra.mxu0 %v699
    %1766 = vmatpush.msra.mxu0 %v695
    %1767 = vmatpush.msra.mxu0 %v691
    %1768 = vmatpush.msra.mxu0 %v687
    %1769 = vmatmul.f32.gmra.mxu0 %v1752
    %v1770 = vpop.f32.mrf.mxu0
    %v1771 = vadd.f32 0.0, %v1770
    %1772 = vdwg.mxu0
    %1773 = vmatpush.msra.mxu0 %v748
    %1774 = vmatpush.msra.mxu0 %v744
    %1775 = vmatpush.msra.mxu0 %v740
    %1776 = vmatpush.msra.mxu0 %v736
    %1777 = vmatpush.msra.mxu0 %v732
    %1778 = vmatpush.msra.mxu0 %v728
    %1779 = vmatpush.msra.mxu0 %v724
    %1780 = vmatpush.msra.mxu0 %v720
    %1781 = vmatpush.msra.mxu0 %v716
    %1782 = vmatpush.msra.mxu0 %v712
    %1783 = vmatpush.msra.mxu0 %v708
    %1784 = vmatpush.msra.mxu0 %v704
    %1785 = vmatpush.msra.mxu0 %v700
    %1786 = vmatpush.msra.mxu0 %v696
    %1787 = vmatpush.msra.mxu0 %v692
    %1788 = vmatpush.msra.mxu0 %v688
    %1789 = vmatmul.f32.gmra.mxu0 %v1752
    %v1790 = vpop.f32.mrf.mxu0
    %v1791 = vadd.f32 0.0, %v1790
    %1792 = vdwg.mxu0
    %1793 = vmatpush.msra.mxu0 %v749
    %1794 = vmatpush.msra.mxu0 %v745
    %1795 = vmatpush.msra.mxu0 %v741
    %1796 = vmatpush.msra.mxu0 %v737
    %1797 = vmatpush.msra.mxu0 %v733
    %1798 = vmatpush.msra.mxu0 %v729
    %1799 = vmatpush.msra.mxu0 %v725
    %1800 = vmatpush.msra.mxu0 %v721
    %1801 = vmatpush.msra.mxu0 %v717
    %1802 = vmatpush.msra.mxu0 %v713
    %1803 = vmatpush.msra.mxu0 %v709
    %1804 = vmatpush.msra.mxu0 %v705
    %1805 = vmatpush.msra.mxu0 %v701
    %1806 = vmatpush.msra.mxu0 %v697
    %1807 = vmatpush.msra.mxu0 %v693
    %1808 = vmatpush.msra.mxu0 %v689
    %1809 = vmatmul.f32.gmra.mxu0 %v1752
    %v1810 = vpop.f32.mrf.mxu0
    %v1811 = vadd.f32 0.0, %v1810
    %1812 = vdwg.mxu0
    %1813 = vmatpush.msra.mxu0 %v750
    %1814 = vmatpush.msra.mxu0 %v746
    %1815 = vmatpush.msra.mxu0 %v742
    %1816 = vmatpush.msra.mxu0 %v738
    %1817 = vmatpush.msra.mxu0 %v734
    %1818 = vmatpush.msra.mxu0 %v730
    %1819 = vmatpush.msra.mxu0 %v726
    %1820 = vmatpush.msra.mxu0 %v722
    %1821 = vmatpush.msra.mxu0 %v718
    %1822 = vmatpush.msra.mxu0 %v714
    %1823 = vmatpush.msra.mxu0 %v710
    %1824 = vmatpush.msra.mxu0 %v706
    %1825 = vmatpush.msra.mxu0 %v702
    %1826 = vmatpush.msra.mxu0 %v698
    %1827 = vmatpush.msra.mxu0 %v694
    %1828 = vmatpush.msra.mxu0 %v690
    %1829 = vmatmul.f32.gmra.mxu0 %v1752
    %v1830 = vpop.f32.mrf.mxu0
    %v1831 = vadd.f32 0.0, %v1830
    %1832 = vdwg.mxu0
    %v1833 = vadd.f32 %v662, %v1771
    %v1834 = vadd.f32 %v685, %v1791
    %v1835 = vxor.u32 %v1833, 2147483648
    %v1836 = vmul.f32 %v1835, 1.442695
    %v1837 = vpow.pop %v1836
    %v1838 = vadd.f32 %v1837, 1.0
    %v1839 = vrcp.pop %v1838
    %v1840 = vmul.f32 %v1838, %v1839
    %v1841 = vsub.f32 1.0, %v1840
    %v1842 = vmul.f32 %v1839, %v1841
    %v1843 = vadd.f32 %v1839, %v1842
    %vm1844 = vweird.f32 %v1838
    %vm1845 = vweird.f32 %v1839
    %vm1846 = vmor %vm1844, %vm1845
    %v1847 = vsel %vm1846, %v1839, %v1843
    %v1848 = vand.u32 2147483647, %v1838
    %vm1849 = vcmp.eq.f32.partialorder %v1848, 8.507059e+37
    %v1850 = vand.u32 %v1838, 2147483648
    %v1851 = vor.u32 1.1754944e-38, %v1850
    %v1852 = vsel %vm1849, %v1851, %v1847
    %v1853 = vmul.f32 1.0, %v1852
    %v1854 = vtanh.pop %v1834
    %v1855 = vxor.u32 %v1834, 2147483648
    %v1856 = vmul.f32 %v1855, 1.442695
    %v1857 = vpow.pop %v1856
    %v1858 = vadd.f32 %v1857, 1.0
    %v1859 = vrcp.pop %v1858
    %v1860 = vmul.f32 %v1858, %v1859
    %v1861 = vsub.f32 1.0, %v1860
    %v1862 = vmul.f32 %v1859, %v1861
    %v1863 = vadd.f32 %v1859, %v1862
    %vm1864 = vweird.f32 %v1858
    %vm1865 = vweird.f32 %v1859
    %vm1866 = vmor %vm1864, %vm1865
    %v1867 = vsel %vm1866, %v1859, %v1863
    %v1868 = vand.u32 2147483647, %v1858
    %vm1869 = vcmp.eq.f32.partialorder %v1868, 8.507059e+37
    %v1870 = vand.u32 %v1858, 2147483648
    %v1871 = vor.u32 1.1754944e-38, %v1870
    %v1872 = vsel %vm1869, %v1871, %v1867
    %v1873 = vmul.f32 1.0, %v1872
    %v1875 = vrot.slane %v1642, 6
    %v1877 = vmul.f32 %v1853, %v1875
    %v1878 = vmul.f32 %v1853, %v1854
    %1880 = vrot.lane.b32.xlu0 %v1878, 64
    %v1881 = vpop.permute.xlu0 %1880
    %v1883 = vadd.f32 %v1877, %v1881
    %v1884 = vtanh.pop %v1883
    %v1885 = vmul.f32 %v1873, %v1884
    %1887 = vrot.lane.b32.xlu0 %v1885, 64
    %v1888 = vpop.permute.xlu0 %1887
    %v1889 = vsel %vm903, %v1888, 0
    %1891 = vmatpush.msra.mxu0 0.0
    %1892 = vmatpush.msra.mxu0 0.0
    %1893 = vmatpush.msra.mxu0 0.0
    %1894 = vmatpush.msra.mxu0 0.0
    %1895 = vmatpush.msra.mxu0 0.0
    %1896 = vmatpush.msra.mxu0 0.0
    %1897 = vmatpush.msra.mxu0 0.0
    %1898 = vmatpush.msra.mxu0 0.0
    %1899 = vmatpush.msra.mxu0 %v765
    %1900 = vmatpush.msra.mxu0 %v763
    %1901 = vmatpush.msra.mxu0 %v761
    %1902 = vmatpush.msra.mxu0 %v759
    %1903 = vmatpush.msra.mxu0 %v757
    %1904 = vmatpush.msra.mxu0 %v755
    %1905 = vmatpush.msra.mxu0 %v753
    %1906 = vmatpush.msra.mxu0 %v751
    %1907 = vmatmul.f32.gmra.mxu0 %v1889
    %v1908 = vpop.f32.mrf.mxu0
    %v1909 = vadd.f32 %v1811, %v1908
    %1910 = vdwg.mxu0
    %1911 = vmatpush.msra.mxu0 0.0
    %1912 = vmatpush.msra.mxu0 0.0
    %1913 = vmatpush.msra.mxu0 0.0
    %1914 = vmatpush.msra.mxu0 0.0
    %1915 = vmatpush.msra.mxu0 0.0
    %1916 = vmatpush.msra.mxu0 0.0
    %1917 = vmatpush.msra.mxu0 0.0
    %1918 = vmatpush.msra.mxu0 0.0
    %1919 = vmatpush.msra.mxu0 %v766
    %1920 = vmatpush.msra.mxu0 %v764
    %1921 = vmatpush.msra.mxu0 %v762
    %1922 = vmatpush.msra.mxu0 %v760
    %1923 = vmatpush.msra.mxu0 %v758
    %1924 = vmatpush.msra.mxu0 %v756
    %1925 = vmatpush.msra.mxu0 %v754
    %1926 = vmatpush.msra.mxu0 %v752
    %1927 = vmatmul.f32.gmra.mxu0 %v1889
    %v1928 = vpop.f32.mrf.mxu0
    %v1929 = vadd.f32 %v1831, %v1928
    %1930 = vdwg.mxu0
    %v1931 = vadd.f32 %v1909, %v947
    %v1932 = vadd.f32 %v1929, %v948
    %v1933 = vxor.u32 %v1931, 2147483648
    %v1934 = vmul.f32 %v1933, 1.442695
    %v1935 = vpow.pop %v1934
    %v1936 = vadd.f32 %v1935, 1.0
    %v1937 = vrcp.pop %v1936
    %v1938 = vmul.f32 %v1936, %v1937
    %v1939 = vsub.f32 1.0, %v1938
    %v1940 = vmul.f32 %v1937, %v1939
    %v1941 = vadd.f32 %v1937, %v1940
    %vm1942 = vweird.f32 %v1936
    %vm1943 = vweird.f32 %v1937
    %vm1944 = vmor %vm1942, %vm1943
    %v1945 = vsel %vm1944, %v1937, %v1941
    %v1946 = vand.u32 2147483647, %v1936
    %vm1947 = vcmp.eq.f32.partialorder %v1946, 8.507059e+37
    %v1948 = vand.u32 %v1936, 2147483648
    %v1949 = vor.u32 1.1754944e-38, %v1948
    %v1950 = vsel %vm1947, %v1949, %v1945
    %v1951 = vmul.f32 1.0, %v1950
    %v1952 = vtanh.pop %v1932
    %v1953 = vxor.u32 %v1932, 2147483648
    %v1954 = vmul.f32 %v1953, 1.442695
    %v1955 = vpow.pop %v1954
    %v1956 = vadd.f32 %v1955, 1.0
    %v1957 = vrcp.pop %v1956
    %v1958 = vmul.f32 %v1956, %v1957
    %v1959 = vsub.f32 1.0, %v1958
    %v1960 = vmul.f32 %v1957, %v1959
    %v1961 = vadd.f32 %v1957, %v1960
    %vm1962 = vweird.f32 %v1956
    %vm1963 = vweird.f32 %v1957
    %vm1964 = vmor %vm1962, %vm1963
    %v1965 = vsel %vm1964, %v1957, %v1961
    %v1966 = vand.u32 2147483647, %v1956
    %vm1967 = vcmp.eq.f32.partialorder %v1966, 8.507059e+37
    %v1968 = vand.u32 %v1956, 2147483648
    %v1969 = vor.u32 1.1754944e-38, %v1968
    %v1970 = vsel %vm1967, %v1969, %v1965
    %v1971 = vmul.f32 1.0, %v1970
    %v1972 = vmul.f32 %v1951, %v1738
    %v1973 = vmul.f32 %v1951, %v1952
    %1975 = vrot.lane.b32.xlu0 %v1973, 64
    %v1976 = vpop.permute.xlu0 %1975
    %v1978 = vadd.f32 %v1972, %v1976
    %v1979 = vtanh.pop %v1978
    %v1980 = vmul.f32 %v1971, %v1979
    %1982 = vst.msk [vmem:[#allocation3] sm:$0x3] %vm1002, %v1888
    %1983 = vst.msk [vmem:[#allocation3] sm:$0x3] %vm1004, %v1980
    %1985 = vrot.lane.b32.xlu0 %v1980, 64
    %v1986 = vpop.permute.xlu0 %1985
    %1988 = vst.msk [vmem:[#allocation2 + $0x8] sm:$0x3] %vm1002, %v1986
    %v1989 = vld [vmem:[#allocation3] sm:$0x3]
    %1990 = vmatpush.msra.mxu0 %v747
    %1991 = vmatpush.msra.mxu0 %v743
    %1992 = vmatpush.msra.mxu0 %v739
    %1993 = vmatpush.msra.mxu0 %v735
    %1994 = vmatpush.msra.mxu0 %v731
    %1995 = vmatpush.msra.mxu0 %v727
    %1996 = vmatpush.msra.mxu0 %v723
    %1997 = vmatpush.msra.mxu0 %v719
    %1998 = vmatpush.msra.mxu0 %v715
    %1999 = vmatpush.msra.mxu0 %v711
    %2000 = vmatpush.msra.mxu0 %v707
    %2001 = vmatpush.msra.mxu0 %v703
    %2002 = vmatpush.msra.mxu0 %v699
    %2003 = vmatpush.msra.mxu0 %v695
    %2004 = vmatpush.msra.mxu0 %v691
    %2005 = vmatpush.msra.mxu0 %v687
    %2006 = vmatmul.f32.gmra.mxu0 %v1989
    %v2007 = vpop.f32.mrf.mxu0
    %v2008 = vadd.f32 0.0, %v2007
    %2009 = vdwg.mxu0
    %2010 = vmatpush.msra.mxu0 %v748
    %2011 = vmatpush.msra.mxu0 %v744
    %2012 = vmatpush.msra.mxu0 %v740
    %2013 = vmatpush.msra.mxu0 %v736
    %2014 = vmatpush.msra.mxu0 %v732
    %2015 = vmatpush.msra.mxu0 %v728
    %2016 = vmatpush.msra.mxu0 %v724
    %2017 = vmatpush.msra.mxu0 %v720
    %2018 = vmatpush.msra.mxu0 %v716
    %2019 = vmatpush.msra.mxu0 %v712
    %2020 = vmatpush.msra.mxu0 %v708
    %2021 = vmatpush.msra.mxu0 %v704
    %2022 = vmatpush.msra.mxu0 %v700
    %2023 = vmatpush.msra.mxu0 %v696
    %2024 = vmatpush.msra.mxu0 %v692
    %2025 = vmatpush.msra.mxu0 %v688
    %2026 = vmatmul.f32.gmra.mxu0 %v1989
    %v2027 = vpop.f32.mrf.mxu0
    %v2028 = vadd.f32 0.0, %v2027
    %2029 = vdwg.mxu0
    %2030 = vmatpush.msra.mxu0 %v749
    %2031 = vmatpush.msra.mxu0 %v745
    %2032 = vmatpush.msra.mxu0 %v741
    %2033 = vmatpush.msra.mxu0 %v737
    %2034 = vmatpush.msra.mxu0 %v733
    %2035 = vmatpush.msra.mxu0 %v729
    %2036 = vmatpush.msra.mxu0 %v725
    %2037 = vmatpush.msra.mxu0 %v721
    %2038 = vmatpush.msra.mxu0 %v717
    %2039 = vmatpush.msra.mxu0 %v713
    %2040 = vmatpush.msra.mxu0 %v709
    %2041 = vmatpush.msra.mxu0 %v705
    %2042 = vmatpush.msra.mxu0 %v701
    %2043 = vmatpush.msra.mxu0 %v697
    %2044 = vmatpush.msra.mxu0 %v693
    %2045 = vmatpush.msra.mxu0 %v689
    %2046 = vmatmul.f32.gmra.mxu0 %v1989
    %v2047 = vpop.f32.mrf.mxu0
    %v2048 = vadd.f32 0.0, %v2047
    %2049 = vdwg.mxu0
    %2050 = vmatpush.msra.mxu0 %v750
    %2051 = vmatpush.msra.mxu0 %v746
    %2052 = vmatpush.msra.mxu0 %v742
    %2053 = vmatpush.msra.mxu0 %v738
    %2054 = vmatpush.msra.mxu0 %v734
    %2055 = vmatpush.msra.mxu0 %v730
    %2056 = vmatpush.msra.mxu0 %v726
    %2057 = vmatpush.msra.mxu0 %v722
    %2058 = vmatpush.msra.mxu0 %v718
    %2059 = vmatpush.msra.mxu0 %v714
    %2060 = vmatpush.msra.mxu0 %v710
    %2061 = vmatpush.msra.mxu0 %v706
    %2062 = vmatpush.msra.mxu0 %v702
    %2063 = vmatpush.msra.mxu0 %v698
    %2064 = vmatpush.msra.mxu0 %v694
    %2065 = vmatpush.msra.mxu0 %v690
    %2066 = vmatmul.f32.gmra.mxu0 %v1989
    %v2067 = vpop.f32.mrf.mxu0
    %v2068 = vadd.f32 0.0, %v2067
    %2069 = vdwg.mxu0
    %v2072 = vrot.slane %v2008, 6
    %v2073 = vrot.slane %v2028, 6
    %v2076 = vadd.f32 %v662, %v2072
    %v2077 = vadd.f32 %v685, %v2073
    %v2078 = vxor.u32 %v2076, 2147483648
    %v2079 = vmul.f32 %v2078, 1.442695
    %v2080 = vpow.pop %v2079
    %v2081 = vadd.f32 %v2080, 1.0
    %v2082 = vrcp.pop %v2081
    %v2083 = vmul.f32 %v2081, %v2082
    %v2084 = vsub.f32 1.0, %v2083
    %v2085 = vmul.f32 %v2082, %v2084
    %v2086 = vadd.f32 %v2082, %v2085
    %vm2087 = vweird.f32 %v2081
    %vm2088 = vweird.f32 %v2082
    %vm2089 = vmor %vm2087, %vm2088
    %v2090 = vsel %vm2089, %v2082, %v2086
    %v2091 = vand.u32 2147483647, %v2081
    %vm2092 = vcmp.eq.f32.partialorder %v2091, 8.507059e+37
    %v2093 = vand.u32 %v2081, 2147483648
    %v2094 = vor.u32 1.1754944e-38, %v2093
    %v2095 = vsel %vm2092, %v2094, %v2090
    %v2096 = vmul.f32 1.0, %v2095
    %v2097 = vtanh.pop %v2077
    %v2098 = vxor.u32 %v2077, 2147483648
    %v2099 = vmul.f32 %v2098, 1.442695
    %v2100 = vpow.pop %v2099
    %v2101 = vadd.f32 %v2100, 1.0
    %v2102 = vrcp.pop %v2101
    %v2103 = vmul.f32 %v2101, %v2102
    %v2104 = vsub.f32 1.0, %v2103
    %v2105 = vmul.f32 %v2102, %v2104
    %v2106 = vadd.f32 %v2102, %v2105
    %vm2107 = vweird.f32 %v2101
    %vm2108 = vweird.f32 %v2102
    %vm2109 = vmor %vm2107, %vm2108
    %v2110 = vsel %vm2109, %v2102, %v2106
    %v2111 = vand.u32 2147483647, %v2101
    %vm2112 = vcmp.eq.f32.partialorder %v2111, 8.507059e+37
    %v2113 = vand.u32 %v2101, 2147483648
    %v2114 = vor.u32 1.1754944e-38, %v2113
    %v2115 = vsel %vm2112, %v2114, %v2110
    %v2116 = vmul.f32 1.0, %v2115
    %v2118 = vrot.slane %v1883, 6
    %v2120 = vmul.f32 %v2096, %v2118
    %v2121 = vmul.f32 %v2096, %v2097
    %2123 = vrot.lane.b32.xlu0 %v2121, 64
    %v2124 = vpop.permute.xlu0 %2123
    %v2126 = vadd.f32 %v2120, %v2124
    %v2127 = vtanh.pop %v2126
    %v2128 = vmul.f32 %v2116, %v2127
    %v2130 = vrot.slane %v2128, 2
    %2131 = vrot.lane.b32.xlu0 %v2130, 64
    %v2132 = vpop.permute.xlu0 %2131
    %v2133 = vsel %vm903, %v2132, 0
    %2135 = vmatpush.msra.mxu0 0.0
    %2136 = vmatpush.msra.mxu0 0.0
    %2137 = vmatpush.msra.mxu0 0.0
    %2138 = vmatpush.msra.mxu0 0.0
    %2139 = vmatpush.msra.mxu0 0.0
    %2140 = vmatpush.msra.mxu0 0.0
    %2141 = vmatpush.msra.mxu0 0.0
    %2142 = vmatpush.msra.mxu0 0.0
    %2143 = vmatpush.msra.mxu0 %v765
    %2144 = vmatpush.msra.mxu0 %v763
    %2145 = vmatpush.msra.mxu0 %v761
    %2146 = vmatpush.msra.mxu0 %v759
    %2147 = vmatpush.msra.mxu0 %v757
    %2148 = vmatpush.msra.mxu0 %v755
    %2149 = vmatpush.msra.mxu0 %v753
    %2150 = vmatpush.msra.mxu0 %v751
    %2151 = vmatmul.f32.gmra.mxu0 %v2133
    %v2152 = vpop.f32.mrf.mxu0
    %v2153 = vadd.f32 %v2048, %v2152
    %2154 = vdwg.mxu0
    %2155 = vmatpush.msra.mxu0 0.0
    %2156 = vmatpush.msra.mxu0 0.0
    %2157 = vmatpush.msra.mxu0 0.0
    %2158 = vmatpush.msra.mxu0 0.0
    %2159 = vmatpush.msra.mxu0 0.0
    %2160 = vmatpush.msra.mxu0 0.0
    %2161 = vmatpush.msra.mxu0 0.0
    %2162 = vmatpush.msra.mxu0 0.0
    %2163 = vmatpush.msra.mxu0 %v766
    %2164 = vmatpush.msra.mxu0 %v764
    %2165 = vmatpush.msra.mxu0 %v762
    %2166 = vmatpush.msra.mxu0 %v760
    %2167 = vmatpush.msra.mxu0 %v758
    %2168 = vmatpush.msra.mxu0 %v756
    %2169 = vmatpush.msra.mxu0 %v754
    %2170 = vmatpush.msra.mxu0 %v752
    %2171 = vmatmul.f32.gmra.mxu0 %v2133
    %v2172 = vpop.f32.mrf.mxu0
    %v2173 = vadd.f32 %v2068, %v2172
    %2174 = vdwg.mxu0
    %v2175 = vadd.f32 %v2153, %v947
    %v2176 = vadd.f32 %v2173, %v948
    %v2177 = vxor.u32 %v2175, 2147483648
    %v2178 = vmul.f32 %v2177, 1.442695
    %v2179 = vpow.pop %v2178
    %v2180 = vadd.f32 %v2179, 1.0
    %v2181 = vrcp.pop %v2180
    %v2182 = vmul.f32 %v2180, %v2181
    %v2183 = vsub.f32 1.0, %v2182
    %v2184 = vmul.f32 %v2181, %v2183
    %v2185 = vadd.f32 %v2181, %v2184
    %vm2186 = vweird.f32 %v2180
    %vm2187 = vweird.f32 %v2181
    %vm2188 = vmor %vm2186, %vm2187
    %v2189 = vsel %vm2188, %v2181, %v2185
    %v2190 = vand.u32 2147483647, %v2180
    %vm2191 = vcmp.eq.f32.partialorder %v2190, 8.507059e+37
    %v2192 = vand.u32 %v2180, 2147483648
    %v2193 = vor.u32 1.1754944e-38, %v2192
    %v2194 = vsel %vm2191, %v2193, %v2189
    %v2195 = vmul.f32 1.0, %v2194
    %v2196 = vtanh.pop %v2176
    %v2197 = vxor.u32 %v2176, 2147483648
    %v2198 = vmul.f32 %v2197, 1.442695
    %v2199 = vpow.pop %v2198
    %v2200 = vadd.f32 %v2199, 1.0
    %v2201 = vrcp.pop %v2200
    %v2202 = vmul.f32 %v2200, %v2201
    %v2203 = vsub.f32 1.0, %v2202
    %v2204 = vmul.f32 %v2201, %v2203
    %v2205 = vadd.f32 %v2201, %v2204
    %vm2206 = vweird.f32 %v2200
    %vm2207 = vweird.f32 %v2201
    %vm2208 = vmor %vm2206, %vm2207
    %v2209 = vsel %vm2208, %v2201, %v2205
    %v2210 = vand.u32 2147483647, %v2200
    %vm2211 = vcmp.eq.f32.partialorder %v2210, 8.507059e+37
    %v2212 = vand.u32 %v2200, 2147483648
    %v2213 = vor.u32 1.1754944e-38, %v2212
    %v2214 = vsel %vm2211, %v2213, %v2209
    %v2215 = vmul.f32 1.0, %v2214
    %v2216 = vmul.f32 %v2195, %v1978
    %v2217 = vmul.f32 %v2195, %v2196
    %2219 = vrot.lane.b32.xlu0 %v2217, 64
    %v2220 = vpop.permute.xlu0 %2219
    %v2222 = vadd.f32 %v2216, %v2220
    %v2223 = vtanh.pop %v2222
    %v2224 = vmul.f32 %v2215, %v2223
    %2225 = vrot.lane.b32.xlu0 %v2128, 64
    %v2226 = vpop.permute.xlu0 %2225
    %2228 = vst.msk [vmem:[#allocation3 - $0x2] sm:$0xc] %vm1250, %v2226
    %2229 = vst.msk [vmem:[#allocation3] sm:$0x3] %vm1004, %v2224
    %2231 = vrot.lane.b32.xlu0 %v2224, 64
    %v2232 = vpop.permute.xlu0 %2231
    %2234 = vst.msk [vmem:[#allocation2 + $0xa] sm:$0x3] %vm1002, %v2232
    %v2235 = vld [vmem:[#allocation3] sm:$0x3]
    %2236 = vmatpush.msra.mxu0 %v747
    %2237 = vmatpush.msra.mxu0 %v743
    %2238 = vmatpush.msra.mxu0 %v739
    %2239 = vmatpush.msra.mxu0 %v735
    %2240 = vmatpush.msra.mxu0 %v731
    %2241 = vmatpush.msra.mxu0 %v727
    %2242 = vmatpush.msra.mxu0 %v723
    %2243 = vmatpush.msra.mxu0 %v719
    %2244 = vmatpush.msra.mxu0 %v715
    %2245 = vmatpush.msra.mxu0 %v711
    %2246 = vmatpush.msra.mxu0 %v707
    %2247 = vmatpush.msra.mxu0 %v703
    %2248 = vmatpush.msra.mxu0 %v699
    %2249 = vmatpush.msra.mxu0 %v695
    %2250 = vmatpush.msra.mxu0 %v691
    %2251 = vmatpush.msra.mxu0 %v687
    %2252 = vmatmul.f32.gmra.mxu0 %v2235
    %v2253 = vpop.f32.mrf.mxu0
    %v2254 = vadd.f32 0.0, %v2253
    %2255 = vdwg.mxu0
    %2256 = vmatpush.msra.mxu0 %v748
    %2257 = vmatpush.msra.mxu0 %v744
    %2258 = vmatpush.msra.mxu0 %v740
    %2259 = vmatpush.msra.mxu0 %v736
    %2260 = vmatpush.msra.mxu0 %v732
    %2261 = vmatpush.msra.mxu0 %v728
    %2262 = vmatpush.msra.mxu0 %v724
    %2263 = vmatpush.msra.mxu0 %v720
    %2264 = vmatpush.msra.mxu0 %v716
    %2265 = vmatpush.msra.mxu0 %v712
    %2266 = vmatpush.msra.mxu0 %v708
    %2267 = vmatpush.msra.mxu0 %v704
    %2268 = vmatpush.msra.mxu0 %v700
    %2269 = vmatpush.msra.mxu0 %v696
    %2270 = vmatpush.msra.mxu0 %v692
    %2271 = vmatpush.msra.mxu0 %v688
    %2272 = vmatmul.f32.gmra.mxu0 %v2235
    %v2273 = vpop.f32.mrf.mxu0
    %v2274 = vadd.f32 0.0, %v2273
    %2275 = vdwg.mxu0
    %2276 = vmatpush.msra.mxu0 %v749
    %2277 = vmatpush.msra.mxu0 %v745
    %2278 = vmatpush.msra.mxu0 %v741
    %2279 = vmatpush.msra.mxu0 %v737
    %2280 = vmatpush.msra.mxu0 %v733
    %2281 = vmatpush.msra.mxu0 %v729
    %2282 = vmatpush.msra.mxu0 %v725
    %2283 = vmatpush.msra.mxu0 %v721
    %2284 = vmatpush.msra.mxu0 %v717
    %2285 = vmatpush.msra.mxu0 %v713
    %2286 = vmatpush.msra.mxu0 %v709
    %2287 = vmatpush.msra.mxu0 %v705
    %2288 = vmatpush.msra.mxu0 %v701
    %2289 = vmatpush.msra.mxu0 %v697
    %2290 = vmatpush.msra.mxu0 %v693
    %2291 = vmatpush.msra.mxu0 %v689
    %2292 = vmatmul.f32.gmra.mxu0 %v2235
    %v2293 = vpop.f32.mrf.mxu0
    %v2294 = vadd.f32 0.0, %v2293
    %2295 = vdwg.mxu0
    %2296 = vmatpush.msra.mxu0 %v750
    %2297 = vmatpush.msra.mxu0 %v746
    %2298 = vmatpush.msra.mxu0 %v742
    %2299 = vmatpush.msra.mxu0 %v738
    %2300 = vmatpush.msra.mxu0 %v734
    %2301 = vmatpush.msra.mxu0 %v730
    %2302 = vmatpush.msra.mxu0 %v726
    %2303 = vmatpush.msra.mxu0 %v722
    %2304 = vmatpush.msra.mxu0 %v718
    %2305 = vmatpush.msra.mxu0 %v714
    %2306 = vmatpush.msra.mxu0 %v710
    %2307 = vmatpush.msra.mxu0 %v706
    %2308 = vmatpush.msra.mxu0 %v702
    %2309 = vmatpush.msra.mxu0 %v698
    %2310 = vmatpush.msra.mxu0 %v694
    %2311 = vmatpush.msra.mxu0 %v690
    %2312 = vmatmul.f32.gmra.mxu0 %v2235
    %v2313 = vpop.f32.mrf.mxu0
    %v2314 = vadd.f32 0.0, %v2313
    %2315 = vdwg.mxu0
    %v2318 = vrot.slane %v2254, 4
    %v2319 = vrot.slane %v2274, 4
    %v2322 = vadd.f32 %v662, %v2318
    %v2323 = vadd.f32 %v685, %v2319
    %v2324 = vxor.u32 %v2322, 2147483648
    %v2325 = vmul.f32 %v2324, 1.442695
    %v2326 = vpow.pop %v2325
    %v2327 = vadd.f32 %v2326, 1.0
    %v2328 = vrcp.pop %v2327
    %v2329 = vmul.f32 %v2327, %v2328
    %v2330 = vsub.f32 1.0, %v2329
    %v2331 = vmul.f32 %v2328, %v2330
    %v2332 = vadd.f32 %v2328, %v2331
    %vm2333 = vweird.f32 %v2327
    %vm2334 = vweird.f32 %v2328
    %vm2335 = vmor %vm2333, %vm2334
    %v2336 = vsel %vm2335, %v2328, %v2332
    %v2337 = vand.u32 2147483647, %v2327
    %vm2338 = vcmp.eq.f32.partialorder %v2337, 8.507059e+37
    %v2339 = vand.u32 %v2327, 2147483648
    %v2340 = vor.u32 1.1754944e-38, %v2339
    %v2341 = vsel %vm2338, %v2340, %v2336
    %v2342 = vmul.f32 1.0, %v2341
    %v2343 = vtanh.pop %v2323
    %v2344 = vxor.u32 %v2323, 2147483648
    %v2345 = vmul.f32 %v2344, 1.442695
    %v2346 = vpow.pop %v2345
    %v2347 = vadd.f32 %v2346, 1.0
    %v2348 = vrcp.pop %v2347
    %v2349 = vmul.f32 %v2347, %v2348
    %v2350 = vsub.f32 1.0, %v2349
    %v2351 = vmul.f32 %v2348, %v2350
    %v2352 = vadd.f32 %v2348, %v2351
    %vm2353 = vweird.f32 %v2347
    %vm2354 = vweird.f32 %v2348
    %vm2355 = vmor %vm2353, %vm2354
    %v2356 = vsel %vm2355, %v2348, %v2352
    %v2357 = vand.u32 2147483647, %v2347
    %vm2358 = vcmp.eq.f32.partialorder %v2357, 8.507059e+37
    %v2359 = vand.u32 %v2347, 2147483648
    %v2360 = vor.u32 1.1754944e-38, %v2359
    %v2361 = vsel %vm2358, %v2360, %v2356
    %v2362 = vmul.f32 1.0, %v2361
    %v2364 = vrot.slane %v2126, 6
    %v2366 = vmul.f32 %v2342, %v2364
    %v2367 = vmul.f32 %v2342, %v2343
    %2369 = vrot.lane.b32.xlu0 %v2367, 64
    %v2370 = vpop.permute.xlu0 %2369
    %v2372 = vadd.f32 %v2366, %v2370
    %v2373 = vtanh.pop %v2372
    %v2374 = vmul.f32 %v2362, %v2373
    %v2376 = vrot.slane %v2374, 4
    %2377 = vrot.lane.b32.xlu0 %v2376, 64
    %v2378 = vpop.permute.xlu0 %2377
    %v2379 = vsel %vm903, %v2378, 0
    %2381 = vmatpush.msra.mxu0 0.0
    %2382 = vmatpush.msra.mxu0 0.0
    %2383 = vmatpush.msra.mxu0 0.0
    %2384 = vmatpush.msra.mxu0 0.0
    %2385 = vmatpush.msra.mxu0 0.0
    %2386 = vmatpush.msra.mxu0 0.0
    %2387 = vmatpush.msra.mxu0 0.0
    %2388 = vmatpush.msra.mxu0 0.0
    %2389 = vmatpush.msra.mxu0 %v765
    %2390 = vmatpush.msra.mxu0 %v763
    %2391 = vmatpush.msra.mxu0 %v761
    %2392 = vmatpush.msra.mxu0 %v759
    %2393 = vmatpush.msra.mxu0 %v757
    %2394 = vmatpush.msra.mxu0 %v755
    %2395 = vmatpush.msra.mxu0 %v753
    %2396 = vmatpush.msra.mxu0 %v751
    %2397 = vmatmul.f32.gmra.mxu0 %v2379
    %v2398 = vpop.f32.mrf.mxu0
    %v2399 = vadd.f32 %v2294, %v2398
    %2400 = vdwg.mxu0
    %2401 = vmatpush.msra.mxu0 0.0
    %2402 = vmatpush.msra.mxu0 0.0
    %2403 = vmatpush.msra.mxu0 0.0
    %2404 = vmatpush.msra.mxu0 0.0
    %2405 = vmatpush.msra.mxu0 0.0
    %2406 = vmatpush.msra.mxu0 0.0
    %2407 = vmatpush.msra.mxu0 0.0
    %2408 = vmatpush.msra.mxu0 0.0
    %2409 = vmatpush.msra.mxu0 %v766
    %2410 = vmatpush.msra.mxu0 %v764
    %2411 = vmatpush.msra.mxu0 %v762
    %2412 = vmatpush.msra.mxu0 %v760
    %2413 = vmatpush.msra.mxu0 %v758
    %2414 = vmatpush.msra.mxu0 %v756
    %2415 = vmatpush.msra.mxu0 %v754
    %2416 = vmatpush.msra.mxu0 %v752
    %2417 = vmatmul.f32.gmra.mxu0 %v2379
    %v2418 = vpop.f32.mrf.mxu0
    %v2419 = vadd.f32 %v2314, %v2418
    %2420 = vdwg.mxu0
    %v2421 = vadd.f32 %v2399, %v947
    %v2422 = vadd.f32 %v2419, %v948
    %v2423 = vxor.u32 %v2421, 2147483648
    %v2424 = vmul.f32 %v2423, 1.442695
    %v2425 = vpow.pop %v2424
    %v2426 = vadd.f32 %v2425, 1.0
    %v2427 = vrcp.pop %v2426
    %v2428 = vmul.f32 %v2426, %v2427
    %v2429 = vsub.f32 1.0, %v2428
    %v2430 = vmul.f32 %v2427, %v2429
    %v2431 = vadd.f32 %v2427, %v2430
    %vm2432 = vweird.f32 %v2426
    %vm2433 = vweird.f32 %v2427
    %vm2434 = vmor %vm2432, %vm2433
    %v2435 = vsel %vm2434, %v2427, %v2431
    %v2436 = vand.u32 2147483647, %v2426
    %vm2437 = vcmp.eq.f32.partialorder %v2436, 8.507059e+37
    %v2438 = vand.u32 %v2426, 2147483648
    %v2439 = vor.u32 1.1754944e-38, %v2438
    %v2440 = vsel %vm2437, %v2439, %v2435
    %v2441 = vmul.f32 1.0, %v2440
    %v2442 = vtanh.pop %v2422
    %v2443 = vxor.u32 %v2422, 2147483648
    %v2444 = vmul.f32 %v2443, 1.442695
    %v2445 = vpow.pop %v2444
    %v2446 = vadd.f32 %v2445, 1.0
    %v2447 = vrcp.pop %v2446
    %v2448 = vmul.f32 %v2446, %v2447
    %v2449 = vsub.f32 1.0, %v2448
    %v2450 = vmul.f32 %v2447, %v2449
    %v2451 = vadd.f32 %v2447, %v2450
    %vm2452 = vweird.f32 %v2446
    %vm2453 = vweird.f32 %v2447
    %vm2454 = vmor %vm2452, %vm2453
    %v2455 = vsel %vm2454, %v2447, %v2451
    %v2456 = vand.u32 2147483647, %v2446
    %vm2457 = vcmp.eq.f32.partialorder %v2456, 8.507059e+37
    %v2458 = vand.u32 %v2446, 2147483648
    %v2459 = vor.u32 1.1754944e-38, %v2458
    %v2460 = vsel %vm2457, %v2459, %v2455
    %v2461 = vmul.f32 1.0, %v2460
    %v2462 = vmul.f32 %v2441, %v2222
    %v2463 = vmul.f32 %v2441, %v2442
    %2465 = vrot.lane.b32.xlu0 %v2463, 64
    %v2466 = vpop.permute.xlu0 %2465
    %v2468 = vadd.f32 %v2462, %v2466
    %v2469 = vtanh.pop %v2468
    %v2470 = vmul.f32 %v2461, %v2469
    %2471 = vrot.lane.b32.xlu0 %v2374, 64
    %v2472 = vpop.permute.xlu0 %2471
    %2474 = vst.msk [vmem:[#allocation3 - $0x4] sm:$0x30] %vm1497, %v2472
    %2475 = vst.msk [vmem:[#allocation3] sm:$0x3] %vm1004, %v2470
    %2477 = vrot.lane.b32.xlu0 %v2470, 64
    %v2478 = vpop.permute.xlu0 %2477
    %2480 = vst.msk [vmem:[#allocation2 + $0xc] sm:$0x3] %vm1002, %v2478
    %v2481 = vld [vmem:[#allocation3] sm:$0x3]
    %2482 = vmatpush.msra.mxu0 %v747
    %2483 = vmatpush.msra.mxu0 %v743
    %2484 = vmatpush.msra.mxu0 %v739
    %2485 = vmatpush.msra.mxu0 %v735
    %2486 = vmatpush.msra.mxu0 %v731
    %2487 = vmatpush.msra.mxu0 %v727
    %2488 = vmatpush.msra.mxu0 %v723
    %2489 = vmatpush.msra.mxu0 %v719
    %2490 = vmatpush.msra.mxu0 %v715
    %2491 = vmatpush.msra.mxu0 %v711
    %2492 = vmatpush.msra.mxu0 %v707
    %2493 = vmatpush.msra.mxu0 %v703
    %2494 = vmatpush.msra.mxu0 %v699
    %2495 = vmatpush.msra.mxu0 %v695
    %2496 = vmatpush.msra.mxu0 %v691
    %2497 = vmatpush.msra.mxu0 %v687
    %2498 = vmatmul.f32.gmra.mxu0 %v2481
    %v2499 = vpop.f32.mrf.mxu0
    %v2500 = vadd.f32 0.0, %v2499
    %2501 = vdwg.mxu0
    %2502 = vmatpush.msra.mxu0 %v748
    %2503 = vmatpush.msra.mxu0 %v744
    %2504 = vmatpush.msra.mxu0 %v740
    %2505 = vmatpush.msra.mxu0 %v736
    %2506 = vmatpush.msra.mxu0 %v732
    %2507 = vmatpush.msra.mxu0 %v728
    %2508 = vmatpush.msra.mxu0 %v724
    %2509 = vmatpush.msra.mxu0 %v720
    %2510 = vmatpush.msra.mxu0 %v716
    %2511 = vmatpush.msra.mxu0 %v712
    %2512 = vmatpush.msra.mxu0 %v708
    %2513 = vmatpush.msra.mxu0 %v704
    %2514 = vmatpush.msra.mxu0 %v700
    %2515 = vmatpush.msra.mxu0 %v696
    %2516 = vmatpush.msra.mxu0 %v692
    %2517 = vmatpush.msra.mxu0 %v688
    %2518 = vmatmul.f32.gmra.mxu0 %v2481
    %v2519 = vpop.f32.mrf.mxu0
    %v2520 = vadd.f32 0.0, %v2519
    %2521 = vdwg.mxu0
    %2522 = vmatpush.msra.mxu0 %v749
    %2523 = vmatpush.msra.mxu0 %v745
    %2524 = vmatpush.msra.mxu0 %v741
    %2525 = vmatpush.msra.mxu0 %v737
    %2526 = vmatpush.msra.mxu0 %v733
    %2527 = vmatpush.msra.mxu0 %v729
    %2528 = vmatpush.msra.mxu0 %v725
    %2529 = vmatpush.msra.mxu0 %v721
    %2530 = vmatpush.msra.mxu0 %v717
    %2531 = vmatpush.msra.mxu0 %v713
    %2532 = vmatpush.msra.mxu0 %v709
    %2533 = vmatpush.msra.mxu0 %v705
    %2534 = vmatpush.msra.mxu0 %v701
    %2535 = vmatpush.msra.mxu0 %v697
    %2536 = vmatpush.msra.mxu0 %v693
    %2537 = vmatpush.msra.mxu0 %v689
    %2538 = vmatmul.f32.gmra.mxu0 %v2481
    %v2539 = vpop.f32.mrf.mxu0
    %v2540 = vadd.f32 0.0, %v2539
    %2541 = vdwg.mxu0
    %2542 = vmatpush.msra.mxu0 %v750
    %2543 = vmatpush.msra.mxu0 %v746
    %2544 = vmatpush.msra.mxu0 %v742
    %2545 = vmatpush.msra.mxu0 %v738
    %2546 = vmatpush.msra.mxu0 %v734
    %2547 = vmatpush.msra.mxu0 %v730
    %2548 = vmatpush.msra.mxu0 %v726
    %2549 = vmatpush.msra.mxu0 %v722
    %2550 = vmatpush.msra.mxu0 %v718
    %2551 = vmatpush.msra.mxu0 %v714
    %2552 = vmatpush.msra.mxu0 %v710
    %2553 = vmatpush.msra.mxu0 %v706
    %2554 = vmatpush.msra.mxu0 %v702
    %2555 = vmatpush.msra.mxu0 %v698
    %2556 = vmatpush.msra.mxu0 %v694
    %2557 = vmatpush.msra.mxu0 %v690
    %2558 = vmatmul.f32.gmra.mxu0 %v2481
    %v2559 = vpop.f32.mrf.mxu0
    %v2560 = vadd.f32 0.0, %v2559
    %2561 = vdwg.mxu0
    %v2564 = vrot.slane %v2500, 2
    %v2565 = vrot.slane %v2520, 2
    %v2568 = vadd.f32 %v662, %v2564
    %v2569 = vadd.f32 %v685, %v2565
    %v2570 = vxor.u32 %v2568, 2147483648
    %v2571 = vmul.f32 %v2570, 1.442695
    %v2572 = vpow.pop %v2571
    %v2573 = vadd.f32 %v2572, 1.0
    %v2574 = vrcp.pop %v2573
    %v2575 = vmul.f32 %v2573, %v2574
    %v2576 = vsub.f32 1.0, %v2575
    %v2577 = vmul.f32 %v2574, %v2576
    %v2578 = vadd.f32 %v2574, %v2577
    %vm2579 = vweird.f32 %v2573
    %vm2580 = vweird.f32 %v2574
    %vm2581 = vmor %vm2579, %vm2580
    %v2582 = vsel %vm2581, %v2574, %v2578
    %v2583 = vand.u32 2147483647, %v2573
    %vm2584 = vcmp.eq.f32.partialorder %v2583, 8.507059e+37
    %v2585 = vand.u32 %v2573, 2147483648
    %v2586 = vor.u32 1.1754944e-38, %v2585
    %v2587 = vsel %vm2584, %v2586, %v2582
    %v2588 = vmul.f32 1.0, %v2587
    %v2589 = vtanh.pop %v2569
    %v2590 = vxor.u32 %v2569, 2147483648
    %v2591 = vmul.f32 %v2590, 1.442695
    %v2592 = vpow.pop %v2591
    %v2593 = vadd.f32 %v2592, 1.0
    %v2594 = vrcp.pop %v2593
    %v2595 = vmul.f32 %v2593, %v2594
    %v2596 = vsub.f32 1.0, %v2595
    %v2597 = vmul.f32 %v2594, %v2596
    %v2598 = vadd.f32 %v2594, %v2597
    %vm2599 = vweird.f32 %v2593
    %vm2600 = vweird.f32 %v2594
    %vm2601 = vmor %vm2599, %vm2600
    %v2602 = vsel %vm2601, %v2594, %v2598
    %v2603 = vand.u32 2147483647, %v2593
    %vm2604 = vcmp.eq.f32.partialorder %v2603, 8.507059e+37
    %v2605 = vand.u32 %v2593, 2147483648
    %v2606 = vor.u32 1.1754944e-38, %v2605
    %v2607 = vsel %vm2604, %v2606, %v2602
    %v2608 = vmul.f32 1.0, %v2607
    %v2610 = vrot.slane %v2372, 6
    %v2612 = vmul.f32 %v2588, %v2610
    %v2613 = vmul.f32 %v2588, %v2589
    %2615 = vrot.lane.b32.xlu0 %v2613, 64
    %v2616 = vpop.permute.xlu0 %2615
    %v2618 = vadd.f32 %v2612, %v2616
    %v2619 = vtanh.pop %v2618
    %v2620 = vmul.f32 %v2608, %v2619
    %v2622 = vrot.slane %v2620, 6
    %2623 = vrot.lane.b32.xlu0 %v2622, 64
    %v2624 = vpop.permute.xlu0 %2623
    %v2625 = vsel %vm903, %v2624, 0
    %2627 = vmatpush.msra.mxu0 0.0
    %2628 = vmatpush.msra.mxu0 0.0
    %2629 = vmatpush.msra.mxu0 0.0
    %2630 = vmatpush.msra.mxu0 0.0
    %2631 = vmatpush.msra.mxu0 0.0
    %2632 = vmatpush.msra.mxu0 0.0
    %2633 = vmatpush.msra.mxu0 0.0
    %2634 = vmatpush.msra.mxu0 0.0
    %2635 = vmatpush.msra.mxu0 %v765
    %2636 = vmatpush.msra.mxu0 %v763
    %2637 = vmatpush.msra.mxu0 %v761
    %2638 = vmatpush.msra.mxu0 %v759
    %2639 = vmatpush.msra.mxu0 %v757
    %2640 = vmatpush.msra.mxu0 %v755
    %2641 = vmatpush.msra.mxu0 %v753
    %2642 = vmatpush.msra.mxu0 %v751
    %2643 = vmatmul.f32.gmra.mxu0 %v2625
    %v2644 = vpop.f32.mrf.mxu0
    %v2645 = vadd.f32 %v2540, %v2644
    %2646 = vdwg.mxu0
    %2647 = vmatpush.msra.mxu0 0.0
    %2648 = vmatpush.msra.mxu0 0.0
    %2649 = vmatpush.msra.mxu0 0.0
    %2650 = vmatpush.msra.mxu0 0.0
    %2651 = vmatpush.msra.mxu0 0.0
    %2652 = vmatpush.msra.mxu0 0.0
    %2653 = vmatpush.msra.mxu0 0.0
    %2654 = vmatpush.msra.mxu0 0.0
    %2655 = vmatpush.msra.mxu0 %v766
    %2656 = vmatpush.msra.mxu0 %v764
    %2657 = vmatpush.msra.mxu0 %v762
    %2658 = vmatpush.msra.mxu0 %v760
    %2659 = vmatpush.msra.mxu0 %v758
    %2660 = vmatpush.msra.mxu0 %v756
    %2661 = vmatpush.msra.mxu0 %v754
    %2662 = vmatpush.msra.mxu0 %v752
    %2663 = vmatmul.f32.gmra.mxu0 %v2625
    %v2664 = vpop.f32.mrf.mxu0
    %v2665 = vadd.f32 %v2560, %v2664
    %2666 = vdwg.mxu0
    %v2667 = vadd.f32 %v2645, %v947
    %v2668 = vadd.f32 %v2665, %v948
    %v2669 = vxor.u32 %v2667, 2147483648
    %v2670 = vmul.f32 %v2669, 1.442695
    %v2671 = vpow.pop %v2670
    %v2672 = vadd.f32 %v2671, 1.0
    %v2673 = vrcp.pop %v2672
    %v2674 = vmul.f32 %v2672, %v2673
    %v2675 = vsub.f32 1.0, %v2674
    %v2676 = vmul.f32 %v2673, %v2675
    %v2677 = vadd.f32 %v2673, %v2676
    %vm2678 = vweird.f32 %v2672
    %vm2679 = vweird.f32 %v2673
    %vm2680 = vmor %vm2678, %vm2679
    %v2681 = vsel %vm2680, %v2673, %v2677
    %v2682 = vand.u32 2147483647, %v2672
    %vm2683 = vcmp.eq.f32.partialorder %v2682, 8.507059e+37
    %v2684 = vand.u32 %v2672, 2147483648
    %v2685 = vor.u32 1.1754944e-38, %v2684
    %v2686 = vsel %vm2683, %v2685, %v2681
    %v2687 = vmul.f32 1.0, %v2686
    %v2688 = vtanh.pop %v2668
    %v2689 = vxor.u32 %v2668, 2147483648
    %v2690 = vmul.f32 %v2689, 1.442695
    %v2691 = vpow.pop %v2690
    %v2692 = vadd.f32 %v2691, 1.0
    %v2693 = vrcp.pop %v2692
    %v2694 = vmul.f32 %v2692, %v2693
    %v2695 = vsub.f32 1.0, %v2694
    %v2696 = vmul.f32 %v2693, %v2695
    %v2697 = vadd.f32 %v2693, %v2696
    %vm2698 = vweird.f32 %v2692
    %vm2699 = vweird.f32 %v2693
    %vm2700 = vmor %vm2698, %vm2699
    %v2701 = vsel %vm2700, %v2693, %v2697
    %v2702 = vand.u32 2147483647, %v2692
    %vm2703 = vcmp.eq.f32.partialorder %v2702, 8.507059e+37
    %v2704 = vand.u32 %v2692, 2147483648
    %v2705 = vor.u32 1.1754944e-38, %v2704
    %v2706 = vsel %vm2703, %v2705, %v2701
    %v2707 = vmul.f32 1.0, %v2706
    %v2708 = vmul.f32 %v2687, %v2468
    %v2709 = vmul.f32 %v2687, %v2688
    %2711 = vrot.lane.b32.xlu0 %v2709, 64
    %v2712 = vpop.permute.xlu0 %2711
    %v2714 = vadd.f32 %v2708, %v2712
    %v2715 = vtanh.pop %v2714
    %v2716 = vmul.f32 %v2707, %v2715
    %2717 = vrot.lane.b32.xlu0 %v2620, 64
    %v2718 = vpop.permute.xlu0 %2717
    %2720 = vst.msk [vmem:[#allocation3 - $0x6] sm:$0xc0] %vm1744, %v2718
    %2721 = vst.msk [vmem:[#allocation3] sm:$0x3] %vm1004, %v2716
    %2723 = vrot.lane.b32.xlu0 %v2716, 64
    %v2724 = vpop.permute.xlu0 %2723
    %2726 = vst.msk [vmem:[#allocation2 + $0xe] sm:$0x3] %vm1002, %v2724
    %v2727 = vld [vmem:[#allocation2] sm:$0xff]
    %v2728 = vld [vmem:[#allocation2 + $0x8] sm:$0xff]
    %v2729 = vld [vmem:[#allocation4] sm:$0xff]
    %v2730 = vld [vmem:[#allocation4 + $0x8] sm:$0xff]
    %v2731 = vadd.f32 %v2727, %v2729
    %v2732 = vadd.f32 %v2728, %v2730
    %v2733 = vld [vmem:[#allocation7] sm:$0xff]
    %v2734 = vld [vmem:[#allocation7 + $0x8] sm:$0xff]
    %v2735 = vld [vmem:[%s19] sm:$0xff]
    %v2736 = vld [vmem:[%s19 + $0x8] sm:$0xff]
    %v2737 = vld [vmem:[%s19 + $0x10] sm:$0xff]
    %v2738 = vld [vmem:[%s19 + $0x18] sm:$0xff]
    %v2739 = vld [vmem:[%s19 + $0x20] sm:$0xff]
    %v2740 = vld [vmem:[%s19 + $0x28] sm:$0xff]
    %v2741 = vld [vmem:[%s19 + $0x30] sm:$0xff]
    %v2742 = vld [vmem:[%s19 + $0x38] sm:$0xff]
    %v2743 = vld [vmem:[%s19 + $0x40] sm:$0xff]
    %v2744 = vld [vmem:[%s19 + $0x48] sm:$0xff]
    %v2745 = vld [vmem:[%s19 + $0x50] sm:$0xff]
    %v2746 = vld [vmem:[%s19 + $0x58] sm:$0xff]
    %v2747 = vld [vmem:[%s19 + $0x60] sm:$0xff]
    %v2748 = vld [vmem:[%s19 + $0x68] sm:$0xff]
    %v2749 = vld [vmem:[%s19 + $0x70] sm:$0xff]
    %v2750 = vld [vmem:[%s19 + $0x78] sm:$0xff]
    %v2751 = vld [vmem:[#allocation16] sm:$0x3]
    %v2753 = vperm.slane %v2751, 0
    %v2754 = vperm.slane %v2751, 1
    %v2758 = vsel %vm903, %v2731, 0
    %v2761 = vsel %vm903, %v2732, 0
    %2763 = vmatpush.msra.mxu0 0.0
    %2764 = vmatpush.msra.mxu0 0.0
    %2765 = vmatpush.msra.mxu0 0.0
    %2766 = vmatpush.msra.mxu0 0.0
    %2767 = vmatpush.msra.mxu0 0.0
    %2768 = vmatpush.msra.mxu0 0.0
    %2769 = vmatpush.msra.mxu0 0.0
    %2770 = vmatpush.msra.mxu0 0.0
    %2771 = vmatpush.msra.mxu0 %v2749
    %2772 = vmatpush.msra.mxu0 %v2747
    %2773 = vmatpush.msra.mxu0 %v2745
    %2774 = vmatpush.msra.mxu0 %v2743
    %2775 = vmatpush.msra.mxu0 %v2741
    %2776 = vmatpush.msra.mxu0 %v2739
    %2777 = vmatpush.msra.mxu0 %v2737
    %2778 = vmatpush.msra.mxu0 %v2735
    %2779 = vmatmul.f32.gmra.mxu0 %v2758
    %v2780 = vpop.f32.mrf.mxu0
    %v2781 = vadd.f32 %v2753, %v2780
    %2782 = vmatmul.f32.gmra.mxu0 %v2761
    %v2783 = vpop.f32.mrf.mxu0
    %v2784 = vadd.f32 %v2753, %v2783
    %2785 = vdwg.mxu0
    %2786 = vmatpush.msra.mxu0 0.0
    %2787 = vmatpush.msra.mxu0 0.0
    %2788 = vmatpush.msra.mxu0 0.0
    %2789 = vmatpush.msra.mxu0 0.0
    %2790 = vmatpush.msra.mxu0 0.0
    %2791 = vmatpush.msra.mxu0 0.0
    %2792 = vmatpush.msra.mxu0 0.0
    %2793 = vmatpush.msra.mxu0 0.0
    %2794 = vmatpush.msra.mxu0 %v2750
    %2795 = vmatpush.msra.mxu0 %v2748
    %2796 = vmatpush.msra.mxu0 %v2746
    %2797 = vmatpush.msra.mxu0 %v2744
    %2798 = vmatpush.msra.mxu0 %v2742
    %2799 = vmatpush.msra.mxu0 %v2740
    %2800 = vmatpush.msra.mxu0 %v2738
    %2801 = vmatpush.msra.mxu0 %v2736
    %2802 = vmatmul.f32.gmra.mxu0 %v2758
    %v2803 = vpop.f32.mrf.mxu0
    %v2804 = vadd.f32 %v2754, %v2803
    %2805 = vmatmul.f32.gmra.mxu0 %v2761
    %v2806 = vpop.f32.mrf.mxu0
    %v2807 = vadd.f32 %v2754, %v2806
    %2808 = vdwg.mxu0
    %2811 = vrot.lane.b32.xlu0 %v2781, 64
    %v2812 = vpop.permute.xlu0 %2811
    %2813 = vrot.lane.b32.xlu0 %v2784, 64
    %v2814 = vpop.permute.xlu0 %2813
    %v2815 = vsel %vm634, %v2781, 0
    %v2817 = vsel %vm634, %v2784, 0
    %v2819 = vsel %vm634, %v2812, 0
    %v2821 = vsel %vm634, %v2814, 0
    %2823 = vmatpush.xpose.msra.mxu0 0.0
    %2824 = vmatpush.xpose.msra.mxu0 0.0
    %2825 = vmatpush.xpose.msra.mxu0 0.0
    %2826 = vmatpush.xpose.msra.mxu0 0.0
    %2827 = vmatpush.xpose.msra.mxu0 0.0
    %2828 = vmatpush.xpose.msra.mxu0 0.0
    %2829 = vmatpush.xpose.msra.mxu0 0.0
    %2830 = vmatpush.xpose.msra.mxu0 0.0
    %2831 = vmatpush.xpose.msra.mxu0 0.0
    %2832 = vmatpush.xpose.msra.mxu0 0.0
    %2833 = vmatpush.xpose.msra.mxu0 0.0
    %2834 = vmatpush.xpose.msra.mxu0 0.0
    %2835 = vmatpush.xpose.msra.mxu0 0.0
    %2836 = vmatpush.xpose.msra.mxu0 0.0
    %2837 = vmatpush.xpose.msra.mxu0 %v2821
    %2838 = vmatpush.xpose.msra.mxu0 %v2819
    %2839 = vmatmul.f32.gmra.mxu0 %v2815
    %v2840 = vpop.f32.mrf.mxu0
    %v2841 = vadd.f32 0.0, %v2840
    %2842 = vmatmul.f32.gmra.mxu0 %v2817
    %v2843 = vpop.f32.mrf.mxu0
    %v2844 = vadd.f32 0.0, %v2843
    %2845 = vdwg.mxu0
    %v2846 = vmul.f32 %v2841, 0.25
    %v2847 = vmul.f32 %v2844, 0.25
    %v2848 = vadd.f32 %v2846, %v2733
    %v2849 = vadd.f32 %v2847, %v2734
    %v2850 = vsel %vm634, %v2848, -inf
    %2851 = vmax.xlane.f32.xlu0 %v2850
    %v2852 = vpop.xlane.xlu0 %2851
    %v2853 = vsel %vm634, %v2849, -inf
    %2854 = vmax.xlane.f32.xlu0 %v2853
    %v2855 = vpop.xlane.xlu0 %2854
    %v2856 = vsub.f32 %v2848, %v2852
    %v2857 = vsub.f32 %v2849, %v2855
    %v2858 = vmul.f32 %v2856, 1.442695
    %v2859 = vpow.pop %v2858
    %v2860 = vmul.f32 %v2857, 1.442695
    %v2861 = vpow.pop %v2860
    %v2862 = vsel %vm634, %v2859, 0.0
    %2863 = vadd.xlane.f32.xlu0 %v2862
    %v2864 = vpop.xlane.xlu0 %2863
    %v2865 = vsel %vm634, %v2861, 0.0
    %2866 = vadd.xlane.f32.xlu0 %v2865
    %v2867 = vpop.xlane.xlu0 %2866
    %v2868 = vrcp.pop %v2864
    %v2869 = vrcp.pop %v2867
    %v2870 = vmul.f32 %v2859, %v2868
    %v2871 = vmul.f32 %v2861, %v2869
    %v2873 = vsel %vm634, %v2870, 0
    %v2876 = vsel %vm634, %v2871, 0
    %2878 = vmatpush.msra.mxu0 0.0
    %2879 = vmatpush.msra.mxu0 0.0
    %2880 = vmatpush.msra.mxu0 0.0
    %2881 = vmatpush.msra.mxu0 0.0
    %2882 = vmatpush.msra.mxu0 0.0
    %2883 = vmatpush.msra.mxu0 0.0
    %2884 = vmatpush.msra.mxu0 0.0
    %2885 = vmatpush.msra.mxu0 0.0
    %2886 = vmatpush.msra.mxu0 0.0
    %2887 = vmatpush.msra.mxu0 0.0
    %2888 = vmatpush.msra.mxu0 0.0
    %2889 = vmatpush.msra.mxu0 0.0
    %2890 = vmatpush.msra.mxu0 0.0
    %2891 = vmatpush.msra.mxu0 0.0
    %2892 = vmatpush.msra.mxu0 %v2807
    %2893 = vmatpush.msra.mxu0 %v2804
    %2894 = vmatmul.f32.gmra.mxu0 %v2873
    %v2895 = vpop.f32.mrf.mxu0
    %v2896 = vadd.f32 0.0, %v2895
    %2897 = vmatmul.f32.gmra.mxu0 %v2876
    %v2898 = vpop.f32.mrf.mxu0
    %v2899 = vadd.f32 0.0, %v2898
    %2900 = vdwg.mxu0
    %2901 = vrot.lane.b32.xlu0 %v2781, 112
    %v2902 = vpop.permute.xlu0 %2901
    %2903 = vrot.lane.b32.xlu0 %v2784, 112
    %v2904 = vpop.permute.xlu0 %2903
    %2905 = vrot.lane.b32.xlu0 %v2781, 48
    %v2906 = vpop.permute.xlu0 %2905
    %2907 = vrot.lane.b32.xlu0 %v2784, 48
    %v2908 = vpop.permute.xlu0 %2907
    %v2909 = vsel %vm634, %v2902, 0
    %v2911 = vsel %vm634, %v2904, 0
    %v2913 = vsel %vm634, %v2906, 0
    %v2915 = vsel %vm634, %v2908, 0
    %2917 = vmatpush.xpose.msra.mxu0 0.0
    %2918 = vmatpush.xpose.msra.mxu0 0.0
    %2919 = vmatpush.xpose.msra.mxu0 0.0
    %2920 = vmatpush.xpose.msra.mxu0 0.0
    %2921 = vmatpush.xpose.msra.mxu0 0.0
    %2922 = vmatpush.xpose.msra.mxu0 0.0
    %2923 = vmatpush.xpose.msra.mxu0 0.0
    %2924 = vmatpush.xpose.msra.mxu0 0.0
    %2925 = vmatpush.xpose.msra.mxu0 0.0
    %2926 = vmatpush.xpose.msra.mxu0 0.0
    %2927 = vmatpush.xpose.msra.mxu0 0.0
    %2928 = vmatpush.xpose.msra.mxu0 0.0
    %2929 = vmatpush.xpose.msra.mxu0 0.0
    %2930 = vmatpush.xpose.msra.mxu0 0.0
    %2931 = vmatpush.xpose.msra.mxu0 %v2915
    %2932 = vmatpush.xpose.msra.mxu0 %v2913
    %2933 = vmatmul.f32.gmra.mxu0 %v2909
    %v2934 = vpop.f32.mrf.mxu0
    %v2935 = vadd.f32 0.0, %v2934
    %2936 = vmatmul.f32.gmra.mxu0 %v2911
    %v2937 = vpop.f32.mrf.mxu0
    %v2938 = vadd.f32 0.0, %v2937
    %2939 = vdwg.mxu0
    %v2940 = vmul.f32 %v2935, 0.25
    %v2941 = vmul.f32 %v2938, 0.25
    %v2942 = vadd.f32 %v2940, %v2733
    %v2943 = vadd.f32 %v2941, %v2734
    %v2944 = vsel %vm634, %v2942, -inf
    %2945 = vmax.xlane.f32.xlu0 %v2944
    %v2946 = vpop.xlane.xlu0 %2945
    %v2947 = vsel %vm634, %v2943, -inf
    %2948 = vmax.xlane.f32.xlu0 %v2947
    %v2949 = vpop.xlane.xlu0 %2948
    %v2950 = vsub.f32 %v2942, %v2946
    %v2951 = vsub.f32 %v2943, %v2949
    %v2952 = vmul.f32 %v2950, 1.442695
    %v2953 = vpow.pop %v2952
    %v2954 = vmul.f32 %v2951, 1.442695
    %v2955 = vpow.pop %v2954
    %v2956 = vsel %vm634, %v2953, 0.0
    %2957 = vadd.xlane.f32.xlu0 %v2956
    %v2958 = vpop.xlane.xlu0 %2957
    %v2959 = vsel %vm634, %v2955, 0.0
    %2960 = vadd.xlane.f32.xlu0 %v2959
    %v2961 = vpop.xlane.xlu0 %2960
    %v2962 = vrcp.pop %v2958
    %v2963 = vrcp.pop %v2961
    %v2964 = vmul.f32 %v2953, %v2962
    %v2965 = vmul.f32 %v2955, %v2963
    %2968 = vrot.lane.b32.xlu0 %v2804, 112
    %v2969 = vpop.permute.xlu0 %2968
    %2970 = vrot.lane.b32.xlu0 %v2807, 112
    %v2971 = vpop.permute.xlu0 %2970
    %v2975 = vsel %vm634, %v2964, 0
    %v2978 = vsel %vm634, %v2965, 0
    %2980 = vmatpush.msra.mxu0 0.0
    %2981 = vmatpush.msra.mxu0 0.0
    %2982 = vmatpush.msra.mxu0 0.0
    %2983 = vmatpush.msra.mxu0 0.0
    %2984 = vmatpush.msra.mxu0 0.0
    %2985 = vmatpush.msra.mxu0 0.0
    %2986 = vmatpush.msra.mxu0 0.0
    %2987 = vmatpush.msra.mxu0 0.0
    %2988 = vmatpush.msra.mxu0 0.0
    %2989 = vmatpush.msra.mxu0 0.0
    %2990 = vmatpush.msra.mxu0 0.0
    %2991 = vmatpush.msra.mxu0 0.0
    %2992 = vmatpush.msra.mxu0 0.0
    %2993 = vmatpush.msra.mxu0 0.0
    %2994 = vmatpush.msra.mxu0 %v2971
    %2995 = vmatpush.msra.mxu0 %v2969
    %2996 = vmatmul.f32.gmra.mxu0 %v2975
    %v2997 = vpop.f32.mrf.mxu0
    %v2998 = vadd.f32 0.0, %v2997
    %2999 = vmatmul.f32.gmra.mxu0 %v2978
    %v3000 = vpop.f32.mrf.mxu0
    %v3001 = vadd.f32 0.0, %v3000
    %3002 = vdwg.mxu0
    %3003 = vrot.lane.b32.xlu0 %v2781, 96
    %v3004 = vpop.permute.xlu0 %3003
    %3005 = vrot.lane.b32.xlu0 %v2784, 96
    %v3006 = vpop.permute.xlu0 %3005
    %3007 = vrot.lane.b32.xlu0 %v2781, 32
    %v3008 = vpop.permute.xlu0 %3007
    %3009 = vrot.lane.b32.xlu0 %v2784, 32
    %v3010 = vpop.permute.xlu0 %3009
    %v3011 = vsel %vm634, %v3004, 0
    %v3013 = vsel %vm634, %v3006, 0
    %v3015 = vsel %vm634, %v3008, 0
    %v3017 = vsel %vm634, %v3010, 0
    %3019 = vmatpush.xpose.msra.mxu0 0.0
    %3020 = vmatpush.xpose.msra.mxu0 0.0
    %3021 = vmatpush.xpose.msra.mxu0 0.0
    %3022 = vmatpush.xpose.msra.mxu0 0.0
    %3023 = vmatpush.xpose.msra.mxu0 0.0
    %3024 = vmatpush.xpose.msra.mxu0 0.0
    %3025 = vmatpush.xpose.msra.mxu0 0.0
    %3026 = vmatpush.xpose.msra.mxu0 0.0
    %3027 = vmatpush.xpose.msra.mxu0 0.0
    %3028 = vmatpush.xpose.msra.mxu0 0.0
    %3029 = vmatpush.xpose.msra.mxu0 0.0
    %3030 = vmatpush.xpose.msra.mxu0 0.0
    %3031 = vmatpush.xpose.msra.mxu0 0.0
    %3032 = vmatpush.xpose.msra.mxu0 0.0
    %3033 = vmatpush.xpose.msra.mxu0 %v3017
    %3034 = vmatpush.xpose.msra.mxu0 %v3015
    %3035 = vmatmul.f32.gmra.mxu0 %v3011
    %v3036 = vpop.f32.mrf.mxu0
    %v3037 = vadd.f32 0.0, %v3036
    %3038 = vmatmul.f32.gmra.mxu0 %v3013
    %v3039 = vpop.f32.mrf.mxu0
    %v3040 = vadd.f32 0.0, %v3039
    %3041 = vdwg.mxu0
    %v3042 = vmul.f32 %v3037, 0.25
    %v3043 = vmul.f32 %v3040, 0.25
    %v3044 = vadd.f32 %v3042, %v2733
    %v3045 = vadd.f32 %v3043, %v2734
    %v3046 = vsel %vm634, %v3044, -inf
    %3047 = vmax.xlane.f32.xlu0 %v3046
    %v3048 = vpop.xlane.xlu0 %3047
    %v3049 = vsel %vm634, %v3045, -inf
    %3050 = vmax.xlane.f32.xlu0 %v3049
    %v3051 = vpop.xlane.xlu0 %3050
    %v3052 = vsub.f32 %v3044, %v3048
    %v3053 = vsub.f32 %v3045, %v3051
    %v3054 = vmul.f32 %v3052, 1.442695
    %v3055 = vpow.pop %v3054
    %v3056 = vmul.f32 %v3053, 1.442695
    %v3057 = vpow.pop %v3056
    %v3058 = vsel %vm634, %v3055, 0.0
    %3059 = vadd.xlane.f32.xlu0 %v3058
    %v3060 = vpop.xlane.xlu0 %3059
    %v3061 = vsel %vm634, %v3057, 0.0
    %3062 = vadd.xlane.f32.xlu0 %v3061
    %v3063 = vpop.xlane.xlu0 %3062
    %v3064 = vrcp.pop %v3060
    %v3065 = vrcp.pop %v3063
    %v3066 = vmul.f32 %v3055, %v3064
    %v3067 = vmul.f32 %v3057, %v3065
    %3068 = vrot.lane.b32.xlu0 %v2804, 96
    %v3069 = vpop.permute.xlu0 %3068
    %3070 = vrot.lane.b32.xlu0 %v2807, 96
    %v3071 = vpop.permute.xlu0 %3070
    %v3075 = vsel %vm634, %v3066, 0
    %v3078 = vsel %vm634, %v3067, 0
    %3080 = vmatpush.msra.mxu0 0.0
    %3081 = vmatpush.msra.mxu0 0.0
    %3082 = vmatpush.msra.mxu0 0.0
    %3083 = vmatpush.msra.mxu0 0.0
    %3084 = vmatpush.msra.mxu0 0.0
    %3085 = vmatpush.msra.mxu0 0.0
    %3086 = vmatpush.msra.mxu0 0.0
    %3087 = vmatpush.msra.mxu0 0.0
    %3088 = vmatpush.msra.mxu0 0.0
    %3089 = vmatpush.msra.mxu0 0.0
    %3090 = vmatpush.msra.mxu0 0.0
    %3091 = vmatpush.msra.mxu0 0.0
    %3092 = vmatpush.msra.mxu0 0.0
    %3093 = vmatpush.msra.mxu0 0.0
    %3094 = vmatpush.msra.mxu0 %v3071
    %3095 = vmatpush.msra.mxu0 %v3069
    %3096 = vmatmul.f32.gmra.mxu0 %v3075
    %v3097 = vpop.f32.mrf.mxu0
    %v3098 = vadd.f32 0.0, %v3097
    %3099 = vmatmul.f32.gmra.mxu0 %v3078
    %v3100 = vpop.f32.mrf.mxu0
    %v3101 = vadd.f32 0.0, %v3100
    %3102 = vdwg.mxu0
    %3103 = vrot.lane.b32.xlu0 %v2781, 80
    %v3104 = vpop.permute.xlu0 %3103
    %3105 = vrot.lane.b32.xlu0 %v2784, 80
    %v3106 = vpop.permute.xlu0 %3105
    %3107 = vrot.lane.b32.xlu0 %v2781, 16
    %v3108 = vpop.permute.xlu0 %3107
    %3109 = vrot.lane.b32.xlu0 %v2784, 16
    %v3110 = vpop.permute.xlu0 %3109
    %v3111 = vsel %vm634, %v3104, 0
    %v3113 = vsel %vm634, %v3106, 0
    %v3115 = vsel %vm634, %v3108, 0
    %v3117 = vsel %vm634, %v3110, 0
    %3119 = vmatpush.xpose.msra.mxu0 0.0
    %3120 = vmatpush.xpose.msra.mxu0 0.0
    %3121 = vmatpush.xpose.msra.mxu0 0.0
    %3122 = vmatpush.xpose.msra.mxu0 0.0
    %3123 = vmatpush.xpose.msra.mxu0 0.0
    %3124 = vmatpush.xpose.msra.mxu0 0.0
    %3125 = vmatpush.xpose.msra.mxu0 0.0
    %3126 = vmatpush.xpose.msra.mxu0 0.0
    %3127 = vmatpush.xpose.msra.mxu0 0.0
    %3128 = vmatpush.xpose.msra.mxu0 0.0
    %3129 = vmatpush.xpose.msra.mxu0 0.0
    %3130 = vmatpush.xpose.msra.mxu0 0.0
    %3131 = vmatpush.xpose.msra.mxu0 0.0
    %3132 = vmatpush.xpose.msra.mxu0 0.0
    %3133 = vmatpush.xpose.msra.mxu0 %v3117
    %3134 = vmatpush.xpose.msra.mxu0 %v3115
    %3135 = vmatmul.f32.gmra.mxu0 %v3111
    %v3136 = vpop.f32.mrf.mxu0
    %v3137 = vadd.f32 0.0, %v3136
    %3138 = vmatmul.f32.gmra.mxu0 %v3113
    %v3139 = vpop.f32.mrf.mxu0
    %v3140 = vadd.f32 0.0, %v3139
    %3141 = vdwg.mxu0
    %v3142 = vmul.f32 %v3137, 0.25
    %v3143 = vmul.f32 %v3140, 0.25
    %v3144 = vadd.f32 %v3142, %v2733
    %v3145 = vadd.f32 %v3143, %v2734
    %v3146 = vsel %vm634, %v3144, -inf
    %3147 = vmax.xlane.f32.xlu0 %v3146
    %v3148 = vpop.xlane.xlu0 %3147
    %v3149 = vsel %vm634, %v3145, -inf
    %3150 = vmax.xlane.f32.xlu0 %v3149
    %v3151 = vpop.xlane.xlu0 %3150
    %v3152 = vsub.f32 %v3144, %v3148
    %v3153 = vsub.f32 %v3145, %v3151
    %v3154 = vmul.f32 %v3152, 1.442695
    %v3155 = vpow.pop %v3154
    %v3156 = vmul.f32 %v3153, 1.442695
    %v3157 = vpow.pop %v3156
    %v3158 = vsel %vm634, %v3155, 0.0
    %3159 = vadd.xlane.f32.xlu0 %v3158
    %v3160 = vpop.xlane.xlu0 %3159
    %v3161 = vsel %vm634, %v3157, 0.0
    %3162 = vadd.xlane.f32.xlu0 %v3161
    %v3163 = vpop.xlane.xlu0 %3162
    %v3164 = vrcp.pop %v3160
    %v3165 = vrcp.pop %v3163
    %v3166 = vmul.f32 %v3155, %v3164
    %v3167 = vmul.f32 %v3157, %v3165
    %3168 = vrot.lane.b32.xlu0 %v2804, 80
    %v3169 = vpop.permute.xlu0 %3168
    %3170 = vrot.lane.b32.xlu0 %v2807, 80
    %v3171 = vpop.permute.xlu0 %3170
    %v3175 = vsel %vm634, %v3166, 0
    %v3178 = vsel %vm634, %v3167, 0
    %3180 = vmatpush.msra.mxu0 0.0
    %3181 = vmatpush.msra.mxu0 0.0
    %3182 = vmatpush.msra.mxu0 0.0
    %3183 = vmatpush.msra.mxu0 0.0
    %3184 = vmatpush.msra.mxu0 0.0
    %3185 = vmatpush.msra.mxu0 0.0
    %3186 = vmatpush.msra.mxu0 0.0
    %3187 = vmatpush.msra.mxu0 0.0
    %3188 = vmatpush.msra.mxu0 0.0
    %3189 = vmatpush.msra.mxu0 0.0
    %3190 = vmatpush.msra.mxu0 0.0
    %3191 = vmatpush.msra.mxu0 0.0
    %3192 = vmatpush.msra.mxu0 0.0
    %3193 = vmatpush.msra.mxu0 0.0
    %3194 = vmatpush.msra.mxu0 %v3171
    %3195 = vmatpush.msra.mxu0 %v3169
    %3196 = vmatmul.f32.gmra.mxu0 %v3175
    %v3197 = vpop.f32.mrf.mxu0
    %v3198 = vadd.f32 0.0, %v3197
    %3199 = vmatmul.f32.gmra.mxu0 %v3178
    %v3200 = vpop.f32.mrf.mxu0
    %v3201 = vadd.f32 0.0, %v3200
    %3202 = vdwg.mxu0
    %3205 = vrot.lane.b32.xlu0 %v2998, 16
    %v3206 = vpop.permute.xlu0 %3205
    %3207 = vrot.lane.b32.xlu0 %v3001, 16
    %v3208 = vpop.permute.xlu0 %3207
    %3213 = vrot.lane.b32.xlu0 %v3098, 32
    %v3214 = vpop.permute.xlu0 %3213
    %3215 = vrot.lane.b32.xlu0 %v3101, 32
    %v3216 = vpop.permute.xlu0 %3215
    %3221 = vrot.lane.b32.xlu0 %v3198, 48
    %v3222 = vpop.permute.xlu0 %3221
    %3223 = vrot.lane.b32.xlu0 %v3201, 48
    %v3224 = vpop.permute.xlu0 %3223
    %v3227 = vsel %vm634, %v2896, %v3206
    %v3228 = vsel %vm634, %v2899, %v3208
    %vm3229 = vcmask 261120
    %v3230 = vsel %vm3229, %v3227, %v3214
    %v3231 = vsel %vm3229, %v3228, %v3216
    %vm3232 = vcmask 392192
    %v3233 = vsel %vm3232, %v3230, %v3222
    %v3234 = vsel %vm3232, %v3231, %v3224
    %v3235 = vld [vmem:[#allocation18] sm:$0xff]
    %v3236 = vld [vmem:[#allocation18 + $0x8] sm:$0xff]
    %v3237 = vld [vmem:[#allocation18 + $0x10] sm:$0xff]
    %v3238 = vld [vmem:[#allocation18 + $0x18] sm:$0xff]
    %v3239 = vld [vmem:[#allocation18 + $0x20] sm:$0xff]
    %v3240 = vld [vmem:[#allocation18 + $0x28] sm:$0xff]
    %v3241 = vld [vmem:[#allocation18 + $0x30] sm:$0xff]
    %v3242 = vld [vmem:[#allocation18 + $0x38] sm:$0xff]
    %v3243 = vld [vmem:[#allocation19] sm:$0x1]
    %v3245 = vperm.slane %v3243, 0
    %v3248 = vsel %vm903, %v3233, 0
    %v3251 = vsel %vm903, %v3234, 0
    %3253 = vmatpush.msra.mxu0 0.0
    %3254 = vmatpush.msra.mxu0 0.0
    %3255 = vmatpush.msra.mxu0 0.0
    %3256 = vmatpush.msra.mxu0 0.0
    %3257 = vmatpush.msra.mxu0 0.0
    %3258 = vmatpush.msra.mxu0 0.0
    %3259 = vmatpush.msra.mxu0 0.0
    %3260 = vmatpush.msra.mxu0 0.0
    %3261 = vmatpush.msra.mxu0 %v3242
    %3262 = vmatpush.msra.mxu0 %v3241
    %3263 = vmatpush.msra.mxu0 %v3240
    %3264 = vmatpush.msra.mxu0 %v3239
    %3265 = vmatpush.msra.mxu0 %v3238
    %3266 = vmatpush.msra.mxu0 %v3237
    %3267 = vmatpush.msra.mxu0 %v3236
    %3268 = vmatpush.msra.mxu0 %v3235
    %3269 = vmatmul.f32.gmra.mxu0 %v3248
    %v3270 = vpop.f32.mrf.mxu0
    %v3271 = vadd.f32 %v3245, %v3270
    %3272 = vmatmul.f32.gmra.mxu0 %v3251
    %v3273 = vpop.f32.mrf.mxu0
    %v3274 = vadd.f32 %v3245, %v3273
    %3275 = vdwg.mxu0
    %v3276 = vadd.f32 %v2731, %v3271
    %v3277 = vadd.f32 %v2732, %v3274
    %v3278 = vld [vmem:[#allocation21] sm:$0x1]
    %v3279 = vld [vmem:[#allocation22] sm:$0x1]
    %v3280 = vsel %vm903, %v3276, 0.0
    %3281 = vadd.xlane.f32.xlu0 %v3280
    %v3282 = vpop.xlane.xlu0 %3281
    %v3283 = vsel %vm903, %v3277, 0.0
    %3284 = vadd.xlane.f32.xlu0 %v3283
    %v3285 = vpop.xlane.xlu0 %3284
    %v3286 = vrcp.pop 64.0
    %v3287 = vmul.f32 64.0, %v3286
    %v3288 = vsub.f32 1.0, %v3287
    %v3289 = vmul.f32 %v3286, %v3288
    %v3290 = vadd.f32 %v3286, %v3289
    %vm3291 = vweird.f32 %v3286
    %v3292 = vsel %vm3291, %v3286, %v3290
    %v3293 = vmul.f32 %v3282, %v3292
    %v3294 = vmul.f32 %v3285, %v3292
    %v3295 = vsub.f32 %v3276, %v3293
    %v3296 = vsub.f32 %v3277, %v3294
    %v3297 = vmul.f32 %v3295, %v3295
    %v3298 = vmul.f32 %v3296, %v3296
    %v3299 = vsel %vm903, %v3297, 0.0
    %3300 = vadd.xlane.f32.xlu0 %v3299
    %v3301 = vpop.xlane.xlu0 %3300
    %v3302 = vsel %vm903, %v3298, 0.0
    %3303 = vadd.xlane.f32.xlu0 %v3302
    %v3304 = vpop.xlane.xlu0 %3303
    %v3305 = vmul.f32 %v3301, %v3292
    %v3306 = vmul.f32 %v3304, %v3292
    %v3307 = vadd.f32 %v3305, 1e-05
    %v3308 = vadd.f32 %v3306, 1e-05
    %v3309 = vrsqrt.pop %v3307
    %v3310 = vmul.f32 %v3309, %v3307
    %v3311 = vmul.f32 %v3310, %v3309
    %v3312 = vmul.f32 0.5, %v3311
    %v3313 = vsub.f32 1.5, %v3312
    %v3314 = vmul.f32 %v3309, %v3313
    %vm3315 = vweird.f32 %v3307
    %vm3316 = vweird.f32 %v3309
    %vm3317 = vmor %vm3315, %vm3316
    %v3318 = vsel %vm3317, %v3309, %v3314
    %v3319 = vrsqrt.pop %v3308
    %v3320 = vmul.f32 %v3319, %v3308
    %v3321 = vmul.f32 %v3320, %v3319
    %v3322 = vmul.f32 0.5, %v3321
    %v3323 = vsub.f32 1.5, %v3322
    %v3324 = vmul.f32 %v3319, %v3323
    %vm3325 = vweird.f32 %v3308
    %vm3326 = vweird.f32 %v3319
    %vm3327 = vmor %vm3325, %vm3326
    %v3328 = vsel %vm3327, %v3319, %v3324
    %v3329 = vmul.f32 %v3295, %v3318
    %v3330 = vmul.f32 %v3296, %v3328
    %v3332 = vperm.slane %v3278, 0
    %v3334 = vmul.f32 %v3329, %v3332
    %v3335 = vmul.f32 %v3330, %v3332
    %v3337 = vperm.slane %v3279, 0
    %v3339 = vadd.f32 %v3334, %v3337
    %v3340 = vadd.f32 %v3335, %v3337
    %v3341 = vld [vmem:[#allocation24] sm:$0xff]
    %v3342 = vld [vmem:[#allocation24 + $0x8] sm:$0xff]
    %v3343 = vld [vmem:[#allocation24 + $0x10] sm:$0xff]
    %v3344 = vld [vmem:[#allocation24 + $0x18] sm:$0xff]
    %v3345 = vld [vmem:[#allocation24 + $0x20] sm:$0xff]
    %v3346 = vld [vmem:[#allocation24 + $0x28] sm:$0xff]
    %v3347 = vld [vmem:[#allocation24 + $0x30] sm:$0xff]
    %v3348 = vld [vmem:[#allocation24 + $0x38] sm:$0xff]
    %v3349 = vld [vmem:[#allocation25] sm:$0x1]
    %v3351 = vperm.slane %v3349, 0
    %v3354 = vsel %vm903, %v3339, 0
    %v3357 = vsel %vm903, %v3340, 0
    %3359 = vmatpush.msra.mxu0 0.0
    %3360 = vmatpush.msra.mxu0 0.0
    %3361 = vmatpush.msra.mxu0 0.0
    %3362 = vmatpush.msra.mxu0 0.0
    %3363 = vmatpush.msra.mxu0 0.0
    %3364 = vmatpush.msra.mxu0 0.0
    %3365 = vmatpush.msra.mxu0 0.0
    %3366 = vmatpush.msra.mxu0 0.0
    %3367 = vmatpush.msra.mxu0 %v3348
    %3368 = vmatpush.msra.mxu0 %v3347
    %3369 = vmatpush.msra.mxu0 %v3346
    %3370 = vmatpush.msra.mxu0 %v3345
    %3371 = vmatpush.msra.mxu0 %v3344
    %3372 = vmatpush.msra.mxu0 %v3343
    %3373 = vmatpush.msra.mxu0 %v3342
    %3374 = vmatpush.msra.mxu0 %v3341
    %3375 = vmatmul.f32.gmra.mxu0 %v3354
    %v3376 = vpop.f32.mrf.mxu0
    %v3377 = vadd.f32 %v3351, %v3376
    %3378 = vmatmul.f32.gmra.mxu0 %v3357
    %v3379 = vpop.f32.mrf.mxu0
    %v3380 = vadd.f32 %v3351, %v3379
    %3381 = vdwg.mxu0
    %v3382 = vmax.f32 %v3377, 0.0
    %v3383 = vmax.f32 %v3380, 0.0
    %v3384 = vld [vmem:[%s35] sm:$0xff]
    %v3385 = vld [vmem:[%s35 + $0x8] sm:$0xff]
    %v3386 = vld [vmem:[%s35 + $0x10] sm:$0xff]
    %v3387 = vld [vmem:[%s35 + $0x18] sm:$0xff]
    %v3388 = vld [vmem:[%s35 + $0x20] sm:$0xff]
    %v3389 = vld [vmem:[%s35 + $0x28] sm:$0xff]
    %v3390 = vld [vmem:[%s35 + $0x30] sm:$0xff]
    %v3391 = vld [vmem:[%s35 + $0x38] sm:$0xff]
    %v3392 = vld [vmem:[%s35 + $0x40] sm:$0xff]
    %v3393 = vld [vmem:[%s35 + $0x48] sm:$0xff]
    %v3394 = vld [vmem:[%s35 + $0x50] sm:$0xff]
    %v3395 = vld [vmem:[%s35 + $0x58] sm:$0xff]
    %v3396 = vld [vmem:[%s35 + $0x60] sm:$0xff]
    %v3397 = vld [vmem:[%s35 + $0x68] sm:$0xff]
    %v3398 = vld [vmem:[%s35 + $0x70] sm:$0xff]
    %v3399 = vld [vmem:[%s35 + $0x78] sm:$0xff]
    %v3400 = vld [vmem:[#allocation27] sm:$0x1]
    %v3402 = vperm.slane %v3400, 0
    %3404 = vmatpush.msra.mxu0 %v3399
    %3405 = vmatpush.msra.mxu0 %v3398
    %3406 = vmatpush.msra.mxu0 %v3397
    %3407 = vmatpush.msra.mxu0 %v3396
    %3408 = vmatpush.msra.mxu0 %v3395
    %3409 = vmatpush.msra.mxu0 %v3394
    %3410 = vmatpush.msra.mxu0 %v3393
    %3411 = vmatpush.msra.mxu0 %v3392
    %3412 = vmatpush.msra.mxu0 %v3391
    %3413 = vmatpush.msra.mxu0 %v3390
    %3414 = vmatpush.msra.mxu0 %v3389
    %3415 = vmatpush.msra.mxu0 %v3388
    %3416 = vmatpush.msra.mxu0 %v3387
    %3417 = vmatpush.msra.mxu0 %v3386
    %3418 = vmatpush.msra.mxu0 %v3385
    %3419 = vmatpush.msra.mxu0 %v3384
    %3420 = vmatmul.f32.gmra.mxu0 %v3382
    %v3421 = vpop.f32.mrf.mxu0
    %v3422 = vadd.f32 %v3402, %v3421
    %3423 = vmatmul.f32.gmra.mxu0 %v3383
    %v3424 = vpop.f32.mrf.mxu0
    %v3425 = vadd.f32 %v3402, %v3424
    %3426 = vdwg.mxu0
    %v3427 = vadd.f32 %v3339, %v3422
    %v3428 = vadd.f32 %v3340, %v3425
    %v3429 = vld [vmem:[#allocation28] sm:$0x1]
    %v3430 = vld [vmem:[#allocation30] sm:$0x1]
    %v3431 = vsel %vm903, %v3427, 0.0
    %3432 = vadd.xlane.f32.xlu0 %v3431
    %v3433 = vpop.xlane.xlu0 %3432
    %v3434 = vsel %vm903, %v3428, 0.0
    %3435 = vadd.xlane.f32.xlu0 %v3434
    %v3436 = vpop.xlane.xlu0 %3435
    %v3437 = vmul.f32 %v3433, %v3292
    %v3438 = vmul.f32 %v3436, %v3292
    %v3439 = vsub.f32 %v3427, %v3437
    %v3440 = vsub.f32 %v3428, %v3438
    %v3441 = vmul.f32 %v3439, %v3439
    %v3442 = vmul.f32 %v3440, %v3440
    %v3443 = vsel %vm903, %v3441, 0.0
    %3444 = vadd.xlane.f32.xlu0 %v3443
    %v3445 = vpop.xlane.xlu0 %3444
    %v3446 = vsel %vm903, %v3442, 0.0
    %3447 = vadd.xlane.f32.xlu0 %v3446
    %v3448 = vpop.xlane.xlu0 %3447
    %v3449 = vmul.f32 %v3445, %v3292
    %v3450 = vmul.f32 %v3448, %v3292
    %v3451 = vadd.f32 %v3449, 1e-05
    %v3452 = vadd.f32 %v3450, 1e-05
    %v3453 = vrsqrt.pop %v3451
    %v3454 = vmul.f32 %v3453, %v3451
    %v3455 = vmul.f32 %v3454, %v3453
    %v3456 = vmul.f32 0.5, %v3455
    %v3457 = vsub.f32 1.5, %v3456
    %v3458 = vmul.f32 %v3453, %v3457
    %vm3459 = vweird.f32 %v3451
    %vm3460 = vweird.f32 %v3453
    %vm3461 = vmor %vm3459, %vm3460
    %v3462 = vsel %vm3461, %v3453, %v3458
    %v3463 = vrsqrt.pop %v3452
    %v3464 = vmul.f32 %v3463, %v3452
    %v3465 = vmul.f32 %v3464, %v3463
    %v3466 = vmul.f32 0.5, %v3465
    %v3467 = vsub.f32 1.5, %v3466
    %v3468 = vmul.f32 %v3463, %v3467
    %vm3469 = vweird.f32 %v3452
    %vm3470 = vweird.f32 %v3463
    %vm3471 = vmor %vm3469, %vm3470
    %v3472 = vsel %vm3471, %v3463, %v3468
    %v3473 = vmul.f32 %v3439, %v3462
    %v3474 = vmul.f32 %v3440, %v3472
    %v3476 = vperm.slane %v3429, 0
    %v3478 = vmul.f32 %v3473, %v3476
    %v3479 = vmul.f32 %v3474, %v3476
    %v3481 = vperm.slane %v3430, 0
    %v3483 = vadd.f32 %v3478, %v3481
    %v3484 = vadd.f32 %v3479, %v3481
    %v3485 = vld [vmem:[#allocation31] sm:$0xff]
    %v3486 = vld [vmem:[#allocation31 + $0x8] sm:$0xff]
    %v3487 = vld [vmem:[#allocation31 + $0x10] sm:$0xff]
    %v3488 = vld [vmem:[#allocation31 + $0x18] sm:$0xff]
    %v3489 = vld [vmem:[#allocation31 + $0x20] sm:$0xff]
    %v3490 = vld [vmem:[#allocation31 + $0x28] sm:$0xff]
    %v3491 = vld [vmem:[#allocation31 + $0x30] sm:$0xff]
    %v3492 = vld [vmem:[#allocation31 + $0x38] sm:$0xff]
    %v3493 = vld [vmem:[#allocation33] sm:$0x1]
    %v3494 = vld [vmem:[#allocation34] sm:$0xff]
    %v3495 = vld [vmem:[#allocation34 + $0x8] sm:$0xff]
    %v3496 = vld [vmem:[#allocation34 + $0x10] sm:$0xff]
    %v3497 = vld [vmem:[#allocation34 + $0x18] sm:$0xff]
    %v3498 = vld [vmem:[#allocation34 + $0x20] sm:$0xff]
    %v3499 = vld [vmem:[#allocation34 + $0x28] sm:$0xff]
    %v3500 = vld [vmem:[#allocation34 + $0x30] sm:$0xff]
    %v3501 = vld [vmem:[#allocation34 + $0x38] sm:$0xff]
    %v3502 = vld [vmem:[#allocation36] sm:$0x1]
    %v3503 = vld [vmem:[#allocation37] sm:$0xff]
    %v3504 = vld [vmem:[#allocation37 + $0x8] sm:$0xff]
    %v3505 = vld [vmem:[#allocation37 + $0x10] sm:$0xff]
    %v3506 = vld [vmem:[#allocation37 + $0x18] sm:$0xff]
    %v3507 = vld [vmem:[#allocation37 + $0x20] sm:$0xff]
    %v3508 = vld [vmem:[#allocation37 + $0x28] sm:$0xff]
    %v3509 = vld [vmem:[#allocation37 + $0x30] sm:$0xff]
    %v3510 = vld [vmem:[#allocation37 + $0x38] sm:$0xff]
    %v3511 = vld [vmem:[#allocation39] sm:$0x1]
    %v3513 = vperm.slane %v3493, 0
    %v3516 = vsel %vm903, %v3483, 0
    %v3519 = vsel %vm903, %v3484, 0
    %3521 = vmatpush.msra.mxu0 0.0
    %3522 = vmatpush.msra.mxu0 0.0
    %3523 = vmatpush.msra.mxu0 0.0
    %3524 = vmatpush.msra.mxu0 0.0
    %3525 = vmatpush.msra.mxu0 0.0
    %3526 = vmatpush.msra.mxu0 0.0
    %3527 = vmatpush.msra.mxu0 0.0
    %3528 = vmatpush.msra.mxu0 0.0
    %3529 = vmatpush.msra.mxu0 %v3492
    %3530 = vmatpush.msra.mxu0 %v3491
    %3531 = vmatpush.msra.mxu0 %v3490
    %3532 = vmatpush.msra.mxu0 %v3489
    %3533 = vmatpush.msra.mxu0 %v3488
    %3534 = vmatpush.msra.mxu0 %v3487
    %3535 = vmatpush.msra.mxu0 %v3486
    %3536 = vmatpush.msra.mxu0 %v3485
    %3537 = vmatmul.f32.gmra.mxu0 %v3516
    %v3538 = vpop.f32.mrf.mxu0
    %v3539 = vadd.f32 %v3513, %v3538
    %3540 = vmatmul.f32.gmra.mxu0 %v3519
    %v3541 = vpop.f32.mrf.mxu0
    %v3542 = vadd.f32 %v3513, %v3541
    %3543 = vdwg.mxu0
    %vm3544 = vcmp.gt.f32.partialorder %v3539, 0.0
    %vm3545 = vcmp.gt.f32.partialorder %v3542, 0.0
    %v3546 = vmin.f32 %v3539, 0.0
    %v3547 = vmin.f32 %v3542, 0.0
    %v3548 = vmul.f32 %v3546, 1.442695
    %v3549 = vpow.pop %v3548
    %v3550 = vmul.f32 %v3547, 1.442695
    %v3551 = vpow.pop %v3550
    %v3552 = vsub.f32 %v3549, 1.0
    %v3553 = vsub.f32 %v3551, 1.0
    %v3554 = vsel %vm3544, %v3539, %v3552
    %v3555 = vsel %vm3545, %v3542, %v3553
    %v3557 = vperm.slane %v3502, 0
    %v3560 = vsel %vm903, %v3554, 0
    %v3563 = vsel %vm903, %v3555, 0
    %3565 = vmatpush.msra.mxu0 0.0
    %3566 = vmatpush.msra.mxu0 0.0
    %3567 = vmatpush.msra.mxu0 0.0
    %3568 = vmatpush.msra.mxu0 0.0
    %3569 = vmatpush.msra.mxu0 0.0
    %3570 = vmatpush.msra.mxu0 0.0
    %3571 = vmatpush.msra.mxu0 0.0
    %3572 = vmatpush.msra.mxu0 0.0
    %3573 = vmatpush.msra.mxu0 %v3501
    %3574 = vmatpush.msra.mxu0 %v3500
    %3575 = vmatpush.msra.mxu0 %v3499
    %3576 = vmatpush.msra.mxu0 %v3498
    %3577 = vmatpush.msra.mxu0 %v3497
    %3578 = vmatpush.msra.mxu0 %v3496
    %3579 = vmatpush.msra.mxu0 %v3495
    %3580 = vmatpush.msra.mxu0 %v3494
    %3581 = vmatmul.f32.gmra.mxu0 %v3560
    %v3582 = vpop.f32.mrf.mxu0
    %v3583 = vadd.f32 %v3557, %v3582
    %3584 = vmatmul.f32.gmra.mxu0 %v3563
    %v3585 = vpop.f32.mrf.mxu0
    %v3586 = vadd.f32 %v3557, %v3585
    %3587 = vdwg.mxu0
    %v3589 = vperm.slane %v3511, 0
    %v3592 = vsel %vm903, %v3583, 0
    %v3595 = vsel %vm903, %v3586, 0
    %3597 = vmatpush.msra.mxu0 0.0
    %3598 = vmatpush.msra.mxu0 0.0
    %3599 = vmatpush.msra.mxu0 0.0
    %3600 = vmatpush.msra.mxu0 0.0
    %3601 = vmatpush.msra.mxu0 0.0
    %3602 = vmatpush.msra.mxu0 0.0
    %3603 = vmatpush.msra.mxu0 0.0
    %3604 = vmatpush.msra.mxu0 0.0
    %3605 = vmatpush.msra.mxu0 %v3510
    %3606 = vmatpush.msra.mxu0 %v3509
    %3607 = vmatpush.msra.mxu0 %v3508
    %3608 = vmatpush.msra.mxu0 %v3507
    %3609 = vmatpush.msra.mxu0 %v3506
    %3610 = vmatpush.msra.mxu0 %v3505
    %3611 = vmatpush.msra.mxu0 %v3504
    %3612 = vmatpush.msra.mxu0 %v3503
    %3613 = vmatmul.f32.gmra.mxu0 %v3592
    %v3614 = vpop.f32.mrf.mxu0
    %v3615 = vadd.f32 %v3589, %v3614
    %3616 = vmatmul.f32.gmra.mxu0 %v3595
    %v3617 = vpop.f32.mrf.mxu0
    %v3618 = vadd.f32 %v3589, %v3617
    %3619 = vdwg.mxu0
    %v3620 = vxor.u32 %v3615, 2147483648
    %v3621 = vxor.u32 %v3618, 2147483648
    %v3622 = vmul.f32 %v3620, 1.442695
    %v3623 = vpow.pop %v3622
    %v3624 = vmul.f32 %v3621, 1.442695
    %v3625 = vpow.pop %v3624
    %v3626 = vadd.f32 %v3623, 1.0
    %v3627 = vadd.f32 %v3625, 1.0
    %v3628 = vrcp.pop %v3626
    %v3629 = vmul.f32 %v3626, %v3628
    %v3630 = vsub.f32 1.0, %v3629
    %v3631 = vmul.f32 %v3628, %v3630
    %v3632 = vadd.f32 %v3628, %v3631
    %vm3633 = vweird.f32 %v3626
    %vm3634 = vweird.f32 %v3628
    %vm3635 = vmor %vm3633, %vm3634
    %v3636 = vsel %vm3635, %v3628, %v3632
    %v3637 = vand.u32 2147483647, %v3626
    %vm3638 = vcmp.eq.f32.partialorder %v3637, 8.507059e+37
    %v3639 = vand.u32 %v3626, 2147483648
    %v3640 = vor.u32 1.1754944e-38, %v3639
    %v3641 = vsel %vm3638, %v3640, %v3636
    %v3642 = vmul.f32 1.0, %v3641
    %v3643 = vrcp.pop %v3627
    %v3644 = vmul.f32 %v3627, %v3643
    %v3645 = vsub.f32 1.0, %v3644
    %v3646 = vmul.f32 %v3643, %v3645
    %v3647 = vadd.f32 %v3643, %v3646
    %vm3648 = vweird.f32 %v3627
    %vm3649 = vweird.f32 %v3643
    %vm3650 = vmor %vm3648, %vm3649
    %v3651 = vsel %vm3650, %v3643, %v3647
    %v3652 = vand.u32 2147483647, %v3627
    %vm3653 = vcmp.eq.f32.partialorder %v3652, 8.507059e+37
    %v3654 = vand.u32 %v3627, 2147483648
    %v3655 = vor.u32 1.1754944e-38, %v3654
    %v3656 = vsel %vm3653, %v3655, %v3651
    %v3657 = vmul.f32 1.0, %v3656
    %v3658 = vmul.f32 %v3642, %v3583
    %v3659 = vmul.f32 %v3657, %v3586
    %v3660 = vsub.f32 1.0, %v3642
    %v3661 = vsub.f32 1.0, %v3657
    %v3662 = vmul.f32 %v3660, %v3483
    %v3663 = vmul.f32 %v3661, %v3484
    %v3664 = vadd.f32 %v3658, %v3662
    %v3665 = vadd.f32 %v3659, %v3663
    %s3666 = scalar_lea.vmem %s19, 128
    %v3667 = vld [vmem:[%s3666] sm:$0xff]
    %v3668 = vld [vmem:[%s3666 + $0x8] sm:$0xff]
    %v3669 = vld [vmem:[%s3666 + $0x10] sm:$0xff]
    %v3670 = vld [vmem:[%s3666 + $0x18] sm:$0xff]
    %v3671 = vld [vmem:[%s3666 + $0x20] sm:$0xff]
    %v3672 = vld [vmem:[%s3666 + $0x28] sm:$0xff]
    %v3673 = vld [vmem:[%s3666 + $0x30] sm:$0xff]
    %v3674 = vld [vmem:[%s3666 + $0x38] sm:$0xff]
    %v3675 = vld [vmem:[%s3666 + $0x40] sm:$0xff]
    %v3676 = vld [vmem:[%s3666 + $0x48] sm:$0xff]
    %v3677 = vld [vmem:[%s3666 + $0x50] sm:$0xff]
    %v3678 = vld [vmem:[%s3666 + $0x58] sm:$0xff]
    %v3679 = vld [vmem:[%s3666 + $0x60] sm:$0xff]
    %v3680 = vld [vmem:[%s3666 + $0x68] sm:$0xff]
    %v3681 = vld [vmem:[%s3666 + $0x70] sm:$0xff]
    %v3682 = vld [vmem:[%s3666 + $0x78] sm:$0xff]
    %s3683 = scalar_lea.vmem [#allocation16], 2
    %v3684 = vld [vmem:[%s3683] sm:$0x3]
    %v3686 = vperm.slane %v3684, 0
    %v3687 = vperm.slane %v3684, 1
    %v3691 = vsel %vm903, %v3664, 0
    %v3694 = vsel %vm903, %v3665, 0
    %3696 = vmatpush.msra.mxu0 0.0
    %3697 = vmatpush.msra.mxu0 0.0
    %3698 = vmatpush.msra.mxu0 0.0
    %3699 = vmatpush.msra.mxu0 0.0
    %3700 = vmatpush.msra.mxu0 0.0
    %3701 = vmatpush.msra.mxu0 0.0
    %3702 = vmatpush.msra.mxu0 0.0
    %3703 = vmatpush.msra.mxu0 0.0
    %3704 = vmatpush.msra.mxu0 %v3681
    %3705 = vmatpush.msra.mxu0 %v3679
    %3706 = vmatpush.msra.mxu0 %v3677
    %3707 = vmatpush.msra.mxu0 %v3675
    %3708 = vmatpush.msra.mxu0 %v3673
    %3709 = vmatpush.msra.mxu0 %v3671
    %3710 = vmatpush.msra.mxu0 %v3669
    %3711 = vmatpush.msra.mxu0 %v3667
    %3712 = vmatmul.f32.gmra.mxu0 %v3691
    %v3713 = vpop.f32.mrf.mxu0
    %v3714 = vadd.f32 %v3686, %v3713
    %3715 = vmatmul.f32.gmra.mxu0 %v3694
    %v3716 = vpop.f32.mrf.mxu0
    %v3717 = vadd.f32 %v3686, %v3716
    %3718 = vdwg.mxu0
    %3719 = vmatpush.msra.mxu0 0.0
    %3720 = vmatpush.msra.mxu0 0.0
    %3721 = vmatpush.msra.mxu0 0.0
    %3722 = vmatpush.msra.mxu0 0.0
    %3723 = vmatpush.msra.mxu0 0.0
    %3724 = vmatpush.msra.mxu0 0.0
    %3725 = vmatpush.msra.mxu0 0.0
    %3726 = vmatpush.msra.mxu0 0.0
    %3727 = vmatpush.msra.mxu0 %v3682
    %3728 = vmatpush.msra.mxu0 %v3680
    %3729 = vmatpush.msra.mxu0 %v3678
    %3730 = vmatpush.msra.mxu0 %v3676
    %3731 = vmatpush.msra.mxu0 %v3674
    %3732 = vmatpush.msra.mxu0 %v3672
    %3733 = vmatpush.msra.mxu0 %v3670
    %3734 = vmatpush.msra.mxu0 %v3668
    %3735 = vmatmul.f32.gmra.mxu0 %v3691
    %v3736 = vpop.f32.mrf.mxu0
    %v3737 = vadd.f32 %v3687, %v3736
    %3738 = vmatmul.f32.gmra.mxu0 %v3694
    %v3739 = vpop.f32.mrf.mxu0
    %v3740 = vadd.f32 %v3687, %v3739
    %3741 = vdwg.mxu0
    %3744 = vrot.lane.b32.xlu0 %v3714, 64
    %v3745 = vpop.permute.xlu0 %3744
    %3746 = vrot.lane.b32.xlu0 %v3717, 64
    %v3747 = vpop.permute.xlu0 %3746
    %v3748 = vsel %vm634, %v3714, 0
    %v3750 = vsel %vm634, %v3717, 0
    %v3752 = vsel %vm634, %v3745, 0
    %v3754 = vsel %vm634, %v3747, 0
    %3756 = vmatpush.xpose.msra.mxu0 0.0
    %3757 = vmatpush.xpose.msra.mxu0 0.0
    %3758 = vmatpush.xpose.msra.mxu0 0.0
    %3759 = vmatpush.xpose.msra.mxu0 0.0
    %3760 = vmatpush.xpose.msra.mxu0 0.0
    %3761 = vmatpush.xpose.msra.mxu0 0.0
    %3762 = vmatpush.xpose.msra.mxu0 0.0
    %3763 = vmatpush.xpose.msra.mxu0 0.0
    %3764 = vmatpush.xpose.msra.mxu0 0.0
    %3765 = vmatpush.xpose.msra.mxu0 0.0
    %3766 = vmatpush.xpose.msra.mxu0 0.0
    %3767 = vmatpush.xpose.msra.mxu0 0.0
    %3768 = vmatpush.xpose.msra.mxu0 0.0
    %3769 = vmatpush.xpose.msra.mxu0 0.0
    %3770 = vmatpush.xpose.msra.mxu0 %v3754
    %3771 = vmatpush.xpose.msra.mxu0 %v3752
    %3772 = vmatmul.f32.gmra.mxu0 %v3748
    %v3773 = vpop.f32.mrf.mxu0
    %v3774 = vadd.f32 0.0, %v3773
    %3775 = vmatmul.f32.gmra.mxu0 %v3750
    %v3776 = vpop.f32.mrf.mxu0
    %v3777 = vadd.f32 0.0, %v3776
    %3778 = vdwg.mxu0
    %v3779 = vmul.f32 %v3774, 0.25
    %v3780 = vmul.f32 %v3777, 0.25
    %v3781 = vadd.f32 %v3779, %v2733
    %v3782 = vadd.f32 %v3780, %v2734
    %v3783 = vsel %vm634, %v3781, -inf
    %3784 = vmax.xlane.f32.xlu0 %v3783
    %v3785 = vpop.xlane.xlu0 %3784
    %v3786 = vsel %vm634, %v3782, -inf
    %3787 = vmax.xlane.f32.xlu0 %v3786
    %v3788 = vpop.xlane.xlu0 %3787
    %v3789 = vsub.f32 %v3781, %v3785
    %v3790 = vsub.f32 %v3782, %v3788
    %v3791 = vmul.f32 %v3789, 1.442695
    %v3792 = vpow.pop %v3791
    %v3793 = vmul.f32 %v3790, 1.442695
    %v3794 = vpow.pop %v3793
    %v3795 = vsel %vm634, %v3792, 0.0
    %3796 = vadd.xlane.f32.xlu0 %v3795
    %v3797 = vpop.xlane.xlu0 %3796
    %v3798 = vsel %vm634, %v3794, 0.0
    %3799 = vadd.xlane.f32.xlu0 %v3798
    %v3800 = vpop.xlane.xlu0 %3799
    %v3801 = vrcp.pop %v3797
    %v3802 = vrcp.pop %v3800
    %v3803 = vmul.f32 %v3792, %v3801
    %v3804 = vmul.f32 %v3794, %v3802
    %v3806 = vsel %vm634, %v3803, 0
    %v3809 = vsel %vm634, %v3804, 0
    %3811 = vmatpush.msra.mxu0 0.0
    %3812 = vmatpush.msra.mxu0 0.0
    %3813 = vmatpush.msra.mxu0 0.0
    %3814 = vmatpush.msra.mxu0 0.0
    %3815 = vmatpush.msra.mxu0 0.0
    %3816 = vmatpush.msra.mxu0 0.0
    %3817 = vmatpush.msra.mxu0 0.0
    %3818 = vmatpush.msra.mxu0 0.0
    %3819 = vmatpush.msra.mxu0 0.0
    %3820 = vmatpush.msra.mxu0 0.0
    %3821 = vmatpush.msra.mxu0 0.0
    %3822 = vmatpush.msra.mxu0 0.0
    %3823 = vmatpush.msra.mxu0 0.0
    %3824 = vmatpush.msra.mxu0 0.0
    %3825 = vmatpush.msra.mxu0 %v3740
    %3826 = vmatpush.msra.mxu0 %v3737
    %3827 = vmatmul.f32.gmra.mxu0 %v3806
    %v3828 = vpop.f32.mrf.mxu0
    %v3829 = vadd.f32 0.0, %v3828
    %3830 = vmatmul.f32.gmra.mxu0 %v3809
    %v3831 = vpop.f32.mrf.mxu0
    %v3832 = vadd.f32 0.0, %v3831
    %3833 = vdwg.mxu0
    %3834 = vrot.lane.b32.xlu0 %v3714, 112
    %v3835 = vpop.permute.xlu0 %3834
    %3836 = vrot.lane.b32.xlu0 %v3717, 112
    %v3837 = vpop.permute.xlu0 %3836
    %3838 = vrot.lane.b32.xlu0 %v3714, 48
    %v3839 = vpop.permute.xlu0 %3838
    %3840 = vrot.lane.b32.xlu0 %v3717, 48
    %v3841 = vpop.permute.xlu0 %3840
    %v3842 = vsel %vm634, %v3835, 0
    %v3844 = vsel %vm634, %v3837, 0
    %v3846 = vsel %vm634, %v3839, 0
    %v3848 = vsel %vm634, %v3841, 0
    %3850 = vmatpush.xpose.msra.mxu0 0.0
    %3851 = vmatpush.xpose.msra.mxu0 0.0
    %3852 = vmatpush.xpose.msra.mxu0 0.0
    %3853 = vmatpush.xpose.msra.mxu0 0.0
    %3854 = vmatpush.xpose.msra.mxu0 0.0
    %3855 = vmatpush.xpose.msra.mxu0 0.0
    %3856 = vmatpush.xpose.msra.mxu0 0.0
    %3857 = vmatpush.xpose.msra.mxu0 0.0
    %3858 = vmatpush.xpose.msra.mxu0 0.0
    %3859 = vmatpush.xpose.msra.mxu0 0.0
    %3860 = vmatpush.xpose.msra.mxu0 0.0
    %3861 = vmatpush.xpose.msra.mxu0 0.0
    %3862 = vmatpush.xpose.msra.mxu0 0.0
    %3863 = vmatpush.xpose.msra.mxu0 0.0
    %3864 = vmatpush.xpose.msra.mxu0 %v3848
    %3865 = vmatpush.xpose.msra.mxu0 %v3846
    %3866 = vmatmul.f32.gmra.mxu0 %v3842
    %v3867 = vpop.f32.mrf.mxu0
    %v3868 = vadd.f32 0.0, %v3867
    %3869 = vmatmul.f32.gmra.mxu0 %v3844
    %v3870 = vpop.f32.mrf.mxu0
    %v3871 = vadd.f32 0.0, %v3870
    %3872 = vdwg.mxu0
    %v3873 = vmul.f32 %v3868, 0.25
    %v3874 = vmul.f32 %v3871, 0.25
    %v3875 = vadd.f32 %v3873, %v2733
    %v3876 = vadd.f32 %v3874, %v2734
    %v3877 = vsel %vm634, %v3875, -inf
    %3878 = vmax.xlane.f32.xlu0 %v3877
    %v3879 = vpop.xlane.xlu0 %3878
    %v3880 = vsel %vm634, %v3876, -inf
    %3881 = vmax.xlane.f32.xlu0 %v3880
    %v3882 = vpop.xlane.xlu0 %3881
    %v3883 = vsub.f32 %v3875, %v3879
    %v3884 = vsub.f32 %v3876, %v3882
    %v3885 = vmul.f32 %v3883, 1.442695
    %v3886 = vpow.pop %v3885
    %v3887 = vmul.f32 %v3884, 1.442695
    %v3888 = vpow.pop %v3887
    %v3889 = vsel %vm634, %v3886, 0.0
    %3890 = vadd.xlane.f32.xlu0 %v3889
    %v3891 = vpop.xlane.xlu0 %3890
    %v3892 = vsel %vm634, %v3888, 0.0
    %3893 = vadd.xlane.f32.xlu0 %v3892
    %v3894 = vpop.xlane.xlu0 %3893
    %v3895 = vrcp.pop %v3891
    %v3896 = vrcp.pop %v3894
    %v3897 = vmul.f32 %v3886, %v3895
    %v3898 = vmul.f32 %v3888, %v3896
    %3901 = vrot.lane.b32.xlu0 %v3737, 112
    %v3902 = vpop.permute.xlu0 %3901
    %3903 = vrot.lane.b32.xlu0 %v3740, 112
    %v3904 = vpop.permute.xlu0 %3903
    %v3908 = vsel %vm634, %v3897, 0
    %v3911 = vsel %vm634, %v3898, 0
    %3913 = vmatpush.msra.mxu0 0.0
    %3914 = vmatpush.msra.mxu0 0.0
    %3915 = vmatpush.msra.mxu0 0.0
    %3916 = vmatpush.msra.mxu0 0.0
    %3917 = vmatpush.msra.mxu0 0.0
    %3918 = vmatpush.msra.mxu0 0.0
    %3919 = vmatpush.msra.mxu0 0.0
    %3920 = vmatpush.msra.mxu0 0.0
    %3921 = vmatpush.msra.mxu0 0.0
    %3922 = vmatpush.msra.mxu0 0.0
    %3923 = vmatpush.msra.mxu0 0.0
    %3924 = vmatpush.msra.mxu0 0.0
    %3925 = vmatpush.msra.mxu0 0.0
    %3926 = vmatpush.msra.mxu0 0.0
    %3927 = vmatpush.msra.mxu0 %v3904
    %3928 = vmatpush.msra.mxu0 %v3902
    %3929 = vmatmul.f32.gmra.mxu0 %v3908
    %v3930 = vpop.f32.mrf.mxu0
    %v3931 = vadd.f32 0.0, %v3930
    %3932 = vmatmul.f32.gmra.mxu0 %v3911
    %v3933 = vpop.f32.mrf.mxu0
    %v3934 = vadd.f32 0.0, %v3933
    %3935 = vdwg.mxu0
    %3936 = vrot.lane.b32.xlu0 %v3714, 96
    %v3937 = vpop.permute.xlu0 %3936
    %3938 = vrot.lane.b32.xlu0 %v3717, 96
    %v3939 = vpop.permute.xlu0 %3938
    %3940 = vrot.lane.b32.xlu0 %v3714, 32
    %v3941 = vpop.permute.xlu0 %3940
    %3942 = vrot.lane.b32.xlu0 %v3717, 32
    %v3943 = vpop.permute.xlu0 %3942
    %v3944 = vsel %vm634, %v3937, 0
    %v3946 = vsel %vm634, %v3939, 0
    %v3948 = vsel %vm634, %v3941, 0
    %v3950 = vsel %vm634, %v3943, 0
    %3952 = vmatpush.xpose.msra.mxu0 0.0
    %3953 = vmatpush.xpose.msra.mxu0 0.0
    %3954 = vmatpush.xpose.msra.mxu0 0.0
    %3955 = vmatpush.xpose.msra.mxu0 0.0
    %3956 = vmatpush.xpose.msra.mxu0 0.0
    %3957 = vmatpush.xpose.msra.mxu0 0.0
    %3958 = vmatpush.xpose.msra.mxu0 0.0
    %3959 = vmatpush.xpose.msra.mxu0 0.0
    %3960 = vmatpush.xpose.msra.mxu0 0.0
    %3961 = vmatpush.xpose.msra.mxu0 0.0
    %3962 = vmatpush.xpose.msra.mxu0 0.0
    %3963 = vmatpush.xpose.msra.mxu0 0.0
    %3964 = vmatpush.xpose.msra.mxu0 0.0
    %3965 = vmatpush.xpose.msra.mxu0 0.0
    %3966 = vmatpush.xpose.msra.mxu0 %v3950
    %3967 = vmatpush.xpose.msra.mxu0 %v3948
    %3968 = vmatmul.f32.gmra.mxu0 %v3944
    %v3969 = vpop.f32.mrf.mxu0
    %v3970 = vadd.f32 0.0, %v3969
    %3971 = vmatmul.f32.gmra.mxu0 %v3946
    %v3972 = vpop.f32.mrf.mxu0
    %v3973 = vadd.f32 0.0, %v3972
    %3974 = vdwg.mxu0
    %v3975 = vmul.f32 %v3970, 0.25
    %v3976 = vmul.f32 %v3973, 0.25
    %v3977 = vadd.f32 %v3975, %v2733
    %v3978 = vadd.f32 %v3976, %v2734
    %v3979 = vsel %vm634, %v3977, -inf
    %3980 = vmax.xlane.f32.xlu0 %v3979
    %v3981 = vpop.xlane.xlu0 %3980
    %v3982 = vsel %vm634, %v3978, -inf
    %3983 = vmax.xlane.f32.xlu0 %v3982
    %v3984 = vpop.xlane.xlu0 %3983
    %v3985 = vsub.f32 %v3977, %v3981
    %v3986 = vsub.f32 %v3978, %v3984
    %v3987 = vmul.f32 %v3985, 1.442695
    %v3988 = vpow.pop %v3987
    %v3989 = vmul.f32 %v3986, 1.442695
    %v3990 = vpow.pop %v3989
    %v3991 = vsel %vm634, %v3988, 0.0
    %3992 = vadd.xlane.f32.xlu0 %v3991
    %v3993 = vpop.xlane.xlu0 %3992
    %v3994 = vsel %vm634, %v3990, 0.0
    %3995 = vadd.xlane.f32.xlu0 %v3994
    %v3996 = vpop.xlane.xlu0 %3995
    %v3997 = vrcp.pop %v3993
    %v3998 = vrcp.pop %v3996
    %v3999 = vmul.f32 %v3988, %v3997
    %v4000 = vmul.f32 %v3990, %v3998
    %4001 = vrot.lane.b32.xlu0 %v3737, 96
    %v4002 = vpop.permute.xlu0 %4001
    %4003 = vrot.lane.b32.xlu0 %v3740, 96
    %v4004 = vpop.permute.xlu0 %4003
    %v4008 = vsel %vm634, %v3999, 0
    %v4011 = vsel %vm634, %v4000, 0
    %4013 = vmatpush.msra.mxu0 0.0
    %4014 = vmatpush.msra.mxu0 0.0
    %4015 = vmatpush.msra.mxu0 0.0
    %4016 = vmatpush.msra.mxu0 0.0
    %4017 = vmatpush.msra.mxu0 0.0
    %4018 = vmatpush.msra.mxu0 0.0
    %4019 = vmatpush.msra.mxu0 0.0
    %4020 = vmatpush.msra.mxu0 0.0
    %4021 = vmatpush.msra.mxu0 0.0
    %4022 = vmatpush.msra.mxu0 0.0
    %4023 = vmatpush.msra.mxu0 0.0
    %4024 = vmatpush.msra.mxu0 0.0
    %4025 = vmatpush.msra.mxu0 0.0
    %4026 = vmatpush.msra.mxu0 0.0
    %4027 = vmatpush.msra.mxu0 %v4004
    %4028 = vmatpush.msra.mxu0 %v4002
    %4029 = vmatmul.f32.gmra.mxu0 %v4008
    %v4030 = vpop.f32.mrf.mxu0
    %v4031 = vadd.f32 0.0, %v4030
    %4032 = vmatmul.f32.gmra.mxu0 %v4011
    %v4033 = vpop.f32.mrf.mxu0
    %v4034 = vadd.f32 0.0, %v4033
    %4035 = vdwg.mxu0
    %4036 = vrot.lane.b32.xlu0 %v3714, 80
    %v4037 = vpop.permute.xlu0 %4036
    %4038 = vrot.lane.b32.xlu0 %v3717, 80
    %v4039 = vpop.permute.xlu0 %4038
    %4040 = vrot.lane.b32.xlu0 %v3714, 16
    %v4041 = vpop.permute.xlu0 %4040
    %4042 = vrot.lane.b32.xlu0 %v3717, 16
    %v4043 = vpop.permute.xlu0 %4042
    %v4044 = vsel %vm634, %v4037, 0
    %v4046 = vsel %vm634, %v4039, 0
    %v4048 = vsel %vm634, %v4041, 0
    %v4050 = vsel %vm634, %v4043, 0
    %4052 = vmatpush.xpose.msra.mxu0 0.0
    %4053 = vmatpush.xpose.msra.mxu0 0.0
    %4054 = vmatpush.xpose.msra.mxu0 0.0
    %4055 = vmatpush.xpose.msra.mxu0 0.0
    %4056 = vmatpush.xpose.msra.mxu0 0.0
    %4057 = vmatpush.xpose.msra.mxu0 0.0
    %4058 = vmatpush.xpose.msra.mxu0 0.0
    %4059 = vmatpush.xpose.msra.mxu0 0.0
    %4060 = vmatpush.xpose.msra.mxu0 0.0
    %4061 = vmatpush.xpose.msra.mxu0 0.0
    %4062 = vmatpush.xpose.msra.mxu0 0.0
    %4063 = vmatpush.xpose.msra.mxu0 0.0
    %4064 = vmatpush.xpose.msra.mxu0 0.0
    %4065 = vmatpush.xpose.msra.mxu0 0.0
    %4066 = vmatpush.xpose.msra.mxu0 %v4050
    %4067 = vmatpush.xpose.msra.mxu0 %v4048
    %4068 = vmatmul.f32.gmra.mxu0 %v4044
    %v4069 = vpop.f32.mrf.mxu0
    %v4070 = vadd.f32 0.0, %v4069
    %4071 = vmatmul.f32.gmra.mxu0 %v4046
    %v4072 = vpop.f32.mrf.mxu0
    %v4073 = vadd.f32 0.0, %v4072
    %4074 = vdwg.mxu0
    %v4075 = vmul.f32 %v4070, 0.25
    %v4076 = vmul.f32 %v4073, 0.25
    %v4077 = vadd.f32 %v4075, %v2733
    %v4078 = vadd.f32 %v4076, %v2734
    %v4079 = vsel %vm634, %v4077, -inf
    %4080 = vmax.xlane.f32.xlu0 %v4079
    %v4081 = vpop.xlane.xlu0 %4080
    %v4082 = vsel %vm634, %v4078, -inf
    %4083 = vmax.xlane.f32.xlu0 %v4082
    %v4084 = vpop.xlane.xlu0 %4083
    %v4085 = vsub.f32 %v4077, %v4081
    %v4086 = vsub.f32 %v4078, %v4084
    %v4087 = vmul.f32 %v4085, 1.442695
    %v4088 = vpow.pop %v4087
    %v4089 = vmul.f32 %v4086, 1.442695
    %v4090 = vpow.pop %v4089
    %v4091 = vsel %vm634, %v4088, 0.0
    %4092 = vadd.xlane.f32.xlu0 %v4091
    %v4093 = vpop.xlane.xlu0 %4092
    %v4094 = vsel %vm634, %v4090, 0.0
    %4095 = vadd.xlane.f32.xlu0 %v4094
    %v4096 = vpop.xlane.xlu0 %4095
    %v4097 = vrcp.pop %v4093
    %v4098 = vrcp.pop %v4096
    %v4099 = vmul.f32 %v4088, %v4097
    %v4100 = vmul.f32 %v4090, %v4098
    %4101 = vrot.lane.b32.xlu0 %v3737, 80
    %v4102 = vpop.permute.xlu0 %4101
    %4103 = vrot.lane.b32.xlu0 %v3740, 80
    %v4104 = vpop.permute.xlu0 %4103
    %v4108 = vsel %vm634, %v4099, 0
    %v4111 = vsel %vm634, %v4100, 0
    %4113 = vmatpush.msra.mxu0 0.0
    %4114 = vmatpush.msra.mxu0 0.0
    %4115 = vmatpush.msra.mxu0 0.0
    %4116 = vmatpush.msra.mxu0 0.0
    %4117 = vmatpush.msra.mxu0 0.0
    %4118 = vmatpush.msra.mxu0 0.0
    %4119 = vmatpush.msra.mxu0 0.0
    %4120 = vmatpush.msra.mxu0 0.0
    %4121 = vmatpush.msra.mxu0 0.0
    %4122 = vmatpush.msra.mxu0 0.0
    %4123 = vmatpush.msra.mxu0 0.0
    %4124 = vmatpush.msra.mxu0 0.0
    %4125 = vmatpush.msra.mxu0 0.0
    %4126 = vmatpush.msra.mxu0 0.0
    %4127 = vmatpush.msra.mxu0 %v4104
    %4128 = vmatpush.msra.mxu0 %v4102
    %4129 = vmatmul.f32.gmra.mxu0 %v4108
    %v4130 = vpop.f32.mrf.mxu0
    %v4131 = vadd.f32 0.0, %v4130
    %4132 = vmatmul.f32.gmra.mxu0 %v4111
    %v4133 = vpop.f32.mrf.mxu0
    %v4134 = vadd.f32 0.0, %v4133
    %4135 = vdwg.mxu0
    %4138 = vrot.lane.b32.xlu0 %v3931, 16
    %v4139 = vpop.permute.xlu0 %4138
    %4140 = vrot.lane.b32.xlu0 %v3934, 16
    %v4141 = vpop.permute.xlu0 %4140
    %4146 = vrot.lane.b32.xlu0 %v4031, 32
    %v4147 = vpop.permute.xlu0 %4146
    %4148 = vrot.lane.b32.xlu0 %v4034, 32
    %v4149 = vpop.permute.xlu0 %4148
    %4154 = vrot.lane.b32.xlu0 %v4131, 48
    %v4155 = vpop.permute.xlu0 %4154
    %4156 = vrot.lane.b32.xlu0 %v4134, 48
    %v4157 = vpop.permute.xlu0 %4156
    %v4160 = vsel %vm634, %v3829, %v4139
    %v4161 = vsel %vm634, %v3832, %v4141
    %v4162 = vsel %vm3229, %v4160, %v4147
    %v4163 = vsel %vm3229, %v4161, %v4149
    %v4164 = vsel %vm3232, %v4162, %v4155
    %v4165 = vsel %vm3232, %v4163, %v4157
    %s4166 = scalar_lea.vmem [#allocation18], 64
    %v4167 = vld [vmem:[%s4166] sm:$0xff]
    %v4168 = vld [vmem:[%s4166 + $0x8] sm:$0xff]
    %v4169 = vld [vmem:[%s4166 + $0x10] sm:$0xff]
    %v4170 = vld [vmem:[%s4166 + $0x18] sm:$0xff]
    %v4171 = vld [vmem:[%s4166 + $0x20] sm:$0xff]
    %v4172 = vld [vmem:[%s4166 + $0x28] sm:$0xff]
    %v4173 = vld [vmem:[%s4166 + $0x30] sm:$0xff]
    %v4174 = vld [vmem:[%s4166 + $0x38] sm:$0xff]
    %s4175 = scalar_lea.vmem [#allocation19], 1
    %v4176 = vld [vmem:[%s4175] sm:$0x1]
    %v4178 = vperm.slane %v4176, 0
    %v4181 = vsel %vm903, %v4164, 0
    %v4184 = vsel %vm903, %v4165, 0
    %4186 = vmatpush.msra.mxu0 0.0
    %4187 = vmatpush.msra.mxu0 0.0
    %4188 = vmatpush.msra.mxu0 0.0
    %4189 = vmatpush.msra.mxu0 0.0
    %4190 = vmatpush.msra.mxu0 0.0
    %4191 = vmatpush.msra.mxu0 0.0
    %4192 = vmatpush.msra.mxu0 0.0
    %4193 = vmatpush.msra.mxu0 0.0
    %4194 = vmatpush.msra.mxu0 %v4174
    %4195 = vmatpush.msra.mxu0 %v4173
    %4196 = vmatpush.msra.mxu0 %v4172
    %4197 = vmatpush.msra.mxu0 %v4171
    %4198 = vmatpush.msra.mxu0 %v4170
    %4199 = vmatpush.msra.mxu0 %v4169
    %4200 = vmatpush.msra.mxu0 %v4168
    %4201 = vmatpush.msra.mxu0 %v4167
    %4202 = vmatmul.f32.gmra.mxu0 %v4181
    %v4203 = vpop.f32.mrf.mxu0
    %v4204 = vadd.f32 %v4178, %v4203
    %4205 = vmatmul.f32.gmra.mxu0 %v4184
    %v4206 = vpop.f32.mrf.mxu0
    %v4207 = vadd.f32 %v4178, %v4206
    %4208 = vdwg.mxu0
    %v4209 = vadd.f32 %v3664, %v4204
    %v4210 = vadd.f32 %v3665, %v4207
    %s4211 = scalar_lea.vmem [#allocation21], 1
    %v4212 = vld [vmem:[%s4211] sm:$0x1]
    %s4213 = scalar_lea.vmem [#allocation22], 1
    %v4214 = vld [vmem:[%s4213] sm:$0x1]
    %v4215 = vsel %vm903, %v4209, 0.0
    %4216 = vadd.xlane.f32.xlu0 %v4215
    %v4217 = vpop.xlane.xlu0 %4216
    %v4218 = vsel %vm903, %v4210, 0.0
    %4219 = vadd.xlane.f32.xlu0 %v4218
    %v4220 = vpop.xlane.xlu0 %4219
    %v4221 = vmul.f32 %v4217, %v3292
    %v4222 = vmul.f32 %v4220, %v3292
    %v4223 = vsub.f32 %v4209, %v4221
    %v4224 = vsub.f32 %v4210, %v4222
    %v4225 = vmul.f32 %v4223, %v4223
    %v4226 = vmul.f32 %v4224, %v4224
    %v4227 = vsel %vm903, %v4225, 0.0
    %4228 = vadd.xlane.f32.xlu0 %v4227
    %v4229 = vpop.xlane.xlu0 %4228
    %v4230 = vsel %vm903, %v4226, 0.0
    %4231 = vadd.xlane.f32.xlu0 %v4230
    %v4232 = vpop.xlane.xlu0 %4231
    %v4233 = vmul.f32 %v4229, %v3292
    %v4234 = vmul.f32 %v4232, %v3292
    %v4235 = vadd.f32 %v4233, 1e-05
    %v4236 = vadd.f32 %v4234, 1e-05
    %v4237 = vrsqrt.pop %v4235
    %v4238 = vmul.f32 %v4237, %v4235
    %v4239 = vmul.f32 %v4238, %v4237
    %v4240 = vmul.f32 0.5, %v4239
    %v4241 = vsub.f32 1.5, %v4240
    %v4242 = vmul.f32 %v4237, %v4241
    %vm4243 = vweird.f32 %v4235
    %vm4244 = vweird.f32 %v4237
    %vm4245 = vmor %vm4243, %vm4244
    %v4246 = vsel %vm4245, %v4237, %v4242
    %v4247 = vrsqrt.pop %v4236
    %v4248 = vmul.f32 %v4247, %v4236
    %v4249 = vmul.f32 %v4248, %v4247
    %v4250 = vmul.f32 0.5, %v4249
    %v4251 = vsub.f32 1.5, %v4250
    %v4252 = vmul.f32 %v4247, %v4251
    %vm4253 = vweird.f32 %v4236
    %vm4254 = vweird.f32 %v4247
    %vm4255 = vmor %vm4253, %vm4254
    %v4256 = vsel %vm4255, %v4247, %v4252
    %v4257 = vmul.f32 %v4223, %v4246
    %v4258 = vmul.f32 %v4224, %v4256
    %v4260 = vperm.slane %v4212, 0
    %v4262 = vmul.f32 %v4257, %v4260
    %v4263 = vmul.f32 %v4258, %v4260
    %v4265 = vperm.slane %v4214, 0
    %v4267 = vadd.f32 %v4262, %v4265
    %v4268 = vadd.f32 %v4263, %v4265
    %s4269 = scalar_lea.vmem [#allocation24], 64
    %v4270 = vld [vmem:[%s4269] sm:$0xff]
    %v4271 = vld [vmem:[%s4269 + $0x8] sm:$0xff]
    %v4272 = vld [vmem:[%s4269 + $0x10] sm:$0xff]
    %v4273 = vld [vmem:[%s4269 + $0x18] sm:$0xff]
    %v4274 = vld [vmem:[%s4269 + $0x20] sm:$0xff]
    %v4275 = vld [vmem:[%s4269 + $0x28] sm:$0xff]
    %v4276 = vld [vmem:[%s4269 + $0x30] sm:$0xff]
    %v4277 = vld [vmem:[%s4269 + $0x38] sm:$0xff]
    %s4278 = scalar_lea.vmem [#allocation25], 1
    %v4279 = vld [vmem:[%s4278] sm:$0x1]
    %v4281 = vperm.slane %v4279, 0
    %v4284 = vsel %vm903, %v4267, 0
    %v4287 = vsel %vm903, %v4268, 0
    %4289 = vmatpush.msra.mxu0 0.0
    %4290 = vmatpush.msra.mxu0 0.0
    %4291 = vmatpush.msra.mxu0 0.0
    %4292 = vmatpush.msra.mxu0 0.0
    %4293 = vmatpush.msra.mxu0 0.0
    %4294 = vmatpush.msra.mxu0 0.0
    %4295 = vmatpush.msra.mxu0 0.0
    %4296 = vmatpush.msra.mxu0 0.0
    %4297 = vmatpush.msra.mxu0 %v4277
    %4298 = vmatpush.msra.mxu0 %v4276
    %4299 = vmatpush.msra.mxu0 %v4275
    %4300 = vmatpush.msra.mxu0 %v4274
    %4301 = vmatpush.msra.mxu0 %v4273
    %4302 = vmatpush.msra.mxu0 %v4272
    %4303 = vmatpush.msra.mxu0 %v4271
    %4304 = vmatpush.msra.mxu0 %v4270
    %4305 = vmatmul.f32.gmra.mxu0 %v4284
    %v4306 = vpop.f32.mrf.mxu0
    %v4307 = vadd.f32 %v4281, %v4306
    %4308 = vmatmul.f32.gmra.mxu0 %v4287
    %v4309 = vpop.f32.mrf.mxu0
    %v4310 = vadd.f32 %v4281, %v4309
    %4311 = vdwg.mxu0
    %v4312 = vmax.f32 %v4307, 0.0
    %v4313 = vmax.f32 %v4310, 0.0
    %s4314 = scalar_lea.vmem %s35, 128
    %v4315 = vld [vmem:[%s4314] sm:$0xff]
    %v4316 = vld [vmem:[%s4314 + $0x8] sm:$0xff]
    %v4317 = vld [vmem:[%s4314 + $0x10] sm:$0xff]
    %v4318 = vld [vmem:[%s4314 + $0x18] sm:$0xff]
    %v4319 = vld [vmem:[%s4314 + $0x20] sm:$0xff]
    %v4320 = vld [vmem:[%s4314 + $0x28] sm:$0xff]
    %v4321 = vld [vmem:[%s4314 + $0x30] sm:$0xff]
    %v4322 = vld [vmem:[%s4314 + $0x38] sm:$0xff]
    %v4323 = vld [vmem:[%s4314 + $0x40] sm:$0xff]
    %v4324 = vld [vmem:[%s4314 + $0x48] sm:$0xff]
    %v4325 = vld [vmem:[%s4314 + $0x50] sm:$0xff]
    %v4326 = vld [vmem:[%s4314 + $0x58] sm:$0xff]
    %v4327 = vld [vmem:[%s4314 + $0x60] sm:$0xff]
    %v4328 = vld [vmem:[%s4314 + $0x68] sm:$0xff]
    %v4329 = vld [vmem:[%s4314 + $0x70] sm:$0xff]
    %v4330 = vld [vmem:[%s4314 + $0x78] sm:$0xff]
    %s4331 = scalar_lea.vmem [#allocation27], 1
    %v4332 = vld [vmem:[%s4331] sm:$0x1]
    %v4334 = vperm.slane %v4332, 0
    %4336 = vmatpush.msra.mxu0 %v4330
    %4337 = vmatpush.msra.mxu0 %v4329
    %4338 = vmatpush.msra.mxu0 %v4328
    %4339 = vmatpush.msra.mxu0 %v4327
    %4340 = vmatpush.msra.mxu0 %v4326
    %4341 = vmatpush.msra.mxu0 %v4325
    %4342 = vmatpush.msra.mxu0 %v4324
    %4343 = vmatpush.msra.mxu0 %v4323
    %4344 = vmatpush.msra.mxu0 %v4322
    %4345 = vmatpush.msra.mxu0 %v4321
    %4346 = vmatpush.msra.mxu0 %v4320
    %4347 = vmatpush.msra.mxu0 %v4319
    %4348 = vmatpush.msra.mxu0 %v4318
    %4349 = vmatpush.msra.mxu0 %v4317
    %4350 = vmatpush.msra.mxu0 %v4316
    %4351 = vmatpush.msra.mxu0 %v4315
    %4352 = vmatmul.f32.gmra.mxu0 %v4312
    %v4353 = vpop.f32.mrf.mxu0
    %v4354 = vadd.f32 %v4334, %v4353
    %4355 = vmatmul.f32.gmra.mxu0 %v4313
    %v4356 = vpop.f32.mrf.mxu0
    %v4357 = vadd.f32 %v4334, %v4356
    %4358 = vdwg.mxu0
    %v4359 = vadd.f32 %v4267, %v4354
    %v4360 = vadd.f32 %v4268, %v4357
    %s4361 = scalar_lea.vmem [#allocation28], 1
    %v4362 = vld [vmem:[%s4361] sm:$0x1]
    %s4363 = scalar_lea.vmem [#allocation30], 1
    %v4364 = vld [vmem:[%s4363] sm:$0x1]
    %v4365 = vsel %vm903, %v4359, 0.0
    %4366 = vadd.xlane.f32.xlu0 %v4365
    %v4367 = vpop.xlane.xlu0 %4366
    %v4368 = vsel %vm903, %v4360, 0.0
    %4369 = vadd.xlane.f32.xlu0 %v4368
    %v4370 = vpop.xlane.xlu0 %4369
    %v4371 = vmul.f32 %v4367, %v3292
    %v4372 = vmul.f32 %v4370, %v3292
    %v4373 = vsub.f32 %v4359, %v4371
    %v4374 = vsub.f32 %v4360, %v4372
    %v4375 = vmul.f32 %v4373, %v4373
    %v4376 = vmul.f32 %v4374, %v4374
    %v4377 = vsel %vm903, %v4375, 0.0
    %4378 = vadd.xlane.f32.xlu0 %v4377
    %v4379 = vpop.xlane.xlu0 %4378
    %v4380 = vsel %vm903, %v4376, 0.0
    %4381 = vadd.xlane.f32.xlu0 %v4380
    %v4382 = vpop.xlane.xlu0 %4381
    %v4383 = vmul.f32 %v4379, %v3292
    %v4384 = vmul.f32 %v4382, %v3292
    %v4385 = vadd.f32 %v4383, 1e-05
    %v4386 = vadd.f32 %v4384, 1e-05
    %v4387 = vrsqrt.pop %v4385
    %v4388 = vmul.f32 %v4387, %v4385
    %v4389 = vmul.f32 %v4388, %v4387
    %v4390 = vmul.f32 0.5, %v4389
    %v4391 = vsub.f32 1.5, %v4390
    %v4392 = vmul.f32 %v4387, %v4391
    %vm4393 = vweird.f32 %v4385
    %vm4394 = vweird.f32 %v4387
    %vm4395 = vmor %vm4393, %vm4394
    %v4396 = vsel %vm4395, %v4387, %v4392
    %v4397 = vrsqrt.pop %v4386
    %v4398 = vmul.f32 %v4397, %v4386
    %v4399 = vmul.f32 %v4398, %v4397
    %v4400 = vmul.f32 0.5, %v4399
    %v4401 = vsub.f32 1.5, %v4400
    %v4402 = vmul.f32 %v4397, %v4401
    %vm4403 = vweird.f32 %v4386
    %vm4404 = vweird.f32 %v4397
    %vm4405 = vmor %vm4403, %vm4404
    %v4406 = vsel %vm4405, %v4397, %v4402
    %v4407 = vmul.f32 %v4373, %v4396
    %v4408 = vmul.f32 %v4374, %v4406
    %v4410 = vperm.slane %v4362, 0
    %v4412 = vmul.f32 %v4407, %v4410
    %v4413 = vmul.f32 %v4408, %v4410
    %v4415 = vperm.slane %v4364, 0
    %v4417 = vadd.f32 %v4412, %v4415
    %v4418 = vadd.f32 %v4413, %v4415
    %s4419 = scalar_lea.vmem [#allocation31], 64
    %v4420 = vld [vmem:[%s4419] sm:$0xff]
    %v4421 = vld [vmem:[%s4419 + $0x8] sm:$0xff]
    %v4422 = vld [vmem:[%s4419 + $0x10] sm:$0xff]
    %v4423 = vld [vmem:[%s4419 + $0x18] sm:$0xff]
    %v4424 = vld [vmem:[%s4419 + $0x20] sm:$0xff]
    %v4425 = vld [vmem:[%s4419 + $0x28] sm:$0xff]
    %v4426 = vld [vmem:[%s4419 + $0x30] sm:$0xff]
    %v4427 = vld [vmem:[%s4419 + $0x38] sm:$0xff]
    %s4428 = scalar_lea.vmem [#allocation33], 1
    %v4429 = vld [vmem:[%s4428] sm:$0x1]
    %s4430 = scalar_lea.vmem [#allocation34], 64
    %v4431 = vld [vmem:[%s4430] sm:$0xff]
    %v4432 = vld [vmem:[%s4430 + $0x8] sm:$0xff]
    %v4433 = vld [vmem:[%s4430 + $0x10] sm:$0xff]
    %v4434 = vld [vmem:[%s4430 + $0x18] sm:$0xff]
    %v4435 = vld [vmem:[%s4430 + $0x20] sm:$0xff]
    %v4436 = vld [vmem:[%s4430 + $0x28] sm:$0xff]
    %v4437 = vld [vmem:[%s4430 + $0x30] sm:$0xff]
    %v4438 = vld [vmem:[%s4430 + $0x38] sm:$0xff]
    %s4439 = scalar_lea.vmem [#allocation36], 1
    %v4440 = vld [vmem:[%s4439] sm:$0x1]
    %s4441 = scalar_lea.vmem [#allocation37], 64
    %v4442 = vld [vmem:[%s4441] sm:$0xff]
    %v4443 = vld [vmem:[%s4441 + $0x8] sm:$0xff]
    %v4444 = vld [vmem:[%s4441 + $0x10] sm:$0xff]
    %v4445 = vld [vmem:[%s4441 + $0x18] sm:$0xff]
    %v4446 = vld [vmem:[%s4441 + $0x20] sm:$0xff]
    %v4447 = vld [vmem:[%s4441 + $0x28] sm:$0xff]
    %v4448 = vld [vmem:[%s4441 + $0x30] sm:$0xff]
    %v4449 = vld [vmem:[%s4441 + $0x38] sm:$0xff]
    %s4450 = scalar_lea.vmem [#allocation39], 1
    %v4451 = vld [vmem:[%s4450] sm:$0x1]
    %v4453 = vperm.slane %v4429, 0
    %v4456 = vsel %vm903, %v4417, 0
    %v4459 = vsel %vm903, %v4418, 0
    %4461 = vmatpush.msra.mxu0 0.0
    %4462 = vmatpush.msra.mxu0 0.0
    %4463 = vmatpush.msra.mxu0 0.0
    %4464 = vmatpush.msra.mxu0 0.0
    %4465 = vmatpush.msra.mxu0 0.0
    %4466 = vmatpush.msra.mxu0 0.0
    %4467 = vmatpush.msra.mxu0 0.0
    %4468 = vmatpush.msra.mxu0 0.0
    %4469 = vmatpush.msra.mxu0 %v4427
    %4470 = vmatpush.msra.mxu0 %v4426
    %4471 = vmatpush.msra.mxu0 %v4425
    %4472 = vmatpush.msra.mxu0 %v4424
    %4473 = vmatpush.msra.mxu0 %v4423
    %4474 = vmatpush.msra.mxu0 %v4422
    %4475 = vmatpush.msra.mxu0 %v4421
    %4476 = vmatpush.msra.mxu0 %v4420
    %4477 = vmatmul.f32.gmra.mxu0 %v4456
    %v4478 = vpop.f32.mrf.mxu0
    %v4479 = vadd.f32 %v4453, %v4478
    %4480 = vmatmul.f32.gmra.mxu0 %v4459
    %v4481 = vpop.f32.mrf.mxu0
    %v4482 = vadd.f32 %v4453, %v4481
    %4483 = vdwg.mxu0
    %vm4484 = vcmp.gt.f32.partialorder %v4479, 0.0
    %vm4485 = vcmp.gt.f32.partialorder %v4482, 0.0
    %v4486 = vmin.f32 %v4479, 0.0
    %v4487 = vmin.f32 %v4482, 0.0
    %v4488 = vmul.f32 %v4486, 1.442695
    %v4489 = vpow.pop %v4488
    %v4490 = vmul.f32 %v4487, 1.442695
    %v4491 = vpow.pop %v4490
    %v4492 = vsub.f32 %v4489, 1.0
    %v4493 = vsub.f32 %v4491, 1.0
    %v4494 = vsel %vm4484, %v4479, %v4492
    %v4495 = vsel %vm4485, %v4482, %v4493
    %v4497 = vperm.slane %v4440, 0
    %v4500 = vsel %vm903, %v4494, 0
    %v4503 = vsel %vm903, %v4495, 0
    %4505 = vmatpush.msra.mxu0 0.0
    %4506 = vmatpush.msra.mxu0 0.0
    %4507 = vmatpush.msra.mxu0 0.0
    %4508 = vmatpush.msra.mxu0 0.0
    %4509 = vmatpush.msra.mxu0 0.0
    %4510 = vmatpush.msra.mxu0 0.0
    %4511 = vmatpush.msra.mxu0 0.0
    %4512 = vmatpush.msra.mxu0 0.0
    %4513 = vmatpush.msra.mxu0 %v4438
    %4514 = vmatpush.msra.mxu0 %v4437
    %4515 = vmatpush.msra.mxu0 %v4436
    %4516 = vmatpush.msra.mxu0 %v4435
    %4517 = vmatpush.msra.mxu0 %v4434
    %4518 = vmatpush.msra.mxu0 %v4433
    %4519 = vmatpush.msra.mxu0 %v4432
    %4520 = vmatpush.msra.mxu0 %v4431
    %4521 = vmatmul.f32.gmra.mxu0 %v4500
    %v4522 = vpop.f32.mrf.mxu0
    %v4523 = vadd.f32 %v4497, %v4522
    %4524 = vmatmul.f32.gmra.mxu0 %v4503
    %v4525 = vpop.f32.mrf.mxu0
    %v4526 = vadd.f32 %v4497, %v4525
    %4527 = vdwg.mxu0
    %v4529 = vperm.slane %v4451, 0
    %v4532 = vsel %vm903, %v4523, 0
    %v4535 = vsel %vm903, %v4526, 0
    %4537 = vmatpush.msra.mxu0 0.0
    %4538 = vmatpush.msra.mxu0 0.0
    %4539 = vmatpush.msra.mxu0 0.0
    %4540 = vmatpush.msra.mxu0 0.0
    %4541 = vmatpush.msra.mxu0 0.0
    %4542 = vmatpush.msra.mxu0 0.0
    %4543 = vmatpush.msra.mxu0 0.0
    %4544 = vmatpush.msra.mxu0 0.0
    %4545 = vmatpush.msra.mxu0 %v4449
    %4546 = vmatpush.msra.mxu0 %v4448
    %4547 = vmatpush.msra.mxu0 %v4447
    %4548 = vmatpush.msra.mxu0 %v4446
    %4549 = vmatpush.msra.mxu0 %v4445
    %4550 = vmatpush.msra.mxu0 %v4444
    %4551 = vmatpush.msra.mxu0 %v4443
    %4552 = vmatpush.msra.mxu0 %v4442
    %4553 = vmatmul.f32.gmra.mxu0 %v4532
    %v4554 = vpop.f32.mrf.mxu0
    %v4555 = vadd.f32 %v4529, %v4554
    %4556 = vmatmul.f32.gmra.mxu0 %v4535
    %v4557 = vpop.f32.mrf.mxu0
    %v4558 = vadd.f32 %v4529, %v4557
    %4559 = vdwg.mxu0
    %v4560 = vxor.u32 %v4555, 2147483648
    %v4561 = vxor.u32 %v4558, 2147483648
    %v4562 = vmul.f32 %v4560, 1.442695
    %v4563 = vpow.pop %v4562
    %v4564 = vmul.f32 %v4561, 1.442695
    %v4565 = vpow.pop %v4564
    %v4566 = vadd.f32 %v4563, 1.0
    %v4567 = vadd.f32 %v4565, 1.0
    %v4568 = vrcp.pop %v4566
    %v4569 = vmul.f32 %v4566, %v4568
    %v4570 = vsub.f32 1.0, %v4569
    %v4571 = vmul.f32 %v4568, %v4570
    %v4572 = vadd.f32 %v4568, %v4571
    %vm4573 = vweird.f32 %v4566
    %vm4574 = vweird.f32 %v4568
    %vm4575 = vmor %vm4573, %vm4574
    %v4576 = vsel %vm4575, %v4568, %v4572
    %v4577 = vand.u32 2147483647, %v4566
    %vm4578 = vcmp.eq.f32.partialorder %v4577, 8.507059e+37
    %v4579 = vand.u32 %v4566, 2147483648
    %v4580 = vor.u32 1.1754944e-38, %v4579
    %v4581 = vsel %vm4578, %v4580, %v4576
    %v4582 = vmul.f32 1.0, %v4581
    %v4583 = vrcp.pop %v4567
    %v4584 = vmul.f32 %v4567, %v4583
    %v4585 = vsub.f32 1.0, %v4584
    %v4586 = vmul.f32 %v4583, %v4585
    %v4587 = vadd.f32 %v4583, %v4586
    %vm4588 = vweird.f32 %v4567
    %vm4589 = vweird.f32 %v4583
    %vm4590 = vmor %vm4588, %vm4589
    %v4591 = vsel %vm4590, %v4583, %v4587
    %v4592 = vand.u32 2147483647, %v4567
    %vm4593 = vcmp.eq.f32.partialorder %v4592, 8.507059e+37
    %v4594 = vand.u32 %v4567, 2147483648
    %v4595 = vor.u32 1.1754944e-38, %v4594
    %v4596 = vsel %vm4593, %v4595, %v4591
    %v4597 = vmul.f32 1.0, %v4596
    %v4598 = vmul.f32 %v4582, %v4523
    %v4599 = vmul.f32 %v4597, %v4526
    %v4600 = vsub.f32 1.0, %v4582
    %v4601 = vsub.f32 1.0, %v4597
    %v4602 = vmul.f32 %v4600, %v4417
    %v4603 = vmul.f32 %v4601, %v4418
    %v4604 = vadd.f32 %v4598, %v4602
    %v4605 = vadd.f32 %v4599, %v4603
    %v4606 = vld [vmem:[#allocation9] sm:$0x3]
    %v4608 = vsel %vm634, %v4606, 0
    %4610 = vmatpush.msra.mxu0 0.0
    %4611 = vmatpush.msra.mxu0 0.0
    %4612 = vmatpush.msra.mxu0 0.0
    %4613 = vmatpush.msra.mxu0 0.0
    %4614 = vmatpush.msra.mxu0 0.0
    %4615 = vmatpush.msra.mxu0 0.0
    %4616 = vmatpush.msra.mxu0 0.0
    %4617 = vmatpush.msra.mxu0 0.0
    %4618 = vmatpush.msra.mxu0 0.0
    %4619 = vmatpush.msra.mxu0 0.0
    %4620 = vmatpush.msra.mxu0 0.0
    %4621 = vmatpush.msra.mxu0 0.0
    %4622 = vmatpush.msra.mxu0 0.0
    %4623 = vmatpush.msra.mxu0 0.0
    %4624 = vmatpush.msra.mxu0 %v4605
    %4625 = vmatpush.msra.mxu0 %v4604
    %4626 = vmatmul.f32.gmra.mxu0 %v4608
    %v4627 = vpop.f32.mrf.mxu0
    %v4628 = vadd.f32 0.0, %v4627
    %4629 = vdwg.mxu0
    %v4630 = vsel %vm903, %v4628, %v2716
    %v4631 = vld [vmem:[#allocation40] sm:$0xff]
    %v4632 = vld [vmem:[#allocation40 + $0x8] sm:$0xff]
    %v4633 = vld [vmem:[#allocation40 + $0x10] sm:$0xff]
    %v4634 = vld [vmem:[#allocation40 + $0x18] sm:$0xff]
    %v4635 = vld [vmem:[#allocation40 + $0x20] sm:$0xff]
    %v4636 = vld [vmem:[#allocation40 + $0x28] sm:$0xff]
    %v4637 = vld [vmem:[#allocation40 + $0x30] sm:$0xff]
    %v4638 = vld [vmem:[#allocation40 + $0x38] sm:$0xff]
    %v4639 = vld [vmem:[#allocation40 + $0x40] sm:$0xff]
    %v4640 = vld [vmem:[#allocation40 + $0x48] sm:$0xff]
    %v4641 = vld [vmem:[#allocation40 + $0x50] sm:$0xff]
    %v4642 = vld [vmem:[#allocation40 + $0x58] sm:$0xff]
    %v4643 = vld [vmem:[#allocation40 + $0x60] sm:$0xff]
    %v4644 = vld [vmem:[#allocation40 + $0x68] sm:$0xff]
    %v4645 = vld [vmem:[#allocation40 + $0x70] sm:$0xff]
    %v4646 = vld [vmem:[#allocation40 + $0x78] sm:$0xff]
    %v4647 = vld [vmem:[#allocation40 + $0x80] sm:$0xff]
    %v4648 = vld [vmem:[#allocation40 + $0x88] sm:$0xff]
    %v4649 = vld [vmem:[#allocation40 + $0x90] sm:$0xff]
    %v4650 = vld [vmem:[#allocation40 + $0x98] sm:$0xff]
    %v4651 = vld [vmem:[#allocation40 + $0xa0] sm:$0xff]
    %v4652 = vld [vmem:[#allocation40 + $0xa8] sm:$0xff]
    %v4653 = vld [vmem:[#allocation40 + $0xb0] sm:$0xff]
    %v4654 = vld [vmem:[#allocation40 + $0xb8] sm:$0xff]
    %v4655 = vld [vmem:[#allocation40 + $0xc0] sm:$0xff]
    %v4656 = vld [vmem:[#allocation40 + $0xc8] sm:$0xff]
    %v4657 = vld [vmem:[#allocation40 + $0xd0] sm:$0xff]
    %v4658 = vld [vmem:[#allocation40 + $0xd8] sm:$0xff]
    %v4659 = vld [vmem:[#allocation40 + $0xe0] sm:$0xff]
    %v4660 = vld [vmem:[#allocation40 + $0xe8] sm:$0xff]
    %v4661 = vld [vmem:[#allocation40 + $0xf0] sm:$0xff]
    %v4662 = vld [vmem:[#allocation40 + $0xf8] sm:$0xff]
    %v4663 = vld [vmem:[#allocation42] sm:$0x3]
    %v4665 = vperm.slane %v4663, 0
    %v4666 = vperm.slane %v4663, 1
    %4669 = vmatpush.msra.mxu0 %v4661
    %4670 = vmatpush.msra.mxu0 %v4659
    %4671 = vmatpush.msra.mxu0 %v4657
    %4672 = vmatpush.msra.mxu0 %v4655
    %4673 = vmatpush.msra.mxu0 %v4653
    %4674 = vmatpush.msra.mxu0 %v4651
    %4675 = vmatpush.msra.mxu0 %v4649
    %4676 = vmatpush.msra.mxu0 %v4647
    %4677 = vmatpush.msra.mxu0 %v4645
    %4678 = vmatpush.msra.mxu0 %v4643
    %4679 = vmatpush.msra.mxu0 %v4641
    %4680 = vmatpush.msra.mxu0 %v4639
    %4681 = vmatpush.msra.mxu0 %v4637
    %4682 = vmatpush.msra.mxu0 %v4635
    %4683 = vmatpush.msra.mxu0 %v4633
    %4684 = vmatpush.msra.mxu0 %v4631
    %4685 = vmatmul.f32.gmra.mxu0 %v4630
    %v4686 = vpop.f32.mrf.mxu0
    %v4687 = vadd.f32 %v4665, %v4686
    %4688 = vdwg.mxu0
    %4689 = vmatpush.msra.mxu0 %v4662
    %4690 = vmatpush.msra.mxu0 %v4660
    %4691 = vmatpush.msra.mxu0 %v4658
    %4692 = vmatpush.msra.mxu0 %v4656
    %4693 = vmatpush.msra.mxu0 %v4654
    %4694 = vmatpush.msra.mxu0 %v4652
    %4695 = vmatpush.msra.mxu0 %v4650
    %4696 = vmatpush.msra.mxu0 %v4648
    %4697 = vmatpush.msra.mxu0 %v4646
    %4698 = vmatpush.msra.mxu0 %v4644
    %4699 = vmatpush.msra.mxu0 %v4642
    %4700 = vmatpush.msra.mxu0 %v4640
    %4701 = vmatpush.msra.mxu0 %v4638
    %4702 = vmatpush.msra.mxu0 %v4636
    %4703 = vmatpush.msra.mxu0 %v4634
    %4704 = vmatpush.msra.mxu0 %v4632
    %4705 = vmatmul.f32.gmra.mxu0 %v4630
    %v4706 = vpop.f32.mrf.mxu0
    %v4707 = vadd.f32 %v4666, %v4706
    %4708 = vdwg.mxu0
    %v4709 = vxor.u32 %v4687, 2147483648
    %v4710 = vmul.f32 %v4709, 1.442695
    %v4711 = vpow.pop %v4710
    %v4712 = vadd.f32 %v4711, 1.0
    %v4713 = vrcp.pop %v4712
    %v4714 = vmul.f32 %v4712, %v4713
    %v4715 = vsub.f32 1.0, %v4714
    %v4716 = vmul.f32 %v4713, %v4715
    %v4717 = vadd.f32 %v4713, %v4716
    %vm4718 = vweird.f32 %v4712
    %vm4719 = vweird.f32 %v4713
    %vm4720 = vmor %vm4718, %vm4719
    %v4721 = vsel %vm4720, %v4713, %v4717
    %v4722 = vand.u32 2147483647, %v4712
    %vm4723 = vcmp.eq.f32.partialorder %v4722, 8.507059e+37
    %v4724 = vand.u32 %v4712, 2147483648
    %v4725 = vor.u32 1.1754944e-38, %v4724
    %v4726 = vsel %vm4723, %v4725, %v4721
    %v4727 = vmul.f32 1.0, %v4726
    %v4728 = vtanh.pop %v4707
    %v4729 = vxor.u32 %v4707, 2147483648
    %v4730 = vmul.f32 %v4729, 1.442695
    %v4731 = vpow.pop %v4730
    %v4732 = vadd.f32 %v4731, 1.0
    %v4733 = vrcp.pop %v4732
    %v4734 = vmul.f32 %v4732, %v4733
    %v4735 = vsub.f32 1.0, %v4734
    %v4736 = vmul.f32 %v4733, %v4735
    %v4737 = vadd.f32 %v4733, %v4736
    %vm4738 = vweird.f32 %v4732
    %vm4739 = vweird.f32 %v4733
    %vm4740 = vmor %vm4738, %vm4739
    %v4741 = vsel %vm4740, %v4733, %v4737
    %v4742 = vand.u32 2147483647, %v4732
    %vm4743 = vcmp.eq.f32.partialorder %v4742, 8.507059e+37
    %v4744 = vand.u32 %v4732, 2147483648
    %v4745 = vor.u32 1.1754944e-38, %v4744
    %v4746 = vsel %vm4743, %v4745, %v4741
    %v4747 = vmul.f32 1.0, %v4746
    %v4748 = vmul.f32 %v4727, %v2714
    %v4749 = vmul.f32 %v4727, %v4728
    %4751 = vrot.lane.b32.xlu0 %v4749, 64
    %v4752 = vpop.permute.xlu0 %4751
    %v4754 = vadd.f32 %v4748, %v4752
    %v4755 = vtanh.pop %v4754
    %v4756 = vmul.f32 %v4747, %v4755
    %v4757 = vld [vmem:[#allocation43] sm:$0xff]
    %v4758 = vld [vmem:[#allocation43 + $0x8] sm:$0xff]
    %v4759 = vld [vmem:[#allocation43 + $0x10] sm:$0xff]
    %v4760 = vld [vmem:[#allocation43 + $0x18] sm:$0xff]
    %v4761 = vld [vmem:[#allocation43 + $0x20] sm:$0xff]
    %v4762 = vld [vmem:[#allocation43 + $0x28] sm:$0xff]
    %v4763 = vld [vmem:[#allocation43 + $0x30] sm:$0xff]
    %v4764 = vld [vmem:[#allocation43 + $0x38] sm:$0xff]
    %v4765 = vld [vmem:[#allocation45] sm:$0x1]
    %v4766 = vld [vmem:[#allocation46] sm:$0xff]
    %v4767 = vld [vmem:[#allocation46 + $0x8] sm:$0xff]
    %v4768 = vld [vmem:[#allocation46 + $0x10] sm:$0xff]
    %v4769 = vld [vmem:[#allocation46 + $0x18] sm:$0xff]
    %v4770 = vld [vmem:[#allocation46 + $0x20] sm:$0xff]
    %v4771 = vld [vmem:[#allocation46 + $0x28] sm:$0xff]
    %v4772 = vld [vmem:[#allocation46 + $0x30] sm:$0xff]
    %v4773 = vld [vmem:[#allocation46 + $0x38] sm:$0xff]
    %v4774 = vld [vmem:[#allocation48] sm:$0x1]
    %v4775 = vld [vmem:[#allocation49] sm:$0xff]
    %v4776 = vld [vmem:[#allocation49 + $0x8] sm:$0xff]
    %v4777 = vld [vmem:[#allocation49 + $0x10] sm:$0xff]
    %v4778 = vld [vmem:[#allocation49 + $0x18] sm:$0xff]
    %v4779 = vld [vmem:[#allocation49 + $0x20] sm:$0xff]
    %v4780 = vld [vmem:[#allocation49 + $0x28] sm:$0xff]
    %v4781 = vld [vmem:[#allocation49 + $0x30] sm:$0xff]
    %v4782 = vld [vmem:[#allocation49 + $0x38] sm:$0xff]
    %v4783 = vld [vmem:[#allocation51] sm:$0x1]
    %v4785 = vperm.slane %v4765, 0
    %4788 = vrot.lane.b32.xlu0 %v4756, 64
    %v4789 = vpop.permute.xlu0 %4788
    %v4790 = vsel %vm903, %v4789, 0
    %4792 = vmatpush.msra.mxu0 0.0
    %4793 = vmatpush.msra.mxu0 0.0
    %4794 = vmatpush.msra.mxu0 0.0
    %4795 = vmatpush.msra.mxu0 0.0
    %4796 = vmatpush.msra.mxu0 0.0
    %4797 = vmatpush.msra.mxu0 0.0
    %4798 = vmatpush.msra.mxu0 0.0
    %4799 = vmatpush.msra.mxu0 0.0
    %4800 = vmatpush.msra.mxu0 %v4764
    %4801 = vmatpush.msra.mxu0 %v4763
    %4802 = vmatpush.msra.mxu0 %v4762
    %4803 = vmatpush.msra.mxu0 %v4761
    %4804 = vmatpush.msra.mxu0 %v4760
    %4805 = vmatpush.msra.mxu0 %v4759
    %4806 = vmatpush.msra.mxu0 %v4758
    %4807 = vmatpush.msra.mxu0 %v4757
    %4808 = vmatmul.f32.gmra.mxu0 %v4790
    %v4809 = vpop.f32.mrf.mxu0
    %v4810 = vadd.f32 %v4785, %v4809
    %4811 = vdwg.mxu0
    %vm4812 = vcmp.gt.f32.partialorder %v4810, 0.0
    %v4813 = vmin.f32 %v4810, 0.0
    %v4814 = vmul.f32 %v4813, 1.442695
    %v4815 = vpow.pop %v4814
    %v4816 = vsub.f32 %v4815, 1.0
    %v4817 = vsel %vm4812, %v4810, %v4816
    %v4819 = vperm.slane %v4774, 0
    %v4822 = vsel %vm903, %v4817, 0
    %4824 = vmatpush.msra.mxu0 0.0
    %4825 = vmatpush.msra.mxu0 0.0
    %4826 = vmatpush.msra.mxu0 0.0
    %4827 = vmatpush.msra.mxu0 0.0
    %4828 = vmatpush.msra.mxu0 0.0
    %4829 = vmatpush.msra.mxu0 0.0
    %4830 = vmatpush.msra.mxu0 0.0
    %4831 = vmatpush.msra.mxu0 0.0
    %4832 = vmatpush.msra.mxu0 %v4773
    %4833 = vmatpush.msra.mxu0 %v4772
    %4834 = vmatpush.msra.mxu0 %v4771
    %4835 = vmatpush.msra.mxu0 %v4770
    %4836 = vmatpush.msra.mxu0 %v4769
    %4837 = vmatpush.msra.mxu0 %v4768
    %4838 = vmatpush.msra.mxu0 %v4767
    %4839 = vmatpush.msra.mxu0 %v4766
    %4840 = vmatmul.f32.gmra.mxu0 %v4822
    %v4841 = vpop.f32.mrf.mxu0
    %v4842 = vadd.f32 %v4819, %v4841
    %4843 = vdwg.mxu0
    %v4845 = vperm.slane %v4783, 0
    %v4848 = vsel %vm903, %v4842, 0
    %4850 = vmatpush.msra.mxu0 0.0
    %4851 = vmatpush.msra.mxu0 0.0
    %4852 = vmatpush.msra.mxu0 0.0
    %4853 = vmatpush.msra.mxu0 0.0
    %4854 = vmatpush.msra.mxu0 0.0
    %4855 = vmatpush.msra.mxu0 0.0
    %4856 = vmatpush.msra.mxu0 0.0
    %4857 = vmatpush.msra.mxu0 0.0
    %4858 = vmatpush.msra.mxu0 %v4782
    %4859 = vmatpush.msra.mxu0 %v4781
    %4860 = vmatpush.msra.mxu0 %v4780
    %4861 = vmatpush.msra.mxu0 %v4779
    %4862 = vmatpush.msra.mxu0 %v4778
    %4863 = vmatpush.msra.mxu0 %v4777
    %4864 = vmatpush.msra.mxu0 %v4776
    %4865 = vmatpush.msra.mxu0 %v4775
    %4866 = vmatmul.f32.gmra.mxu0 %v4848
    %v4867 = vpop.f32.mrf.mxu0
    %v4868 = vadd.f32 %v4845, %v4867
    %4869 = vdwg.mxu0
    %v4870 = vxor.u32 %v4868, 2147483648
    %v4871 = vmul.f32 %v4870, 1.442695
    %v4872 = vpow.pop %v4871
    %v4873 = vadd.f32 %v4872, 1.0
    %v4874 = vrcp.pop %v4873
    %v4875 = vmul.f32 %v4873, %v4874
    %v4876 = vsub.f32 1.0, %v4875
    %v4877 = vmul.f32 %v4874, %v4876
    %v4878 = vadd.f32 %v4874, %v4877
    %vm4879 = vweird.f32 %v4873
    %vm4880 = vweird.f32 %v4874
    %vm4881 = vmor %vm4879, %vm4880
    %v4882 = vsel %vm4881, %v4874, %v4878
    %v4883 = vand.u32 2147483647, %v4873
    %vm4884 = vcmp.eq.f32.partialorder %v4883, 8.507059e+37
    %v4885 = vand.u32 %v4873, 2147483648
    %v4886 = vor.u32 1.1754944e-38, %v4885
    %v4887 = vsel %vm4884, %v4886, %v4882
    %v4888 = vmul.f32 1.0, %v4887
    %v4889 = vmul.f32 %v4888, %v4842
    %v4890 = vsub.f32 1.0, %v4888
    %v4892 = vmul.f32 %v4890, %v4789
    %v4893 = vadd.f32 %v4889, %v4892
    %v4894 = vld [vmem:[%s71] sm:$0xff]
    %v4895 = vld [vmem:[%s71 + $0x8] sm:$0xff]
    %v4896 = vld [vmem:[%s71 + $0x10] sm:$0xff]
    %v4897 = vld [vmem:[%s71 + $0x18] sm:$0xff]
    %v4898 = vld [vmem:[%s71 + $0x20] sm:$0xff]
    %v4899 = vld [vmem:[%s71 + $0x28] sm:$0xff]
    %v4900 = vld [vmem:[%s71 + $0x30] sm:$0xff]
    %v4901 = vld [vmem:[%s71 + $0x38] sm:$0xff]
    %v4902 = vld [vmem:[%s73] sm:$0x1]
    %v4904 = vperm.slane %v4902, 0
    %v4907 = vsel %vm903, %v4893, 0
    %4909 = vmatpush.msra.mxu0 0.0
    %4910 = vmatpush.msra.mxu0 0.0
    %4911 = vmatpush.msra.mxu0 0.0
    %4912 = vmatpush.msra.mxu0 0.0
    %4913 = vmatpush.msra.mxu0 0.0
    %4914 = vmatpush.msra.mxu0 0.0
    %4915 = vmatpush.msra.mxu0 0.0
    %4916 = vmatpush.msra.mxu0 0.0
    %4917 = vmatpush.msra.mxu0 %v4901
    %4918 = vmatpush.msra.mxu0 %v4900
    %4919 = vmatpush.msra.mxu0 %v4899
    %4920 = vmatpush.msra.mxu0 %v4898
    %4921 = vmatpush.msra.mxu0 %v4897
    %4922 = vmatpush.msra.mxu0 %v4896
    %4923 = vmatpush.msra.mxu0 %v4895
    %4924 = vmatpush.msra.mxu0 %v4894
    %4925 = vmatmul.f32.gmra.mxu0 %v4907
    %v4926 = vpop.f32.mrf.mxu0
    %v4927 = vadd.f32 %v4904, %v4926
    %4928 = vdwg.mxu0
    %vm4929 = vcmask 254976
    %4930 = vst.msk [vmem:[#allocation52] sm:$0x3] %vm4929, %v4927
    // Predicated region
    $region274: #{tft_forward_fused.1} parent=1 // pred_check
      _
    $region275: #{tft_forward_fused.1} parent=1 // pred_check_branch
      %4932 = sbr.rel (0) target = $region277
    $region276: #{tft_forward_fused.1} parent=1 // pred_region
      %4934 = vsyncadd [#allocation6], 0
      %s4936 = sshll.u32 [#allocation52], 4
      %s4937 = int_to_ptr.vmem [resolvable:$true] %s4936
      %s4938 = sshll.u32 %s75, 4
      %s4939 = int_to_ptr.hbm [resolvable:$true] %s4938
      %4941 = dma.vmem_to_hbm [thread:$0]  %s4937, 32, %s4939, [#allocation6]
    $region277: #{tft_forward_fused.1} parent=1 // pred_fallthru
      _
    // Predicated region
    $region278: #{tft_forward_fused.1} parent=1 // pred_check
      _
    $region279: #{tft_forward_fused.1} parent=1 // pred_check_branch
      %4943 = sbr.rel (0) target = $region281
    $region280: #{tft_forward_fused.1} parent=1 // pred_region
      %4945 = dma.done [#allocation6], 32
    $region281: #{tft_forward_fused.1} parent=1 // pred_fallthru
      _
    %4946 = vsyncpa [#allocation5], 1
    %4947 = vsyncpa [#allocation8], 1
    %4948 = vsyncpa [#allocation11], 1
    %4949 = vsyncpa [#allocation14], 1
    %4950 = vsyncpa [#allocation17], 1
    %4951 = vsyncpa [#allocation20], 1
    %4952 = vsyncpa [#allocation23], 1
    %4953 = vsyncpa [#allocation26], 1
    %4954 = vsyncpa [#allocation29], 1
    %4955 = vsyncpa [#allocation32], 1
    %4956 = vsyncpa [#allocation35], 1
    %4957 = vsyncpa [#allocation38], 1
    %4958 = vsyncpa [#allocation41], 1
    %4959 = vsyncpa [#allocation44], 1
    %4960 = vsyncpa [#allocation47], 1
    %4961 = vsyncpa [#allocation50], 1
    %4962 = vsyncpa [#allocation6], 1

</llo_original>
